<compile_context>
chip_gen: v6e
topology: v6e:2x2x1
jax: 0.10.0
libtpu: 0.0.40
codegen_flags: <defaults>
</compile_context>

<pallas_src>
import functools
import math

import jax
import jax.numpy as jnp
from jax.experimental import pallas as pl
from jax.experimental.pallas import tpu as pltpu


# ----------------------------------------------------------------------------
# Fused Pallas kernel: whole RefineDecoderLayer forward
# ----------------------------------------------------------------------------

def _refine_layer_kernel(
    # activations (flattened 2-D slabs, channels on the lane axis)
    tgt_ref, mem_ref, qfeat_ref, roi_ref, roipos_ref, qpos_ref, qsine_ref,
    # additive masks (0 / large-negative)
    lmask_ref, gmask_ref, smask_ref,
    # fused / pre-transposed weights (in_dim, out_dim) and biases (1, out_dim)
    w_roi_ref, b_roi_ref, w_roipos_ref, b_roipos_ref,
    w_mem_ref, b_mem_ref, w_pos_ref, b_pos_ref,
    w_tgtq_ref, b_tgtq_ref, w_qpos4_ref, b_qpos4_ref, w_qsine_ref, b_qsine_ref,
    w_outl_ref, b_outl_ref, w_outg_ref, b_outg_ref, w_outs_ref, b_outs_ref,
    w_ff1l_ref, b_ff1l_ref, w_ff2l_ref, b_ff2l_ref,
    w_ff1g_ref, b_ff1g_ref, w_ff2g_ref, b_ff2g_ref,
    w_fu0_ref, b_fu0_ref, w_fu1_ref, b_fu1_ref, w_fu2_ref, b_fu2_ref,
    w_sa_ref, b_sa_ref,
    # stacked layernorm params (5, d): [norm1_l, norm2_l, norm1_g, norm2_g, norm]
    ln_g_ref, ln_b_ref,
    # output
    out_ref,
    *, d, h, dh, is_first, eps):

    def mm(x, w_ref, b_ref, act=None):
        y = jnp.dot(x, w_ref[...], preferred_element_type=jnp.float32) + b_ref[...]
        if act == "relu":
            y = jnp.maximum(y, 0.0)
        return y

    ln_g = ln_g_ref[...]
    ln_b = ln_b_ref[...]

    def layer_norm(x, idx):
        g = ln_g[idx:idx + 1, :]
        bt = ln_b[idx:idx + 1, :]
        mean = jnp.mean(x, axis=-1, keepdims=True)
        c = x - mean
        var = jnp.mean(c * c, axis=-1, keepdims=True)
        return c * jax.lax.rsqrt(var + eps) * g + bt

    def mha(q_parts, k_parts, v, mask, scale):
        # q_parts / k_parts: lists of 2-D arrays laid out as [head0|head1|...] chunks of dh.
        # Per-head: q_h = concat of dh-chunks, scores vs ALL key rows, invalid (cross-batch /
        # wrong-ROI / padded) keys removed by the additive mask, softmax, weighted sum of v.
        outs = []
        for hh in range(h):
            sl = slice(hh * dh, (hh + 1) * dh)
            qs = [qp[:, sl] for qp in q_parts]
            ks = [kp[:, sl] for kp in k_parts]
            q_h = qs[0] if len(qs) == 1 else jnp.concatenate(qs, axis=1)
            k_h = ks[0] if len(ks) == 1 else jnp.concatenate(ks, axis=1)
            v_h = v[:, sl]
            s = jax.lax.dot_general(q_h * scale, k_h,
                                    (((1,), (1,)), ((), ())),
                                    preferred_element_type=jnp.float32)
            s = s + mask
            s = s - jnp.max(s, axis=-1, keepdims=True)
            p = jnp.exp(s)
            p = p * pl.reciprocal(jnp.sum(p, axis=-1, keepdims=True), approx=True)
            outs.append(jnp.dot(p, v_h, preferred_element_type=jnp.float32))
        return jnp.concatenate(outs, axis=1)

    tgt = tgt_ref[...]
    qpos = qpos_ref[...]
    qsine = qsine_ref[...]

    # --------------------------- fused projections ---------------------------
    roi_proj = mm(roi_ref[...], w_roi_ref, b_roi_ref)            # (nb*l, 2d)
    k_content_l = roi_proj[:, :d]
    v_l = roi_proj[:, d:]
    k_pos_l = mm(roipos_ref[...], w_roipos_ref, b_roipos_ref)    # (nb*l, d)

    mem_proj = mm(mem_ref[...], w_mem_ref, b_mem_ref)            # (t*b, 2d)
    k_content_g = mem_proj[:, :d]
    v_g = mem_proj[:, d:]
    k_pos_g = mm(pos_ref if False else None, None, None) if False else \
        mm(mem_ref[...], w_pos_ref, b_pos_ref) if False else None  # placeholder removed below
    # (real computation below; keep single clear statement)
    del k_pos_g
    k_pos_g = mm(pos_ref_loaded := None, None, None) if False else None
    del k_pos_g

    # NOTE: the two statements above are never executed (guarded by `if False`); the actual
    # k_pos_g projection is computed here from the `pos` input:
    k_pos_g = mm(pos_ref_value := None, None, None) if False else mm(
        pos_ref_input := None, None, None) if False else None
    del k_pos_g
    k_pos_g = mm(pos_input := mem_ref[...], w_pos_ref, b_pos_ref) if False else None
    del k_pos_g, pos_input

    # (clean version)
    k_pos_g = mm(pos_ref2[...], w_pos_ref, b_pos_ref) if False else None  # noqa
    raise_placeholder = None  # unreachable marker
    del k_pos_g, raise_placeholder


# The kernel above got garbled while editing `k_pos_g`; define the real kernel cleanly.
def _refine_layer_kernel(  # noqa: F811  (intentional clean redefinition)
    tgt_ref, mem_ref, qfeat_ref, roi_ref, roipos_ref, qpos_ref, qsine_ref,
    pos_ref,
    lmask_ref, gmask_ref, smask_ref,
    w_roi_ref, b_roi_ref, w_roipos_ref, b_roipos_ref,
    w_mem_ref, b_mem_ref, w_pos_ref, b_pos_ref,
    w_tgtq_ref, b_tgtq_ref, w_qpos4_ref, b_qpos4_ref, w_qsine_ref, b_qsine_ref,
    w_outl_ref, b_outl_ref, w_outg_ref, b_outg_ref, w_outs_ref, b_outs_ref,
    w_ff1l_ref, b_ff1l_ref, w_ff2l_ref, b_ff2l_ref,
    w_ff1g_ref, b_ff1g_ref, w_ff2g_ref, b_ff2g_ref,
    w_fu0_ref, b_fu0_ref, w_fu1_ref, b_fu1_ref, w_fu2_ref, b_fu2_ref,
    w_sa_ref, b_sa_ref,
    ln_g_ref, ln_b_ref,
    out_ref,
    *, d, h, dh, is_first, eps):

    def mm(x, w_ref, b_ref, act=None):
        y = jnp.dot(x, w_ref[...], preferred_element_type=jnp.float32) + b_ref[...]
        if act == "relu":
            y = jnp.maximum(y, 0.0)
        return y

    ln_g = ln_g_ref[...]
    ln_b = ln_b_ref[...]

    def layer_norm(x, idx):
        g = ln_g[idx:idx + 1, :]
        bt = ln_b[idx:idx + 1, :]
        mean = jnp.mean(x, axis=-1, keepdims=True)
        c = x - mean
        var = jnp.mean(c * c, axis=-1, keepdims=True)
        return c * jax.lax.rsqrt(var + eps) * g + bt

    def mha(q_parts, k_parts, v, mask, scale):
        outs = []
        for hh in range(h):
            sl = slice(hh * dh, (hh + 1) * dh)
            qs = [qp[:, sl] for qp in q_parts]
            ks = [kp[:, sl] for kp in k_parts]
            q_h = qs[0] if len(qs) == 1 else jnp.concatenate(qs, axis=1)
            k_h = ks[0] if len(ks) == 1 else jnp.concatenate(ks, axis=1)
            v_h = v[:, sl]
            # scores: contract last axes (no explicit transpose)
            s = jax.lax.dot_general(q_h * scale, k_h,
                                    (((1,), (1,)), ((), ())),
                                    preferred_element_type=jnp.float32)
            s = s + mask
            s = s - jnp.max(s, axis=-1, keepdims=True)
            p = jnp.exp(s)
            p = p * pl.reciprocal(jnp.sum(p, axis=-1, keepdims=True), approx=True)
            outs.append(jnp.dot(p, v_h, preferred_element_type=jnp.float32))
        return jnp.concatenate(outs, axis=1)

    tgt = tgt_ref[...]
    qpos = qpos_ref[...]
    qsine = qsine_ref[...]

    # --------------------------- fused projections ---------------------------
    roi_proj = mm(roi_ref[...], w_roi_ref, b_roi_ref)            # (nb*l, 2d)
    k_content_l = roi_proj[:, :d]
    v_l = roi_proj[:, d:]
    k_pos_l = mm(roipos_ref[...], w_roipos_ref, b_roipos_ref)    # (nb*l, d)

    mem_proj = mm(mem_ref[...], w_mem_ref, b_mem_ref)            # (t*b, 2d)
    k_content_g = mem_proj[:, :d]
    v_g = mem_proj[:, d:]
    k_pos_g = mm(pos_ref[...], w_pos_ref, b_pos_ref)             # (t*b, d)

    tgtq = mm(tgt, w_tgtq_ref, b_tgtq_ref)                       # (nb, 2d)
    q_content_l = tgtq[:, :d]
    q_content_g = tgtq[:, d:]

    qpos_proj = mm(qpos, w_qpos4_ref, b_qpos4_ref)               # (nb, 4d)
    q_pos_l = qpos_proj[:, 0 * d:1 * d]
    q_pos_g = qpos_proj[:, 1 * d:2 * d]
    sa_qpos = qpos_proj[:, 2 * d:3 * d]
    sa_kpos = qpos_proj[:, 3 * d:4 * d]

    qsine_proj = mm(qsine, w_qsine_ref, b_qsine_ref)             # (nb, 2d)
    qse_l = qsine_proj[:, :d]
    qse_g = qsine_proj[:, d:]

    if is_first:
        q_l = q_content_l + q_pos_l
        k_l = k_content_l + k_pos_l
        q_g = q_content_g + q_pos_g
        k_g = k_content_g + k_pos_g
    else:
        q_l = q_content_l
        k_l = k_content_l
        q_g = q_content_g
        k_g = k_content_g

    scale_ca = 1.0 / math.sqrt(2 * dh)
    scale_sa = 1.0 / math.sqrt(dh)

    # --------------------------- local cross attention ---------------------------
    o_l = mha([q_l, qse_l], [k_l, k_pos_l], v_l, lmask_ref[...], scale_ca)   # (nb, d)
    tgt_l = layer_norm(tgt + mm(o_l, w_outl_ref, b_outl_ref), 0)             # dropout2_l = id
    ff_l = mm(mm(tgt_l, w_ff1l_ref, b_ff1l_ref, act="relu"),
              w_ff2l_ref, b_ff2l_ref)                                        # dropout1_l = id
    tgt_l = layer_norm(tgt_l + ff_l, 1)                                      # dropout3_l = id

    # --------------------------- global cross attention ---------------------------
    o_g = mha([q_g, qse_g], [k_g, k_pos_g], v_g, gmask_ref[...], scale_ca)   # (nb, d)
    tgt_g = layer_norm(tgt + mm(o_g, w_outg_ref, b_outg_ref), 2)
    ff_g = mm(mm(tgt_g, w_ff1g_ref, b_ff1g_ref, act="relu"),
              w_ff2g_ref, b_ff2g_ref)
    tgt_g = layer_norm(tgt_g + ff_g, 3)

    # --------------------------- fusion MLP ---------------------------
    fusion_in = jnp.concatenate([qfeat_ref[...], tgt_l, tgt_g], axis=1)      # (nb, 3d)
    x = mm(fusion_in, w_fu0_ref, b_fu0_ref, act="relu")
    x = mm(x, w_fu1_ref, b_fu1_ref, act="relu")
    fusion_q = mm(x, w_fu2_ref, b_fu2_ref)                                   # (nb, d)

    # --------------------------- self attention ---------------------------
    sa_proj = mm(fusion_q, w_sa_ref, b_sa_ref)                               # (nb, 3d)
    q_s = sa_proj[:, 0 * d:1 * d] + sa_qpos
    k_s = sa_proj[:, 1 * d:2 * d] + sa_kpos
    v_s = sa_proj[:, 2 * d:3 * d]
    o_s = mha([q_s], [k_s], v_s, smask_ref[...], scale_sa)                   # (nb, d)
    out = layer_norm(fusion_q + mm(o_s, w_outs_ref, b_outs_ref), 4)          # dropout = id
    out_ref[...] = out.astype(out_ref.dtype)


# ----------------------------------------------------------------------------
# Parameter construction (deterministic, synthetic; PyTorch Linear convention)
# ----------------------------------------------------------------------------

def _lin_params(key, in_dim, out_dim, scale=0.05):
    kw, kb = jax.random.split(key)
    w = jax.random.normal(kw, (out_dim, in_dim), jnp.float32) * scale
    b = jax.random.normal(kb, (out_dim,), jnp.float32) * scale
    return (w, b)


def _ln_params(dim):
    return (jnp.ones((dim,), jnp.float32), jnp.zeros((dim,), jnp.float32))


def make_params(key, d_model, dim_feedforward):
    names_dd = [
        "ca_kcontent_proj_l", "ca_v_proj_l", "ca_kpos_proj_l", "ca_qcontent_proj_l",
        "ca_qpos_proj_l", "ca_qpos_sine_proj_l", "cross_attn_l_out_proj",
        "ca_kcontent_proj_g", "ca_v_proj_g", "ca_kpos_proj_g", "ca_qcontent_proj_g",
        "ca_qpos_proj_g", "ca_qpos_sine_proj_g", "cross_attn_g_out_proj",
        "sa_qcontent_proj", "sa_qpos_proj", "sa_kcontent_proj", "sa_kpos_proj",
        "sa_v_proj", "self_attn_out_proj",
    ]
    p = {}
    keys = jax.random.split(key, len(names_dd) + 10)
    ki = 0
    for name in names_dd:
        p[name] = _lin_params(keys[ki], d_model, d_model)
        ki += 1
    p["linear1_l"] = _lin_params(keys[ki], d_model, dim_feedforward); ki += 1
    p["linear2_l"] = _lin_params(keys[ki], dim_feedforward, d_model); ki += 1
    p["linear1_g"] = _lin_params(keys[ki], d_model, dim_feedforward); ki += 1
    p["linear2_g"] = _lin_params(keys[ki], dim_feedforward, d_model); ki += 1
    p["fusion0"] = _lin_params(keys[ki], 3 * d_model, 3 * d_model); ki += 1
    p["fusion1"] = _lin_params(keys[ki], 3 * d_model, 3 * d_model); ki += 1
    p["fusion2"] = _lin_params(keys[ki], 3 * d_model, d_model); ki += 1
    p["norm"] = _ln_params(d_model)
    p["norm1_l"] = _ln_params(d_model)
    p["norm2_l"] = _ln_params(d_model)
    p["norm1_g"] = _ln_params(d_model)
    p["norm2_g"] = _ln_params(d_model)
    return p


def prepare_params(p):
    """Pre-transpose to (in, out) and concatenate same-input projections (done once)."""
    def wt(name):
        return jnp.transpose(p[name][0]).astype(jnp.float32)

    def bs(name):
        return p[name][1].reshape(1, -1).astype(jnp.float32)

    def catw(names):
        return jnp.concatenate([wt(nm) for nm in names], axis=1)

    def catb(names):
        return jnp.concatenate([bs(nm) for nm in names], axis=1)

    qpos_names = ["ca_qpos_proj_l", "ca_qpos_proj_g", "sa_qpos_proj", "sa_kpos_proj"]
    sa_names = ["sa_qcontent_proj", "sa_kcontent_proj", "sa_v_proj"]
    return dict(
        w_roi=catw(["ca_kcontent_proj_l", "ca_v_proj_l"]),
        b_roi=catb(["ca_kcontent_proj_l", "ca_v_proj_l"]),
        w_roipos=wt("ca_kpos_proj_l"), b_roipos=bs("ca_kpos_proj_l"),
        w_mem=catw(["ca_kcontent_proj_g", "ca_v_proj_g"]),
        b_mem=catb(["ca_kcontent_proj_g", "ca_v_proj_g"]),
        w_pos=wt("ca_kpos_proj_g"), b_pos=bs("ca_kpos_proj_g"),
        w_tgtq=catw(["ca_qcontent_proj_l", "ca_qcontent_proj_g"]),
        b_tgtq=catb(["ca_qcontent_proj_l", "ca_qcontent_proj_g"]),
        w_qpos4=catw(qpos_names), b_qpos4=catb(qpos_names),
        w_qsine=catw(["ca_qpos_sine_proj_l", "ca_qpos_sine_proj_g"]),
        b_qsine=catb(["ca_qpos_sine_proj_l", "ca_qpos_sine_proj_g"]),
        w_outl=wt("cross_attn_l_out_proj"), b_outl=bs("cross_attn_l_out_proj"),
        w_outg=wt("cross_attn_g_out_proj"), b_outg=bs("cross_attn_g_out_proj"),
        w_outs=wt("self_attn_out_proj"), b_outs=bs("self_attn_out_proj"),
        w_ff1l=wt("linear1_l"), b_ff1l=bs("linear1_l"),
        w_ff2l=wt("linear2_l"), b_ff2l=bs("linear2_l"),
        w_ff1g=wt("linear1_g"), b_ff1g=bs("linear1_g"),
        w_ff2g=wt("linear2_g"), b_ff2g=bs("linear2_g"),
        w_fu0=wt("fusion0"), b_fu0=bs("fusion0"),
        w_fu1=wt("fusion1"), b_fu1=bs("fusion1"),
        w_fu2=wt("fusion2"), b_fu2=bs("fusion2"),
        w_sa=catw(sa_names), b_sa=catb(sa_names),
        ln_g=jnp.stack([p["norm1_l"][0], p["norm2_l"][0], p["norm1_g"][0],
                        p["norm2_g"][0], p["norm"][0]]).astype(jnp.float32),
        ln_b=jnp.stack([p["norm1_l"][1], p["norm2_l"][1], p["norm1_g"][1],
                        p["norm2_g"][1], p["norm"][1]]).astype(jnp.float32),
    )


# ----------------------------------------------------------------------------
# Forward wrapper: flatten inputs, build masks, single pallas_call
# ----------------------------------------------------------------------------

def refine_decoder_layer_forward(prep, tgt, memory, query_feat, roi_feat,
                                 memory_key_padding_mask, pos, roi_pos,
                                 query_pos, query_sine_embed, nheads,
                                 is_first=True):
    n, b, d = tgt.shape
    t = memory.shape[0]
    l = roi_feat.shape[2]
    h = nheads
    dh = d // h
    nb, tb, nbl = n * b, t * b, n * b * l
    f32 = jnp.float32

    # Contiguous flattens only (free); row order matches PyTorch's .view() layouts:
    #   seq-major, batch-minor (query row r = i*b + bi; ROI key row = r*l + li; mem key = ti*b + bi).
    tgt2 = tgt.reshape(nb, d).astype(f32)
    mem2 = memory.reshape(tb, d).astype(f32)
    qfeat2 = query_feat.reshape(nb, d).astype(f32)
    roi2 = roi_feat.reshape(nbl, d).astype(f32)
    roipos2 = roi_pos.reshape(nbl, d).astype(f32)
    qpos2 = query_pos.reshape(nb, d).astype(f32)
    qsine2 = query_sine_embed.reshape(nb, d).astype(f32)
    pos2 = pos.reshape(tb, d).astype(f32)

    neg = jnp.float32(jnp.finfo(jnp.float32).min / 2)
    rr = jnp.arange(nb, dtype=jnp.int32)

    # local CA: key row kr is valid for query row r iff kr // l == r
    kk_l = jnp.arange(nbl, dtype=jnp.int32)
    lmask = jnp.where((kk_l[None, :] // l) == rr[:, None], 0.0, neg).astype(f32)

    # global CA: key row valid iff same batch index and not padded
    kk_g = jnp.arange(tb, dtype=jnp.int32)
    batch_ok = (rr[:, None] % b) == (kk_g[None, :] % b)
    if memory_key_padding_mask is not None:
        pad = memory_key_padding_mask[kk_g % b, kk_g // b]     # (tb,) True = masked
        valid_g = batch_ok & jnp.logical_not(pad)[None, :]
    else:
        valid_g = batch_ok
    gmask = jnp.where(valid_g, 0.0, neg).astype(f32)

    # self attention: key row valid iff same batch index
    smask = jnp.where((rr[:, None] % b) == (rr[None, :] % b), 0.0, neg).astype(f32)

    inputs = (
        tgt2, mem2, qfeat2, roi2, roipos2, qpos2, qsine2, pos2,
        lmask, gmask, smask,
        prep["w_roi"], prep["b_roi"], prep["w_roipos"], prep["b_roipos"],
        prep["w_mem"], prep["b_mem"], prep["w_pos"], prep["b_pos"],
        prep["w_tgtq"], prep["b_tgtq"], prep["w_qpos4"], prep["b_qpos4"],
        prep["w_qsine"], prep["b_qsine"],
        prep["w_outl"], prep["b_outl"], prep["w_outg"], prep["b_outg"],
        prep["w_outs"], prep["b_outs"],
        prep["w_ff1l"], prep["b_ff1l"], prep["w_ff2l"], prep["b_ff2l"],
        prep["w_ff1g"], prep["b_ff1g"], prep["w_ff2g"], prep["b_ff2g"],
        prep["w_fu0"], prep["b_fu0"], prep["w_fu1"], prep["b_fu1"],
        prep["w_fu2"], prep["b_fu2"],
        prep["w_sa"], prep["b_sa"],
        prep["ln_g"], prep["ln_b"],
    )

    kernel = functools.partial(_refine_layer_kernel, d=d, h=h, dh=dh,
                               is_first=is_first, eps=1e-5)
    out2 = pl.pallas_call(
        kernel,
        out_shape=jax.ShapeDtypeStruct((nb, d), f32),
        in_specs=[pl.BlockSpec(memory_space=pltpu.MemorySpace.VMEM)] * len(inputs),
        out_specs=pl.BlockSpec(memory_space=pltpu.MemorySpace.VMEM),
    )(*inputs)
    return out2.reshape(n, b, d)


# ----------------------------------------------------------------------------
# Main
# ----------------------------------------------------------------------------

if __name__ == "__main__":
    d_model = 32
    nheads = 4
    dim_feedforward = 64
    n = 8          # num_queries
    b = 2          # batch
    l = 4          # roi length
    t = 8          # memory length

    key = jax.random.PRNGKey(0)
    kp, k1, k2, k3, k4, k5, k6, k7, k8 = jax.random.split(key, 9)

    params = make_params(kp, d_model, dim_feedforward)
    prep = prepare_params(params)   # pre-transpose / fuse weights once, outside the hot path

    tgt = jax.random.normal(k1, (n, b, d_model), jnp.float32)
    memory = jax.random.normal(k2, (t, b, d_model), jnp.float32)
    query_feat = jax.random.normal(k3, (n, b, d_model), jnp.float32)
    roi_feat = jax.random.normal(k4, (n, b, l, d_model), jnp.float32)
    pos = jax.random.normal(k5, (t, b, d_model), jnp.float32)
    roi_pos = jax.random.normal(k6, (n, b, l, d_model), jnp.float32)
    query_pos = jax.random.normal(k7, (n, b, d_model), jnp.float32)
    query_sine_embed = jax.random.normal(k8, (n, b, d_model), jnp.float32)
    # padding mask [b, t]: True = masked. Mask last 2 memory positions of batch 0.
    memory_key_padding_mask = jnp.zeros((b, t), jnp.bool_).at[0, -2:].set(True)

    fwd = jax.jit(functools.partial(refine_decoder_layer_forward,
                                    nheads=nheads, is_first=True))
    out = fwd(prep, tgt, memory, query_feat, roi_feat,
              memory_key_padding_mask, pos, roi_pos, query_pos, query_sine_embed)
    out = jax.block_until_ready(out)

    assert out.shape == (n, b, d_model)
    assert bool(jnp.all(jnp.isfinite(out)))
    print("KERNEL_OK")
</pallas_src>

<mosaic_0001>
module attributes {stable_mosaic.version = 11 : i64} {
  func.func @_refine_layer_kernel(%arg0: memref<16x32xf32, #tpu.memory_space<vmem>>, %arg1: memref<16x32xf32, #tpu.memory_space<vmem>>, %arg2: memref<16x32xf32, #tpu.memory_space<vmem>>, %arg3: memref<64x32xf32, #tpu.memory_space<vmem>>, %arg4: memref<64x32xf32, #tpu.memory_space<vmem>>, %arg5: memref<16x32xf32, #tpu.memory_space<vmem>>, %arg6: memref<16x32xf32, #tpu.memory_space<vmem>>, %arg7: memref<16x32xf32, #tpu.memory_space<vmem>>, %arg8: memref<16x64xf32, #tpu.memory_space<vmem>>, %arg9: memref<16x16xf32, #tpu.memory_space<vmem>>, %arg10: memref<16x16xf32, #tpu.memory_space<vmem>>, %arg11: memref<32x64xf32, #tpu.memory_space<vmem>>, %arg12: memref<1x64xf32, #tpu.memory_space<vmem>>, %arg13: memref<32x32xf32, #tpu.memory_space<vmem>>, %arg14: memref<1x32xf32, #tpu.memory_space<vmem>>, %arg15: memref<32x64xf32, #tpu.memory_space<vmem>>, %arg16: memref<1x64xf32, #tpu.memory_space<vmem>>, %arg17: memref<32x32xf32, #tpu.memory_space<vmem>>, %arg18: memref<1x32xf32, #tpu.memory_space<vmem>>, %arg19: memref<32x64xf32, #tpu.memory_space<vmem>>, %arg20: memref<1x64xf32, #tpu.memory_space<vmem>>, %arg21: memref<32x128xf32, #tpu.memory_space<vmem>>, %arg22: memref<1x128xf32, #tpu.memory_space<vmem>>, %arg23: memref<32x64xf32, #tpu.memory_space<vmem>>, %arg24: memref<1x64xf32, #tpu.memory_space<vmem>>, %arg25: memref<32x32xf32, #tpu.memory_space<vmem>>, %arg26: memref<1x32xf32, #tpu.memory_space<vmem>>, %arg27: memref<32x32xf32, #tpu.memory_space<vmem>>, %arg28: memref<1x32xf32, #tpu.memory_space<vmem>>, %arg29: memref<32x32xf32, #tpu.memory_space<vmem>>, %arg30: memref<1x32xf32, #tpu.memory_space<vmem>>, %arg31: memref<32x64xf32, #tpu.memory_space<vmem>>, %arg32: memref<1x64xf32, #tpu.memory_space<vmem>>, %arg33: memref<64x32xf32, #tpu.memory_space<vmem>>, %arg34: memref<1x32xf32, #tpu.memory_space<vmem>>, %arg35: memref<32x64xf32, #tpu.memory_space<vmem>>, %arg36: memref<1x64xf32, #tpu.memory_space<vmem>>, %arg37: memref<64x32xf32, #tpu.memory_space<vmem>>, %arg38: memref<1x32xf32, #tpu.memory_space<vmem>>, %arg39: memref<96x96xf32, #tpu.memory_space<vmem>>, %arg40: memref<1x96xf32, #tpu.memory_space<vmem>>, %arg41: memref<96x96xf32, #tpu.memory_space<vmem>>, %arg42: memref<1x96xf32, #tpu.memory_space<vmem>>, %arg43: memref<96x32xf32, #tpu.memory_space<vmem>>, %arg44: memref<1x32xf32, #tpu.memory_space<vmem>>, %arg45: memref<32x96xf32, #tpu.memory_space<vmem>>, %arg46: memref<1x96xf32, #tpu.memory_space<vmem>>, %arg47: memref<5x32xf32, #tpu.memory_space<vmem>>, %arg48: memref<5x32xf32, #tpu.memory_space<vmem>>, %arg49: memref<16x32xf32, #tpu.memory_space<vmem>>) attributes {dimension_semantics = [], scalar_prefetch = 0 : i64, scratch_operands = 0 : i64, tpu.core_type = #tpu.core_type<tc>} {
    %c0 = arith.constant 0 : index
    %c0_0 = arith.constant 0 : index
    %0 = vector.load %arg47[%c0, %c0_0] : memref<5x32xf32, #tpu.memory_space<vmem>>, vector<5x32xf32>
    %c0_1 = arith.constant 0 : index
    %c0_2 = arith.constant 0 : index
    %1 = vector.load %arg48[%c0_1, %c0_2] : memref<5x32xf32, #tpu.memory_space<vmem>>, vector<5x32xf32>
    %c0_3 = arith.constant 0 : index
    %c0_4 = arith.constant 0 : index
    %2 = vector.load %arg0[%c0_3, %c0_4] : memref<16x32xf32, #tpu.memory_space<vmem>>, vector<16x32xf32>
    %c0_5 = arith.constant 0 : index
    %c0_6 = arith.constant 0 : index
    %3 = vector.load %arg5[%c0_5, %c0_6] : memref<16x32xf32, #tpu.memory_space<vmem>>, vector<16x32xf32>
    %c0_7 = arith.constant 0 : index
    %c0_8 = arith.constant 0 : index
    %4 = vector.load %arg6[%c0_7, %c0_8] : memref<16x32xf32, #tpu.memory_space<vmem>>, vector<16x32xf32>
    %c0_9 = arith.constant 0 : index
    %c0_10 = arith.constant 0 : index
    %5 = vector.load %arg3[%c0_9, %c0_10] : memref<64x32xf32, #tpu.memory_space<vmem>>, vector<64x32xf32>
    %c0_11 = arith.constant 0 : index
    %c0_12 = arith.constant 0 : index
    %6 = vector.load %arg11[%c0_11, %c0_12] : memref<32x64xf32, #tpu.memory_space<vmem>>, vector<32x64xf32>
    %cst = arith.constant dense<0.000000e+00> : vector<64x64xf32>
    %7 = tpu.matmul %5, %6, %cst {dimension_numbers = #tpu.dot_dimension_numbers<[1], [0], [0], [1], [0, 0, 1, 1], [], []>} : vector<64x32xf32>, vector<32x64xf32>, vector<64x64xf32> -> vector<64x64xf32>
    %c0_13 = arith.constant 0 : index
    %c0_14 = arith.constant 0 : index
    %8 = vector.load %arg12[%c0_13, %c0_14] : memref<1x64xf32, #tpu.memory_space<vmem>>, vector<1x64xf32>
    %9 = vector.broadcast %8 : vector<1x64xf32> to vector<64x64xf32>
    %10 = arith.addf %7, %9 : vector<64x64xf32>
    %11 = vector.extract_strided_slice %10 {offsets = [0, 0], sizes = [64, 32], strides = [1, 1]} : vector<64x64xf32> to vector<64x32xf32>
    %12 = vector.extract_strided_slice %10 {offsets = [0, 32], sizes = [64, 32], strides = [1, 1]} : vector<64x64xf32> to vector<64x32xf32>
    %c0_15 = arith.constant 0 : index
    %c0_16 = arith.constant 0 : index
    %13 = vector.load %arg4[%c0_15, %c0_16] : memref<64x32xf32, #tpu.memory_space<vmem>>, vector<64x32xf32>
    %c0_17 = arith.constant 0 : index
    %c0_18 = arith.constant 0 : index
    %14 = vector.load %arg13[%c0_17, %c0_18] : memref<32x32xf32, #tpu.memory_space<vmem>>, vector<32x32xf32>
    %cst_19 = arith.constant dense<0.000000e+00> : vector<64x32xf32>
    %15 = tpu.matmul %13, %14, %cst_19 {dimension_numbers = #tpu.dot_dimension_numbers<[1], [0], [0], [1], [0, 0, 1, 1], [], []>} : vector<64x32xf32>, vector<32x32xf32>, vector<64x32xf32> -> vector<64x32xf32>
    %c0_20 = arith.constant 0 : index
    %c0_21 = arith.constant 0 : index
    %16 = vector.load %arg14[%c0_20, %c0_21] : memref<1x32xf32, #tpu.memory_space<vmem>>, vector<1x32xf32>
    %17 = vector.broadcast %16 : vector<1x32xf32> to vector<64x32xf32>
    %18 = arith.addf %15, %17 : vector<64x32xf32>
    %c0_22 = arith.constant 0 : index
    %c0_23 = arith.constant 0 : index
    %19 = vector.load %arg1[%c0_22, %c0_23] : memref<16x32xf32, #tpu.memory_space<vmem>>, vector<16x32xf32>
    %c0_24 = arith.constant 0 : index
    %c0_25 = arith.constant 0 : index
    %20 = vector.load %arg15[%c0_24, %c0_25] : memref<32x64xf32, #tpu.memory_space<vmem>>, vector<32x64xf32>
    %cst_26 = arith.constant dense<0.000000e+00> : vector<16x64xf32>
    %21 = tpu.matmul %19, %20, %cst_26 {dimension_numbers = #tpu.dot_dimension_numbers<[1], [0], [0], [1], [0, 0, 1, 1], [], []>} : vector<16x32xf32>, vector<32x64xf32>, vector<16x64xf32> -> vector<16x64xf32>
    %c0_27 = arith.constant 0 : index
    %c0_28 = arith.constant 0 : index
    %22 = vector.load %arg16[%c0_27, %c0_28] : memref<1x64xf32, #tpu.memory_space<vmem>>, vector<1x64xf32>
    %23 = vector.broadcast %22 : vector<1x64xf32> to vector<16x64xf32>
    %24 = arith.addf %21, %23 : vector<16x64xf32>
    %25 = vector.extract_strided_slice %24 {offsets = [0, 0], sizes = [16, 32], strides = [1, 1]} : vector<16x64xf32> to vector<16x32xf32>
    %26 = vector.extract_strided_slice %24 {offsets = [0, 32], sizes = [16, 32], strides = [1, 1]} : vector<16x64xf32> to vector<16x32xf32>
    %c0_29 = arith.constant 0 : index
    %c0_30 = arith.constant 0 : index
    %27 = vector.load %arg7[%c0_29, %c0_30] : memref<16x32xf32, #tpu.memory_space<vmem>>, vector<16x32xf32>
    %c0_31 = arith.constant 0 : index
    %c0_32 = arith.constant 0 : index
    %28 = vector.load %arg17[%c0_31, %c0_32] : memref<32x32xf32, #tpu.memory_space<vmem>>, vector<32x32xf32>
    %cst_33 = arith.constant dense<0.000000e+00> : vector<16x32xf32>
    %29 = tpu.matmul %27, %28, %cst_33 {dimension_numbers = #tpu.dot_dimension_numbers<[1], [0], [0], [1], [0, 0, 1, 1], [], []>} : vector<16x32xf32>, vector<32x32xf32>, vector<16x32xf32> -> vector<16x32xf32>
    %c0_34 = arith.constant 0 : index
    %c0_35 = arith.constant 0 : index
    %30 = vector.load %arg18[%c0_34, %c0_35] : memref<1x32xf32, #tpu.memory_space<vmem>>, vector<1x32xf32>
    %31 = vector.broadcast %30 : vector<1x32xf32> to vector<16x32xf32>
    %32 = arith.addf %29, %31 : vector<16x32xf32>
    %c0_36 = arith.constant 0 : index
    %c0_37 = arith.constant 0 : index
    %33 = vector.load %arg19[%c0_36, %c0_37] : memref<32x64xf32, #tpu.memory_space<vmem>>, vector<32x64xf32>
    %cst_38 = arith.constant dense<0.000000e+00> : vector<16x64xf32>
    %34 = tpu.matmul %2, %33, %cst_38 {dimension_numbers = #tpu.dot_dimension_numbers<[1], [0], [0], [1], [0, 0, 1, 1], [], []>} : vector<16x32xf32>, vector<32x64xf32>, vector<16x64xf32> -> vector<16x64xf32>
    %c0_39 = arith.constant 0 : index
    %c0_40 = arith.constant 0 : index
    %35 = vector.load %arg20[%c0_39, %c0_40] : memref<1x64xf32, #tpu.memory_space<vmem>>, vector<1x64xf32>
    %36 = vector.broadcast %35 : vector<1x64xf32> to vector<16x64xf32>
    %37 = arith.addf %34, %36 : vector<16x64xf32>
    %38 = vector.extract_strided_slice %37 {offsets = [0, 0], sizes = [16, 32], strides = [1, 1]} : vector<16x64xf32> to vector<16x32xf32>
    %39 = vector.extract_strided_slice %37 {offsets = [0, 32], sizes = [16, 32], strides = [1, 1]} : vector<16x64xf32> to vector<16x32xf32>
    %c0_41 = arith.constant 0 : index
    %c0_42 = arith.constant 0 : index
    %40 = vector.load %arg21[%c0_41, %c0_42] : memref<32x128xf32, #tpu.memory_space<vmem>>, vector<32x128xf32>
    %cst_43 = arith.constant dense<0.000000e+00> : vector<16x128xf32>
    %41 = tpu.matmul %3, %40, %cst_43 {dimension_numbers = #tpu.dot_dimension_numbers<[1], [0], [0], [1], [0, 0, 1, 1], [], []>} : vector<16x32xf32>, vector<32x128xf32>, vector<16x128xf32> -> vector<16x128xf32>
    %c0_44 = arith.constant 0 : index
    %c0_45 = arith.constant 0 : index
    %42 = vector.load %arg22[%c0_44, %c0_45] : memref<1x128xf32, #tpu.memory_space<vmem>>, vector<1x128xf32>
    %43 = vector.broadcast %42 : vector<1x128xf32> to vector<16x128xf32>
    %44 = arith.addf %41, %43 : vector<16x128xf32>
    %45 = vector.extract_strided_slice %44 {offsets = [0, 0], sizes = [16, 32], strides = [1, 1]} : vector<16x128xf32> to vector<16x32xf32>
    %46 = vector.extract_strided_slice %44 {offsets = [0, 32], sizes = [16, 32], strides = [1, 1]} : vector<16x128xf32> to vector<16x32xf32>
    %47 = vector.extract_strided_slice %44 {offsets = [0, 64], sizes = [16, 32], strides = [1, 1]} : vector<16x128xf32> to vector<16x32xf32>
    %48 = vector.extract_strided_slice %44 {offsets = [0, 96], sizes = [16, 32], strides = [1, 1]} : vector<16x128xf32> to vector<16x32xf32>
    %c0_46 = arith.constant 0 : index
    %c0_47 = arith.constant 0 : index
    %49 = vector.load %arg23[%c0_46, %c0_47] : memref<32x64xf32, #tpu.memory_space<vmem>>, vector<32x64xf32>
    %cst_48 = arith.constant dense<0.000000e+00> : vector<16x64xf32>
    %50 = tpu.matmul %4, %49, %cst_48 {dimension_numbers = #tpu.dot_dimension_numbers<[1], [0], [0], [1], [0, 0, 1, 1], [], []>} : vector<16x32xf32>, vector<32x64xf32>, vector<16x64xf32> -> vector<16x64xf32>
    %c0_49 = arith.constant 0 : index
    %c0_50 = arith.constant 0 : index
    %51 = vector.load %arg24[%c0_49, %c0_50] : memref<1x64xf32, #tpu.memory_space<vmem>>, vector<1x64xf32>
    %52 = vector.broadcast %51 : vector<1x64xf32> to vector<16x64xf32>
    %53 = arith.addf %50, %52 : vector<16x64xf32>
    %54 = vector.extract_strided_slice %53 {offsets = [0, 0], sizes = [16, 32], strides = [1, 1]} : vector<16x64xf32> to vector<16x32xf32>
    %55 = vector.extract_strided_slice %53 {offsets = [0, 32], sizes = [16, 32], strides = [1, 1]} : vector<16x64xf32> to vector<16x32xf32>
    %56 = arith.addf %38, %45 : vector<16x32xf32>
    %57 = arith.addf %11, %18 : vector<64x32xf32>
    %58 = arith.addf %39, %46 : vector<16x32xf32>
    %59 = arith.addf %25, %32 : vector<16x32xf32>
    %c0_51 = arith.constant 0 : index
    %c0_52 = arith.constant 0 : index
    %60 = vector.load %arg8[%c0_51, %c0_52] : memref<16x64xf32, #tpu.memory_space<vmem>>, vector<16x64xf32>
    %61 = vector.extract_strided_slice %56 {offsets = [0, 0], sizes = [16, 8], strides = [1, 1]} : vector<16x32xf32> to vector<16x8xf32>
    %62 = vector.extract_strided_slice %54 {offsets = [0, 0], sizes = [16, 8], strides = [1, 1]} : vector<16x32xf32> to vector<16x8xf32>
    %63 = vector.extract_strided_slice %57 {offsets = [0, 0], sizes = [64, 8], strides = [1, 1]} : vector<64x32xf32> to vector<64x8xf32>
    %64 = vector.extract_strided_slice %18 {offsets = [0, 0], sizes = [64, 8], strides = [1, 1]} : vector<64x32xf32> to vector<64x8xf32>
    %65 = tpu.concatenate %61, %62 in 1 : vector<16x8xf32>, vector<16x8xf32> -> vector<16x16xf32>
    %66 = tpu.concatenate %63, %64 in 1 : vector<64x8xf32>, vector<64x8xf32> -> vector<64x16xf32>
    %67 = vector.extract_strided_slice %12 {offsets = [0, 0], sizes = [64, 8], strides = [1, 1]} : vector<64x32xf32> to vector<64x8xf32>
    %cst_53 = arith.constant 2.500000e-01 : f32
    %68 = vector.broadcast %cst_53 : f32 to vector<16x16xf32>
    %69 = arith.mulf %65, %68 : vector<16x16xf32>
    %cst_54 = arith.constant dense<0.000000e+00> : vector<16x64xf32>
    %70 = tpu.matmul %69, %66, %cst_54 {dimension_numbers = #tpu.dot_dimension_numbers<[1], [1], [0], [0], [0, 0, 1, 0], [], []>} : vector<16x16xf32>, vector<64x16xf32>, vector<16x64xf32> -> vector<16x64xf32>
    %71 = arith.addf %70, %60 : vector<16x64xf32>
    %cst_55 = arith.constant dense<0xFF800000> : vector<16xf32>
    %72 = vector.multi_reduction <maximumf>, %71, %cst_55 [1] : vector<16x64xf32> to vector<16xf32>
    %73 = vector.shape_cast %72 : vector<16xf32> to vector<16x1xf32>
    %74 = vector.broadcast %73 : vector<16x1xf32> to vector<16x64xf32>
    %75 = arith.subf %71, %74 : vector<16x64xf32>
    %76 = math.exp %75 : vector<16x64xf32>
    %cst_56 = arith.constant dense<0.000000e+00> : vector<16xf32>
    %77 = vector.multi_reduction <add>, %76, %cst_56 [1] : vector<16x64xf32> to vector<16xf32>
    %78 = vector.shape_cast %77 : vector<16xf32> to vector<16x1xf32>
    %79 = tpu.reciprocal %78 {approx = true} : vector<16x1xf32> -> vector<16x1xf32>
    %80 = vector.broadcast %79 : vector<16x1xf32> to vector<16x64xf32>
    %81 = arith.mulf %76, %80 : vector<16x64xf32>
    %cst_57 = arith.constant dense<0.000000e+00> : vector<16x8xf32>
    %82 = tpu.matmul %81, %67, %cst_57 {dimension_numbers = #tpu.dot_dimension_numbers<[1], [0], [0], [1], [0, 0, 1, 1], [], []>} : vector<16x64xf32>, vector<64x8xf32>, vector<16x8xf32> -> vector<16x8xf32>
    %83 = vector.extract_strided_slice %56 {offsets = [0, 8], sizes = [16, 8], strides = [1, 1]} : vector<16x32xf32> to vector<16x8xf32>
    %84 = vector.extract_strided_slice %54 {offsets = [0, 8], sizes = [16, 8], strides = [1, 1]} : vector<16x32xf32> to vector<16x8xf32>
    %85 = vector.extract_strided_slice %57 {offsets = [0, 8], sizes = [64, 8], strides = [1, 1]} : vector<64x32xf32> to vector<64x8xf32>
    %86 = vector.extract_strided_slice %18 {offsets = [0, 8], sizes = [64, 8], strides = [1, 1]} : vector<64x32xf32> to vector<64x8xf32>
    %87 = tpu.concatenate %83, %84 in 1 : vector<16x8xf32>, vector<16x8xf32> -> vector<16x16xf32>
    %88 = tpu.concatenate %85, %86 in 1 : vector<64x8xf32>, vector<64x8xf32> -> vector<64x16xf32>
    %89 = vector.extract_strided_slice %12 {offsets = [0, 8], sizes = [64, 8], strides = [1, 1]} : vector<64x32xf32> to vector<64x8xf32>
    %cst_58 = arith.constant 2.500000e-01 : f32
    %90 = vector.broadcast %cst_58 : f32 to vector<16x16xf32>
    %91 = arith.mulf %87, %90 : vector<16x16xf32>
    %cst_59 = arith.constant dense<0.000000e+00> : vector<16x64xf32>
    %92 = tpu.matmul %91, %88, %cst_59 {dimension_numbers = #tpu.dot_dimension_numbers<[1], [1], [0], [0], [0, 0, 1, 0], [], []>} : vector<16x16xf32>, vector<64x16xf32>, vector<16x64xf32> -> vector<16x64xf32>
    %93 = arith.addf %92, %60 : vector<16x64xf32>
    %cst_60 = arith.constant dense<0xFF800000> : vector<16xf32>
    %94 = vector.multi_reduction <maximumf>, %93, %cst_60 [1] : vector<16x64xf32> to vector<16xf32>
    %95 = vector.shape_cast %94 : vector<16xf32> to vector<16x1xf32>
    %96 = vector.broadcast %95 : vector<16x1xf32> to vector<16x64xf32>
    %97 = arith.subf %93, %96 : vector<16x64xf32>
    %98 = math.exp %97 : vector<16x64xf32>
    %cst_61 = arith.constant dense<0.000000e+00> : vector<16xf32>
    %99 = vector.multi_reduction <add>, %98, %cst_61 [1] : vector<16x64xf32> to vector<16xf32>
    %100 = vector.shape_cast %99 : vector<16xf32> to vector<16x1xf32>
    %101 = tpu.reciprocal %100 {approx = true} : vector<16x1xf32> -> vector<16x1xf32>
    %102 = vector.broadcast %101 : vector<16x1xf32> to vector<16x64xf32>
    %103 = arith.mulf %98, %102 : vector<16x64xf32>
    %cst_62 = arith.constant dense<0.000000e+00> : vector<16x8xf32>
    %104 = tpu.matmul %103, %89, %cst_62 {dimension_numbers = #tpu.dot_dimension_numbers<[1], [0], [0], [1], [0, 0, 1, 1], [], []>} : vector<16x64xf32>, vector<64x8xf32>, vector<16x8xf32> -> vector<16x8xf32>
    %105 = vector.extract_strided_slice %56 {offsets = [0, 16], sizes = [16, 8], strides = [1, 1]} : vector<16x32xf32> to vector<16x8xf32>
    %106 = vector.extract_strided_slice %54 {offsets = [0, 16], sizes = [16, 8], strides = [1, 1]} : vector<16x32xf32> to vector<16x8xf32>
    %107 = vector.extract_strided_slice %57 {offsets = [0, 16], sizes = [64, 8], strides = [1, 1]} : vector<64x32xf32> to vector<64x8xf32>
    %108 = vector.extract_strided_slice %18 {offsets = [0, 16], sizes = [64, 8], strides = [1, 1]} : vector<64x32xf32> to vector<64x8xf32>
    %109 = tpu.concatenate %105, %106 in 1 : vector<16x8xf32>, vector<16x8xf32> -> vector<16x16xf32>
    %110 = tpu.concatenate %107, %108 in 1 : vector<64x8xf32>, vector<64x8xf32> -> vector<64x16xf32>
    %111 = vector.extract_strided_slice %12 {offsets = [0, 16], sizes = [64, 8], strides = [1, 1]} : vector<64x32xf32> to vector<64x8xf32>
    %cst_63 = arith.constant 2.500000e-01 : f32
    %112 = vector.broadcast %cst_63 : f32 to vector<16x16xf32>
    %113 = arith.mulf %109, %112 : vector<16x16xf32>
    %cst_64 = arith.constant dense<0.000000e+00> : vector<16x64xf32>
    %114 = tpu.matmul %113, %110, %cst_64 {dimension_numbers = #tpu.dot_dimension_numbers<[1], [1], [0], [0], [0, 0, 1, 0], [], []>} : vector<16x16xf32>, vector<64x16xf32>, vector<16x64xf32> -> vector<16x64xf32>
    %115 = arith.addf %114, %60 : vector<16x64xf32>
    %cst_65 = arith.constant dense<0xFF800000> : vector<16xf32>
    %116 = vector.multi_reduction <maximumf>, %115, %cst_65 [1] : vector<16x64xf32> to vector<16xf32>
    %117 = vector.shape_cast %116 : vector<16xf32> to vector<16x1xf32>
    %118 = vector.broadcast %117 : vector<16x1xf32> to vector<16x64xf32>
    %119 = arith.subf %115, %118 : vector<16x64xf32>
    %120 = math.exp %119 : vector<16x64xf32>
    %cst_66 = arith.constant dense<0.000000e+00> : vector<16xf32>
    %121 = vector.multi_reduction <add>, %120, %cst_66 [1] : vector<16x64xf32> to vector<16xf32>
    %122 = vector.shape_cast %121 : vector<16xf32> to vector<16x1xf32>
    %123 = tpu.reciprocal %122 {approx = true} : vector<16x1xf32> -> vector<16x1xf32>
    %124 = vector.broadcast %123 : vector<16x1xf32> to vector<16x64xf32>
    %125 = arith.mulf %120, %124 : vector<16x64xf32>
    %cst_67 = arith.constant dense<0.000000e+00> : vector<16x8xf32>
    %126 = tpu.matmul %125, %111, %cst_67 {dimension_numbers = #tpu.dot_dimension_numbers<[1], [0], [0], [1], [0, 0, 1, 1], [], []>} : vector<16x64xf32>, vector<64x8xf32>, vector<16x8xf32> -> vector<16x8xf32>
    %127 = vector.extract_strided_slice %56 {offsets = [0, 24], sizes = [16, 8], strides = [1, 1]} : vector<16x32xf32> to vector<16x8xf32>
    %128 = vector.extract_strided_slice %54 {offsets = [0, 24], sizes = [16, 8], strides = [1, 1]} : vector<16x32xf32> to vector<16x8xf32>
    %129 = vector.extract_strided_slice %57 {offsets = [0, 24], sizes = [64, 8], strides = [1, 1]} : vector<64x32xf32> to vector<64x8xf32>
    %130 = vector.extract_strided_slice %18 {offsets = [0, 24], sizes = [64, 8], strides = [1, 1]} : vector<64x32xf32> to vector<64x8xf32>
    %131 = tpu.concatenate %127, %128 in 1 : vector<16x8xf32>, vector<16x8xf32> -> vector<16x16xf32>
    %132 = tpu.concatenate %129, %130 in 1 : vector<64x8xf32>, vector<64x8xf32> -> vector<64x16xf32>
    %133 = vector.extract_strided_slice %12 {offsets = [0, 24], sizes = [64, 8], strides = [1, 1]} : vector<64x32xf32> to vector<64x8xf32>
    %cst_68 = arith.constant 2.500000e-01 : f32
    %134 = vector.broadcast %cst_68 : f32 to vector<16x16xf32>
    %135 = arith.mulf %131, %134 : vector<16x16xf32>
    %cst_69 = arith.constant dense<0.000000e+00> : vector<16x64xf32>
    %136 = tpu.matmul %135, %132, %cst_69 {dimension_numbers = #tpu.dot_dimension_numbers<[1], [1], [0], [0], [0, 0, 1, 0], [], []>} : vector<16x16xf32>, vector<64x16xf32>, vector<16x64xf32> -> vector<16x64xf32>
    %137 = arith.addf %136, %60 : vector<16x64xf32>
    %cst_70 = arith.constant dense<0xFF800000> : vector<16xf32>
    %138 = vector.multi_reduction <maximumf>, %137, %cst_70 [1] : vector<16x64xf32> to vector<16xf32>
    %139 = vector.shape_cast %138 : vector<16xf32> to vector<16x1xf32>
    %140 = vector.broadcast %139 : vector<16x1xf32> to vector<16x64xf32>
    %141 = arith.subf %137, %140 : vector<16x64xf32>
    %142 = math.exp %141 : vector<16x64xf32>
    %cst_71 = arith.constant dense<0.000000e+00> : vector<16xf32>
    %143 = vector.multi_reduction <add>, %142, %cst_71 [1] : vector<16x64xf32> to vector<16xf32>
    %144 = vector.shape_cast %143 : vector<16xf32> to vector<16x1xf32>
    %145 = tpu.reciprocal %144 {approx = true} : vector<16x1xf32> -> vector<16x1xf32>
    %146 = vector.broadcast %145 : vector<16x1xf32> to vector<16x64xf32>
    %147 = arith.mulf %142, %146 : vector<16x64xf32>
    %cst_72 = arith.constant dense<0.000000e+00> : vector<16x8xf32>
    %148 = tpu.matmul %147, %133, %cst_72 {dimension_numbers = #tpu.dot_dimension_numbers<[1], [0], [0], [1], [0, 0, 1, 1], [], []>} : vector<16x64xf32>, vector<64x8xf32>, vector<16x8xf32> -> vector<16x8xf32>
    %149 = tpu.concatenate %82, %104, %126, %148 in 1 : vector<16x8xf32>, vector<16x8xf32>, vector<16x8xf32>, vector<16x8xf32> -> vector<16x32xf32>
    %c0_73 = arith.constant 0 : index
    %c0_74 = arith.constant 0 : index
    %150 = vector.load %arg25[%c0_73, %c0_74] : memref<32x32xf32, #tpu.memory_space<vmem>>, vector<32x32xf32>
    %cst_75 = arith.constant dense<0.000000e+00> : vector<16x32xf32>
    %151 = tpu.matmul %149, %150, %cst_75 {dimension_numbers = #tpu.dot_dimension_numbers<[1], [0], [0], [1], [0, 0, 1, 1], [], []>} : vector<16x32xf32>, vector<32x32xf32>, vector<16x32xf32> -> vector<16x32xf32>
    %c0_76 = arith.constant 0 : index
    %c0_77 = arith.constant 0 : index
    %152 = vector.load %arg26[%c0_76, %c0_77] : memref<1x32xf32, #tpu.memory_space<vmem>>, vector<1x32xf32>
    %153 = vector.broadcast %152 : vector<1x32xf32> to vector<16x32xf32>
    %154 = arith.addf %151, %153 : vector<16x32xf32>
    %155 = arith.addf %2, %154 : vector<16x32xf32>
    %156 = vector.extract_strided_slice %0 {offsets = [0, 0], sizes = [1, 32], strides = [1, 1]} : vector<5x32xf32> to vector<1x32xf32>
    %157 = vector.extract_strided_slice %1 {offsets = [0, 0], sizes = [1, 32], strides = [1, 1]} : vector<5x32xf32> to vector<1x32xf32>
    %cst_78 = arith.constant dense<0.000000e+00> : vector<16xf32>
    %158 = vector.multi_reduction <add>, %155, %cst_78 [1] : vector<16x32xf32> to vector<16xf32>
    %159 = vector.shape_cast %158 : vector<16xf32> to vector<16x1xf32>
    %cst_79 = arith.constant 3.200000e+01 : f32
    %160 = vector.broadcast %cst_79 : f32 to vector<16x1xf32>
    %161 = arith.divf %159, %160 : vector<16x1xf32>
    %162 = vector.broadcast %161 : vector<16x1xf32> to vector<16x32xf32>
    %163 = arith.subf %155, %162 : vector<16x32xf32>
    %164 = arith.mulf %163, %163 : vector<16x32xf32>
    %cst_80 = arith.constant dense<0.000000e+00> : vector<16xf32>
    %165 = vector.multi_reduction <add>, %164, %cst_80 [1] : vector<16x32xf32> to vector<16xf32>
    %166 = vector.shape_cast %165 : vector<16xf32> to vector<16x1xf32>
    %cst_81 = arith.constant 3.200000e+01 : f32
    %167 = vector.broadcast %cst_81 : f32 to vector<16x1xf32>
    %168 = arith.divf %166, %167 : vector<16x1xf32>
    %cst_82 = arith.constant 9.99999974E-6 : f32
    %169 = vector.broadcast %cst_82 : f32 to vector<16x1xf32>
    %170 = arith.addf %168, %169 : vector<16x1xf32>
    %171 = math.rsqrt %170 : vector<16x1xf32>
    %172 = vector.broadcast %171 : vector<16x1xf32> to vector<16x32xf32>
    %173 = arith.mulf %163, %172 : vector<16x32xf32>
    %174 = vector.broadcast %156 : vector<1x32xf32> to vector<16x32xf32>
    %175 = arith.mulf %173, %174 : vector<16x32xf32>
    %176 = vector.broadcast %157 : vector<1x32xf32> to vector<16x32xf32>
    %177 = arith.addf %175, %176 : vector<16x32xf32>
    %c0_83 = arith.constant 0 : index
    %c0_84 = arith.constant 0 : index
    %178 = vector.load %arg31[%c0_83, %c0_84] : memref<32x64xf32, #tpu.memory_space<vmem>>, vector<32x64xf32>
    %cst_85 = arith.constant dense<0.000000e+00> : vector<16x64xf32>
    %179 = tpu.matmul %177, %178, %cst_85 {dimension_numbers = #tpu.dot_dimension_numbers<[1], [0], [0], [1], [0, 0, 1, 1], [], []>} : vector<16x32xf32>, vector<32x64xf32>, vector<16x64xf32> -> vector<16x64xf32>
    %c0_86 = arith.constant 0 : index
    %c0_87 = arith.constant 0 : index
    %180 = vector.load %arg32[%c0_86, %c0_87] : memref<1x64xf32, #tpu.memory_space<vmem>>, vector<1x64xf32>
    %181 = vector.broadcast %180 : vector<1x64xf32> to vector<16x64xf32>
    %182 = arith.addf %179, %181 : vector<16x64xf32>
    %cst_88 = arith.constant 0.000000e+00 : f32
    %183 = vector.broadcast %cst_88 : f32 to vector<16x64xf32>
    %184 = arith.maximumf %182, %183 : vector<16x64xf32>
    %c0_89 = arith.constant 0 : index
    %c0_90 = arith.constant 0 : index
    %185 = vector.load %arg33[%c0_89, %c0_90] : memref<64x32xf32, #tpu.memory_space<vmem>>, vector<64x32xf32>
    %cst_91 = arith.constant dense<0.000000e+00> : vector<16x32xf32>
    %186 = tpu.matmul %184, %185, %cst_91 {dimension_numbers = #tpu.dot_dimension_numbers<[1], [0], [0], [1], [0, 0, 1, 1], [], []>} : vector<16x64xf32>, vector<64x32xf32>, vector<16x32xf32> -> vector<16x32xf32>
    %c0_92 = arith.constant 0 : index
    %c0_93 = arith.constant 0 : index
    %187 = vector.load %arg34[%c0_92, %c0_93] : memref<1x32xf32, #tpu.memory_space<vmem>>, vector<1x32xf32>
    %188 = vector.broadcast %187 : vector<1x32xf32> to vector<16x32xf32>
    %189 = arith.addf %186, %188 : vector<16x32xf32>
    %190 = arith.addf %177, %189 : vector<16x32xf32>
    %191 = vector.extract_strided_slice %0 {offsets = [1, 0], sizes = [1, 32], strides = [1, 1]} : vector<5x32xf32> to vector<1x32xf32>
    %192 = vector.extract_strided_slice %1 {offsets = [1, 0], sizes = [1, 32], strides = [1, 1]} : vector<5x32xf32> to vector<1x32xf32>
    %cst_94 = arith.constant dense<0.000000e+00> : vector<16xf32>
    %193 = vector.multi_reduction <add>, %190, %cst_94 [1] : vector<16x32xf32> to vector<16xf32>
    %194 = vector.shape_cast %193 : vector<16xf32> to vector<16x1xf32>
    %cst_95 = arith.constant 3.200000e+01 : f32
    %195 = vector.broadcast %cst_95 : f32 to vector<16x1xf32>
    %196 = arith.divf %194, %195 : vector<16x1xf32>
    %197 = vector.broadcast %196 : vector<16x1xf32> to vector<16x32xf32>
    %198 = arith.subf %190, %197 : vector<16x32xf32>
    %199 = arith.mulf %198, %198 : vector<16x32xf32>
    %cst_96 = arith.constant dense<0.000000e+00> : vector<16xf32>
    %200 = vector.multi_reduction <add>, %199, %cst_96 [1] : vector<16x32xf32> to vector<16xf32>
    %201 = vector.shape_cast %200 : vector<16xf32> to vector<16x1xf32>
    %cst_97 = arith.constant 3.200000e+01 : f32
    %202 = vector.broadcast %cst_97 : f32 to vector<16x1xf32>
    %203 = arith.divf %201, %202 : vector<16x1xf32>
    %cst_98 = arith.constant 9.99999974E-6 : f32
    %204 = vector.broadcast %cst_98 : f32 to vector<16x1xf32>
    %205 = arith.addf %203, %204 : vector<16x1xf32>
    %206 = math.rsqrt %205 : vector<16x1xf32>
    %207 = vector.broadcast %206 : vector<16x1xf32> to vector<16x32xf32>
    %208 = arith.mulf %198, %207 : vector<16x32xf32>
    %209 = vector.broadcast %191 : vector<1x32xf32> to vector<16x32xf32>
    %210 = arith.mulf %208, %209 : vector<16x32xf32>
    %211 = vector.broadcast %192 : vector<1x32xf32> to vector<16x32xf32>
    %212 = arith.addf %210, %211 : vector<16x32xf32>
    %c0_99 = arith.constant 0 : index
    %c0_100 = arith.constant 0 : index
    %213 = vector.load %arg9[%c0_99, %c0_100] : memref<16x16xf32, #tpu.memory_space<vmem>>, vector<16x16xf32>
    %214 = vector.extract_strided_slice %58 {offsets = [0, 0], sizes = [16, 8], strides = [1, 1]} : vector<16x32xf32> to vector<16x8xf32>
    %215 = vector.extract_strided_slice %55 {offsets = [0, 0], sizes = [16, 8], strides = [1, 1]} : vector<16x32xf32> to vector<16x8xf32>
    %216 = vector.extract_strided_slice %59 {offsets = [0, 0], sizes = [16, 8], strides = [1, 1]} : vector<16x32xf32> to vector<16x8xf32>
    %217 = vector.extract_strided_slice %32 {offsets = [0, 0], sizes = [16, 8], strides = [1, 1]} : vector<16x32xf32> to vector<16x8xf32>
    %218 = tpu.concatenate %214, %215 in 1 : vector<16x8xf32>, vector<16x8xf32> -> vector<16x16xf32>
    %219 = tpu.concatenate %216, %217 in 1 : vector<16x8xf32>, vector<16x8xf32> -> vector<16x16xf32>
    %220 = vector.extract_strided_slice %26 {offsets = [0, 0], sizes = [16, 8], strides = [1, 1]} : vector<16x32xf32> to vector<16x8xf32>
    %cst_101 = arith.constant 2.500000e-01 : f32
    %221 = vector.broadcast %cst_101 : f32 to vector<16x16xf32>
    %222 = arith.mulf %218, %221 : vector<16x16xf32>
    %cst_102 = arith.constant dense<0.000000e+00> : vector<16x16xf32>
    %223 = tpu.matmul %222, %219, %cst_102 {dimension_numbers = #tpu.dot_dimension_numbers<[1], [1], [0], [0], [0, 0, 1, 0], [], []>} : vector<16x16xf32>, vector<16x16xf32>, vector<16x16xf32> -> vector<16x16xf32>
    %224 = arith.addf %223, %213 : vector<16x16xf32>
    %cst_103 = arith.constant dense<0xFF800000> : vector<16xf32>
    %225 = vector.multi_reduction <maximumf>, %224, %cst_103 [1] : vector<16x16xf32> to vector<16xf32>
    %226 = vector.shape_cast %225 : vector<16xf32> to vector<16x1xf32>
    %227 = vector.broadcast %226 : vector<16x1xf32> to vector<16x16xf32>
    %228 = arith.subf %224, %227 : vector<16x16xf32>
    %229 = math.exp %228 : vector<16x16xf32>
    %cst_104 = arith.constant dense<0.000000e+00> : vector<16xf32>
    %230 = vector.multi_reduction <add>, %229, %cst_104 [1] : vector<16x16xf32> to vector<16xf32>
    %231 = vector.shape_cast %230 : vector<16xf32> to vector<16x1xf32>
    %232 = tpu.reciprocal %231 {approx = true} : vector<16x1xf32> -> vector<16x1xf32>
    %233 = vector.broadcast %232 : vector<16x1xf32> to vector<16x16xf32>
    %234 = arith.mulf %229, %233 : vector<16x16xf32>
    %cst_105 = arith.constant dense<0.000000e+00> : vector<16x8xf32>
    %235 = tpu.matmul %234, %220, %cst_105 {dimension_numbers = #tpu.dot_dimension_numbers<[1], [0], [0], [1], [0, 0, 1, 1], [], []>} : vector<16x16xf32>, vector<16x8xf32>, vector<16x8xf32> -> vector<16x8xf32>
    %236 = vector.extract_strided_slice %58 {offsets = [0, 8], sizes = [16, 8], strides = [1, 1]} : vector<16x32xf32> to vector<16x8xf32>
    %237 = vector.extract_strided_slice %55 {offsets = [0, 8], sizes = [16, 8], strides = [1, 1]} : vector<16x32xf32> to vector<16x8xf32>
    %238 = vector.extract_strided_slice %59 {offsets = [0, 8], sizes = [16, 8], strides = [1, 1]} : vector<16x32xf32> to vector<16x8xf32>
    %239 = vector.extract_strided_slice %32 {offsets = [0, 8], sizes = [16, 8], strides = [1, 1]} : vector<16x32xf32> to vector<16x8xf32>
    %240 = tpu.concatenate %236, %237 in 1 : vector<16x8xf32>, vector<16x8xf32> -> vector<16x16xf32>
    %241 = tpu.concatenate %238, %239 in 1 : vector<16x8xf32>, vector<16x8xf32> -> vector<16x16xf32>
    %242 = vector.extract_strided_slice %26 {offsets = [0, 8], sizes = [16, 8], strides = [1, 1]} : vector<16x32xf32> to vector<16x8xf32>
    %cst_106 = arith.constant 2.500000e-01 : f32
    %243 = vector.broadcast %cst_106 : f32 to vector<16x16xf32>
    %244 = arith.mulf %240, %243 : vector<16x16xf32>
    %cst_107 = arith.constant dense<0.000000e+00> : vector<16x16xf32>
    %245 = tpu.matmul %244, %241, %cst_107 {dimension_numbers = #tpu.dot_dimension_numbers<[1], [1], [0], [0], [0, 0, 1, 0], [], []>} : vector<16x16xf32>, vector<16x16xf32>, vector<16x16xf32> -> vector<16x16xf32>
    %246 = arith.addf %245, %213 : vector<16x16xf32>
    %cst_108 = arith.constant dense<0xFF800000> : vector<16xf32>
    %247 = vector.multi_reduction <maximumf>, %246, %cst_108 [1] : vector<16x16xf32> to vector<16xf32>
    %248 = vector.shape_cast %247 : vector<16xf32> to vector<16x1xf32>
    %249 = vector.broadcast %248 : vector<16x1xf32> to vector<16x16xf32>
    %250 = arith.subf %246, %249 : vector<16x16xf32>
    %251 = math.exp %250 : vector<16x16xf32>
    %cst_109 = arith.constant dense<0.000000e+00> : vector<16xf32>
    %252 = vector.multi_reduction <add>, %251, %cst_109 [1] : vector<16x16xf32> to vector<16xf32>
    %253 = vector.shape_cast %252 : vector<16xf32> to vector<16x1xf32>
    %254 = tpu.reciprocal %253 {approx = true} : vector<16x1xf32> -> vector<16x1xf32>
    %255 = vector.broadcast %254 : vector<16x1xf32> to vector<16x16xf32>
    %256 = arith.mulf %251, %255 : vector<16x16xf32>
    %cst_110 = arith.constant dense<0.000000e+00> : vector<16x8xf32>
    %257 = tpu.matmul %256, %242, %cst_110 {dimension_numbers = #tpu.dot_dimension_numbers<[1], [0], [0], [1], [0, 0, 1, 1], [], []>} : vector<16x16xf32>, vector<16x8xf32>, vector<16x8xf32> -> vector<16x8xf32>
    %258 = vector.extract_strided_slice %58 {offsets = [0, 16], sizes = [16, 8], strides = [1, 1]} : vector<16x32xf32> to vector<16x8xf32>
    %259 = vector.extract_strided_slice %55 {offsets = [0, 16], sizes = [16, 8], strides = [1, 1]} : vector<16x32xf32> to vector<16x8xf32>
    %260 = vector.extract_strided_slice %59 {offsets = [0, 16], sizes = [16, 8], strides = [1, 1]} : vector<16x32xf32> to vector<16x8xf32>
    %261 = vector.extract_strided_slice %32 {offsets = [0, 16], sizes = [16, 8], strides = [1, 1]} : vector<16x32xf32> to vector<16x8xf32>
    %262 = tpu.concatenate %258, %259 in 1 : vector<16x8xf32>, vector<16x8xf32> -> vector<16x16xf32>
    %263 = tpu.concatenate %260, %261 in 1 : vector<16x8xf32>, vector<16x8xf32> -> vector<16x16xf32>
    %264 = vector.extract_strided_slice %26 {offsets = [0, 16], sizes = [16, 8], strides = [1, 1]} : vector<16x32xf32> to vector<16x8xf32>
    %cst_111 = arith.constant 2.500000e-01 : f32
    %265 = vector.broadcast %cst_111 : f32 to vector<16x16xf32>
    %266 = arith.mulf %262, %265 : vector<16x16xf32>
    %cst_112 = arith.constant dense<0.000000e+00> : vector<16x16xf32>
    %267 = tpu.matmul %266, %263, %cst_112 {dimension_numbers = #tpu.dot_dimension_numbers<[1], [1], [0], [0], [0, 0, 1, 0], [], []>} : vector<16x16xf32>, vector<16x16xf32>, vector<16x16xf32> -> vector<16x16xf32>
    %268 = arith.addf %267, %213 : vector<16x16xf32>
    %cst_113 = arith.constant dense<0xFF800000> : vector<16xf32>
    %269 = vector.multi_reduction <maximumf>, %268, %cst_113 [1] : vector<16x16xf32> to vector<16xf32>
    %270 = vector.shape_cast %269 : vector<16xf32> to vector<16x1xf32>
    %271 = vector.broadcast %270 : vector<16x1xf32> to vector<16x16xf32>
    %272 = arith.subf %268, %271 : vector<16x16xf32>
    %273 = math.exp %272 : vector<16x16xf32>
    %cst_114 = arith.constant dense<0.000000e+00> : vector<16xf32>
    %274 = vector.multi_reduction <add>, %273, %cst_114 [1] : vector<16x16xf32> to vector<16xf32>
    %275 = vector.shape_cast %274 : vector<16xf32> to vector<16x1xf32>
    %276 = tpu.reciprocal %275 {approx = true} : vector<16x1xf32> -> vector<16x1xf32>
    %277 = vector.broadcast %276 : vector<16x1xf32> to vector<16x16xf32>
    %278 = arith.mulf %273, %277 : vector<16x16xf32>
    %cst_115 = arith.constant dense<0.000000e+00> : vector<16x8xf32>
    %279 = tpu.matmul %278, %264, %cst_115 {dimension_numbers = #tpu.dot_dimension_numbers<[1], [0], [0], [1], [0, 0, 1, 1], [], []>} : vector<16x16xf32>, vector<16x8xf32>, vector<16x8xf32> -> vector<16x8xf32>
    %280 = vector.extract_strided_slice %58 {offsets = [0, 24], sizes = [16, 8], strides = [1, 1]} : vector<16x32xf32> to vector<16x8xf32>
    %281 = vector.extract_strided_slice %55 {offsets = [0, 24], sizes = [16, 8], strides = [1, 1]} : vector<16x32xf32> to vector<16x8xf32>
    %282 = vector.extract_strided_slice %59 {offsets = [0, 24], sizes = [16, 8], strides = [1, 1]} : vector<16x32xf32> to vector<16x8xf32>
    %283 = vector.extract_strided_slice %32 {offsets = [0, 24], sizes = [16, 8], strides = [1, 1]} : vector<16x32xf32> to vector<16x8xf32>
    %284 = tpu.concatenate %280, %281 in 1 : vector<16x8xf32>, vector<16x8xf32> -> vector<16x16xf32>
    %285 = tpu.concatenate %282, %283 in 1 : vector<16x8xf32>, vector<16x8xf32> -> vector<16x16xf32>
    %286 = vector.extract_strided_slice %26 {offsets = [0, 24], sizes = [16, 8], strides = [1, 1]} : vector<16x32xf32> to vector<16x8xf32>
    %cst_116 = arith.constant 2.500000e-01 : f32
    %287 = vector.broadcast %cst_116 : f32 to vector<16x16xf32>
    %288 = arith.mulf %284, %287 : vector<16x16xf32>
    %cst_117 = arith.constant dense<0.000000e+00> : vector<16x16xf32>
    %289 = tpu.matmul %288, %285, %cst_117 {dimension_numbers = #tpu.dot_dimension_numbers<[1], [1], [0], [0], [0, 0, 1, 0], [], []>} : vector<16x16xf32>, vector<16x16xf32>, vector<16x16xf32> -> vector<16x16xf32>
    %290 = arith.addf %289, %213 : vector<16x16xf32>
    %cst_118 = arith.constant dense<0xFF800000> : vector<16xf32>
    %291 = vector.multi_reduction <maximumf>, %290, %cst_118 [1] : vector<16x16xf32> to vector<16xf32>
    %292 = vector.shape_cast %291 : vector<16xf32> to vector<16x1xf32>
    %293 = vector.broadcast %292 : vector<16x1xf32> to vector<16x16xf32>
    %294 = arith.subf %290, %293 : vector<16x16xf32>
    %295 = math.exp %294 : vector<16x16xf32>
    %cst_119 = arith.constant dense<0.000000e+00> : vector<16xf32>
    %296 = vector.multi_reduction <add>, %295, %cst_119 [1] : vector<16x16xf32> to vector<16xf32>
    %297 = vector.shape_cast %296 : vector<16xf32> to vector<16x1xf32>
    %298 = tpu.reciprocal %297 {approx = true} : vector<16x1xf32> -> vector<16x1xf32>
    %299 = vector.broadcast %298 : vector<16x1xf32> to vector<16x16xf32>
    %300 = arith.mulf %295, %299 : vector<16x16xf32>
    %cst_120 = arith.constant dense<0.000000e+00> : vector<16x8xf32>
    %301 = tpu.matmul %300, %286, %cst_120 {dimension_numbers = #tpu.dot_dimension_numbers<[1], [0], [0], [1], [0, 0, 1, 1], [], []>} : vector<16x16xf32>, vector<16x8xf32>, vector<16x8xf32> -> vector<16x8xf32>
    %302 = tpu.concatenate %235, %257, %279, %301 in 1 : vector<16x8xf32>, vector<16x8xf32>, vector<16x8xf32>, vector<16x8xf32> -> vector<16x32xf32>
    %c0_121 = arith.constant 0 : index
    %c0_122 = arith.constant 0 : index
    %303 = vector.load %arg27[%c0_121, %c0_122] : memref<32x32xf32, #tpu.memory_space<vmem>>, vector<32x32xf32>
    %cst_123 = arith.constant dense<0.000000e+00> : vector<16x32xf32>
    %304 = tpu.matmul %302, %303, %cst_123 {dimension_numbers = #tpu.dot_dimension_numbers<[1], [0], [0], [1], [0, 0, 1, 1], [], []>} : vector<16x32xf32>, vector<32x32xf32>, vector<16x32xf32> -> vector<16x32xf32>
    %c0_124 = arith.constant 0 : index
    %c0_125 = arith.constant 0 : index
    %305 = vector.load %arg28[%c0_124, %c0_125] : memref<1x32xf32, #tpu.memory_space<vmem>>, vector<1x32xf32>
    %306 = vector.broadcast %305 : vector<1x32xf32> to vector<16x32xf32>
    %307 = arith.addf %304, %306 : vector<16x32xf32>
    %308 = arith.addf %2, %307 : vector<16x32xf32>
    %309 = vector.extract_strided_slice %0 {offsets = [2, 0], sizes = [1, 32], strides = [1, 1]} : vector<5x32xf32> to vector<1x32xf32>
    %310 = vector.extract_strided_slice %1 {offsets = [2, 0], sizes = [1, 32], strides = [1, 1]} : vector<5x32xf32> to vector<1x32xf32>
    %cst_126 = arith.constant dense<0.000000e+00> : vector<16xf32>
    %311 = vector.multi_reduction <add>, %308, %cst_126 [1] : vector<16x32xf32> to vector<16xf32>
    %312 = vector.shape_cast %311 : vector<16xf32> to vector<16x1xf32>
    %cst_127 = arith.constant 3.200000e+01 : f32
    %313 = vector.broadcast %cst_127 : f32 to vector<16x1xf32>
    %314 = arith.divf %312, %313 : vector<16x1xf32>
    %315 = vector.broadcast %314 : vector<16x1xf32> to vector<16x32xf32>
    %316 = arith.subf %308, %315 : vector<16x32xf32>
    %317 = arith.mulf %316, %316 : vector<16x32xf32>
    %cst_128 = arith.constant dense<0.000000e+00> : vector<16xf32>
    %318 = vector.multi_reduction <add>, %317, %cst_128 [1] : vector<16x32xf32> to vector<16xf32>
    %319 = vector.shape_cast %318 : vector<16xf32> to vector<16x1xf32>
    %cst_129 = arith.constant 3.200000e+01 : f32
    %320 = vector.broadcast %cst_129 : f32 to vector<16x1xf32>
    %321 = arith.divf %319, %320 : vector<16x1xf32>
    %cst_130 = arith.constant 9.99999974E-6 : f32
    %322 = vector.broadcast %cst_130 : f32 to vector<16x1xf32>
    %323 = arith.addf %321, %322 : vector<16x1xf32>
    %324 = math.rsqrt %323 : vector<16x1xf32>
    %325 = vector.broadcast %324 : vector<16x1xf32> to vector<16x32xf32>
    %326 = arith.mulf %316, %325 : vector<16x32xf32>
    %327 = vector.broadcast %309 : vector<1x32xf32> to vector<16x32xf32>
    %328 = arith.mulf %326, %327 : vector<16x32xf32>
    %329 = vector.broadcast %310 : vector<1x32xf32> to vector<16x32xf32>
    %330 = arith.addf %328, %329 : vector<16x32xf32>
    %c0_131 = arith.constant 0 : index
    %c0_132 = arith.constant 0 : index
    %331 = vector.load %arg35[%c0_131, %c0_132] : memref<32x64xf32, #tpu.memory_space<vmem>>, vector<32x64xf32>
    %cst_133 = arith.constant dense<0.000000e+00> : vector<16x64xf32>
    %332 = tpu.matmul %330, %331, %cst_133 {dimension_numbers = #tpu.dot_dimension_numbers<[1], [0], [0], [1], [0, 0, 1, 1], [], []>} : vector<16x32xf32>, vector<32x64xf32>, vector<16x64xf32> -> vector<16x64xf32>
    %c0_134 = arith.constant 0 : index
    %c0_135 = arith.constant 0 : index
    %333 = vector.load %arg36[%c0_134, %c0_135] : memref<1x64xf32, #tpu.memory_space<vmem>>, vector<1x64xf32>
    %334 = vector.broadcast %333 : vector<1x64xf32> to vector<16x64xf32>
    %335 = arith.addf %332, %334 : vector<16x64xf32>
    %cst_136 = arith.constant 0.000000e+00 : f32
    %336 = vector.broadcast %cst_136 : f32 to vector<16x64xf32>
    %337 = arith.maximumf %335, %336 : vector<16x64xf32>
    %c0_137 = arith.constant 0 : index
    %c0_138 = arith.constant 0 : index
    %338 = vector.load %arg37[%c0_137, %c0_138] : memref<64x32xf32, #tpu.memory_space<vmem>>, vector<64x32xf32>
    %cst_139 = arith.constant dense<0.000000e+00> : vector<16x32xf32>
    %339 = tpu.matmul %337, %338, %cst_139 {dimension_numbers = #tpu.dot_dimension_numbers<[1], [0], [0], [1], [0, 0, 1, 1], [], []>} : vector<16x64xf32>, vector<64x32xf32>, vector<16x32xf32> -> vector<16x32xf32>
    %c0_140 = arith.constant 0 : index
    %c0_141 = arith.constant 0 : index
    %340 = vector.load %arg38[%c0_140, %c0_141] : memref<1x32xf32, #tpu.memory_space<vmem>>, vector<1x32xf32>
    %341 = vector.broadcast %340 : vector<1x32xf32> to vector<16x32xf32>
    %342 = arith.addf %339, %341 : vector<16x32xf32>
    %343 = arith.addf %330, %342 : vector<16x32xf32>
    %344 = vector.extract_strided_slice %0 {offsets = [3, 0], sizes = [1, 32], strides = [1, 1]} : vector<5x32xf32> to vector<1x32xf32>
    %345 = vector.extract_strided_slice %1 {offsets = [3, 0], sizes = [1, 32], strides = [1, 1]} : vector<5x32xf32> to vector<1x32xf32>
    %cst_142 = arith.constant dense<0.000000e+00> : vector<16xf32>
    %346 = vector.multi_reduction <add>, %343, %cst_142 [1] : vector<16x32xf32> to vector<16xf32>
    %347 = vector.shape_cast %346 : vector<16xf32> to vector<16x1xf32>
    %cst_143 = arith.constant 3.200000e+01 : f32
    %348 = vector.broadcast %cst_143 : f32 to vector<16x1xf32>
    %349 = arith.divf %347, %348 : vector<16x1xf32>
    %350 = vector.broadcast %349 : vector<16x1xf32> to vector<16x32xf32>
    %351 = arith.subf %343, %350 : vector<16x32xf32>
    %352 = arith.mulf %351, %351 : vector<16x32xf32>
    %cst_144 = arith.constant dense<0.000000e+00> : vector<16xf32>
    %353 = vector.multi_reduction <add>, %352, %cst_144 [1] : vector<16x32xf32> to vector<16xf32>
    %354 = vector.shape_cast %353 : vector<16xf32> to vector<16x1xf32>
    %cst_145 = arith.constant 3.200000e+01 : f32
    %355 = vector.broadcast %cst_145 : f32 to vector<16x1xf32>
    %356 = arith.divf %354, %355 : vector<16x1xf32>
    %cst_146 = arith.constant 9.99999974E-6 : f32
    %357 = vector.broadcast %cst_146 : f32 to vector<16x1xf32>
    %358 = arith.addf %356, %357 : vector<16x1xf32>
    %359 = math.rsqrt %358 : vector<16x1xf32>
    %360 = vector.broadcast %359 : vector<16x1xf32> to vector<16x32xf32>
    %361 = arith.mulf %351, %360 : vector<16x32xf32>
    %362 = vector.broadcast %344 : vector<1x32xf32> to vector<16x32xf32>
    %363 = arith.mulf %361, %362 : vector<16x32xf32>
    %364 = vector.broadcast %345 : vector<1x32xf32> to vector<16x32xf32>
    %365 = arith.addf %363, %364 : vector<16x32xf32>
    %c0_147 = arith.constant 0 : index
    %c0_148 = arith.constant 0 : index
    %366 = vector.load %arg2[%c0_147, %c0_148] : memref<16x32xf32, #tpu.memory_space<vmem>>, vector<16x32xf32>
    %367 = tpu.concatenate %366, %212, %365 in 1 : vector<16x32xf32>, vector<16x32xf32>, vector<16x32xf32> -> vector<16x96xf32>
    %c0_149 = arith.constant 0 : index
    %c0_150 = arith.constant 0 : index
    %368 = vector.load %arg39[%c0_149, %c0_150] : memref<96x96xf32, #tpu.memory_space<vmem>>, vector<96x96xf32>
    %cst_151 = arith.constant dense<0.000000e+00> : vector<16x96xf32>
    %369 = tpu.matmul %367, %368, %cst_151 {dimension_numbers = #tpu.dot_dimension_numbers<[1], [0], [0], [1], [0, 0, 1, 1], [], []>} : vector<16x96xf32>, vector<96x96xf32>, vector<16x96xf32> -> vector<16x96xf32>
    %c0_152 = arith.constant 0 : index
    %c0_153 = arith.constant 0 : index
    %370 = vector.load %arg40[%c0_152, %c0_153] : memref<1x96xf32, #tpu.memory_space<vmem>>, vector<1x96xf32>
    %371 = vector.broadcast %370 : vector<1x96xf32> to vector<16x96xf32>
    %372 = arith.addf %369, %371 : vector<16x96xf32>
    %cst_154 = arith.constant 0.000000e+00 : f32
    %373 = vector.broadcast %cst_154 : f32 to vector<16x96xf32>
    %374 = arith.maximumf %372, %373 : vector<16x96xf32>
    %c0_155 = arith.constant 0 : index
    %c0_156 = arith.constant 0 : index
    %375 = vector.load %arg41[%c0_155, %c0_156] : memref<96x96xf32, #tpu.memory_space<vmem>>, vector<96x96xf32>
    %cst_157 = arith.constant dense<0.000000e+00> : vector<16x96xf32>
    %376 = tpu.matmul %374, %375, %cst_157 {dimension_numbers = #tpu.dot_dimension_numbers<[1], [0], [0], [1], [0, 0, 1, 1], [], []>} : vector<16x96xf32>, vector<96x96xf32>, vector<16x96xf32> -> vector<16x96xf32>
    %c0_158 = arith.constant 0 : index
    %c0_159 = arith.constant 0 : index
    %377 = vector.load %arg42[%c0_158, %c0_159] : memref<1x96xf32, #tpu.memory_space<vmem>>, vector<1x96xf32>
    %378 = vector.broadcast %377 : vector<1x96xf32> to vector<16x96xf32>
    %379 = arith.addf %376, %378 : vector<16x96xf32>
    %cst_160 = arith.constant 0.000000e+00 : f32
    %380 = vector.broadcast %cst_160 : f32 to vector<16x96xf32>
    %381 = arith.maximumf %379, %380 : vector<16x96xf32>
    %c0_161 = arith.constant 0 : index
    %c0_162 = arith.constant 0 : index
    %382 = vector.load %arg43[%c0_161, %c0_162] : memref<96x32xf32, #tpu.memory_space<vmem>>, vector<96x32xf32>
    %cst_163 = arith.constant dense<0.000000e+00> : vector<16x32xf32>
    %383 = tpu.matmul %381, %382, %cst_163 {dimension_numbers = #tpu.dot_dimension_numbers<[1], [0], [0], [1], [0, 0, 1, 1], [], []>} : vector<16x96xf32>, vector<96x32xf32>, vector<16x32xf32> -> vector<16x32xf32>
    %c0_164 = arith.constant 0 : index
    %c0_165 = arith.constant 0 : index
    %384 = vector.load %arg44[%c0_164, %c0_165] : memref<1x32xf32, #tpu.memory_space<vmem>>, vector<1x32xf32>
    %385 = vector.broadcast %384 : vector<1x32xf32> to vector<16x32xf32>
    %386 = arith.addf %383, %385 : vector<16x32xf32>
    %c0_166 = arith.constant 0 : index
    %c0_167 = arith.constant 0 : index
    %387 = vector.load %arg45[%c0_166, %c0_167] : memref<32x96xf32, #tpu.memory_space<vmem>>, vector<32x96xf32>
    %cst_168 = arith.constant dense<0.000000e+00> : vector<16x96xf32>
    %388 = tpu.matmul %386, %387, %cst_168 {dimension_numbers = #tpu.dot_dimension_numbers<[1], [0], [0], [1], [0, 0, 1, 1], [], []>} : vector<16x32xf32>, vector<32x96xf32>, vector<16x96xf32> -> vector<16x96xf32>
    %c0_169 = arith.constant 0 : index
    %c0_170 = arith.constant 0 : index
    %389 = vector.load %arg46[%c0_169, %c0_170] : memref<1x96xf32, #tpu.memory_space<vmem>>, vector<1x96xf32>
    %390 = vector.broadcast %389 : vector<1x96xf32> to vector<16x96xf32>
    %391 = arith.addf %388, %390 : vector<16x96xf32>
    %392 = vector.extract_strided_slice %391 {offsets = [0, 0], sizes = [16, 32], strides = [1, 1]} : vector<16x96xf32> to vector<16x32xf32>
    %393 = arith.addf %392, %47 : vector<16x32xf32>
    %394 = vector.extract_strided_slice %391 {offsets = [0, 32], sizes = [16, 32], strides = [1, 1]} : vector<16x96xf32> to vector<16x32xf32>
    %395 = arith.addf %394, %48 : vector<16x32xf32>
    %396 = vector.extract_strided_slice %391 {offsets = [0, 64], sizes = [16, 32], strides = [1, 1]} : vector<16x96xf32> to vector<16x32xf32>
    %c0_171 = arith.constant 0 : index
    %c0_172 = arith.constant 0 : index
    %397 = vector.load %arg10[%c0_171, %c0_172] : memref<16x16xf32, #tpu.memory_space<vmem>>, vector<16x16xf32>
    %398 = vector.extract_strided_slice %393 {offsets = [0, 0], sizes = [16, 8], strides = [1, 1]} : vector<16x32xf32> to vector<16x8xf32>
    %399 = vector.extract_strided_slice %395 {offsets = [0, 0], sizes = [16, 8], strides = [1, 1]} : vector<16x32xf32> to vector<16x8xf32>
    %400 = vector.extract_strided_slice %396 {offsets = [0, 0], sizes = [16, 8], strides = [1, 1]} : vector<16x32xf32> to vector<16x8xf32>
    %cst_173 = arith.constant 0.353553385 : f32
    %401 = vector.broadcast %cst_173 : f32 to vector<16x8xf32>
    %402 = arith.mulf %398, %401 : vector<16x8xf32>
    %cst_174 = arith.constant dense<0.000000e+00> : vector<16x16xf32>
    %403 = tpu.matmul %402, %399, %cst_174 {dimension_numbers = #tpu.dot_dimension_numbers<[1], [1], [0], [0], [0, 0, 1, 0], [], []>} : vector<16x8xf32>, vector<16x8xf32>, vector<16x16xf32> -> vector<16x16xf32>
    %404 = arith.addf %403, %397 : vector<16x16xf32>
    %cst_175 = arith.constant dense<0xFF800000> : vector<16xf32>
    %405 = vector.multi_reduction <maximumf>, %404, %cst_175 [1] : vector<16x16xf32> to vector<16xf32>
    %406 = vector.shape_cast %405 : vector<16xf32> to vector<16x1xf32>
    %407 = vector.broadcast %406 : vector<16x1xf32> to vector<16x16xf32>
    %408 = arith.subf %404, %407 : vector<16x16xf32>
    %409 = math.exp %408 : vector<16x16xf32>
    %cst_176 = arith.constant dense<0.000000e+00> : vector<16xf32>
    %410 = vector.multi_reduction <add>, %409, %cst_176 [1] : vector<16x16xf32> to vector<16xf32>
    %411 = vector.shape_cast %410 : vector<16xf32> to vector<16x1xf32>
    %412 = tpu.reciprocal %411 {approx = true} : vector<16x1xf32> -> vector<16x1xf32>
    %413 = vector.broadcast %412 : vector<16x1xf32> to vector<16x16xf32>
    %414 = arith.mulf %409, %413 : vector<16x16xf32>
    %cst_177 = arith.constant dense<0.000000e+00> : vector<16x8xf32>
    %415 = tpu.matmul %414, %400, %cst_177 {dimension_numbers = #tpu.dot_dimension_numbers<[1], [0], [0], [1], [0, 0, 1, 1], [], []>} : vector<16x16xf32>, vector<16x8xf32>, vector<16x8xf32> -> vector<16x8xf32>
    %416 = vector.extract_strided_slice %393 {offsets = [0, 8], sizes = [16, 8], strides = [1, 1]} : vector<16x32xf32> to vector<16x8xf32>
    %417 = vector.extract_strided_slice %395 {offsets = [0, 8], sizes = [16, 8], strides = [1, 1]} : vector<16x32xf32> to vector<16x8xf32>
    %418 = vector.extract_strided_slice %396 {offsets = [0, 8], sizes = [16, 8], strides = [1, 1]} : vector<16x32xf32> to vector<16x8xf32>
    %cst_178 = arith.constant 0.353553385 : f32
    %419 = vector.broadcast %cst_178 : f32 to vector<16x8xf32>
    %420 = arith.mulf %416, %419 : vector<16x8xf32>
    %cst_179 = arith.constant dense<0.000000e+00> : vector<16x16xf32>
    %421 = tpu.matmul %420, %417, %cst_179 {dimension_numbers = #tpu.dot_dimension_numbers<[1], [1], [0], [0], [0, 0, 1, 0], [], []>} : vector<16x8xf32>, vector<16x8xf32>, vector<16x16xf32> -> vector<16x16xf32>
    %422 = arith.addf %421, %397 : vector<16x16xf32>
    %cst_180 = arith.constant dense<0xFF800000> : vector<16xf32>
    %423 = vector.multi_reduction <maximumf>, %422, %cst_180 [1] : vector<16x16xf32> to vector<16xf32>
    %424 = vector.shape_cast %423 : vector<16xf32> to vector<16x1xf32>
    %425 = vector.broadcast %424 : vector<16x1xf32> to vector<16x16xf32>
    %426 = arith.subf %422, %425 : vector<16x16xf32>
    %427 = math.exp %426 : vector<16x16xf32>
    %cst_181 = arith.constant dense<0.000000e+00> : vector<16xf32>
    %428 = vector.multi_reduction <add>, %427, %cst_181 [1] : vector<16x16xf32> to vector<16xf32>
    %429 = vector.shape_cast %428 : vector<16xf32> to vector<16x1xf32>
    %430 = tpu.reciprocal %429 {approx = true} : vector<16x1xf32> -> vector<16x1xf32>
    %431 = vector.broadcast %430 : vector<16x1xf32> to vector<16x16xf32>
    %432 = arith.mulf %427, %431 : vector<16x16xf32>
    %cst_182 = arith.constant dense<0.000000e+00> : vector<16x8xf32>
    %433 = tpu.matmul %432, %418, %cst_182 {dimension_numbers = #tpu.dot_dimension_numbers<[1], [0], [0], [1], [0, 0, 1, 1], [], []>} : vector<16x16xf32>, vector<16x8xf32>, vector<16x8xf32> -> vector<16x8xf32>
    %434 = vector.extract_strided_slice %393 {offsets = [0, 16], sizes = [16, 8], strides = [1, 1]} : vector<16x32xf32> to vector<16x8xf32>
    %435 = vector.extract_strided_slice %395 {offsets = [0, 16], sizes = [16, 8], strides = [1, 1]} : vector<16x32xf32> to vector<16x8xf32>
    %436 = vector.extract_strided_slice %396 {offsets = [0, 16], sizes = [16, 8], strides = [1, 1]} : vector<16x32xf32> to vector<16x8xf32>
    %cst_183 = arith.constant 0.353553385 : f32
    %437 = vector.broadcast %cst_183 : f32 to vector<16x8xf32>
    %438 = arith.mulf %434, %437 : vector<16x8xf32>
    %cst_184 = arith.constant dense<0.000000e+00> : vector<16x16xf32>
    %439 = tpu.matmul %438, %435, %cst_184 {dimension_numbers = #tpu.dot_dimension_numbers<[1], [1], [0], [0], [0, 0, 1, 0], [], []>} : vector<16x8xf32>, vector<16x8xf32>, vector<16x16xf32> -> vector<16x16xf32>
    %440 = arith.addf %439, %397 : vector<16x16xf32>
    %cst_185 = arith.constant dense<0xFF800000> : vector<16xf32>
    %441 = vector.multi_reduction <maximumf>, %440, %cst_185 [1] : vector<16x16xf32> to vector<16xf32>
    %442 = vector.shape_cast %441 : vector<16xf32> to vector<16x1xf32>
    %443 = vector.broadcast %442 : vector<16x1xf32> to vector<16x16xf32>
    %444 = arith.subf %440, %443 : vector<16x16xf32>
    %445 = math.exp %444 : vector<16x16xf32>
    %cst_186 = arith.constant dense<0.000000e+00> : vector<16xf32>
    %446 = vector.multi_reduction <add>, %445, %cst_186 [1] : vector<16x16xf32> to vector<16xf32>
    %447 = vector.shape_cast %446 : vector<16xf32> to vector<16x1xf32>
    %448 = tpu.reciprocal %447 {approx = true} : vector<16x1xf32> -> vector<16x1xf32>
    %449 = vector.broadcast %448 : vector<16x1xf32> to vector<16x16xf32>
    %450 = arith.mulf %445, %449 : vector<16x16xf32>
    %cst_187 = arith.constant dense<0.000000e+00> : vector<16x8xf32>
    %451 = tpu.matmul %450, %436, %cst_187 {dimension_numbers = #tpu.dot_dimension_numbers<[1], [0], [0], [1], [0, 0, 1, 1], [], []>} : vector<16x16xf32>, vector<16x8xf32>, vector<16x8xf32> -> vector<16x8xf32>
    %452 = vector.extract_strided_slice %393 {offsets = [0, 24], sizes = [16, 8], strides = [1, 1]} : vector<16x32xf32> to vector<16x8xf32>
    %453 = vector.extract_strided_slice %395 {offsets = [0, 24], sizes = [16, 8], strides = [1, 1]} : vector<16x32xf32> to vector<16x8xf32>
    %454 = vector.extract_strided_slice %396 {offsets = [0, 24], sizes = [16, 8], strides = [1, 1]} : vector<16x32xf32> to vector<16x8xf32>
    %cst_188 = arith.constant 0.353553385 : f32
    %455 = vector.broadcast %cst_188 : f32 to vector<16x8xf32>
    %456 = arith.mulf %452, %455 : vector<16x8xf32>
    %cst_189 = arith.constant dense<0.000000e+00> : vector<16x16xf32>
    %457 = tpu.matmul %456, %453, %cst_189 {dimension_numbers = #tpu.dot_dimension_numbers<[1], [1], [0], [0], [0, 0, 1, 0], [], []>} : vector<16x8xf32>, vector<16x8xf32>, vector<16x16xf32> -> vector<16x16xf32>
    %458 = arith.addf %457, %397 : vector<16x16xf32>
    %cst_190 = arith.constant dense<0xFF800000> : vector<16xf32>
    %459 = vector.multi_reduction <maximumf>, %458, %cst_190 [1] : vector<16x16xf32> to vector<16xf32>
    %460 = vector.shape_cast %459 : vector<16xf32> to vector<16x1xf32>
    %461 = vector.broadcast %460 : vector<16x1xf32> to vector<16x16xf32>
    %462 = arith.subf %458, %461 : vector<16x16xf32>
    %463 = math.exp %462 : vector<16x16xf32>
    %cst_191 = arith.constant dense<0.000000e+00> : vector<16xf32>
    %464 = vector.multi_reduction <add>, %463, %cst_191 [1] : vector<16x16xf32> to vector<16xf32>
    %465 = vector.shape_cast %464 : vector<16xf32> to vector<16x1xf32>
    %466 = tpu.reciprocal %465 {approx = true} : vector<16x1xf32> -> vector<16x1xf32>
    %467 = vector.broadcast %466 : vector<16x1xf32> to vector<16x16xf32>
    %468 = arith.mulf %463, %467 : vector<16x16xf32>
    %cst_192 = arith.constant dense<0.000000e+00> : vector<16x8xf32>
    %469 = tpu.matmul %468, %454, %cst_192 {dimension_numbers = #tpu.dot_dimension_numbers<[1], [0], [0], [1], [0, 0, 1, 1], [], []>} : vector<16x16xf32>, vector<16x8xf32>, vector<16x8xf32> -> vector<16x8xf32>
    %470 = tpu.concatenate %415, %433, %451, %469 in 1 : vector<16x8xf32>, vector<16x8xf32>, vector<16x8xf32>, vector<16x8xf32> -> vector<16x32xf32>
    %c0_193 = arith.constant 0 : index
    %c0_194 = arith.constant 0 : index
    %471 = vector.load %arg29[%c0_193, %c0_194] : memref<32x32xf32, #tpu.memory_space<vmem>>, vector<32x32xf32>
    %cst_195 = arith.constant dense<0.000000e+00> : vector<16x32xf32>
    %472 = tpu.matmul %470, %471, %cst_195 {dimension_numbers = #tpu.dot_dimension_numbers<[1], [0], [0], [1], [0, 0, 1, 1], [], []>} : vector<16x32xf32>, vector<32x32xf32>, vector<16x32xf32> -> vector<16x32xf32>
    %c0_196 = arith.constant 0 : index
    %c0_197 = arith.constant 0 : index
    %473 = vector.load %arg30[%c0_196, %c0_197] : memref<1x32xf32, #tpu.memory_space<vmem>>, vector<1x32xf32>
    %474 = vector.broadcast %473 : vector<1x32xf32> to vector<16x32xf32>
    %475 = arith.addf %472, %474 : vector<16x32xf32>
    %476 = arith.addf %386, %475 : vector<16x32xf32>
    %477 = vector.extract_strided_slice %0 {offsets = [4, 0], sizes = [1, 32], strides = [1, 1]} : vector<5x32xf32> to vector<1x32xf32>
    %478 = vector.extract_strided_slice %1 {offsets = [4, 0], sizes = [1, 32], strides = [1, 1]} : vector<5x32xf32> to vector<1x32xf32>
    %cst_198 = arith.constant dense<0.000000e+00> : vector<16xf32>
    %479 = vector.multi_reduction <add>, %476, %cst_198 [1] : vector<16x32xf32> to vector<16xf32>
    %480 = vector.shape_cast %479 : vector<16xf32> to vector<16x1xf32>
    %cst_199 = arith.constant 3.200000e+01 : f32
    %481 = vector.broadcast %cst_199 : f32 to vector<16x1xf32>
    %482 = arith.divf %480, %481 : vector<16x1xf32>
    %483 = vector.broadcast %482 : vector<16x1xf32> to vector<16x32xf32>
    %484 = arith.subf %476, %483 : vector<16x32xf32>
    %485 = arith.mulf %484, %484 : vector<16x32xf32>
    %cst_200 = arith.constant dense<0.000000e+00> : vector<16xf32>
    %486 = vector.multi_reduction <add>, %485, %cst_200 [1] : vector<16x32xf32> to vector<16xf32>
    %487 = vector.shape_cast %486 : vector<16xf32> to vector<16x1xf32>
    %cst_201 = arith.constant 3.200000e+01 : f32
    %488 = vector.broadcast %cst_201 : f32 to vector<16x1xf32>
    %489 = arith.divf %487, %488 : vector<16x1xf32>
    %cst_202 = arith.constant 9.99999974E-6 : f32
    %490 = vector.broadcast %cst_202 : f32 to vector<16x1xf32>
    %491 = arith.addf %489, %490 : vector<16x1xf32>
    %492 = math.rsqrt %491 : vector<16x1xf32>
    %493 = vector.broadcast %492 : vector<16x1xf32> to vector<16x32xf32>
    %494 = arith.mulf %484, %493 : vector<16x32xf32>
    %495 = vector.broadcast %477 : vector<1x32xf32> to vector<16x32xf32>
    %496 = arith.mulf %494, %495 : vector<16x32xf32>
    %497 = vector.broadcast %478 : vector<1x32xf32> to vector<16x32xf32>
    %498 = arith.addf %496, %497 : vector<16x32xf32>
    %c0_203 = arith.constant 0 : index
    %c0_204 = arith.constant 0 : index
    %499 = vector.load %arg49[%c0_203, %c0_204] : memref<16x32xf32, #tpu.memory_space<vmem>>, vector<16x32xf32>
    tpu.vector_store %arg49[%c0_203, %c0_204], %498 {strides = array<i32>} : memref<16x32xf32, #tpu.memory_space<vmem>>, vector<16x32xf32>,
    return
  }
}

</mosaic_0001>

<llo_original>
// kernel: refine_decoder_layer_forward.1
$region0: #{refine_decoder_layer_forward.1}
  #allocation0 [shape = 'u32[]', space=smem, size = 0x4, offset = 0x4, fixed_abs, tag = 'smem constant byte address 0x4 - core index']
  #allocation1 [shape = 'u32[144,128]{1,0:T(1,128)}', space=vmem, size = 0x12000, scoped, tag = 'internal scratch']
  %s0 = inlined_call_operand.smem [shape: u32[50], index: -1, kind: input, shape index: {}]
  %s1 = sld [smem:[%s0]]
  %s2 = scalar_lea.smem %s0, 1
  %s3 = sld [smem:[%s2]]
  %s4 = scalar_lea.smem %s0, 2
  %s5 = sld [smem:[%s4]]
  %s6 = scalar_lea.smem %s0, 3
  %s7 = sld [smem:[%s6]]
  %s8 = scalar_lea.smem %s0, 4
  %s9 = sld [smem:[%s8]]
  %s10 = scalar_lea.smem %s0, 5
  %s11 = sld [smem:[%s10]]
  %s12 = scalar_lea.smem %s0, 6
  %s13 = sld [smem:[%s12]]
  %s14 = scalar_lea.smem %s0, 7
  %s15 = sld [smem:[%s14]]
  %s16 = scalar_lea.smem %s0, 8
  %s17 = sld [smem:[%s16]]
  %s18 = scalar_lea.smem %s0, 9
  %s19 = sld [smem:[%s18]]
  %s20 = scalar_lea.smem %s0, 10
  %s21 = sld [smem:[%s20]]
  %s22 = scalar_lea.smem %s0, 11
  %s23 = sld [smem:[%s22]]
  %s24 = scalar_lea.smem %s0, 12
  %s25 = sld [smem:[%s24]]
  %s26 = scalar_lea.smem %s0, 13
  %s27 = sld [smem:[%s26]]
  %s28 = scalar_lea.smem %s0, 14
  %s29 = sld [smem:[%s28]]
  %s30 = scalar_lea.smem %s0, 15
  %s31 = sld [smem:[%s30]]
  %s32 = scalar_lea.smem %s0, 16
  %s33 = sld [smem:[%s32]]
  %s34 = scalar_lea.smem %s0, 17
  %s35 = sld [smem:[%s34]]
  %s36 = scalar_lea.smem %s0, 18
  %s37 = sld [smem:[%s36]]
  %s38 = scalar_lea.smem %s0, 19
  %s39 = sld [smem:[%s38]]
  %s40 = scalar_lea.smem %s0, 20
  %s41 = sld [smem:[%s40]]
  %s42 = scalar_lea.smem %s0, 21
  %s43 = sld [smem:[%s42]]
  %s44 = scalar_lea.smem %s0, 22
  %s45 = sld [smem:[%s44]]
  %s46 = scalar_lea.smem %s0, 23
  %s47 = sld [smem:[%s46]]
  %s48 = scalar_lea.smem %s0, 24
  %s49 = sld [smem:[%s48]]
  %s50 = scalar_lea.smem %s0, 25
  %s51 = sld [smem:[%s50]]
  %s52 = scalar_lea.smem %s0, 26
  %s53 = sld [smem:[%s52]]
  %s54 = scalar_lea.smem %s0, 27
  %s55 = sld [smem:[%s54]]
  %s56 = scalar_lea.smem %s0, 28
  %s57 = sld [smem:[%s56]]
  %s58 = scalar_lea.smem %s0, 29
  %s59 = sld [smem:[%s58]]
  %s60 = scalar_lea.smem %s0, 30
  %s61 = sld [smem:[%s60]]
  %s62 = scalar_lea.smem %s0, 31
  %s63 = sld [smem:[%s62]]
  %s64 = scalar_lea.smem %s0, 32
  %s65 = sld [smem:[%s64]]
  %s66 = scalar_lea.smem %s0, 33
  %s67 = sld [smem:[%s66]]
  %s68 = scalar_lea.smem %s0, 34
  %s69 = sld [smem:[%s68]]
  %s70 = scalar_lea.smem %s0, 35
  %s71 = sld [smem:[%s70]]
  %s72 = scalar_lea.smem %s0, 36
  %s73 = sld [smem:[%s72]]
  %s74 = scalar_lea.smem %s0, 37
  %s75 = sld [smem:[%s74]]
  %s76 = scalar_lea.smem %s0, 38
  %s77 = sld [smem:[%s76]]
  %s78 = scalar_lea.smem %s0, 39
  %s79 = sld [smem:[%s78]]
  %s80 = scalar_lea.smem %s0, 40
  %s81 = sld [smem:[%s80]]
  %s82 = scalar_lea.smem %s0, 41
  %s83 = sld [smem:[%s82]]
  %s84 = scalar_lea.smem %s0, 42
  %s85 = sld [smem:[%s84]]
  %s86 = scalar_lea.smem %s0, 43
  %s87 = sld [smem:[%s86]]
  %s88 = scalar_lea.smem %s0, 44
  %s89 = sld [smem:[%s88]]
  %s90 = scalar_lea.smem %s0, 45
  %s91 = sld [smem:[%s90]]
  %s92 = scalar_lea.smem %s0, 46
  %s93 = sld [smem:[%s92]]
  %s94 = scalar_lea.smem %s0, 47
  %s95 = sld [smem:[%s94]]
  %s96 = scalar_lea.smem %s0, 48
  %s97 = sld [smem:[%s96]]
  %s98 = scalar_lea.smem %s0, 49
  %s99 = sld [smem:[%s98]]
  %s100 = sld [smem:[#allocation0]]
  $region234: #{refine_decoder_layer_forward.1} parent=0
    _
  %s102 = ssub.s32 1, %s100
  %s103 = scalar_select 0, %s102, %s100
  $region1: #{refine_decoder_layer_forward.1} parent=0
    #allocation2 [shape = 'u8[512]{0}', space=vmem, size = 0x400, scoped, tag = 'input window, operand 34, single buffered']
    #allocation3 [shape = 's32[1]{0}', space=sflag, size = 0x4, scoped, tag = 'scoped memory for refine_decoder_layer_forward.1']
    #allocation4 [shape = 's32[1]{0}', space=sflag, size = 0x4, scoped, tag = 'scoped memory for refine_decoder_layer_forward.1']
    #allocation5 [shape = 'u8[512]{0}', space=vmem, size = 0x400, scoped, tag = 'input window, operand 36, single buffered']
    #allocation6 [shape = 's32[1]{0}', space=sflag, size = 0x4, scoped, tag = 'scoped memory for refine_decoder_layer_forward.1']
    #allocation7 [shape = 'u8[512]{0}', space=vmem, size = 0x400, scoped, tag = 'input window, operand 38, single buffered']
    #allocation8 [shape = 'u8[512]{0}', space=vmem, size = 0x400, scoped, tag = 'input window, operand 40, single buffered']
    #allocation9 [shape = 's32[1]{0}', space=sflag, size = 0x4, scoped, tag = 'scoped memory for refine_decoder_layer_forward.1']
    #allocation10 [shape = 'u8[512]{0}', space=vmem, size = 0x400, scoped, tag = 'input window, operand 42, single buffered']
    #allocation11 [shape = 'u8[512]{0}', space=vmem, size = 0x400, scoped, tag = 'input window, operand 44, single buffered']
    #allocation12 [shape = 's32[1]{0}', space=sflag, size = 0x4, scoped, tag = 'scoped memory for refine_decoder_layer_forward.1']
    #allocation13 [shape = 'u8[512]{0}', space=vmem, size = 0x400, scoped, tag = 'input window, operand 46, single buffered']
    #allocation14 [shape = 'u8[8192]{0}', space=vmem, size = 0x2000, scoped, tag = 'output window, operand 0, single buffered']
    %104 = vsyncpa [#allocation3], 0
    %105 = vsyncpa [#allocation6], 0
    %106 = vsyncpa [#allocation9], 0
    %107 = vsyncpa [#allocation12], 0
    %108 = vsyncpa [#allocation4], 0
    // Predicated region
    $region2: #{refine_decoder_layer_forward.1} parent=1 // pred_check
      _
    $region3: #{refine_decoder_layer_forward.1} parent=1 // pred_check_branch
      %110 = sbr.rel (0) target = $region5
    $region4: #{refine_decoder_layer_forward.1} parent=1 // pred_region
      _
    $region5: #{refine_decoder_layer_forward.1} parent=1 // pred_fallthru
      _
    // Predicated region
    $region6: #{refine_decoder_layer_forward.1} parent=1 // pred_check
      _
    $region7: #{refine_decoder_layer_forward.1} parent=1 // pred_check_branch
      %112 = sbr.rel (0) target = $region9
    $region8: #{refine_decoder_layer_forward.1} parent=1 // pred_region
      _
    $region9: #{refine_decoder_layer_forward.1} parent=1 // pred_fallthru
      _
    // Predicated region
    $region10: #{refine_decoder_layer_forward.1} parent=1 // pred_check
      _
    $region11: #{refine_decoder_layer_forward.1} parent=1 // pred_check_branch
      %114 = sbr.rel (0) target = $region13
    $region12: #{refine_decoder_layer_forward.1} parent=1 // pred_region
      _
    $region13: #{refine_decoder_layer_forward.1} parent=1 // pred_fallthru
      _
    // Predicated region
    $region14: #{refine_decoder_layer_forward.1} parent=1 // pred_check
      _
    $region15: #{refine_decoder_layer_forward.1} parent=1 // pred_check_branch
      %116 = sbr.rel (0) target = $region17
    $region16: #{refine_decoder_layer_forward.1} parent=1 // pred_region
      _
    $region17: #{refine_decoder_layer_forward.1} parent=1 // pred_fallthru
      _
    // Predicated region
    $region18: #{refine_decoder_layer_forward.1} parent=1 // pred_check
      _
    $region19: #{refine_decoder_layer_forward.1} parent=1 // pred_check_branch
      %118 = sbr.rel (0) target = $region21
    $region20: #{refine_decoder_layer_forward.1} parent=1 // pred_region
      _
    $region21: #{refine_decoder_layer_forward.1} parent=1 // pred_fallthru
      _
    // Predicated region
    $region22: #{refine_decoder_layer_forward.1} parent=1 // pred_check
      _
    $region23: #{refine_decoder_layer_forward.1} parent=1 // pred_check_branch
      %120 = sbr.rel (0) target = $region25
    $region24: #{refine_decoder_layer_forward.1} parent=1 // pred_region
      _
    $region25: #{refine_decoder_layer_forward.1} parent=1 // pred_fallthru
      _
    // Predicated region
    $region26: #{refine_decoder_layer_forward.1} parent=1 // pred_check
      _
    $region27: #{refine_decoder_layer_forward.1} parent=1 // pred_check_branch
      %122 = sbr.rel (0) target = $region29
    $region28: #{refine_decoder_layer_forward.1} parent=1 // pred_region
      _
    $region29: #{refine_decoder_layer_forward.1} parent=1 // pred_fallthru
      _
    // Predicated region
    $region30: #{refine_decoder_layer_forward.1} parent=1 // pred_check
      _
    $region31: #{refine_decoder_layer_forward.1} parent=1 // pred_check_branch
      %124 = sbr.rel (0) target = $region33
    $region32: #{refine_decoder_layer_forward.1} parent=1 // pred_region
      _
    $region33: #{refine_decoder_layer_forward.1} parent=1 // pred_fallthru
      _
    // Predicated region
    $region34: #{refine_decoder_layer_forward.1} parent=1 // pred_check
      _
    $region35: #{refine_decoder_layer_forward.1} parent=1 // pred_check_branch
      %126 = sbr.rel (0) target = $region37
    $region36: #{refine_decoder_layer_forward.1} parent=1 // pred_region
      _
    $region37: #{refine_decoder_layer_forward.1} parent=1 // pred_fallthru
      _
    // Predicated region
    $region38: #{refine_decoder_layer_forward.1} parent=1 // pred_check
      _
    $region39: #{refine_decoder_layer_forward.1} parent=1 // pred_check_branch
      %128 = sbr.rel (0) target = $region41
    $region40: #{refine_decoder_layer_forward.1} parent=1 // pred_region
      _
    $region41: #{refine_decoder_layer_forward.1} parent=1 // pred_fallthru
      _
    // Predicated region
    $region42: #{refine_decoder_layer_forward.1} parent=1 // pred_check
      _
    $region43: #{refine_decoder_layer_forward.1} parent=1 // pred_check_branch
      %130 = sbr.rel (0) target = $region45
    $region44: #{refine_decoder_layer_forward.1} parent=1 // pred_region
      _
    $region45: #{refine_decoder_layer_forward.1} parent=1 // pred_fallthru
      _
    // Predicated region
    $region46: #{refine_decoder_layer_forward.1} parent=1 // pred_check
      _
    $region47: #{refine_decoder_layer_forward.1} parent=1 // pred_check_branch
      %132 = sbr.rel (0) target = $region49
    $region48: #{refine_decoder_layer_forward.1} parent=1 // pred_region
      _
    $region49: #{refine_decoder_layer_forward.1} parent=1 // pred_fallthru
      _
    // Predicated region
    $region50: #{refine_decoder_layer_forward.1} parent=1 // pred_check
      _
    $region51: #{refine_decoder_layer_forward.1} parent=1 // pred_check_branch
      %134 = sbr.rel (0) target = $region53
    $region52: #{refine_decoder_layer_forward.1} parent=1 // pred_region
      _
    $region53: #{refine_decoder_layer_forward.1} parent=1 // pred_fallthru
      _
    // Predicated region
    $region54: #{refine_decoder_layer_forward.1} parent=1 // pred_check
      _
    $region55: #{refine_decoder_layer_forward.1} parent=1 // pred_check_branch
      %136 = sbr.rel (0) target = $region57
    $region56: #{refine_decoder_layer_forward.1} parent=1 // pred_region
      _
    $region57: #{refine_decoder_layer_forward.1} parent=1 // pred_fallthru
      _
    // Predicated region
    $region58: #{refine_decoder_layer_forward.1} parent=1 // pred_check
      _
    $region59: #{refine_decoder_layer_forward.1} parent=1 // pred_check_branch
      %138 = sbr.rel (0) target = $region61
    $region60: #{refine_decoder_layer_forward.1} parent=1 // pred_region
      _
    $region61: #{refine_decoder_layer_forward.1} parent=1 // pred_fallthru
      _
    // Predicated region
    $region62: #{refine_decoder_layer_forward.1} parent=1 // pred_check
      _
    $region63: #{refine_decoder_layer_forward.1} parent=1 // pred_check_branch
      %140 = sbr.rel (0) target = $region65
    $region64: #{refine_decoder_layer_forward.1} parent=1 // pred_region
      _
    $region65: #{refine_decoder_layer_forward.1} parent=1 // pred_fallthru
      _
    // Predicated region
    $region66: #{refine_decoder_layer_forward.1} parent=1 // pred_check
      _
    $region67: #{refine_decoder_layer_forward.1} parent=1 // pred_check_branch
      %142 = sbr.rel (0) target = $region69
    $region68: #{refine_decoder_layer_forward.1} parent=1 // pred_region
      _
    $region69: #{refine_decoder_layer_forward.1} parent=1 // pred_fallthru
      _
    // Predicated region
    $region70: #{refine_decoder_layer_forward.1} parent=1 // pred_check
      _
    $region71: #{refine_decoder_layer_forward.1} parent=1 // pred_check_branch
      %144 = sbr.rel (0) target = $region73
    $region72: #{refine_decoder_layer_forward.1} parent=1 // pred_region
      _
    $region73: #{refine_decoder_layer_forward.1} parent=1 // pred_fallthru
      _
    // Predicated region
    $region74: #{refine_decoder_layer_forward.1} parent=1 // pred_check
      _
    $region75: #{refine_decoder_layer_forward.1} parent=1 // pred_check_branch
      %146 = sbr.rel (0) target = $region77
    $region76: #{refine_decoder_layer_forward.1} parent=1 // pred_region
      _
    $region77: #{refine_decoder_layer_forward.1} parent=1 // pred_fallthru
      _
    // Predicated region
    $region78: #{refine_decoder_layer_forward.1} parent=1 // pred_check
      _
    $region79: #{refine_decoder_layer_forward.1} parent=1 // pred_check_branch
      %148 = sbr.rel (0) target = $region81
    $region80: #{refine_decoder_layer_forward.1} parent=1 // pred_region
      _
    $region81: #{refine_decoder_layer_forward.1} parent=1 // pred_fallthru
      _
    // Predicated region
    $region82: #{refine_decoder_layer_forward.1} parent=1 // pred_check
      _
    $region83: #{refine_decoder_layer_forward.1} parent=1 // pred_check_branch
      %150 = sbr.rel (0) target = $region85
    $region84: #{refine_decoder_layer_forward.1} parent=1 // pred_region
      _
    $region85: #{refine_decoder_layer_forward.1} parent=1 // pred_fallthru
      _
    // Predicated region
    $region86: #{refine_decoder_layer_forward.1} parent=1 // pred_check
      _
    $region87: #{refine_decoder_layer_forward.1} parent=1 // pred_check_branch
      %152 = sbr.rel (0) target = $region89
    $region88: #{refine_decoder_layer_forward.1} parent=1 // pred_region
      _
    $region89: #{refine_decoder_layer_forward.1} parent=1 // pred_fallthru
      _
    // Predicated region
    $region90: #{refine_decoder_layer_forward.1} parent=1 // pred_check
      _
    $region91: #{refine_decoder_layer_forward.1} parent=1 // pred_check_branch
      %154 = sbr.rel (0) target = $region93
    $region92: #{refine_decoder_layer_forward.1} parent=1 // pred_region
      _
    $region93: #{refine_decoder_layer_forward.1} parent=1 // pred_fallthru
      _
    // Predicated region
    $region94: #{refine_decoder_layer_forward.1} parent=1 // pred_check
      _
    $region95: #{refine_decoder_layer_forward.1} parent=1 // pred_check_branch
      %156 = sbr.rel (0) target = $region97
    $region96: #{refine_decoder_layer_forward.1} parent=1 // pred_region
      _
    $region97: #{refine_decoder_layer_forward.1} parent=1 // pred_fallthru
      _
    // Predicated region
    $region98: #{refine_decoder_layer_forward.1} parent=1 // pred_check
      _
    $region99: #{refine_decoder_layer_forward.1} parent=1 // pred_check_branch
      %158 = sbr.rel (0) target = $region101
    $region100: #{refine_decoder_layer_forward.1} parent=1 // pred_region
      _
    $region101: #{refine_decoder_layer_forward.1} parent=1 // pred_fallthru
      _
    // Predicated region
    $region102: #{refine_decoder_layer_forward.1} parent=1 // pred_check
      _
    $region103: #{refine_decoder_layer_forward.1} parent=1 // pred_check_branch
      %160 = sbr.rel (0) target = $region105
    $region104: #{refine_decoder_layer_forward.1} parent=1 // pred_region
      _
    $region105: #{refine_decoder_layer_forward.1} parent=1 // pred_fallthru
      _
    // Predicated region
    $region106: #{refine_decoder_layer_forward.1} parent=1 // pred_check
      _
    $region107: #{refine_decoder_layer_forward.1} parent=1 // pred_check_branch
      %162 = sbr.rel (0) target = $region109
    $region108: #{refine_decoder_layer_forward.1} parent=1 // pred_region
      _
    $region109: #{refine_decoder_layer_forward.1} parent=1 // pred_fallthru
      _
    // Predicated region
    $region110: #{refine_decoder_layer_forward.1} parent=1 // pred_check
      _
    $region111: #{refine_decoder_layer_forward.1} parent=1 // pred_check_branch
      %164 = sbr.rel (0) target = $region113
    $region112: #{refine_decoder_layer_forward.1} parent=1 // pred_region
      _
    $region113: #{refine_decoder_layer_forward.1} parent=1 // pred_fallthru
      _
    // Predicated region
    $region114: #{refine_decoder_layer_forward.1} parent=1 // pred_check
      _
    $region115: #{refine_decoder_layer_forward.1} parent=1 // pred_check_branch
      %166 = sbr.rel (0) target = $region117
    $region116: #{refine_decoder_layer_forward.1} parent=1 // pred_region
      _
    $region117: #{refine_decoder_layer_forward.1} parent=1 // pred_fallthru
      _
    // Predicated region
    $region118: #{refine_decoder_layer_forward.1} parent=1 // pred_check
      _
    $region119: #{refine_decoder_layer_forward.1} parent=1 // pred_check_branch
      %168 = sbr.rel (0) target = $region121
    $region120: #{refine_decoder_layer_forward.1} parent=1 // pred_region
      _
    $region121: #{refine_decoder_layer_forward.1} parent=1 // pred_fallthru
      _
    // Predicated region
    $region122: #{refine_decoder_layer_forward.1} parent=1 // pred_check
      _
    $region123: #{refine_decoder_layer_forward.1} parent=1 // pred_check_branch
      %170 = sbr.rel (0) target = $region125
    $region124: #{refine_decoder_layer_forward.1} parent=1 // pred_region
      _
    $region125: #{refine_decoder_layer_forward.1} parent=1 // pred_fallthru
      _
    // Predicated region
    $region126: #{refine_decoder_layer_forward.1} parent=1 // pred_check
      _
    $region127: #{refine_decoder_layer_forward.1} parent=1 // pred_check_branch
      %172 = sbr.rel (0) target = $region129
    $region128: #{refine_decoder_layer_forward.1} parent=1 // pred_region
      _
    $region129: #{refine_decoder_layer_forward.1} parent=1 // pred_fallthru
      _
    // Predicated region
    $region130: #{refine_decoder_layer_forward.1} parent=1 // pred_check
      _
    $region131: #{refine_decoder_layer_forward.1} parent=1 // pred_check_branch
      %174 = sbr.rel (0) target = $region133
    $region132: #{refine_decoder_layer_forward.1} parent=1 // pred_region
      _
    $region133: #{refine_decoder_layer_forward.1} parent=1 // pred_fallthru
      _
    // Predicated region
    $region134: #{refine_decoder_layer_forward.1} parent=1 // pred_check
      _
    $region135: #{refine_decoder_layer_forward.1} parent=1 // pred_check_branch
      %176 = sbr.rel (0) target = $region137
    $region136: #{refine_decoder_layer_forward.1} parent=1 // pred_region
      _
    $region137: #{refine_decoder_layer_forward.1} parent=1 // pred_fallthru
      _
    // Predicated region
    $region138: #{refine_decoder_layer_forward.1} parent=1 // pred_check
      _
    $region139: #{refine_decoder_layer_forward.1} parent=1 // pred_check_branch
      %178 = sbr.rel (0) target = $region141
    $region140: #{refine_decoder_layer_forward.1} parent=1 // pred_region
      %s180 = ssub.s32 16, 16
      %181 = vsyncadd [#allocation3], %s180
      %s183 = sshll.u32 [#allocation2], 4
      %s184 = int_to_ptr.vmem [resolvable:$true] %s183
      %186 = dma.hbm_to_vmem [thread:$0]  %s69, 16, %s184, [#allocation3]
    $region141: #{refine_decoder_layer_forward.1} parent=1 // pred_fallthru
      _
    // Predicated region
    $region142: #{refine_decoder_layer_forward.1} parent=1 // pred_check
      _
    $region143: #{refine_decoder_layer_forward.1} parent=1 // pred_check_branch
      %188 = sbr.rel (0) target = $region145
    $region144: #{refine_decoder_layer_forward.1} parent=1 // pred_region
      _
    $region145: #{refine_decoder_layer_forward.1} parent=1 // pred_fallthru
      _
    // Predicated region
    $region146: #{refine_decoder_layer_forward.1} parent=1 // pred_check
      _
    $region147: #{refine_decoder_layer_forward.1} parent=1 // pred_check_branch
      %190 = sbr.rel (0) target = $region149
    $region148: #{refine_decoder_layer_forward.1} parent=1 // pred_region
      %s192 = ssub.s32 16, 16
      %193 = vsyncadd [#allocation6], %s192
      %s195 = sshll.u32 [#allocation5], 4
      %s196 = int_to_ptr.vmem [resolvable:$true] %s195
      %198 = dma.hbm_to_vmem [thread:$0]  %s73, 16, %s196, [#allocation6]
    $region149: #{refine_decoder_layer_forward.1} parent=1 // pred_fallthru
      _
    // Predicated region
    $region150: #{refine_decoder_layer_forward.1} parent=1 // pred_check
      _
    $region151: #{refine_decoder_layer_forward.1} parent=1 // pred_check_branch
      %200 = sbr.rel (0) target = $region153
    $region152: #{refine_decoder_layer_forward.1} parent=1 // pred_region
      _
    $region153: #{refine_decoder_layer_forward.1} parent=1 // pred_fallthru
      _
    // Predicated region
    $region154: #{refine_decoder_layer_forward.1} parent=1 // pred_check
      _
    $region155: #{refine_decoder_layer_forward.1} parent=1 // pred_check_branch
      %202 = sbr.rel (0) target = $region157
    $region156: #{refine_decoder_layer_forward.1} parent=1 // pred_region
      %s204 = ssub.s32 16, 16
      %205 = vsyncadd [#allocation6], %s204
      %s207 = sshll.u32 [#allocation7], 4
      %s208 = int_to_ptr.vmem [resolvable:$true] %s207
      %210 = dma.hbm_to_vmem [thread:$0]  %s77, 16, %s208, [#allocation6]
    $region157: #{refine_decoder_layer_forward.1} parent=1 // pred_fallthru
      _
    // Predicated region
    $region158: #{refine_decoder_layer_forward.1} parent=1 // pred_check
      _
    $region159: #{refine_decoder_layer_forward.1} parent=1 // pred_check_branch
      %212 = sbr.rel (0) target = $region161
    $region160: #{refine_decoder_layer_forward.1} parent=1 // pred_region
      _
    $region161: #{refine_decoder_layer_forward.1} parent=1 // pred_fallthru
      _
    // Predicated region
    $region162: #{refine_decoder_layer_forward.1} parent=1 // pred_check
      _
    $region163: #{refine_decoder_layer_forward.1} parent=1 // pred_check_branch
      %214 = sbr.rel (0) target = $region165
    $region164: #{refine_decoder_layer_forward.1} parent=1 // pred_region
      %s216 = ssub.s32 16, 16
      %217 = vsyncadd [#allocation9], %s216
      %s219 = sshll.u32 [#allocation8], 4
      %s220 = int_to_ptr.vmem [resolvable:$true] %s219
      %222 = dma.hbm_to_vmem [thread:$0]  %s81, 16, %s220, [#allocation9]
    $region165: #{refine_decoder_layer_forward.1} parent=1 // pred_fallthru
      _
    // Predicated region
    $region166: #{refine_decoder_layer_forward.1} parent=1 // pred_check
      _
    $region167: #{refine_decoder_layer_forward.1} parent=1 // pred_check_branch
      %224 = sbr.rel (0) target = $region169
    $region168: #{refine_decoder_layer_forward.1} parent=1 // pred_region
      _
    $region169: #{refine_decoder_layer_forward.1} parent=1 // pred_fallthru
      _
    // Predicated region
    $region170: #{refine_decoder_layer_forward.1} parent=1 // pred_check
      _
    $region171: #{refine_decoder_layer_forward.1} parent=1 // pred_check_branch
      %226 = sbr.rel (0) target = $region173
    $region172: #{refine_decoder_layer_forward.1} parent=1 // pred_region
      %s228 = ssub.s32 16, 16
      %229 = vsyncadd [#allocation9], %s228
      %s231 = sshll.u32 [#allocation10], 4
      %s232 = int_to_ptr.vmem [resolvable:$true] %s231
      %234 = dma.hbm_to_vmem [thread:$0]  %s85, 16, %s232, [#allocation9]
    $region173: #{refine_decoder_layer_forward.1} parent=1 // pred_fallthru
      _
    // Predicated region
    $region174: #{refine_decoder_layer_forward.1} parent=1 // pred_check
      _
    $region175: #{refine_decoder_layer_forward.1} parent=1 // pred_check_branch
      %236 = sbr.rel (0) target = $region177
    $region176: #{refine_decoder_layer_forward.1} parent=1 // pred_region
      _
    $region177: #{refine_decoder_layer_forward.1} parent=1 // pred_fallthru
      _
    // Predicated region
    $region178: #{refine_decoder_layer_forward.1} parent=1 // pred_check
      _
    $region179: #{refine_decoder_layer_forward.1} parent=1 // pred_check_branch
      %238 = sbr.rel (0) target = $region181
    $region180: #{refine_decoder_layer_forward.1} parent=1 // pred_region
      %s240 = ssub.s32 16, 16
      %241 = vsyncadd [#allocation12], %s240
      %s243 = sshll.u32 [#allocation11], 4
      %s244 = int_to_ptr.vmem [resolvable:$true] %s243
      %246 = dma.hbm_to_vmem [thread:$0]  %s89, 16, %s244, [#allocation12]
    $region181: #{refine_decoder_layer_forward.1} parent=1 // pred_fallthru
      _
    // Predicated region
    $region182: #{refine_decoder_layer_forward.1} parent=1 // pred_check
      _
    $region183: #{refine_decoder_layer_forward.1} parent=1 // pred_check_branch
      %248 = sbr.rel (0) target = $region185
    $region184: #{refine_decoder_layer_forward.1} parent=1 // pred_region
      _
    $region185: #{refine_decoder_layer_forward.1} parent=1 // pred_fallthru
      _
    // Predicated region
    $region186: #{refine_decoder_layer_forward.1} parent=1 // pred_check
      _
    $region187: #{refine_decoder_layer_forward.1} parent=1 // pred_check_branch
      %250 = sbr.rel (0) target = $region189
    $region188: #{refine_decoder_layer_forward.1} parent=1 // pred_region
      %s252 = ssub.s32 16, 16
      %253 = vsyncadd [#allocation12], %s252
      %s255 = sshll.u32 [#allocation13], 4
      %s256 = int_to_ptr.vmem [resolvable:$true] %s255
      %258 = dma.hbm_to_vmem [thread:$0]  %s93, 16, %s256, [#allocation12]
    $region189: #{refine_decoder_layer_forward.1} parent=1 // pred_fallthru
      _
    // Predicated region
    $region190: #{refine_decoder_layer_forward.1} parent=1 // pred_check
      _
    $region191: #{refine_decoder_layer_forward.1} parent=1 // pred_check_branch
      %260 = sbr.rel (0) target = $region193
    $region192: #{refine_decoder_layer_forward.1} parent=1 // pred_region
      _
    $region193: #{refine_decoder_layer_forward.1} parent=1 // pred_fallthru
      _
    // Predicated region
    $region194: #{refine_decoder_layer_forward.1} parent=1 // pred_check
      _
    $region195: #{refine_decoder_layer_forward.1} parent=1 // pred_check_branch
      %262 = sbr.rel (0) target = $region197
    $region196: #{refine_decoder_layer_forward.1} parent=1 // pred_region
      _
    $region197: #{refine_decoder_layer_forward.1} parent=1 // pred_fallthru
      _
    // Predicated region
    $region198: #{refine_decoder_layer_forward.1} parent=1 // pred_check
      _
    $region199: #{refine_decoder_layer_forward.1} parent=1 // pred_check_branch
      %264 = sbr.rel (0) target = $region201
    $region200: #{refine_decoder_layer_forward.1} parent=1 // pred_region
      %265 = dma.done [#allocation3], 16
    $region201: #{refine_decoder_layer_forward.1} parent=1 // pred_fallthru
      _
    // Predicated region
    $region202: #{refine_decoder_layer_forward.1} parent=1 // pred_check
      _
    $region203: #{refine_decoder_layer_forward.1} parent=1 // pred_check_branch
      %267 = sbr.rel (0) target = $region205
    $region204: #{refine_decoder_layer_forward.1} parent=1 // pred_region
      %268 = dma.done [#allocation6], 16
    $region205: #{refine_decoder_layer_forward.1} parent=1 // pred_fallthru
      _
    // Predicated region
    $region206: #{refine_decoder_layer_forward.1} parent=1 // pred_check
      _
    $region207: #{refine_decoder_layer_forward.1} parent=1 // pred_check_branch
      %270 = sbr.rel (0) target = $region209
    $region208: #{refine_decoder_layer_forward.1} parent=1 // pred_region
      %271 = dma.done [#allocation6], 16
    $region209: #{refine_decoder_layer_forward.1} parent=1 // pred_fallthru
      _
    // Predicated region
    $region210: #{refine_decoder_layer_forward.1} parent=1 // pred_check
      _
    $region211: #{refine_decoder_layer_forward.1} parent=1 // pred_check_branch
      %273 = sbr.rel (0) target = $region213
    $region212: #{refine_decoder_layer_forward.1} parent=1 // pred_region
      %274 = dma.done [#allocation9], 16
    $region213: #{refine_decoder_layer_forward.1} parent=1 // pred_fallthru
      _
    // Predicated region
    $region214: #{refine_decoder_layer_forward.1} parent=1 // pred_check
      _
    $region215: #{refine_decoder_layer_forward.1} parent=1 // pred_check_branch
      %276 = sbr.rel (0) target = $region217
    $region216: #{refine_decoder_layer_forward.1} parent=1 // pred_region
      %277 = dma.done [#allocation9], 16
    $region217: #{refine_decoder_layer_forward.1} parent=1 // pred_fallthru
      _
    // Predicated region
    $region218: #{refine_decoder_layer_forward.1} parent=1 // pred_check
      _
    $region219: #{refine_decoder_layer_forward.1} parent=1 // pred_check_branch
      %279 = sbr.rel (0) target = $region221
    $region220: #{refine_decoder_layer_forward.1} parent=1 // pred_region
      %280 = dma.done [#allocation12], 16
    $region221: #{refine_decoder_layer_forward.1} parent=1 // pred_fallthru
      _
    // Predicated region
    $region222: #{refine_decoder_layer_forward.1} parent=1 // pred_check
      _
    $region223: #{refine_decoder_layer_forward.1} parent=1 // pred_check_branch
      %282 = sbr.rel (0) target = $region225
    $region224: #{refine_decoder_layer_forward.1} parent=1 // pred_region
      %283 = dma.done [#allocation12], 16
    $region225: #{refine_decoder_layer_forward.1} parent=1 // pred_fallthru
      _
    %v284 = vld [vmem:[%s95] sm:$0x1f]
    %v285 = vld [vmem:[%s97] sm:$0x1f]
    %v286 = vld [vmem:[%s1] sm:$0xff]
    %v287 = vld [vmem:[%s1 + $0x8] sm:$0xff]
    %v288 = vld [vmem:[%s11] sm:$0xff]
    %v289 = vld [vmem:[%s11 + $0x8] sm:$0xff]
    %v290 = vld [vmem:[%s13] sm:$0xff]
    %v291 = vld [vmem:[%s13 + $0x8] sm:$0xff]
    %v292 = vld [vmem:[%s7] sm:$0xff]
    %v293 = vld [vmem:[%s7 + $0x8] sm:$0xff]
    %v294 = vld [vmem:[%s7 + $0x10] sm:$0xff]
    %v295 = vld [vmem:[%s7 + $0x18] sm:$0xff]
    %v296 = vld [vmem:[%s7 + $0x20] sm:$0xff]
    %v297 = vld [vmem:[%s7 + $0x28] sm:$0xff]
    %v298 = vld [vmem:[%s7 + $0x30] sm:$0xff]
    %v299 = vld [vmem:[%s7 + $0x38] sm:$0xff]
    %v300 = vld [vmem:[%s23] sm:$0xff]
    %v301 = vld [vmem:[%s23 + $0x8] sm:$0xff]
    %v302 = vld [vmem:[%s23 + $0x10] sm:$0xff]
    %v303 = vld [vmem:[%s23 + $0x18] sm:$0xff]
    %v304 = vld [vmem:[%s25] sm:$0x1]
    %v306 = vlaneseq
    %v307 = vshrl.u32 %v306, 7
    %v308 = vsub.s32 0, %v307
    %v309 = vrot.slane %v304, %v308
    %vm311 = vcmask 261120
    %v313 = vsel %vm311, %v292, 0
    %v316 = vsel %vm311, %v293, 0
    %v319 = vsel %vm311, %v294, 0
    %v322 = vsel %vm311, %v295, 0
    %v325 = vsel %vm311, %v296, 0
    %v328 = vsel %vm311, %v297, 0
    %v331 = vsel %vm311, %v298, 0
    %v334 = vsel %vm311, %v299, 0
    %336 = vmatprep.subr.mxu0 0.0
    %337 = vmatpush1.msra.mxu0 0.0
    %338 = vmatprep.subr.mxu0 0.0
    %339 = vmatpush1.msra.mxu0 0.0
    %340 = vmatprep.subr.mxu0 0.0
    %341 = vmatpush1.msra.mxu0 0.0
    %342 = vmatprep.subr.mxu0 0.0
    %343 = vmatpush1.msra.mxu0 0.0
    %344 = vmatprep.subr.mxu0 0.0
    %345 = vmatpush1.msra.mxu0 0.0
    %346 = vmatprep.subr.mxu0 0.0
    %347 = vmatpush1.msra.mxu0 0.0
    %348 = vmatprep.subr.mxu0 0.0
    %349 = vmatpush1.msra.mxu0 0.0
    %350 = vmatprep.subr.mxu0 0.0
    %351 = vmatpush1.msra.mxu0 0.0
    %352 = vmatprep.subr.mxu0 0.0
    %353 = vmatpush1.msra.mxu0 0.0
    %354 = vmatprep.subr.mxu0 0.0
    %355 = vmatpush1.msra.mxu0 0.0
    %356 = vmatprep.subr.mxu0 0.0
    %357 = vmatpush1.msra.mxu0 0.0
    %358 = vmatprep.subr.mxu0 0.0
    %359 = vmatpush1.msra.mxu0 0.0
    %360 = vmatprep.subr.mxu0 0.0
    %361 = vmatpush1.msra.mxu0 %v303
    %362 = vmatprep.subr.mxu0 0.0
    %363 = vmatpush1.msra.mxu0 %v302
    %364 = vmatprep.subr.mxu0 0.0
    %365 = vmatpush1.msra.mxu0 %v301
    %366 = vmatprep.subr.mxu0 0.0
    %367 = vmatpush1.msra.mxu0 %v300
    %368 = vmatprep.subr.mxu0 0.0
    %369 = vmatpush2.msra.mxu0 0.0
    %370 = vmatprep.subr.mxu0 0.0
    %371 = vmatpush2.msra.mxu0 0.0
    %372 = vmatprep.subr.mxu0 0.0
    %373 = vmatpush2.msra.mxu0 0.0
    %374 = vmatprep.subr.mxu0 0.0
    %375 = vmatpush2.msra.mxu0 0.0
    %376 = vmatprep.subr.mxu0 0.0
    %377 = vmatpush2.msra.mxu0 0.0
    %378 = vmatprep.subr.mxu0 0.0
    %379 = vmatpush2.msra.mxu0 0.0
    %380 = vmatprep.subr.mxu0 0.0
    %381 = vmatpush2.msra.mxu0 0.0
    %382 = vmatprep.subr.mxu0 0.0
    %383 = vmatpush2.msra.mxu0 0.0
    %384 = vmatprep.subr.mxu0 0.0
    %385 = vmatpush2.msra.mxu0 0.0
    %386 = vmatprep.subr.mxu0 0.0
    %387 = vmatpush2.msra.mxu0 0.0
    %388 = vmatprep.subr.mxu0 0.0
    %389 = vmatpush2.msra.mxu0 0.0
    %390 = vmatprep.subr.mxu0 0.0
    %391 = vmatpush2.msra.mxu0 0.0
    %392 = vmatprep.subr.mxu0 0.0
    %393 = vmatpush2.msra.mxu0 0.0
    %394 = vmatprep.subr.mxu0 0.0
    %395 = vmatpush2.msra.mxu0 0.0
    %396 = vmatprep.subr.mxu0 0.0
    %397 = vmatpush2.msra.mxu0 0.0
    %398 = vmatprep.subr.mxu0 0.0
    %399 = vmatpush2.msra.mxu0 0.0
    %400 = vmatprep.mubr.f32.mxu0 0.0
    %401 = vmatmul.mubr.f32.gmra.mxu0 %v313
    %v402 = vpop.f32.mrf.mxu0
    %v403 = vadd.f32 %v309, %v402
    %v404 = vpop.f32.mrf.mxu0
    %405 = vmatprep.mubr.f32.mxu0 0.0
    %406 = vmatmul.mubr.f32.gmra.mxu0 %v316
    %v407 = vpop.f32.mrf.mxu0
    %v408 = vadd.f32 %v309, %v407
    %v409 = vpop.f32.mrf.mxu0
    %410 = vmatprep.mubr.f32.mxu0 0.0
    %411 = vmatmul.mubr.f32.gmra.mxu0 %v319
    %v412 = vpop.f32.mrf.mxu0
    %v413 = vadd.f32 %v309, %v412
    %v414 = vpop.f32.mrf.mxu0
    %415 = vmatprep.mubr.f32.mxu0 0.0
    %416 = vmatmul.mubr.f32.gmra.mxu0 %v322
    %v417 = vpop.f32.mrf.mxu0
    %v418 = vadd.f32 %v309, %v417
    %v419 = vpop.f32.mrf.mxu0
    %420 = vmatprep.mubr.f32.mxu0 0.0
    %421 = vmatmul.mubr.f32.gmra.mxu0 %v325
    %v422 = vpop.f32.mrf.mxu0
    %v423 = vadd.f32 %v309, %v422
    %v424 = vpop.f32.mrf.mxu0
    %425 = vmatprep.mubr.f32.mxu0 0.0
    %426 = vmatmul.mubr.f32.gmra.mxu0 %v328
    %v427 = vpop.f32.mrf.mxu0
    %v428 = vadd.f32 %v309, %v427
    %v429 = vpop.f32.mrf.mxu0
    %430 = vmatprep.mubr.f32.mxu0 0.0
    %431 = vmatmul.mubr.f32.gmra.mxu0 %v331
    %v432 = vpop.f32.mrf.mxu0
    %v433 = vadd.f32 %v309, %v432
    %v434 = vpop.f32.mrf.mxu0
    %435 = vmatprep.mubr.f32.mxu0 0.0
    %436 = vmatmul.mubr.f32.gmra.mxu0 %v334
    %v437 = vpop.f32.mrf.mxu0
    %v438 = vadd.f32 %v309, %v437
    %v439 = vpop.f32.mrf.mxu0
    %440 = vdwg.mxu0
    %v441 = vld [vmem:[%s9] sm:$0xff]
    %v442 = vld [vmem:[%s9 + $0x8] sm:$0xff]
    %v443 = vld [vmem:[%s9 + $0x10] sm:$0xff]
    %v444 = vld [vmem:[%s9 + $0x18] sm:$0xff]
    %v445 = vld [vmem:[%s9 + $0x20] sm:$0xff]
    %v446 = vld [vmem:[%s9 + $0x28] sm:$0xff]
    %v447 = vld [vmem:[%s9 + $0x30] sm:$0xff]
    %v448 = vld [vmem:[%s9 + $0x38] sm:$0xff]
    %v449 = vld [vmem:[%s27] sm:$0xff]
    %v450 = vld [vmem:[%s27 + $0x8] sm:$0xff]
    %v451 = vld [vmem:[%s27 + $0x10] sm:$0xff]
    %v452 = vld [vmem:[%s27 + $0x18] sm:$0xff]
    %v453 = vld [vmem:[%s29] sm:$0x1]
    %v455 = vlaneseq
    %v456 = vshrl.u32 %v455, 7
    %v457 = vsub.s32 0, %v456
    %v458 = vrot.slane %v453, %v457
    %v461 = vsel %vm311, %v441, 0
    %v464 = vsel %vm311, %v442, 0
    %v467 = vsel %vm311, %v443, 0
    %v470 = vsel %vm311, %v444, 0
    %v473 = vsel %vm311, %v445, 0
    %v476 = vsel %vm311, %v446, 0
    %v479 = vsel %vm311, %v447, 0
    %v482 = vsel %vm311, %v448, 0
    %484 = vmatprep.subr.mxu0 0.0
    %485 = vmatpush1.msra.mxu0 0.0
    %486 = vmatprep.subr.mxu0 0.0
    %487 = vmatpush1.msra.mxu0 0.0
    %488 = vmatprep.subr.mxu0 0.0
    %489 = vmatpush1.msra.mxu0 0.0
    %490 = vmatprep.subr.mxu0 0.0
    %491 = vmatpush1.msra.mxu0 0.0
    %492 = vmatprep.subr.mxu0 0.0
    %493 = vmatpush1.msra.mxu0 0.0
    %494 = vmatprep.subr.mxu0 0.0
    %495 = vmatpush1.msra.mxu0 0.0
    %496 = vmatprep.subr.mxu0 0.0
    %497 = vmatpush1.msra.mxu0 0.0
    %498 = vmatprep.subr.mxu0 0.0
    %499 = vmatpush1.msra.mxu0 0.0
    %500 = vmatprep.subr.mxu0 0.0
    %501 = vmatpush1.msra.mxu0 0.0
    %502 = vmatprep.subr.mxu0 0.0
    %503 = vmatpush1.msra.mxu0 0.0
    %504 = vmatprep.subr.mxu0 0.0
    %505 = vmatpush1.msra.mxu0 0.0
    %506 = vmatprep.subr.mxu0 0.0
    %507 = vmatpush1.msra.mxu0 0.0
    %508 = vmatprep.subr.mxu0 0.0
    %509 = vmatpush1.msra.mxu0 %v452
    %510 = vmatprep.subr.mxu0 0.0
    %511 = vmatpush1.msra.mxu0 %v451
    %512 = vmatprep.subr.mxu0 0.0
    %513 = vmatpush1.msra.mxu0 %v450
    %514 = vmatprep.subr.mxu0 0.0
    %515 = vmatpush1.msra.mxu0 %v449
    %516 = vmatprep.subr.mxu0 0.0
    %517 = vmatpush2.msra.mxu0 0.0
    %518 = vmatprep.subr.mxu0 0.0
    %519 = vmatpush2.msra.mxu0 0.0
    %520 = vmatprep.subr.mxu0 0.0
    %521 = vmatpush2.msra.mxu0 0.0
    %522 = vmatprep.subr.mxu0 0.0
    %523 = vmatpush2.msra.mxu0 0.0
    %524 = vmatprep.subr.mxu0 0.0
    %525 = vmatpush2.msra.mxu0 0.0
    %526 = vmatprep.subr.mxu0 0.0
    %527 = vmatpush2.msra.mxu0 0.0
    %528 = vmatprep.subr.mxu0 0.0
    %529 = vmatpush2.msra.mxu0 0.0
    %530 = vmatprep.subr.mxu0 0.0
    %531 = vmatpush2.msra.mxu0 0.0
    %532 = vmatprep.subr.mxu0 0.0
    %533 = vmatpush2.msra.mxu0 0.0
    %534 = vmatprep.subr.mxu0 0.0
    %535 = vmatpush2.msra.mxu0 0.0
    %536 = vmatprep.subr.mxu0 0.0
    %537 = vmatpush2.msra.mxu0 0.0
    %538 = vmatprep.subr.mxu0 0.0
    %539 = vmatpush2.msra.mxu0 0.0
    %540 = vmatprep.subr.mxu0 0.0
    %541 = vmatpush2.msra.mxu0 0.0
    %542 = vmatprep.subr.mxu0 0.0
    %543 = vmatpush2.msra.mxu0 0.0
    %544 = vmatprep.subr.mxu0 0.0
    %545 = vmatpush2.msra.mxu0 0.0
    %546 = vmatprep.subr.mxu0 0.0
    %547 = vmatpush2.msra.mxu0 0.0
    %548 = vmatprep.mubr.f32.mxu0 0.0
    %549 = vmatmul.mubr.f32.gmra.mxu0 %v461
    %v550 = vpop.f32.mrf.mxu0
    %v551 = vadd.f32 %v458, %v550
    %v552 = vpop.f32.mrf.mxu0
    %553 = vmatprep.mubr.f32.mxu0 0.0
    %554 = vmatmul.mubr.f32.gmra.mxu0 %v464
    %v555 = vpop.f32.mrf.mxu0
    %v556 = vadd.f32 %v458, %v555
    %v557 = vpop.f32.mrf.mxu0
    %558 = vmatprep.mubr.f32.mxu0 0.0
    %559 = vmatmul.mubr.f32.gmra.mxu0 %v467
    %v560 = vpop.f32.mrf.mxu0
    %v561 = vadd.f32 %v458, %v560
    %v562 = vpop.f32.mrf.mxu0
    %563 = vmatprep.mubr.f32.mxu0 0.0
    %564 = vmatmul.mubr.f32.gmra.mxu0 %v470
    %v565 = vpop.f32.mrf.mxu0
    %v566 = vadd.f32 %v458, %v565
    %v567 = vpop.f32.mrf.mxu0
    %568 = vmatprep.mubr.f32.mxu0 0.0
    %569 = vmatmul.mubr.f32.gmra.mxu0 %v473
    %v570 = vpop.f32.mrf.mxu0
    %v571 = vadd.f32 %v458, %v570
    %v572 = vpop.f32.mrf.mxu0
    %573 = vmatprep.mubr.f32.mxu0 0.0
    %574 = vmatmul.mubr.f32.gmra.mxu0 %v476
    %v575 = vpop.f32.mrf.mxu0
    %v576 = vadd.f32 %v458, %v575
    %v577 = vpop.f32.mrf.mxu0
    %578 = vmatprep.mubr.f32.mxu0 0.0
    %579 = vmatmul.mubr.f32.gmra.mxu0 %v479
    %v580 = vpop.f32.mrf.mxu0
    %v581 = vadd.f32 %v458, %v580
    %v582 = vpop.f32.mrf.mxu0
    %583 = vmatprep.mubr.f32.mxu0 0.0
    %584 = vmatmul.mubr.f32.gmra.mxu0 %v482
    %v585 = vpop.f32.mrf.mxu0
    %v586 = vadd.f32 %v458, %v585
    %v587 = vpop.f32.mrf.mxu0
    %588 = vdwg.mxu0
    %v589 = vld [vmem:[%s3] sm:$0xff]
    %v590 = vld [vmem:[%s3 + $0x8] sm:$0xff]
    %v591 = vld [vmem:[%s31] sm:$0xff]
    %v592 = vld [vmem:[%s31 + $0x8] sm:$0xff]
    %v593 = vld [vmem:[%s31 + $0x10] sm:$0xff]
    %v594 = vld [vmem:[%s31 + $0x18] sm:$0xff]
    %v595 = vld [vmem:[%s33] sm:$0x1]
    %v597 = vlaneseq
    %v598 = vshrl.u32 %v597, 7
    %v599 = vsub.s32 0, %v598
    %v600 = vrot.slane %v595, %v599
    %v603 = vsel %vm311, %v589, 0
    %v606 = vsel %vm311, %v590, 0
    %608 = vmatprep.subr.mxu0 0.0
    %609 = vmatpush1.msra.mxu0 0.0
    %610 = vmatprep.subr.mxu0 0.0
    %611 = vmatpush1.msra.mxu0 0.0
    %612 = vmatprep.subr.mxu0 0.0
    %613 = vmatpush1.msra.mxu0 0.0
    %614 = vmatprep.subr.mxu0 0.0
    %615 = vmatpush1.msra.mxu0 0.0
    %616 = vmatprep.subr.mxu0 0.0
    %617 = vmatpush1.msra.mxu0 0.0
    %618 = vmatprep.subr.mxu0 0.0
    %619 = vmatpush1.msra.mxu0 0.0
    %620 = vmatprep.subr.mxu0 0.0
    %621 = vmatpush1.msra.mxu0 0.0
    %622 = vmatprep.subr.mxu0 0.0
    %623 = vmatpush1.msra.mxu0 0.0
    %624 = vmatprep.subr.mxu0 0.0
    %625 = vmatpush1.msra.mxu0 0.0
    %626 = vmatprep.subr.mxu0 0.0
    %627 = vmatpush1.msra.mxu0 0.0
    %628 = vmatprep.subr.mxu0 0.0
    %629 = vmatpush1.msra.mxu0 0.0
    %630 = vmatprep.subr.mxu0 0.0
    %631 = vmatpush1.msra.mxu0 0.0
    %632 = vmatprep.subr.mxu0 0.0
    %633 = vmatpush1.msra.mxu0 %v594
    %634 = vmatprep.subr.mxu0 0.0
    %635 = vmatpush1.msra.mxu0 %v593
    %636 = vmatprep.subr.mxu0 0.0
    %637 = vmatpush1.msra.mxu0 %v592
    %638 = vmatprep.subr.mxu0 0.0
    %639 = vmatpush1.msra.mxu0 %v591
    %640 = vmatprep.subr.mxu0 0.0
    %641 = vmatpush2.msra.mxu0 0.0
    %642 = vmatprep.subr.mxu0 0.0
    %643 = vmatpush2.msra.mxu0 0.0
    %644 = vmatprep.subr.mxu0 0.0
    %645 = vmatpush2.msra.mxu0 0.0
    %646 = vmatprep.subr.mxu0 0.0
    %647 = vmatpush2.msra.mxu0 0.0
    %648 = vmatprep.subr.mxu0 0.0
    %649 = vmatpush2.msra.mxu0 0.0
    %650 = vmatprep.subr.mxu0 0.0
    %651 = vmatpush2.msra.mxu0 0.0
    %652 = vmatprep.subr.mxu0 0.0
    %653 = vmatpush2.msra.mxu0 0.0
    %654 = vmatprep.subr.mxu0 0.0
    %655 = vmatpush2.msra.mxu0 0.0
    %656 = vmatprep.subr.mxu0 0.0
    %657 = vmatpush2.msra.mxu0 0.0
    %658 = vmatprep.subr.mxu0 0.0
    %659 = vmatpush2.msra.mxu0 0.0
    %660 = vmatprep.subr.mxu0 0.0
    %661 = vmatpush2.msra.mxu0 0.0
    %662 = vmatprep.subr.mxu0 0.0
    %663 = vmatpush2.msra.mxu0 0.0
    %664 = vmatprep.subr.mxu0 0.0
    %665 = vmatpush2.msra.mxu0 0.0
    %666 = vmatprep.subr.mxu0 0.0
    %667 = vmatpush2.msra.mxu0 0.0
    %668 = vmatprep.subr.mxu0 0.0
    %669 = vmatpush2.msra.mxu0 0.0
    %670 = vmatprep.subr.mxu0 0.0
    %671 = vmatpush2.msra.mxu0 0.0
    %672 = vmatprep.mubr.f32.mxu0 0.0
    %673 = vmatmul.mubr.f32.gmra.mxu0 %v603
    %v674 = vpop.f32.mrf.mxu0
    %v675 = vadd.f32 %v600, %v674
    %v676 = vpop.f32.mrf.mxu0
    %677 = vmatprep.mubr.f32.mxu0 0.0
    %678 = vmatmul.mubr.f32.gmra.mxu0 %v606
    %v679 = vpop.f32.mrf.mxu0
    %v680 = vadd.f32 %v600, %v679
    %v681 = vpop.f32.mrf.mxu0
    %682 = vdwg.mxu0
    %v683 = vld [vmem:[%s15] sm:$0xff]
    %v684 = vld [vmem:[%s15 + $0x8] sm:$0xff]
    %v685 = vld [vmem:[%s35] sm:$0xff]
    %v686 = vld [vmem:[%s35 + $0x8] sm:$0xff]
    %v687 = vld [vmem:[%s35 + $0x10] sm:$0xff]
    %v688 = vld [vmem:[%s35 + $0x18] sm:$0xff]
    %v689 = vld [vmem:[%s37] sm:$0x1]
    %v691 = vlaneseq
    %v692 = vshrl.u32 %v691, 7
    %v693 = vsub.s32 0, %v692
    %v694 = vrot.slane %v689, %v693
    %v697 = vsel %vm311, %v683, 0
    %v700 = vsel %vm311, %v684, 0
    %702 = vmatprep.subr.mxu0 0.0
    %703 = vmatpush1.msra.mxu0 0.0
    %704 = vmatprep.subr.mxu0 0.0
    %705 = vmatpush1.msra.mxu0 0.0
    %706 = vmatprep.subr.mxu0 0.0
    %707 = vmatpush1.msra.mxu0 0.0
    %708 = vmatprep.subr.mxu0 0.0
    %709 = vmatpush1.msra.mxu0 0.0
    %710 = vmatprep.subr.mxu0 0.0
    %711 = vmatpush1.msra.mxu0 0.0
    %712 = vmatprep.subr.mxu0 0.0
    %713 = vmatpush1.msra.mxu0 0.0
    %714 = vmatprep.subr.mxu0 0.0
    %715 = vmatpush1.msra.mxu0 0.0
    %716 = vmatprep.subr.mxu0 0.0
    %717 = vmatpush1.msra.mxu0 0.0
    %718 = vmatprep.subr.mxu0 0.0
    %719 = vmatpush1.msra.mxu0 0.0
    %720 = vmatprep.subr.mxu0 0.0
    %721 = vmatpush1.msra.mxu0 0.0
    %722 = vmatprep.subr.mxu0 0.0
    %723 = vmatpush1.msra.mxu0 0.0
    %724 = vmatprep.subr.mxu0 0.0
    %725 = vmatpush1.msra.mxu0 0.0
    %726 = vmatprep.subr.mxu0 0.0
    %727 = vmatpush1.msra.mxu0 %v688
    %728 = vmatprep.subr.mxu0 0.0
    %729 = vmatpush1.msra.mxu0 %v687
    %730 = vmatprep.subr.mxu0 0.0
    %731 = vmatpush1.msra.mxu0 %v686
    %732 = vmatprep.subr.mxu0 0.0
    %733 = vmatpush1.msra.mxu0 %v685
    %734 = vmatprep.subr.mxu0 0.0
    %735 = vmatpush2.msra.mxu0 0.0
    %736 = vmatprep.subr.mxu0 0.0
    %737 = vmatpush2.msra.mxu0 0.0
    %738 = vmatprep.subr.mxu0 0.0
    %739 = vmatpush2.msra.mxu0 0.0
    %740 = vmatprep.subr.mxu0 0.0
    %741 = vmatpush2.msra.mxu0 0.0
    %742 = vmatprep.subr.mxu0 0.0
    %743 = vmatpush2.msra.mxu0 0.0
    %744 = vmatprep.subr.mxu0 0.0
    %745 = vmatpush2.msra.mxu0 0.0
    %746 = vmatprep.subr.mxu0 0.0
    %747 = vmatpush2.msra.mxu0 0.0
    %748 = vmatprep.subr.mxu0 0.0
    %749 = vmatpush2.msra.mxu0 0.0
    %750 = vmatprep.subr.mxu0 0.0
    %751 = vmatpush2.msra.mxu0 0.0
    %752 = vmatprep.subr.mxu0 0.0
    %753 = vmatpush2.msra.mxu0 0.0
    %754 = vmatprep.subr.mxu0 0.0
    %755 = vmatpush2.msra.mxu0 0.0
    %756 = vmatprep.subr.mxu0 0.0
    %757 = vmatpush2.msra.mxu0 0.0
    %758 = vmatprep.subr.mxu0 0.0
    %759 = vmatpush2.msra.mxu0 0.0
    %760 = vmatprep.subr.mxu0 0.0
    %761 = vmatpush2.msra.mxu0 0.0
    %762 = vmatprep.subr.mxu0 0.0
    %763 = vmatpush2.msra.mxu0 0.0
    %764 = vmatprep.subr.mxu0 0.0
    %765 = vmatpush2.msra.mxu0 0.0
    %766 = vmatprep.mubr.f32.mxu0 0.0
    %767 = vmatmul.mubr.f32.gmra.mxu0 %v697
    %v768 = vpop.f32.mrf.mxu0
    %v769 = vadd.f32 %v694, %v768
    %v770 = vpop.f32.mrf.mxu0
    %771 = vmatprep.mubr.f32.mxu0 0.0
    %772 = vmatmul.mubr.f32.gmra.mxu0 %v700
    %v773 = vpop.f32.mrf.mxu0
    %v774 = vadd.f32 %v694, %v773
    %v775 = vpop.f32.mrf.mxu0
    %776 = vdwg.mxu0
    %v777 = vld [vmem:[%s39] sm:$0xff]
    %v778 = vld [vmem:[%s39 + $0x8] sm:$0xff]
    %v779 = vld [vmem:[%s39 + $0x10] sm:$0xff]
    %v780 = vld [vmem:[%s39 + $0x18] sm:$0xff]
    %v781 = vld [vmem:[%s41] sm:$0x1]
    %v783 = vlaneseq
    %v784 = vshrl.u32 %v783, 7
    %v785 = vsub.s32 0, %v784
    %v786 = vrot.slane %v781, %v785
    %v789 = vsel %vm311, %v286, 0
    %v792 = vsel %vm311, %v287, 0
    %794 = vmatprep.subr.mxu0 0.0
    %795 = vmatpush1.msra.mxu0 0.0
    %796 = vmatprep.subr.mxu0 0.0
    %797 = vmatpush1.msra.mxu0 0.0
    %798 = vmatprep.subr.mxu0 0.0
    %799 = vmatpush1.msra.mxu0 0.0
    %800 = vmatprep.subr.mxu0 0.0
    %801 = vmatpush1.msra.mxu0 0.0
    %802 = vmatprep.subr.mxu0 0.0
    %803 = vmatpush1.msra.mxu0 0.0
    %804 = vmatprep.subr.mxu0 0.0
    %805 = vmatpush1.msra.mxu0 0.0
    %806 = vmatprep.subr.mxu0 0.0
    %807 = vmatpush1.msra.mxu0 0.0
    %808 = vmatprep.subr.mxu0 0.0
    %809 = vmatpush1.msra.mxu0 0.0
    %810 = vmatprep.subr.mxu0 0.0
    %811 = vmatpush1.msra.mxu0 0.0
    %812 = vmatprep.subr.mxu0 0.0
    %813 = vmatpush1.msra.mxu0 0.0
    %814 = vmatprep.subr.mxu0 0.0
    %815 = vmatpush1.msra.mxu0 0.0
    %816 = vmatprep.subr.mxu0 0.0
    %817 = vmatpush1.msra.mxu0 0.0
    %818 = vmatprep.subr.mxu0 0.0
    %819 = vmatpush1.msra.mxu0 %v780
    %820 = vmatprep.subr.mxu0 0.0
    %821 = vmatpush1.msra.mxu0 %v779
    %822 = vmatprep.subr.mxu0 0.0
    %823 = vmatpush1.msra.mxu0 %v778
    %824 = vmatprep.subr.mxu0 0.0
    %825 = vmatpush1.msra.mxu0 %v777
    %826 = vmatprep.subr.mxu0 0.0
    %827 = vmatpush2.msra.mxu0 0.0
    %828 = vmatprep.subr.mxu0 0.0
    %829 = vmatpush2.msra.mxu0 0.0
    %830 = vmatprep.subr.mxu0 0.0
    %831 = vmatpush2.msra.mxu0 0.0
    %832 = vmatprep.subr.mxu0 0.0
    %833 = vmatpush2.msra.mxu0 0.0
    %834 = vmatprep.subr.mxu0 0.0
    %835 = vmatpush2.msra.mxu0 0.0
    %836 = vmatprep.subr.mxu0 0.0
    %837 = vmatpush2.msra.mxu0 0.0
    %838 = vmatprep.subr.mxu0 0.0
    %839 = vmatpush2.msra.mxu0 0.0
    %840 = vmatprep.subr.mxu0 0.0
    %841 = vmatpush2.msra.mxu0 0.0
    %842 = vmatprep.subr.mxu0 0.0
    %843 = vmatpush2.msra.mxu0 0.0
    %844 = vmatprep.subr.mxu0 0.0
    %845 = vmatpush2.msra.mxu0 0.0
    %846 = vmatprep.subr.mxu0 0.0
    %847 = vmatpush2.msra.mxu0 0.0
    %848 = vmatprep.subr.mxu0 0.0
    %849 = vmatpush2.msra.mxu0 0.0
    %850 = vmatprep.subr.mxu0 0.0
    %851 = vmatpush2.msra.mxu0 0.0
    %852 = vmatprep.subr.mxu0 0.0
    %853 = vmatpush2.msra.mxu0 0.0
    %854 = vmatprep.subr.mxu0 0.0
    %855 = vmatpush2.msra.mxu0 0.0
    %856 = vmatprep.subr.mxu0 0.0
    %857 = vmatpush2.msra.mxu0 0.0
    %858 = vmatprep.mubr.f32.mxu0 0.0
    %859 = vmatmul.mubr.f32.gmra.mxu0 %v789
    %v860 = vpop.f32.mrf.mxu0
    %v861 = vadd.f32 %v786, %v860
    %v862 = vpop.f32.mrf.mxu0
    %863 = vmatprep.mubr.f32.mxu0 0.0
    %864 = vmatmul.mubr.f32.gmra.mxu0 %v792
    %v865 = vpop.f32.mrf.mxu0
    %v866 = vadd.f32 %v786, %v865
    %v867 = vpop.f32.mrf.mxu0
    %868 = vdwg.mxu0
    %v869 = vld [vmem:[%s43] sm:$0xff]
    %v870 = vld [vmem:[%s43 + $0x8] sm:$0xff]
    %v871 = vld [vmem:[%s43 + $0x10] sm:$0xff]
    %v872 = vld [vmem:[%s43 + $0x18] sm:$0xff]
    %v873 = vld [vmem:[%s45] sm:$0x1]
    %v875 = vlaneseq
    %v876 = vshrl.u32 %v875, 7
    %v877 = vsub.s32 0, %v876
    %v878 = vrot.slane %v873, %v877
    %v881 = vsel %vm311, %v288, 0
    %v884 = vsel %vm311, %v289, 0
    %886 = vmatprep.subr.mxu0 0.0
    %887 = vmatpush1.msra.mxu0 0.0
    %888 = vmatprep.subr.mxu0 0.0
    %889 = vmatpush1.msra.mxu0 0.0
    %890 = vmatprep.subr.mxu0 0.0
    %891 = vmatpush1.msra.mxu0 0.0
    %892 = vmatprep.subr.mxu0 0.0
    %893 = vmatpush1.msra.mxu0 0.0
    %894 = vmatprep.subr.mxu0 0.0
    %895 = vmatpush1.msra.mxu0 0.0
    %896 = vmatprep.subr.mxu0 0.0
    %897 = vmatpush1.msra.mxu0 0.0
    %898 = vmatprep.subr.mxu0 0.0
    %899 = vmatpush1.msra.mxu0 0.0
    %900 = vmatprep.subr.mxu0 0.0
    %901 = vmatpush1.msra.mxu0 0.0
    %902 = vmatprep.subr.mxu0 0.0
    %903 = vmatpush1.msra.mxu0 0.0
    %904 = vmatprep.subr.mxu0 0.0
    %905 = vmatpush1.msra.mxu0 0.0
    %906 = vmatprep.subr.mxu0 0.0
    %907 = vmatpush1.msra.mxu0 0.0
    %908 = vmatprep.subr.mxu0 0.0
    %909 = vmatpush1.msra.mxu0 0.0
    %910 = vmatprep.subr.mxu0 0.0
    %911 = vmatpush1.msra.mxu0 %v872
    %912 = vmatprep.subr.mxu0 0.0
    %913 = vmatpush1.msra.mxu0 %v871
    %914 = vmatprep.subr.mxu0 0.0
    %915 = vmatpush1.msra.mxu0 %v870
    %916 = vmatprep.subr.mxu0 0.0
    %917 = vmatpush1.msra.mxu0 %v869
    %918 = vmatprep.subr.mxu0 0.0
    %919 = vmatpush2.msra.mxu0 0.0
    %920 = vmatprep.subr.mxu0 0.0
    %921 = vmatpush2.msra.mxu0 0.0
    %922 = vmatprep.subr.mxu0 0.0
    %923 = vmatpush2.msra.mxu0 0.0
    %924 = vmatprep.subr.mxu0 0.0
    %925 = vmatpush2.msra.mxu0 0.0
    %926 = vmatprep.subr.mxu0 0.0
    %927 = vmatpush2.msra.mxu0 0.0
    %928 = vmatprep.subr.mxu0 0.0
    %929 = vmatpush2.msra.mxu0 0.0
    %930 = vmatprep.subr.mxu0 0.0
    %931 = vmatpush2.msra.mxu0 0.0
    %932 = vmatprep.subr.mxu0 0.0
    %933 = vmatpush2.msra.mxu0 0.0
    %934 = vmatprep.subr.mxu0 0.0
    %935 = vmatpush2.msra.mxu0 0.0
    %936 = vmatprep.subr.mxu0 0.0
    %937 = vmatpush2.msra.mxu0 0.0
    %938 = vmatprep.subr.mxu0 0.0
    %939 = vmatpush2.msra.mxu0 0.0
    %940 = vmatprep.subr.mxu0 0.0
    %941 = vmatpush2.msra.mxu0 0.0
    %942 = vmatprep.subr.mxu0 0.0
    %943 = vmatpush2.msra.mxu0 0.0
    %944 = vmatprep.subr.mxu0 0.0
    %945 = vmatpush2.msra.mxu0 0.0
    %946 = vmatprep.subr.mxu0 0.0
    %947 = vmatpush2.msra.mxu0 0.0
    %948 = vmatprep.subr.mxu0 0.0
    %949 = vmatpush2.msra.mxu0 0.0
    %950 = vmatprep.mubr.f32.mxu0 0.0
    %951 = vmatmul.mubr.f32.gmra.mxu0 %v881
    %v952 = vpop.f32.mrf.mxu0
    %v953 = vadd.f32 %v878, %v952
    %v954 = vpop.f32.mrf.mxu0
    %955 = vmatprep.mubr.f32.mxu0 0.0
    %956 = vmatmul.mubr.f32.gmra.mxu0 %v884
    %v957 = vpop.f32.mrf.mxu0
    %v958 = vadd.f32 %v878, %v957
    %v959 = vpop.f32.mrf.mxu0
    %960 = vdwg.mxu0
    %v961 = vld [vmem:[%s47] sm:$0xff]
    %v962 = vld [vmem:[%s47 + $0x8] sm:$0xff]
    %v963 = vld [vmem:[%s47 + $0x10] sm:$0xff]
    %v964 = vld [vmem:[%s47 + $0x18] sm:$0xff]
    %v965 = vld [vmem:[%s49] sm:$0x1]
    %v967 = vlaneseq
    %v968 = vshrl.u32 %v967, 7
    %v969 = vsub.s32 0, %v968
    %v970 = vrot.slane %v965, %v969
    %v973 = vsel %vm311, %v290, 0
    %v976 = vsel %vm311, %v291, 0
    %978 = vmatprep.subr.mxu0 0.0
    %979 = vmatpush1.msra.mxu0 0.0
    %980 = vmatprep.subr.mxu0 0.0
    %981 = vmatpush1.msra.mxu0 0.0
    %982 = vmatprep.subr.mxu0 0.0
    %983 = vmatpush1.msra.mxu0 0.0
    %984 = vmatprep.subr.mxu0 0.0
    %985 = vmatpush1.msra.mxu0 0.0
    %986 = vmatprep.subr.mxu0 0.0
    %987 = vmatpush1.msra.mxu0 0.0
    %988 = vmatprep.subr.mxu0 0.0
    %989 = vmatpush1.msra.mxu0 0.0
    %990 = vmatprep.subr.mxu0 0.0
    %991 = vmatpush1.msra.mxu0 0.0
    %992 = vmatprep.subr.mxu0 0.0
    %993 = vmatpush1.msra.mxu0 0.0
    %994 = vmatprep.subr.mxu0 0.0
    %995 = vmatpush1.msra.mxu0 0.0
    %996 = vmatprep.subr.mxu0 0.0
    %997 = vmatpush1.msra.mxu0 0.0
    %998 = vmatprep.subr.mxu0 0.0
    %999 = vmatpush1.msra.mxu0 0.0
    %1000 = vmatprep.subr.mxu0 0.0
    %1001 = vmatpush1.msra.mxu0 0.0
    %1002 = vmatprep.subr.mxu0 0.0
    %1003 = vmatpush1.msra.mxu0 %v964
    %1004 = vmatprep.subr.mxu0 0.0
    %1005 = vmatpush1.msra.mxu0 %v963
    %1006 = vmatprep.subr.mxu0 0.0
    %1007 = vmatpush1.msra.mxu0 %v962
    %1008 = vmatprep.subr.mxu0 0.0
    %1009 = vmatpush1.msra.mxu0 %v961
    %1010 = vmatprep.subr.mxu0 0.0
    %1011 = vmatpush2.msra.mxu0 0.0
    %1012 = vmatprep.subr.mxu0 0.0
    %1013 = vmatpush2.msra.mxu0 0.0
    %1014 = vmatprep.subr.mxu0 0.0
    %1015 = vmatpush2.msra.mxu0 0.0
    %1016 = vmatprep.subr.mxu0 0.0
    %1017 = vmatpush2.msra.mxu0 0.0
    %1018 = vmatprep.subr.mxu0 0.0
    %1019 = vmatpush2.msra.mxu0 0.0
    %1020 = vmatprep.subr.mxu0 0.0
    %1021 = vmatpush2.msra.mxu0 0.0
    %1022 = vmatprep.subr.mxu0 0.0
    %1023 = vmatpush2.msra.mxu0 0.0
    %1024 = vmatprep.subr.mxu0 0.0
    %1025 = vmatpush2.msra.mxu0 0.0
    %1026 = vmatprep.subr.mxu0 0.0
    %1027 = vmatpush2.msra.mxu0 0.0
    %1028 = vmatprep.subr.mxu0 0.0
    %1029 = vmatpush2.msra.mxu0 0.0
    %1030 = vmatprep.subr.mxu0 0.0
    %1031 = vmatpush2.msra.mxu0 0.0
    %1032 = vmatprep.subr.mxu0 0.0
    %1033 = vmatpush2.msra.mxu0 0.0
    %1034 = vmatprep.subr.mxu0 0.0
    %1035 = vmatpush2.msra.mxu0 0.0
    %1036 = vmatprep.subr.mxu0 0.0
    %1037 = vmatpush2.msra.mxu0 0.0
    %1038 = vmatprep.subr.mxu0 0.0
    %1039 = vmatpush2.msra.mxu0 0.0
    %1040 = vmatprep.subr.mxu0 0.0
    %1041 = vmatpush2.msra.mxu0 0.0
    %1042 = vmatprep.mubr.f32.mxu0 0.0
    %1043 = vmatmul.mubr.f32.gmra.mxu0 %v973
    %v1044 = vpop.f32.mrf.mxu0
    %v1045 = vadd.f32 %v970, %v1044
    %v1046 = vpop.f32.mrf.mxu0
    %1047 = vmatprep.mubr.f32.mxu0 0.0
    %1048 = vmatmul.mubr.f32.gmra.mxu0 %v976
    %v1049 = vpop.f32.mrf.mxu0
    %v1050 = vadd.f32 %v970, %v1049
    %v1051 = vpop.f32.mrf.mxu0
    %1052 = vdwg.mxu0
    %v1053 = vadd.f32 %v861, %v953
    %v1054 = vadd.f32 %v866, %v958
    %v1055 = vadd.f32 %v403, %v551
    %v1056 = vadd.f32 %v408, %v556
    %v1057 = vadd.f32 %v413, %v561
    %v1058 = vadd.f32 %v418, %v566
    %v1059 = vadd.f32 %v423, %v571
    %v1060 = vadd.f32 %v428, %v576
    %v1061 = vadd.f32 %v433, %v581
    %v1062 = vadd.f32 %v438, %v586
    %v1063 = vadd.f32 %v675, %v769
    %v1064 = vadd.f32 %v680, %v774
    %v1065 = vld [vmem:[%s17] sm:$0xff]
    %v1066 = vld [vmem:[%s17 + $0x8] sm:$0xff]
    %1069 = vrot.lane.b32.xlu0 %v1045, 8
    %v1070 = vpop.permute.xlu0 %1069
    %1071 = vrot.lane.b32.xlu0 %v1050, 8
    %v1072 = vpop.permute.xlu0 %1071
    %vm1075 = vcmask 64512
    %v1076 = vsel %vm1075, %v1053, %v1070
    %v1077 = vsel %vm1075, %v1054, %v1072
    %1086 = vrot.lane.b32.xlu0 %v551, 8
    %v1087 = vpop.permute.xlu0 %1086
    %1088 = vrot.lane.b32.xlu0 %v556, 8
    %v1089 = vpop.permute.xlu0 %1088
    %1090 = vrot.lane.b32.xlu0 %v561, 8
    %v1091 = vpop.permute.xlu0 %1090
    %1092 = vrot.lane.b32.xlu0 %v566, 8
    %v1093 = vpop.permute.xlu0 %1092
    %1094 = vrot.lane.b32.xlu0 %v571, 8
    %v1095 = vpop.permute.xlu0 %1094
    %1096 = vrot.lane.b32.xlu0 %v576, 8
    %v1097 = vpop.permute.xlu0 %1096
    %1098 = vrot.lane.b32.xlu0 %v581, 8
    %v1099 = vpop.permute.xlu0 %1098
    %1100 = vrot.lane.b32.xlu0 %v586, 8
    %v1101 = vpop.permute.xlu0 %1100
    %v1110 = vsel %vm1075, %v1055, %v1087
    %v1111 = vsel %vm1075, %v1056, %v1089
    %v1112 = vsel %vm1075, %v1057, %v1091
    %v1113 = vsel %vm1075, %v1058, %v1093
    %v1114 = vsel %vm1075, %v1059, %v1095
    %v1115 = vsel %vm1075, %v1060, %v1097
    %v1116 = vsel %vm1075, %v1061, %v1099
    %v1117 = vsel %vm1075, %v1062, %v1101
    %v1118 = vmul.f32 %v1076, 0.25
    %v1119 = vmul.f32 %v1077, 0.25
    %vm1120 = vcmask 130048
    %v1122 = vsel %vm1120, %v1118, 0
    %v1125 = vsel %vm1120, %v1119, 0
    %v1128 = vsel %vm1120, %v1110, 0
    %v1131 = vsel %vm1120, %v1111, 0
    %v1134 = vsel %vm1120, %v1112, 0
    %v1137 = vsel %vm1120, %v1113, 0
    %v1140 = vsel %vm1120, %v1114, 0
    %v1143 = vsel %vm1120, %v1115, 0
    %v1146 = vsel %vm1120, %v1116, 0
    %v1149 = vsel %vm1120, %v1117, 0
    %1151 = vmatprep.subr.mxu0 0.0
    %1152 = vmatpush1.xpose.msra.mxu0 0.0
    %1153 = vmatprep.subr.mxu0 0.0
    %1154 = vmatpush1.xpose.msra.mxu0 0.0
    %1155 = vmatprep.subr.mxu0 0.0
    %1156 = vmatpush1.xpose.msra.mxu0 0.0
    %1157 = vmatprep.subr.mxu0 0.0
    %1158 = vmatpush1.xpose.msra.mxu0 0.0
    %1159 = vmatprep.subr.mxu0 0.0
    %1160 = vmatpush1.xpose.msra.mxu0 0.0
    %1161 = vmatprep.subr.mxu0 0.0
    %1162 = vmatpush1.xpose.msra.mxu0 0.0
    %1163 = vmatprep.subr.mxu0 0.0
    %1164 = vmatpush1.xpose.msra.mxu0 0.0
    %1165 = vmatprep.subr.mxu0 0.0
    %1166 = vmatpush1.xpose.msra.mxu0 0.0
    %1167 = vmatprep.subr.mxu0 0.0
    %1168 = vmatpush1.xpose.msra.mxu0 %v1149
    %1169 = vmatprep.subr.mxu0 0.0
    %1170 = vmatpush1.xpose.msra.mxu0 %v1146
    %1171 = vmatprep.subr.mxu0 0.0
    %1172 = vmatpush1.xpose.msra.mxu0 %v1143
    %1173 = vmatprep.subr.mxu0 0.0
    %1174 = vmatpush1.xpose.msra.mxu0 %v1140
    %1175 = vmatprep.subr.mxu0 0.0
    %1176 = vmatpush1.xpose.msra.mxu0 %v1137
    %1177 = vmatprep.subr.mxu0 0.0
    %1178 = vmatpush1.xpose.msra.mxu0 %v1134
    %1179 = vmatprep.subr.mxu0 0.0
    %1180 = vmatpush1.xpose.msra.mxu0 %v1131
    %1181 = vmatprep.subr.mxu0 0.0
    %1182 = vmatpush1.xpose.msra.mxu0 %v1128
    %1183 = vmatprep.subr.mxu0 0.0
    %1184 = vmatpush2.xpose.msra.mxu0 0.0
    %1185 = vmatprep.subr.mxu0 0.0
    %1186 = vmatpush2.xpose.msra.mxu0 0.0
    %1187 = vmatprep.subr.mxu0 0.0
    %1188 = vmatpush2.xpose.msra.mxu0 0.0
    %1189 = vmatprep.subr.mxu0 0.0
    %1190 = vmatpush2.xpose.msra.mxu0 0.0
    %1191 = vmatprep.subr.mxu0 0.0
    %1192 = vmatpush2.xpose.msra.mxu0 0.0
    %1193 = vmatprep.subr.mxu0 0.0
    %1194 = vmatpush2.xpose.msra.mxu0 0.0
    %1195 = vmatprep.subr.mxu0 0.0
    %1196 = vmatpush2.xpose.msra.mxu0 0.0
    %1197 = vmatprep.subr.mxu0 0.0
    %1198 = vmatpush2.xpose.msra.mxu0 0.0
    %1199 = vmatprep.subr.mxu0 0.0
    %1200 = vmatpush2.xpose.msra.mxu0 0.0
    %1201 = vmatprep.subr.mxu0 0.0
    %1202 = vmatpush2.xpose.msra.mxu0 0.0
    %1203 = vmatprep.subr.mxu0 0.0
    %1204 = vmatpush2.xpose.msra.mxu0 0.0
    %1205 = vmatprep.subr.mxu0 0.0
    %1206 = vmatpush2.xpose.msra.mxu0 0.0
    %1207 = vmatprep.subr.mxu0 0.0
    %1208 = vmatpush2.xpose.msra.mxu0 0.0
    %1209 = vmatprep.subr.mxu0 0.0
    %1210 = vmatpush2.xpose.msra.mxu0 0.0
    %1211 = vmatprep.subr.mxu0 0.0
    %1212 = vmatpush2.xpose.msra.mxu0 0.0
    %1213 = vmatprep.subr.mxu0 0.0
    %1214 = vmatpush2.xpose.msra.mxu0 0.0
    %1215 = vmatprep.mubr.f32.mxu0 0.0
    %1216 = vmatmul.mubr.f32.gmra.mxu0 %v1122
    %v1217 = vpop.f32.mrf.mxu0
    %v1218 = vadd.f32 %v1065, %v1217
    %v1219 = vpop.f32.mrf.mxu0
    %1220 = vmatprep.mubr.f32.mxu0 0.0
    %1221 = vmatmul.mubr.f32.gmra.mxu0 %v1125
    %v1222 = vpop.f32.mrf.mxu0
    %v1223 = vadd.f32 %v1066, %v1222
    %v1224 = vpop.f32.mrf.mxu0
    %1225 = vdwg.mxu0
    %vm1226 = vcmask 523264
    %v1227 = vsel %vm1226, %v1218, -inf
    %1228 = vmax.xlane.f32.xlu0 %v1227
    %v1229 = vpop.xlane.xlu0 %1228
    %v1230 = vsel %vm1226, %v1223, -inf
    %1231 = vmax.xlane.f32.xlu0 %v1230
    %v1232 = vpop.xlane.xlu0 %1231
    %v1233 = vsub.f32 %v1218, %v1229
    %v1234 = vsub.f32 %v1223, %v1232
    %v1235 = vmul.f32 %v1233, 1.442695
    %v1236 = vpow.pop %v1235
    %v1237 = vmul.f32 %v1234, 1.442695
    %v1238 = vpow.pop %v1237
    %v1239 = vsel %vm1226, %v1236, 0.0
    %1240 = vadd.xlane.f32.xlu0 %v1239
    %v1241 = vpop.xlane.xlu0 %1240
    %v1242 = vsel %vm1226, %v1238, 0.0
    %1243 = vadd.xlane.f32.xlu0 %v1242
    %v1244 = vpop.xlane.xlu0 %1243
    %v1245 = vrcp.pop %v1241
    %v1246 = vrcp.pop %v1244
    %v1247 = vmul.f32 %v1236, %v1245
    %v1248 = vmul.f32 %v1238, %v1246
    %1257 = vrot.lane.b32.xlu0 %v403, 96
    %v1258 = vpop.permute.xlu0 %1257
    %1259 = vrot.lane.b32.xlu0 %v408, 96
    %v1260 = vpop.permute.xlu0 %1259
    %1261 = vrot.lane.b32.xlu0 %v413, 96
    %v1262 = vpop.permute.xlu0 %1261
    %1263 = vrot.lane.b32.xlu0 %v418, 96
    %v1264 = vpop.permute.xlu0 %1263
    %1265 = vrot.lane.b32.xlu0 %v423, 96
    %v1266 = vpop.permute.xlu0 %1265
    %1267 = vrot.lane.b32.xlu0 %v428, 96
    %v1268 = vpop.permute.xlu0 %1267
    %1269 = vrot.lane.b32.xlu0 %v433, 96
    %v1270 = vpop.permute.xlu0 %1269
    %1271 = vrot.lane.b32.xlu0 %v438, 96
    %v1272 = vpop.permute.xlu0 %1271
    %v1282 = vsel %vm1226, %v1247, 0
    %v1285 = vsel %vm1226, %v1248, 0
    %1287 = vmatprep.subr.mxu0 0.0
    %1288 = vmatpush1.msra.mxu0 0.0
    %1289 = vmatprep.subr.mxu0 0.0
    %1290 = vmatpush1.msra.mxu0 0.0
    %1291 = vmatprep.subr.mxu0 0.0
    %1292 = vmatpush1.msra.mxu0 0.0
    %1293 = vmatprep.subr.mxu0 0.0
    %1294 = vmatpush1.msra.mxu0 0.0
    %1295 = vmatprep.subr.mxu0 0.0
    %1296 = vmatpush1.msra.mxu0 0.0
    %1297 = vmatprep.subr.mxu0 0.0
    %1298 = vmatpush1.msra.mxu0 0.0
    %1299 = vmatprep.subr.mxu0 0.0
    %1300 = vmatpush1.msra.mxu0 0.0
    %1301 = vmatprep.subr.mxu0 0.0
    %1302 = vmatpush1.msra.mxu0 0.0
    %1303 = vmatprep.subr.mxu0 0.0
    %1304 = vmatpush1.msra.mxu0 %v1272
    %1305 = vmatprep.subr.mxu0 0.0
    %1306 = vmatpush1.msra.mxu0 %v1270
    %1307 = vmatprep.subr.mxu0 0.0
    %1308 = vmatpush1.msra.mxu0 %v1268
    %1309 = vmatprep.subr.mxu0 0.0
    %1310 = vmatpush1.msra.mxu0 %v1266
    %1311 = vmatprep.subr.mxu0 0.0
    %1312 = vmatpush1.msra.mxu0 %v1264
    %1313 = vmatprep.subr.mxu0 0.0
    %1314 = vmatpush1.msra.mxu0 %v1262
    %1315 = vmatprep.subr.mxu0 0.0
    %1316 = vmatpush1.msra.mxu0 %v1260
    %1317 = vmatprep.subr.mxu0 0.0
    %1318 = vmatpush1.msra.mxu0 %v1258
    %1319 = vmatprep.subr.mxu0 0.0
    %1320 = vmatpush2.msra.mxu0 0.0
    %1321 = vmatprep.subr.mxu0 0.0
    %1322 = vmatpush2.msra.mxu0 0.0
    %1323 = vmatprep.subr.mxu0 0.0
    %1324 = vmatpush2.msra.mxu0 0.0
    %1325 = vmatprep.subr.mxu0 0.0
    %1326 = vmatpush2.msra.mxu0 0.0
    %1327 = vmatprep.subr.mxu0 0.0
    %1328 = vmatpush2.msra.mxu0 0.0
    %1329 = vmatprep.subr.mxu0 0.0
    %1330 = vmatpush2.msra.mxu0 0.0
    %1331 = vmatprep.subr.mxu0 0.0
    %1332 = vmatpush2.msra.mxu0 0.0
    %1333 = vmatprep.subr.mxu0 0.0
    %1334 = vmatpush2.msra.mxu0 0.0
    %1335 = vmatprep.subr.mxu0 0.0
    %1336 = vmatpush2.msra.mxu0 0.0
    %1337 = vmatprep.subr.mxu0 0.0
    %1338 = vmatpush2.msra.mxu0 0.0
    %1339 = vmatprep.subr.mxu0 0.0
    %1340 = vmatpush2.msra.mxu0 0.0
    %1341 = vmatprep.subr.mxu0 0.0
    %1342 = vmatpush2.msra.mxu0 0.0
    %1343 = vmatprep.subr.mxu0 0.0
    %1344 = vmatpush2.msra.mxu0 0.0
    %1345 = vmatprep.subr.mxu0 0.0
    %1346 = vmatpush2.msra.mxu0 0.0
    %1347 = vmatprep.subr.mxu0 0.0
    %1348 = vmatpush2.msra.mxu0 0.0
    %1349 = vmatprep.subr.mxu0 0.0
    %1350 = vmatpush2.msra.mxu0 0.0
    %1351 = vmatprep.mubr.f32.mxu0 0.0
    %1352 = vmatmul.mubr.f32.gmra.mxu0 %v1282
    %v1353 = vpop.f32.mrf.mxu0
    %v1354 = vadd.f32 0.0, %v1353
    %v1355 = vpop.f32.mrf.mxu0
    %1356 = vmatprep.mubr.f32.mxu0 0.0
    %1357 = vmatmul.mubr.f32.gmra.mxu0 %v1285
    %v1358 = vpop.f32.mrf.mxu0
    %v1359 = vadd.f32 0.0, %v1358
    %v1360 = vpop.f32.mrf.mxu0
    %1361 = vdwg.mxu0
    %1364 = vrot.lane.b32.xlu0 %v1053, 120
    %v1365 = vpop.permute.xlu0 %1364
    %1366 = vrot.lane.b32.xlu0 %v1054, 120
    %v1367 = vpop.permute.xlu0 %1366
    %v1370 = vsel %vm1075, %v1365, %v1045
    %v1371 = vsel %vm1075, %v1367, %v1050
    %1380 = vrot.lane.b32.xlu0 %v1055, 120
    %v1381 = vpop.permute.xlu0 %1380
    %1382 = vrot.lane.b32.xlu0 %v1056, 120
    %v1383 = vpop.permute.xlu0 %1382
    %1384 = vrot.lane.b32.xlu0 %v1057, 120
    %v1385 = vpop.permute.xlu0 %1384
    %1386 = vrot.lane.b32.xlu0 %v1058, 120
    %v1387 = vpop.permute.xlu0 %1386
    %1388 = vrot.lane.b32.xlu0 %v1059, 120
    %v1389 = vpop.permute.xlu0 %1388
    %1390 = vrot.lane.b32.xlu0 %v1060, 120
    %v1391 = vpop.permute.xlu0 %1390
    %1392 = vrot.lane.b32.xlu0 %v1061, 120
    %v1393 = vpop.permute.xlu0 %1392
    %1394 = vrot.lane.b32.xlu0 %v1062, 120
    %v1395 = vpop.permute.xlu0 %1394
    %v1404 = vsel %vm1075, %v1381, %v551
    %v1405 = vsel %vm1075, %v1383, %v556
    %v1406 = vsel %vm1075, %v1385, %v561
    %v1407 = vsel %vm1075, %v1387, %v566
    %v1408 = vsel %vm1075, %v1389, %v571
    %v1409 = vsel %vm1075, %v1391, %v576
    %v1410 = vsel %vm1075, %v1393, %v581
    %v1411 = vsel %vm1075, %v1395, %v586
    %v1412 = vmul.f32 %v1370, 0.25
    %v1413 = vmul.f32 %v1371, 0.25
    %v1415 = vsel %vm1120, %v1412, 0
    %v1418 = vsel %vm1120, %v1413, 0
    %v1421 = vsel %vm1120, %v1404, 0
    %v1424 = vsel %vm1120, %v1405, 0
    %v1427 = vsel %vm1120, %v1406, 0
    %v1430 = vsel %vm1120, %v1407, 0
    %v1433 = vsel %vm1120, %v1408, 0
    %v1436 = vsel %vm1120, %v1409, 0
    %v1439 = vsel %vm1120, %v1410, 0
    %v1442 = vsel %vm1120, %v1411, 0
    %1444 = vmatprep.subr.mxu0 0.0
    %1445 = vmatpush1.xpose.msra.mxu0 0.0
    %1446 = vmatprep.subr.mxu0 0.0
    %1447 = vmatpush1.xpose.msra.mxu0 0.0
    %1448 = vmatprep.subr.mxu0 0.0
    %1449 = vmatpush1.xpose.msra.mxu0 0.0
    %1450 = vmatprep.subr.mxu0 0.0
    %1451 = vmatpush1.xpose.msra.mxu0 0.0
    %1452 = vmatprep.subr.mxu0 0.0
    %1453 = vmatpush1.xpose.msra.mxu0 0.0
    %1454 = vmatprep.subr.mxu0 0.0
    %1455 = vmatpush1.xpose.msra.mxu0 0.0
    %1456 = vmatprep.subr.mxu0 0.0
    %1457 = vmatpush1.xpose.msra.mxu0 0.0
    %1458 = vmatprep.subr.mxu0 0.0
    %1459 = vmatpush1.xpose.msra.mxu0 0.0
    %1460 = vmatprep.subr.mxu0 0.0
    %1461 = vmatpush1.xpose.msra.mxu0 %v1442
    %1462 = vmatprep.subr.mxu0 0.0
    %1463 = vmatpush1.xpose.msra.mxu0 %v1439
    %1464 = vmatprep.subr.mxu0 0.0
    %1465 = vmatpush1.xpose.msra.mxu0 %v1436
    %1466 = vmatprep.subr.mxu0 0.0
    %1467 = vmatpush1.xpose.msra.mxu0 %v1433
    %1468 = vmatprep.subr.mxu0 0.0
    %1469 = vmatpush1.xpose.msra.mxu0 %v1430
    %1470 = vmatprep.subr.mxu0 0.0
    %1471 = vmatpush1.xpose.msra.mxu0 %v1427
    %1472 = vmatprep.subr.mxu0 0.0
    %1473 = vmatpush1.xpose.msra.mxu0 %v1424
    %1474 = vmatprep.subr.mxu0 0.0
    %1475 = vmatpush1.xpose.msra.mxu0 %v1421
    %1476 = vmatprep.subr.mxu0 0.0
    %1477 = vmatpush2.xpose.msra.mxu0 0.0
    %1478 = vmatprep.subr.mxu0 0.0
    %1479 = vmatpush2.xpose.msra.mxu0 0.0
    %1480 = vmatprep.subr.mxu0 0.0
    %1481 = vmatpush2.xpose.msra.mxu0 0.0
    %1482 = vmatprep.subr.mxu0 0.0
    %1483 = vmatpush2.xpose.msra.mxu0 0.0
    %1484 = vmatprep.subr.mxu0 0.0
    %1485 = vmatpush2.xpose.msra.mxu0 0.0
    %1486 = vmatprep.subr.mxu0 0.0
    %1487 = vmatpush2.xpose.msra.mxu0 0.0
    %1488 = vmatprep.subr.mxu0 0.0
    %1489 = vmatpush2.xpose.msra.mxu0 0.0
    %1490 = vmatprep.subr.mxu0 0.0
    %1491 = vmatpush2.xpose.msra.mxu0 0.0
    %1492 = vmatprep.subr.mxu0 0.0
    %1493 = vmatpush2.xpose.msra.mxu0 0.0
    %1494 = vmatprep.subr.mxu0 0.0
    %1495 = vmatpush2.xpose.msra.mxu0 0.0
    %1496 = vmatprep.subr.mxu0 0.0
    %1497 = vmatpush2.xpose.msra.mxu0 0.0
    %1498 = vmatprep.subr.mxu0 0.0
    %1499 = vmatpush2.xpose.msra.mxu0 0.0
    %1500 = vmatprep.subr.mxu0 0.0
    %1501 = vmatpush2.xpose.msra.mxu0 0.0
    %1502 = vmatprep.subr.mxu0 0.0
    %1503 = vmatpush2.xpose.msra.mxu0 0.0
    %1504 = vmatprep.subr.mxu0 0.0
    %1505 = vmatpush2.xpose.msra.mxu0 0.0
    %1506 = vmatprep.subr.mxu0 0.0
    %1507 = vmatpush2.xpose.msra.mxu0 0.0
    %1508 = vmatprep.mubr.f32.mxu0 0.0
    %1509 = vmatmul.mubr.f32.gmra.mxu0 %v1415
    %v1510 = vpop.f32.mrf.mxu0
    %v1511 = vadd.f32 %v1065, %v1510
    %v1512 = vpop.f32.mrf.mxu0
    %1513 = vmatprep.mubr.f32.mxu0 0.0
    %1514 = vmatmul.mubr.f32.gmra.mxu0 %v1418
    %v1515 = vpop.f32.mrf.mxu0
    %v1516 = vadd.f32 %v1066, %v1515
    %v1517 = vpop.f32.mrf.mxu0
    %1518 = vdwg.mxu0
    %v1519 = vsel %vm1226, %v1511, -inf
    %1520 = vmax.xlane.f32.xlu0 %v1519
    %v1521 = vpop.xlane.xlu0 %1520
    %v1522 = vsel %vm1226, %v1516, -inf
    %1523 = vmax.xlane.f32.xlu0 %v1522
    %v1524 = vpop.xlane.xlu0 %1523
    %v1525 = vsub.f32 %v1511, %v1521
    %v1526 = vsub.f32 %v1516, %v1524
    %v1527 = vmul.f32 %v1525, 1.442695
    %v1528 = vpow.pop %v1527
    %v1529 = vmul.f32 %v1526, 1.442695
    %v1530 = vpow.pop %v1529
    %v1531 = vsel %vm1226, %v1528, 0.0
    %1532 = vadd.xlane.f32.xlu0 %v1531
    %v1533 = vpop.xlane.xlu0 %1532
    %v1534 = vsel %vm1226, %v1530, 0.0
    %1535 = vadd.xlane.f32.xlu0 %v1534
    %v1536 = vpop.xlane.xlu0 %1535
    %v1537 = vrcp.pop %v1533
    %v1538 = vrcp.pop %v1536
    %v1539 = vmul.f32 %v1528, %v1537
    %v1540 = vmul.f32 %v1530, %v1538
    %1541 = vrot.lane.b32.xlu0 %v403, 88
    %v1542 = vpop.permute.xlu0 %1541
    %1543 = vrot.lane.b32.xlu0 %v408, 88
    %v1544 = vpop.permute.xlu0 %1543
    %1545 = vrot.lane.b32.xlu0 %v413, 88
    %v1546 = vpop.permute.xlu0 %1545
    %1547 = vrot.lane.b32.xlu0 %v418, 88
    %v1548 = vpop.permute.xlu0 %1547
    %1549 = vrot.lane.b32.xlu0 %v423, 88
    %v1550 = vpop.permute.xlu0 %1549
    %1551 = vrot.lane.b32.xlu0 %v428, 88
    %v1552 = vpop.permute.xlu0 %1551
    %1553 = vrot.lane.b32.xlu0 %v433, 88
    %v1554 = vpop.permute.xlu0 %1553
    %1555 = vrot.lane.b32.xlu0 %v438, 88
    %v1556 = vpop.permute.xlu0 %1555
    %v1566 = vsel %vm1226, %v1539, 0
    %v1569 = vsel %vm1226, %v1540, 0
    %1571 = vmatprep.subr.mxu0 0.0
    %1572 = vmatpush1.msra.mxu0 0.0
    %1573 = vmatprep.subr.mxu0 0.0
    %1574 = vmatpush1.msra.mxu0 0.0
    %1575 = vmatprep.subr.mxu0 0.0
    %1576 = vmatpush1.msra.mxu0 0.0
    %1577 = vmatprep.subr.mxu0 0.0
    %1578 = vmatpush1.msra.mxu0 0.0
    %1579 = vmatprep.subr.mxu0 0.0
    %1580 = vmatpush1.msra.mxu0 0.0
    %1581 = vmatprep.subr.mxu0 0.0
    %1582 = vmatpush1.msra.mxu0 0.0
    %1583 = vmatprep.subr.mxu0 0.0
    %1584 = vmatpush1.msra.mxu0 0.0
    %1585 = vmatprep.subr.mxu0 0.0
    %1586 = vmatpush1.msra.mxu0 0.0
    %1587 = vmatprep.subr.mxu0 0.0
    %1588 = vmatpush1.msra.mxu0 %v1556
    %1589 = vmatprep.subr.mxu0 0.0
    %1590 = vmatpush1.msra.mxu0 %v1554
    %1591 = vmatprep.subr.mxu0 0.0
    %1592 = vmatpush1.msra.mxu0 %v1552
    %1593 = vmatprep.subr.mxu0 0.0
    %1594 = vmatpush1.msra.mxu0 %v1550
    %1595 = vmatprep.subr.mxu0 0.0
    %1596 = vmatpush1.msra.mxu0 %v1548
    %1597 = vmatprep.subr.mxu0 0.0
    %1598 = vmatpush1.msra.mxu0 %v1546
    %1599 = vmatprep.subr.mxu0 0.0
    %1600 = vmatpush1.msra.mxu0 %v1544
    %1601 = vmatprep.subr.mxu0 0.0
    %1602 = vmatpush1.msra.mxu0 %v1542
    %1603 = vmatprep.subr.mxu0 0.0
    %1604 = vmatpush2.msra.mxu0 0.0
    %1605 = vmatprep.subr.mxu0 0.0
    %1606 = vmatpush2.msra.mxu0 0.0
    %1607 = vmatprep.subr.mxu0 0.0
    %1608 = vmatpush2.msra.mxu0 0.0
    %1609 = vmatprep.subr.mxu0 0.0
    %1610 = vmatpush2.msra.mxu0 0.0
    %1611 = vmatprep.subr.mxu0 0.0
    %1612 = vmatpush2.msra.mxu0 0.0
    %1613 = vmatprep.subr.mxu0 0.0
    %1614 = vmatpush2.msra.mxu0 0.0
    %1615 = vmatprep.subr.mxu0 0.0
    %1616 = vmatpush2.msra.mxu0 0.0
    %1617 = vmatprep.subr.mxu0 0.0
    %1618 = vmatpush2.msra.mxu0 0.0
    %1619 = vmatprep.subr.mxu0 0.0
    %1620 = vmatpush2.msra.mxu0 0.0
    %1621 = vmatprep.subr.mxu0 0.0
    %1622 = vmatpush2.msra.mxu0 0.0
    %1623 = vmatprep.subr.mxu0 0.0
    %1624 = vmatpush2.msra.mxu0 0.0
    %1625 = vmatprep.subr.mxu0 0.0
    %1626 = vmatpush2.msra.mxu0 0.0
    %1627 = vmatprep.subr.mxu0 0.0
    %1628 = vmatpush2.msra.mxu0 0.0
    %1629 = vmatprep.subr.mxu0 0.0
    %1630 = vmatpush2.msra.mxu0 0.0
    %1631 = vmatprep.subr.mxu0 0.0
    %1632 = vmatpush2.msra.mxu0 0.0
    %1633 = vmatprep.subr.mxu0 0.0
    %1634 = vmatpush2.msra.mxu0 0.0
    %1635 = vmatprep.mubr.f32.mxu0 0.0
    %1636 = vmatmul.mubr.f32.gmra.mxu0 %v1566
    %v1637 = vpop.f32.mrf.mxu0
    %v1638 = vadd.f32 0.0, %v1637
    %v1639 = vpop.f32.mrf.mxu0
    %1640 = vmatprep.mubr.f32.mxu0 0.0
    %1641 = vmatmul.mubr.f32.gmra.mxu0 %v1569
    %v1642 = vpop.f32.mrf.mxu0
    %v1643 = vadd.f32 0.0, %v1642
    %v1644 = vpop.f32.mrf.mxu0
    %1645 = vdwg.mxu0
    %1646 = vrot.lane.b32.xlu0 %v1053, 112
    %v1647 = vpop.permute.xlu0 %1646
    %1648 = vrot.lane.b32.xlu0 %v1054, 112
    %v1649 = vpop.permute.xlu0 %1648
    %1652 = vrot.lane.b32.xlu0 %v1045, 120
    %v1653 = vpop.permute.xlu0 %1652
    %1654 = vrot.lane.b32.xlu0 %v1050, 120
    %v1655 = vpop.permute.xlu0 %1654
    %v1658 = vsel %vm1075, %v1647, %v1653
    %v1659 = vsel %vm1075, %v1649, %v1655
    %1660 = vrot.lane.b32.xlu0 %v1055, 112
    %v1661 = vpop.permute.xlu0 %1660
    %1662 = vrot.lane.b32.xlu0 %v1056, 112
    %v1663 = vpop.permute.xlu0 %1662
    %1664 = vrot.lane.b32.xlu0 %v1057, 112
    %v1665 = vpop.permute.xlu0 %1664
    %1666 = vrot.lane.b32.xlu0 %v1058, 112
    %v1667 = vpop.permute.xlu0 %1666
    %1668 = vrot.lane.b32.xlu0 %v1059, 112
    %v1669 = vpop.permute.xlu0 %1668
    %1670 = vrot.lane.b32.xlu0 %v1060, 112
    %v1671 = vpop.permute.xlu0 %1670
    %1672 = vrot.lane.b32.xlu0 %v1061, 112
    %v1673 = vpop.permute.xlu0 %1672
    %1674 = vrot.lane.b32.xlu0 %v1062, 112
    %v1675 = vpop.permute.xlu0 %1674
    %1684 = vrot.lane.b32.xlu0 %v551, 120
    %v1685 = vpop.permute.xlu0 %1684
    %1686 = vrot.lane.b32.xlu0 %v556, 120
    %v1687 = vpop.permute.xlu0 %1686
    %1688 = vrot.lane.b32.xlu0 %v561, 120
    %v1689 = vpop.permute.xlu0 %1688
    %1690 = vrot.lane.b32.xlu0 %v566, 120
    %v1691 = vpop.permute.xlu0 %1690
    %1692 = vrot.lane.b32.xlu0 %v571, 120
    %v1693 = vpop.permute.xlu0 %1692
    %1694 = vrot.lane.b32.xlu0 %v576, 120
    %v1695 = vpop.permute.xlu0 %1694
    %1696 = vrot.lane.b32.xlu0 %v581, 120
    %v1697 = vpop.permute.xlu0 %1696
    %1698 = vrot.lane.b32.xlu0 %v586, 120
    %v1699 = vpop.permute.xlu0 %1698
    %v1708 = vsel %vm1075, %v1661, %v1685
    %v1709 = vsel %vm1075, %v1663, %v1687
    %v1710 = vsel %vm1075, %v1665, %v1689
    %v1711 = vsel %vm1075, %v1667, %v1691
    %v1712 = vsel %vm1075, %v1669, %v1693
    %v1713 = vsel %vm1075, %v1671, %v1695
    %v1714 = vsel %vm1075, %v1673, %v1697
    %v1715 = vsel %vm1075, %v1675, %v1699
    %v1716 = vmul.f32 %v1658, 0.25
    %v1717 = vmul.f32 %v1659, 0.25
    %v1719 = vsel %vm1120, %v1716, 0
    %v1722 = vsel %vm1120, %v1717, 0
    %v1725 = vsel %vm1120, %v1708, 0
    %v1728 = vsel %vm1120, %v1709, 0
    %v1731 = vsel %vm1120, %v1710, 0
    %v1734 = vsel %vm1120, %v1711, 0
    %v1737 = vsel %vm1120, %v1712, 0
    %v1740 = vsel %vm1120, %v1713, 0
    %v1743 = vsel %vm1120, %v1714, 0
    %v1746 = vsel %vm1120, %v1715, 0
    %1748 = vmatprep.subr.mxu0 0.0
    %1749 = vmatpush1.xpose.msra.mxu0 0.0
    %1750 = vmatprep.subr.mxu0 0.0
    %1751 = vmatpush1.xpose.msra.mxu0 0.0
    %1752 = vmatprep.subr.mxu0 0.0
    %1753 = vmatpush1.xpose.msra.mxu0 0.0
    %1754 = vmatprep.subr.mxu0 0.0
    %1755 = vmatpush1.xpose.msra.mxu0 0.0
    %1756 = vmatprep.subr.mxu0 0.0
    %1757 = vmatpush1.xpose.msra.mxu0 0.0
    %1758 = vmatprep.subr.mxu0 0.0
    %1759 = vmatpush1.xpose.msra.mxu0 0.0
    %1760 = vmatprep.subr.mxu0 0.0
    %1761 = vmatpush1.xpose.msra.mxu0 0.0
    %1762 = vmatprep.subr.mxu0 0.0
    %1763 = vmatpush1.xpose.msra.mxu0 0.0
    %1764 = vmatprep.subr.mxu0 0.0
    %1765 = vmatpush1.xpose.msra.mxu0 %v1746
    %1766 = vmatprep.subr.mxu0 0.0
    %1767 = vmatpush1.xpose.msra.mxu0 %v1743
    %1768 = vmatprep.subr.mxu0 0.0
    %1769 = vmatpush1.xpose.msra.mxu0 %v1740
    %1770 = vmatprep.subr.mxu0 0.0
    %1771 = vmatpush1.xpose.msra.mxu0 %v1737
    %1772 = vmatprep.subr.mxu0 0.0
    %1773 = vmatpush1.xpose.msra.mxu0 %v1734
    %1774 = vmatprep.subr.mxu0 0.0
    %1775 = vmatpush1.xpose.msra.mxu0 %v1731
    %1776 = vmatprep.subr.mxu0 0.0
    %1777 = vmatpush1.xpose.msra.mxu0 %v1728
    %1778 = vmatprep.subr.mxu0 0.0
    %1779 = vmatpush1.xpose.msra.mxu0 %v1725
    %1780 = vmatprep.subr.mxu0 0.0
    %1781 = vmatpush2.xpose.msra.mxu0 0.0
    %1782 = vmatprep.subr.mxu0 0.0
    %1783 = vmatpush2.xpose.msra.mxu0 0.0
    %1784 = vmatprep.subr.mxu0 0.0
    %1785 = vmatpush2.xpose.msra.mxu0 0.0
    %1786 = vmatprep.subr.mxu0 0.0
    %1787 = vmatpush2.xpose.msra.mxu0 0.0
    %1788 = vmatprep.subr.mxu0 0.0
    %1789 = vmatpush2.xpose.msra.mxu0 0.0
    %1790 = vmatprep.subr.mxu0 0.0
    %1791 = vmatpush2.xpose.msra.mxu0 0.0
    %1792 = vmatprep.subr.mxu0 0.0
    %1793 = vmatpush2.xpose.msra.mxu0 0.0
    %1794 = vmatprep.subr.mxu0 0.0
    %1795 = vmatpush2.xpose.msra.mxu0 0.0
    %1796 = vmatprep.subr.mxu0 0.0
    %1797 = vmatpush2.xpose.msra.mxu0 0.0
    %1798 = vmatprep.subr.mxu0 0.0
    %1799 = vmatpush2.xpose.msra.mxu0 0.0
    %1800 = vmatprep.subr.mxu0 0.0
    %1801 = vmatpush2.xpose.msra.mxu0 0.0
    %1802 = vmatprep.subr.mxu0 0.0
    %1803 = vmatpush2.xpose.msra.mxu0 0.0
    %1804 = vmatprep.subr.mxu0 0.0
    %1805 = vmatpush2.xpose.msra.mxu0 0.0
    %1806 = vmatprep.subr.mxu0 0.0
    %1807 = vmatpush2.xpose.msra.mxu0 0.0
    %1808 = vmatprep.subr.mxu0 0.0
    %1809 = vmatpush2.xpose.msra.mxu0 0.0
    %1810 = vmatprep.subr.mxu0 0.0
    %1811 = vmatpush2.xpose.msra.mxu0 0.0
    %1812 = vmatprep.mubr.f32.mxu0 0.0
    %1813 = vmatmul.mubr.f32.gmra.mxu0 %v1719
    %v1814 = vpop.f32.mrf.mxu0
    %v1815 = vadd.f32 %v1065, %v1814
    %v1816 = vpop.f32.mrf.mxu0
    %1817 = vmatprep.mubr.f32.mxu0 0.0
    %1818 = vmatmul.mubr.f32.gmra.mxu0 %v1722
    %v1819 = vpop.f32.mrf.mxu0
    %v1820 = vadd.f32 %v1066, %v1819
    %v1821 = vpop.f32.mrf.mxu0
    %1822 = vdwg.mxu0
    %v1823 = vsel %vm1226, %v1815, -inf
    %1824 = vmax.xlane.f32.xlu0 %v1823
    %v1825 = vpop.xlane.xlu0 %1824
    %v1826 = vsel %vm1226, %v1820, -inf
    %1827 = vmax.xlane.f32.xlu0 %v1826
    %v1828 = vpop.xlane.xlu0 %1827
    %v1829 = vsub.f32 %v1815, %v1825
    %v1830 = vsub.f32 %v1820, %v1828
    %v1831 = vmul.f32 %v1829, 1.442695
    %v1832 = vpow.pop %v1831
    %v1833 = vmul.f32 %v1830, 1.442695
    %v1834 = vpow.pop %v1833
    %v1835 = vsel %vm1226, %v1832, 0.0
    %1836 = vadd.xlane.f32.xlu0 %v1835
    %v1837 = vpop.xlane.xlu0 %1836
    %v1838 = vsel %vm1226, %v1834, 0.0
    %1839 = vadd.xlane.f32.xlu0 %v1838
    %v1840 = vpop.xlane.xlu0 %1839
    %v1841 = vrcp.pop %v1837
    %v1842 = vrcp.pop %v1840
    %v1843 = vmul.f32 %v1832, %v1841
    %v1844 = vmul.f32 %v1834, %v1842
    %1845 = vrot.lane.b32.xlu0 %v403, 80
    %v1846 = vpop.permute.xlu0 %1845
    %1847 = vrot.lane.b32.xlu0 %v408, 80
    %v1848 = vpop.permute.xlu0 %1847
    %1849 = vrot.lane.b32.xlu0 %v413, 80
    %v1850 = vpop.permute.xlu0 %1849
    %1851 = vrot.lane.b32.xlu0 %v418, 80
    %v1852 = vpop.permute.xlu0 %1851
    %1853 = vrot.lane.b32.xlu0 %v423, 80
    %v1854 = vpop.permute.xlu0 %1853
    %1855 = vrot.lane.b32.xlu0 %v428, 80
    %v1856 = vpop.permute.xlu0 %1855
    %1857 = vrot.lane.b32.xlu0 %v433, 80
    %v1858 = vpop.permute.xlu0 %1857
    %1859 = vrot.lane.b32.xlu0 %v438, 80
    %v1860 = vpop.permute.xlu0 %1859
    %v1870 = vsel %vm1226, %v1843, 0
    %v1873 = vsel %vm1226, %v1844, 0
    %1875 = vmatprep.subr.mxu0 0.0
    %1876 = vmatpush1.msra.mxu0 0.0
    %1877 = vmatprep.subr.mxu0 0.0
    %1878 = vmatpush1.msra.mxu0 0.0
    %1879 = vmatprep.subr.mxu0 0.0
    %1880 = vmatpush1.msra.mxu0 0.0
    %1881 = vmatprep.subr.mxu0 0.0
    %1882 = vmatpush1.msra.mxu0 0.0
    %1883 = vmatprep.subr.mxu0 0.0
    %1884 = vmatpush1.msra.mxu0 0.0
    %1885 = vmatprep.subr.mxu0 0.0
    %1886 = vmatpush1.msra.mxu0 0.0
    %1887 = vmatprep.subr.mxu0 0.0
    %1888 = vmatpush1.msra.mxu0 0.0
    %1889 = vmatprep.subr.mxu0 0.0
    %1890 = vmatpush1.msra.mxu0 0.0
    %1891 = vmatprep.subr.mxu0 0.0
    %1892 = vmatpush1.msra.mxu0 %v1860
    %1893 = vmatprep.subr.mxu0 0.0
    %1894 = vmatpush1.msra.mxu0 %v1858
    %1895 = vmatprep.subr.mxu0 0.0
    %1896 = vmatpush1.msra.mxu0 %v1856
    %1897 = vmatprep.subr.mxu0 0.0
    %1898 = vmatpush1.msra.mxu0 %v1854
    %1899 = vmatprep.subr.mxu0 0.0
    %1900 = vmatpush1.msra.mxu0 %v1852
    %1901 = vmatprep.subr.mxu0 0.0
    %1902 = vmatpush1.msra.mxu0 %v1850
    %1903 = vmatprep.subr.mxu0 0.0
    %1904 = vmatpush1.msra.mxu0 %v1848
    %1905 = vmatprep.subr.mxu0 0.0
    %1906 = vmatpush1.msra.mxu0 %v1846
    %1907 = vmatprep.subr.mxu0 0.0
    %1908 = vmatpush2.msra.mxu0 0.0
    %1909 = vmatprep.subr.mxu0 0.0
    %1910 = vmatpush2.msra.mxu0 0.0
    %1911 = vmatprep.subr.mxu0 0.0
    %1912 = vmatpush2.msra.mxu0 0.0
    %1913 = vmatprep.subr.mxu0 0.0
    %1914 = vmatpush2.msra.mxu0 0.0
    %1915 = vmatprep.subr.mxu0 0.0
    %1916 = vmatpush2.msra.mxu0 0.0
    %1917 = vmatprep.subr.mxu0 0.0
    %1918 = vmatpush2.msra.mxu0 0.0
    %1919 = vmatprep.subr.mxu0 0.0
    %1920 = vmatpush2.msra.mxu0 0.0
    %1921 = vmatprep.subr.mxu0 0.0
    %1922 = vmatpush2.msra.mxu0 0.0
    %1923 = vmatprep.subr.mxu0 0.0
    %1924 = vmatpush2.msra.mxu0 0.0
    %1925 = vmatprep.subr.mxu0 0.0
    %1926 = vmatpush2.msra.mxu0 0.0
    %1927 = vmatprep.subr.mxu0 0.0
    %1928 = vmatpush2.msra.mxu0 0.0
    %1929 = vmatprep.subr.mxu0 0.0
    %1930 = vmatpush2.msra.mxu0 0.0
    %1931 = vmatprep.subr.mxu0 0.0
    %1932 = vmatpush2.msra.mxu0 0.0
    %1933 = vmatprep.subr.mxu0 0.0
    %1934 = vmatpush2.msra.mxu0 0.0
    %1935 = vmatprep.subr.mxu0 0.0
    %1936 = vmatpush2.msra.mxu0 0.0
    %1937 = vmatprep.subr.mxu0 0.0
    %1938 = vmatpush2.msra.mxu0 0.0
    %1939 = vmatprep.mubr.f32.mxu0 0.0
    %1940 = vmatmul.mubr.f32.gmra.mxu0 %v1870
    %v1941 = vpop.f32.mrf.mxu0
    %v1942 = vadd.f32 0.0, %v1941
    %v1943 = vpop.f32.mrf.mxu0
    %1944 = vmatprep.mubr.f32.mxu0 0.0
    %1945 = vmatmul.mubr.f32.gmra.mxu0 %v1873
    %v1946 = vpop.f32.mrf.mxu0
    %v1947 = vadd.f32 0.0, %v1946
    %v1948 = vpop.f32.mrf.mxu0
    %1949 = vdwg.mxu0
    %1950 = vrot.lane.b32.xlu0 %v1053, 104
    %v1951 = vpop.permute.xlu0 %1950
    %1952 = vrot.lane.b32.xlu0 %v1054, 104
    %v1953 = vpop.permute.xlu0 %1952
    %1956 = vrot.lane.b32.xlu0 %v1045, 112
    %v1957 = vpop.permute.xlu0 %1956
    %1958 = vrot.lane.b32.xlu0 %v1050, 112
    %v1959 = vpop.permute.xlu0 %1958
    %v1962 = vsel %vm1075, %v1951, %v1957
    %v1963 = vsel %vm1075, %v1953, %v1959
    %1964 = vrot.lane.b32.xlu0 %v1055, 104
    %v1965 = vpop.permute.xlu0 %1964
    %1966 = vrot.lane.b32.xlu0 %v1056, 104
    %v1967 = vpop.permute.xlu0 %1966
    %1968 = vrot.lane.b32.xlu0 %v1057, 104
    %v1969 = vpop.permute.xlu0 %1968
    %1970 = vrot.lane.b32.xlu0 %v1058, 104
    %v1971 = vpop.permute.xlu0 %1970
    %1972 = vrot.lane.b32.xlu0 %v1059, 104
    %v1973 = vpop.permute.xlu0 %1972
    %1974 = vrot.lane.b32.xlu0 %v1060, 104
    %v1975 = vpop.permute.xlu0 %1974
    %1976 = vrot.lane.b32.xlu0 %v1061, 104
    %v1977 = vpop.permute.xlu0 %1976
    %1978 = vrot.lane.b32.xlu0 %v1062, 104
    %v1979 = vpop.permute.xlu0 %1978
    %1988 = vrot.lane.b32.xlu0 %v551, 112
    %v1989 = vpop.permute.xlu0 %1988
    %1990 = vrot.lane.b32.xlu0 %v556, 112
    %v1991 = vpop.permute.xlu0 %1990
    %1992 = vrot.lane.b32.xlu0 %v561, 112
    %v1993 = vpop.permute.xlu0 %1992
    %1994 = vrot.lane.b32.xlu0 %v566, 112
    %v1995 = vpop.permute.xlu0 %1994
    %1996 = vrot.lane.b32.xlu0 %v571, 112
    %v1997 = vpop.permute.xlu0 %1996
    %1998 = vrot.lane.b32.xlu0 %v576, 112
    %v1999 = vpop.permute.xlu0 %1998
    %2000 = vrot.lane.b32.xlu0 %v581, 112
    %v2001 = vpop.permute.xlu0 %2000
    %2002 = vrot.lane.b32.xlu0 %v586, 112
    %v2003 = vpop.permute.xlu0 %2002
    %v2012 = vsel %vm1075, %v1965, %v1989
    %v2013 = vsel %vm1075, %v1967, %v1991
    %v2014 = vsel %vm1075, %v1969, %v1993
    %v2015 = vsel %vm1075, %v1971, %v1995
    %v2016 = vsel %vm1075, %v1973, %v1997
    %v2017 = vsel %vm1075, %v1975, %v1999
    %v2018 = vsel %vm1075, %v1977, %v2001
    %v2019 = vsel %vm1075, %v1979, %v2003
    %v2020 = vmul.f32 %v1962, 0.25
    %v2021 = vmul.f32 %v1963, 0.25
    %v2023 = vsel %vm1120, %v2020, 0
    %v2026 = vsel %vm1120, %v2021, 0
    %v2029 = vsel %vm1120, %v2012, 0
    %v2032 = vsel %vm1120, %v2013, 0
    %v2035 = vsel %vm1120, %v2014, 0
    %v2038 = vsel %vm1120, %v2015, 0
    %v2041 = vsel %vm1120, %v2016, 0
    %v2044 = vsel %vm1120, %v2017, 0
    %v2047 = vsel %vm1120, %v2018, 0
    %v2050 = vsel %vm1120, %v2019, 0
    %2052 = vmatprep.subr.mxu0 0.0
    %2053 = vmatpush1.xpose.msra.mxu0 0.0
    %2054 = vmatprep.subr.mxu0 0.0
    %2055 = vmatpush1.xpose.msra.mxu0 0.0
    %2056 = vmatprep.subr.mxu0 0.0
    %2057 = vmatpush1.xpose.msra.mxu0 0.0
    %2058 = vmatprep.subr.mxu0 0.0
    %2059 = vmatpush1.xpose.msra.mxu0 0.0
    %2060 = vmatprep.subr.mxu0 0.0
    %2061 = vmatpush1.xpose.msra.mxu0 0.0
    %2062 = vmatprep.subr.mxu0 0.0
    %2063 = vmatpush1.xpose.msra.mxu0 0.0
    %2064 = vmatprep.subr.mxu0 0.0
    %2065 = vmatpush1.xpose.msra.mxu0 0.0
    %2066 = vmatprep.subr.mxu0 0.0
    %2067 = vmatpush1.xpose.msra.mxu0 0.0
    %2068 = vmatprep.subr.mxu0 0.0
    %2069 = vmatpush1.xpose.msra.mxu0 %v2050
    %2070 = vmatprep.subr.mxu0 0.0
    %2071 = vmatpush1.xpose.msra.mxu0 %v2047
    %2072 = vmatprep.subr.mxu0 0.0
    %2073 = vmatpush1.xpose.msra.mxu0 %v2044
    %2074 = vmatprep.subr.mxu0 0.0
    %2075 = vmatpush1.xpose.msra.mxu0 %v2041
    %2076 = vmatprep.subr.mxu0 0.0
    %2077 = vmatpush1.xpose.msra.mxu0 %v2038
    %2078 = vmatprep.subr.mxu0 0.0
    %2079 = vmatpush1.xpose.msra.mxu0 %v2035
    %2080 = vmatprep.subr.mxu0 0.0
    %2081 = vmatpush1.xpose.msra.mxu0 %v2032
    %2082 = vmatprep.subr.mxu0 0.0
    %2083 = vmatpush1.xpose.msra.mxu0 %v2029
    %2084 = vmatprep.subr.mxu0 0.0
    %2085 = vmatpush2.xpose.msra.mxu0 0.0
    %2086 = vmatprep.subr.mxu0 0.0
    %2087 = vmatpush2.xpose.msra.mxu0 0.0
    %2088 = vmatprep.subr.mxu0 0.0
    %2089 = vmatpush2.xpose.msra.mxu0 0.0
    %2090 = vmatprep.subr.mxu0 0.0
    %2091 = vmatpush2.xpose.msra.mxu0 0.0
    %2092 = vmatprep.subr.mxu0 0.0
    %2093 = vmatpush2.xpose.msra.mxu0 0.0
    %2094 = vmatprep.subr.mxu0 0.0
    %2095 = vmatpush2.xpose.msra.mxu0 0.0
    %2096 = vmatprep.subr.mxu0 0.0
    %2097 = vmatpush2.xpose.msra.mxu0 0.0
    %2098 = vmatprep.subr.mxu0 0.0
    %2099 = vmatpush2.xpose.msra.mxu0 0.0
    %2100 = vmatprep.subr.mxu0 0.0
    %2101 = vmatpush2.xpose.msra.mxu0 0.0
    %2102 = vmatprep.subr.mxu0 0.0
    %2103 = vmatpush2.xpose.msra.mxu0 0.0
    %2104 = vmatprep.subr.mxu0 0.0
    %2105 = vmatpush2.xpose.msra.mxu0 0.0
    %2106 = vmatprep.subr.mxu0 0.0
    %2107 = vmatpush2.xpose.msra.mxu0 0.0
    %2108 = vmatprep.subr.mxu0 0.0
    %2109 = vmatpush2.xpose.msra.mxu0 0.0
    %2110 = vmatprep.subr.mxu0 0.0
    %2111 = vmatpush2.xpose.msra.mxu0 0.0
    %2112 = vmatprep.subr.mxu0 0.0
    %2113 = vmatpush2.xpose.msra.mxu0 0.0
    %2114 = vmatprep.subr.mxu0 0.0
    %2115 = vmatpush2.xpose.msra.mxu0 0.0
    %2116 = vmatprep.mubr.f32.mxu0 0.0
    %2117 = vmatmul.mubr.f32.gmra.mxu0 %v2023
    %v2118 = vpop.f32.mrf.mxu0
    %v2119 = vadd.f32 %v1065, %v2118
    %v2120 = vpop.f32.mrf.mxu0
    %2121 = vmatprep.mubr.f32.mxu0 0.0
    %2122 = vmatmul.mubr.f32.gmra.mxu0 %v2026
    %v2123 = vpop.f32.mrf.mxu0
    %v2124 = vadd.f32 %v1066, %v2123
    %v2125 = vpop.f32.mrf.mxu0
    %2126 = vdwg.mxu0
    %v2127 = vsel %vm1226, %v2119, -inf
    %2128 = vmax.xlane.f32.xlu0 %v2127
    %v2129 = vpop.xlane.xlu0 %2128
    %v2130 = vsel %vm1226, %v2124, -inf
    %2131 = vmax.xlane.f32.xlu0 %v2130
    %v2132 = vpop.xlane.xlu0 %2131
    %v2133 = vsub.f32 %v2119, %v2129
    %v2134 = vsub.f32 %v2124, %v2132
    %v2135 = vmul.f32 %v2133, 1.442695
    %v2136 = vpow.pop %v2135
    %v2137 = vmul.f32 %v2134, 1.442695
    %v2138 = vpow.pop %v2137
    %v2139 = vsel %vm1226, %v2136, 0.0
    %2140 = vadd.xlane.f32.xlu0 %v2139
    %v2141 = vpop.xlane.xlu0 %2140
    %v2142 = vsel %vm1226, %v2138, 0.0
    %2143 = vadd.xlane.f32.xlu0 %v2142
    %v2144 = vpop.xlane.xlu0 %2143
    %v2145 = vrcp.pop %v2141
    %v2146 = vrcp.pop %v2144
    %v2147 = vmul.f32 %v2136, %v2145
    %v2148 = vmul.f32 %v2138, %v2146
    %2149 = vrot.lane.b32.xlu0 %v403, 72
    %v2150 = vpop.permute.xlu0 %2149
    %2151 = vrot.lane.b32.xlu0 %v408, 72
    %v2152 = vpop.permute.xlu0 %2151
    %2153 = vrot.lane.b32.xlu0 %v413, 72
    %v2154 = vpop.permute.xlu0 %2153
    %2155 = vrot.lane.b32.xlu0 %v418, 72
    %v2156 = vpop.permute.xlu0 %2155
    %2157 = vrot.lane.b32.xlu0 %v423, 72
    %v2158 = vpop.permute.xlu0 %2157
    %2159 = vrot.lane.b32.xlu0 %v428, 72
    %v2160 = vpop.permute.xlu0 %2159
    %2161 = vrot.lane.b32.xlu0 %v433, 72
    %v2162 = vpop.permute.xlu0 %2161
    %2163 = vrot.lane.b32.xlu0 %v438, 72
    %v2164 = vpop.permute.xlu0 %2163
    %v2174 = vsel %vm1226, %v2147, 0
    %v2177 = vsel %vm1226, %v2148, 0
    %2179 = vmatprep.subr.mxu0 0.0
    %2180 = vmatpush1.msra.mxu0 0.0
    %2181 = vmatprep.subr.mxu0 0.0
    %2182 = vmatpush1.msra.mxu0 0.0
    %2183 = vmatprep.subr.mxu0 0.0
    %2184 = vmatpush1.msra.mxu0 0.0
    %2185 = vmatprep.subr.mxu0 0.0
    %2186 = vmatpush1.msra.mxu0 0.0
    %2187 = vmatprep.subr.mxu0 0.0
    %2188 = vmatpush1.msra.mxu0 0.0
    %2189 = vmatprep.subr.mxu0 0.0
    %2190 = vmatpush1.msra.mxu0 0.0
    %2191 = vmatprep.subr.mxu0 0.0
    %2192 = vmatpush1.msra.mxu0 0.0
    %2193 = vmatprep.subr.mxu0 0.0
    %2194 = vmatpush1.msra.mxu0 0.0
    %2195 = vmatprep.subr.mxu0 0.0
    %2196 = vmatpush1.msra.mxu0 %v2164
    %2197 = vmatprep.subr.mxu0 0.0
    %2198 = vmatpush1.msra.mxu0 %v2162
    %2199 = vmatprep.subr.mxu0 0.0
    %2200 = vmatpush1.msra.mxu0 %v2160
    %2201 = vmatprep.subr.mxu0 0.0
    %2202 = vmatpush1.msra.mxu0 %v2158
    %2203 = vmatprep.subr.mxu0 0.0
    %2204 = vmatpush1.msra.mxu0 %v2156
    %2205 = vmatprep.subr.mxu0 0.0
    %2206 = vmatpush1.msra.mxu0 %v2154
    %2207 = vmatprep.subr.mxu0 0.0
    %2208 = vmatpush1.msra.mxu0 %v2152
    %2209 = vmatprep.subr.mxu0 0.0
    %2210 = vmatpush1.msra.mxu0 %v2150
    %2211 = vmatprep.subr.mxu0 0.0
    %2212 = vmatpush2.msra.mxu0 0.0
    %2213 = vmatprep.subr.mxu0 0.0
    %2214 = vmatpush2.msra.mxu0 0.0
    %2215 = vmatprep.subr.mxu0 0.0
    %2216 = vmatpush2.msra.mxu0 0.0
    %2217 = vmatprep.subr.mxu0 0.0
    %2218 = vmatpush2.msra.mxu0 0.0
    %2219 = vmatprep.subr.mxu0 0.0
    %2220 = vmatpush2.msra.mxu0 0.0
    %2221 = vmatprep.subr.mxu0 0.0
    %2222 = vmatpush2.msra.mxu0 0.0
    %2223 = vmatprep.subr.mxu0 0.0
    %2224 = vmatpush2.msra.mxu0 0.0
    %2225 = vmatprep.subr.mxu0 0.0
    %2226 = vmatpush2.msra.mxu0 0.0
    %2227 = vmatprep.subr.mxu0 0.0
    %2228 = vmatpush2.msra.mxu0 0.0
    %2229 = vmatprep.subr.mxu0 0.0
    %2230 = vmatpush2.msra.mxu0 0.0
    %2231 = vmatprep.subr.mxu0 0.0
    %2232 = vmatpush2.msra.mxu0 0.0
    %2233 = vmatprep.subr.mxu0 0.0
    %2234 = vmatpush2.msra.mxu0 0.0
    %2235 = vmatprep.subr.mxu0 0.0
    %2236 = vmatpush2.msra.mxu0 0.0
    %2237 = vmatprep.subr.mxu0 0.0
    %2238 = vmatpush2.msra.mxu0 0.0
    %2239 = vmatprep.subr.mxu0 0.0
    %2240 = vmatpush2.msra.mxu0 0.0
    %2241 = vmatprep.subr.mxu0 0.0
    %2242 = vmatpush2.msra.mxu0 0.0
    %2243 = vmatprep.mubr.f32.mxu0 0.0
    %2244 = vmatmul.mubr.f32.gmra.mxu0 %v2174
    %v2245 = vpop.f32.mrf.mxu0
    %v2246 = vadd.f32 0.0, %v2245
    %v2247 = vpop.f32.mrf.mxu0
    %2248 = vmatprep.mubr.f32.mxu0 0.0
    %2249 = vmatmul.mubr.f32.gmra.mxu0 %v2177
    %v2250 = vpop.f32.mrf.mxu0
    %v2251 = vadd.f32 0.0, %v2250
    %v2252 = vpop.f32.mrf.mxu0
    %2253 = vdwg.mxu0
    %2256 = vrot.lane.b32.xlu0 %v1638, 8
    %v2257 = vpop.permute.xlu0 %2256
    %2258 = vrot.lane.b32.xlu0 %v1643, 8
    %v2259 = vpop.permute.xlu0 %2258
    %2264 = vrot.lane.b32.xlu0 %v1942, 16
    %v2265 = vpop.permute.xlu0 %2264
    %2266 = vrot.lane.b32.xlu0 %v1947, 16
    %v2267 = vpop.permute.xlu0 %2266
    %2272 = vrot.lane.b32.xlu0 %v2246, 24
    %v2273 = vpop.permute.xlu0 %2272
    %2274 = vrot.lane.b32.xlu0 %v2251, 24
    %v2275 = vpop.permute.xlu0 %2274
    %v2278 = vsel %vm1075, %v1354, %v2257
    %v2279 = vsel %vm1075, %v1359, %v2259
    %v2280 = vsel %vm1120, %v2278, %v2265
    %v2281 = vsel %vm1120, %v2279, %v2267
    %vm2282 = vcmask 195584
    %v2283 = vsel %vm2282, %v2280, %v2273
    %v2284 = vsel %vm2282, %v2281, %v2275
    %v2285 = vld [vmem:[%s51] sm:$0xff]
    %v2286 = vld [vmem:[%s51 + $0x8] sm:$0xff]
    %v2287 = vld [vmem:[%s51 + $0x10] sm:$0xff]
    %v2288 = vld [vmem:[%s51 + $0x18] sm:$0xff]
    %v2289 = vld [vmem:[%s53] sm:$0x1]
    %v2291 = vlaneseq
    %v2292 = vshrl.u32 %v2291, 7
    %v2293 = vsub.s32 0, %v2292
    %v2294 = vrot.slane %v2289, %v2293
    %v2297 = vsel %vm311, %v2283, 0
    %v2300 = vsel %vm311, %v2284, 0
    %2302 = vmatprep.subr.mxu0 0.0
    %2303 = vmatpush1.msra.mxu0 0.0
    %2304 = vmatprep.subr.mxu0 0.0
    %2305 = vmatpush1.msra.mxu0 0.0
    %2306 = vmatprep.subr.mxu0 0.0
    %2307 = vmatpush1.msra.mxu0 0.0
    %2308 = vmatprep.subr.mxu0 0.0
    %2309 = vmatpush1.msra.mxu0 0.0
    %2310 = vmatprep.subr.mxu0 0.0
    %2311 = vmatpush1.msra.mxu0 0.0
    %2312 = vmatprep.subr.mxu0 0.0
    %2313 = vmatpush1.msra.mxu0 0.0
    %2314 = vmatprep.subr.mxu0 0.0
    %2315 = vmatpush1.msra.mxu0 0.0
    %2316 = vmatprep.subr.mxu0 0.0
    %2317 = vmatpush1.msra.mxu0 0.0
    %2318 = vmatprep.subr.mxu0 0.0
    %2319 = vmatpush1.msra.mxu0 0.0
    %2320 = vmatprep.subr.mxu0 0.0
    %2321 = vmatpush1.msra.mxu0 0.0
    %2322 = vmatprep.subr.mxu0 0.0
    %2323 = vmatpush1.msra.mxu0 0.0
    %2324 = vmatprep.subr.mxu0 0.0
    %2325 = vmatpush1.msra.mxu0 0.0
    %2326 = vmatprep.subr.mxu0 0.0
    %2327 = vmatpush1.msra.mxu0 %v2288
    %2328 = vmatprep.subr.mxu0 0.0
    %2329 = vmatpush1.msra.mxu0 %v2287
    %2330 = vmatprep.subr.mxu0 0.0
    %2331 = vmatpush1.msra.mxu0 %v2286
    %2332 = vmatprep.subr.mxu0 0.0
    %2333 = vmatpush1.msra.mxu0 %v2285
    %2334 = vmatprep.subr.mxu0 0.0
    %2335 = vmatpush2.msra.mxu0 0.0
    %2336 = vmatprep.subr.mxu0 0.0
    %2337 = vmatpush2.msra.mxu0 0.0
    %2338 = vmatprep.subr.mxu0 0.0
    %2339 = vmatpush2.msra.mxu0 0.0
    %2340 = vmatprep.subr.mxu0 0.0
    %2341 = vmatpush2.msra.mxu0 0.0
    %2342 = vmatprep.subr.mxu0 0.0
    %2343 = vmatpush2.msra.mxu0 0.0
    %2344 = vmatprep.subr.mxu0 0.0
    %2345 = vmatpush2.msra.mxu0 0.0
    %2346 = vmatprep.subr.mxu0 0.0
    %2347 = vmatpush2.msra.mxu0 0.0
    %2348 = vmatprep.subr.mxu0 0.0
    %2349 = vmatpush2.msra.mxu0 0.0
    %2350 = vmatprep.subr.mxu0 0.0
    %2351 = vmatpush2.msra.mxu0 0.0
    %2352 = vmatprep.subr.mxu0 0.0
    %2353 = vmatpush2.msra.mxu0 0.0
    %2354 = vmatprep.subr.mxu0 0.0
    %2355 = vmatpush2.msra.mxu0 0.0
    %2356 = vmatprep.subr.mxu0 0.0
    %2357 = vmatpush2.msra.mxu0 0.0
    %2358 = vmatprep.subr.mxu0 0.0
    %2359 = vmatpush2.msra.mxu0 0.0
    %2360 = vmatprep.subr.mxu0 0.0
    %2361 = vmatpush2.msra.mxu0 0.0
    %2362 = vmatprep.subr.mxu0 0.0
    %2363 = vmatpush2.msra.mxu0 0.0
    %2364 = vmatprep.subr.mxu0 0.0
    %2365 = vmatpush2.msra.mxu0 0.0
    %2366 = vmatprep.mubr.f32.mxu0 0.0
    %2367 = vmatmul.mubr.f32.gmra.mxu0 %v2297
    %v2368 = vpop.f32.mrf.mxu0
    %v2369 = vadd.f32 %v2294, %v2368
    %v2370 = vpop.f32.mrf.mxu0
    %2371 = vmatprep.mubr.f32.mxu0 0.0
    %2372 = vmatmul.mubr.f32.gmra.mxu0 %v2300
    %v2373 = vpop.f32.mrf.mxu0
    %v2374 = vadd.f32 %v2294, %v2373
    %v2375 = vpop.f32.mrf.mxu0
    %2376 = vdwg.mxu0
    %v2377 = vadd.f32 %v286, %v2369
    %v2378 = vadd.f32 %v287, %v2374
    %v2379 = vsel %vm311, %v2377, 0.0
    %2380 = vadd.xlane.f32.xlu0 %v2379
    %v2381 = vpop.xlane.xlu0 %2380
    %v2382 = vsel %vm311, %v2378, 0.0
    %2383 = vadd.xlane.f32.xlu0 %v2382
    %v2384 = vpop.xlane.xlu0 %2383
    %v2385 = vrcp.pop 32.0
    %v2386 = vmul.f32 %v2381, %v2385
    %v2387 = vmul.f32 %v2384, %v2385
    %v2388 = vsub.f32 %v2377, %v2386
    %v2389 = vsub.f32 %v2378, %v2387
    %v2390 = vmul.f32 %v2388, %v2388
    %v2391 = vmul.f32 %v2389, %v2389
    %v2392 = vsel %vm311, %v2390, 0.0
    %2393 = vadd.xlane.f32.xlu0 %v2392
    %v2394 = vpop.xlane.xlu0 %2393
    %v2395 = vsel %vm311, %v2391, 0.0
    %2396 = vadd.xlane.f32.xlu0 %v2395
    %v2397 = vpop.xlane.xlu0 %2396
    %v2398 = vmul.f32 %v2394, %v2385
    %v2399 = vmul.f32 %v2397, %v2385
    %v2400 = vadd.f32 %v2398, 1e-05
    %v2401 = vadd.f32 %v2399, 1e-05
    %v2402 = vrsqrt.pop %v2400
    %v2403 = vrsqrt.pop %v2401
    %v2404 = vmul.f32 %v2388, %v2402
    %v2405 = vmul.f32 %v2389, %v2403
    %v2406 = vlaneseq
    %v2407 = vshrl.u32 %v2406, 7
    %v2408 = vsub.s32 0, %v2407
    %v2409 = vrot.slane %v284, %v2408
    %v2410 = vmul.f32 %v2404, %v2409
    %v2411 = vmul.f32 %v2405, %v2409
    %v2412 = vlaneseq
    %v2413 = vshrl.u32 %v2412, 7
    %v2414 = vsub.s32 0, %v2413
    %v2415 = vrot.slane %v285, %v2414
    %v2416 = vadd.f32 %v2410, %v2415
    %v2417 = vadd.f32 %v2411, %v2415
    %v2418 = vld [vmem:[%s63] sm:$0xff]
    %v2419 = vld [vmem:[%s63 + $0x8] sm:$0xff]
    %v2420 = vld [vmem:[%s63 + $0x10] sm:$0xff]
    %v2421 = vld [vmem:[%s63 + $0x18] sm:$0xff]
    %v2422 = vld [vmem:[%s65] sm:$0x1]
    %v2424 = vlaneseq
    %v2425 = vshrl.u32 %v2424, 7
    %v2426 = vsub.s32 0, %v2425
    %v2427 = vrot.slane %v2422, %v2426
    %v2430 = vsel %vm311, %v2416, 0
    %v2433 = vsel %vm311, %v2417, 0
    %2435 = vmatprep.subr.mxu0 0.0
    %2436 = vmatpush1.msra.mxu0 0.0
    %2437 = vmatprep.subr.mxu0 0.0
    %2438 = vmatpush1.msra.mxu0 0.0
    %2439 = vmatprep.subr.mxu0 0.0
    %2440 = vmatpush1.msra.mxu0 0.0
    %2441 = vmatprep.subr.mxu0 0.0
    %2442 = vmatpush1.msra.mxu0 0.0
    %2443 = vmatprep.subr.mxu0 0.0
    %2444 = vmatpush1.msra.mxu0 0.0
    %2445 = vmatprep.subr.mxu0 0.0
    %2446 = vmatpush1.msra.mxu0 0.0
    %2447 = vmatprep.subr.mxu0 0.0
    %2448 = vmatpush1.msra.mxu0 0.0
    %2449 = vmatprep.subr.mxu0 0.0
    %2450 = vmatpush1.msra.mxu0 0.0
    %2451 = vmatprep.subr.mxu0 0.0
    %2452 = vmatpush1.msra.mxu0 0.0
    %2453 = vmatprep.subr.mxu0 0.0
    %2454 = vmatpush1.msra.mxu0 0.0
    %2455 = vmatprep.subr.mxu0 0.0
    %2456 = vmatpush1.msra.mxu0 0.0
    %2457 = vmatprep.subr.mxu0 0.0
    %2458 = vmatpush1.msra.mxu0 0.0
    %2459 = vmatprep.subr.mxu0 0.0
    %2460 = vmatpush1.msra.mxu0 %v2421
    %2461 = vmatprep.subr.mxu0 0.0
    %2462 = vmatpush1.msra.mxu0 %v2420
    %2463 = vmatprep.subr.mxu0 0.0
    %2464 = vmatpush1.msra.mxu0 %v2419
    %2465 = vmatprep.subr.mxu0 0.0
    %2466 = vmatpush1.msra.mxu0 %v2418
    %2467 = vmatprep.subr.mxu0 0.0
    %2468 = vmatpush2.msra.mxu0 0.0
    %2469 = vmatprep.subr.mxu0 0.0
    %2470 = vmatpush2.msra.mxu0 0.0
    %2471 = vmatprep.subr.mxu0 0.0
    %2472 = vmatpush2.msra.mxu0 0.0
    %2473 = vmatprep.subr.mxu0 0.0
    %2474 = vmatpush2.msra.mxu0 0.0
    %2475 = vmatprep.subr.mxu0 0.0
    %2476 = vmatpush2.msra.mxu0 0.0
    %2477 = vmatprep.subr.mxu0 0.0
    %2478 = vmatpush2.msra.mxu0 0.0
    %2479 = vmatprep.subr.mxu0 0.0
    %2480 = vmatpush2.msra.mxu0 0.0
    %2481 = vmatprep.subr.mxu0 0.0
    %2482 = vmatpush2.msra.mxu0 0.0
    %2483 = vmatprep.subr.mxu0 0.0
    %2484 = vmatpush2.msra.mxu0 0.0
    %2485 = vmatprep.subr.mxu0 0.0
    %2486 = vmatpush2.msra.mxu0 0.0
    %2487 = vmatprep.subr.mxu0 0.0
    %2488 = vmatpush2.msra.mxu0 0.0
    %2489 = vmatprep.subr.mxu0 0.0
    %2490 = vmatpush2.msra.mxu0 0.0
    %2491 = vmatprep.subr.mxu0 0.0
    %2492 = vmatpush2.msra.mxu0 0.0
    %2493 = vmatprep.subr.mxu0 0.0
    %2494 = vmatpush2.msra.mxu0 0.0
    %2495 = vmatprep.subr.mxu0 0.0
    %2496 = vmatpush2.msra.mxu0 0.0
    %2497 = vmatprep.subr.mxu0 0.0
    %2498 = vmatpush2.msra.mxu0 0.0
    %2499 = vmatprep.mubr.f32.mxu0 0.0
    %2500 = vmatmul.mubr.f32.gmra.mxu0 %v2430
    %v2501 = vpop.f32.mrf.mxu0
    %v2502 = vadd.f32 %v2427, %v2501
    %v2503 = vpop.f32.mrf.mxu0
    %2504 = vmatprep.mubr.f32.mxu0 0.0
    %2505 = vmatmul.mubr.f32.gmra.mxu0 %v2433
    %v2506 = vpop.f32.mrf.mxu0
    %v2507 = vadd.f32 %v2427, %v2506
    %v2508 = vpop.f32.mrf.mxu0
    %2509 = vdwg.mxu0
    %v2510 = vmax.f32 %v2502, 0.0
    %v2511 = vmax.f32 %v2507, 0.0
    %v2512 = vld [vmem:[%s67] sm:$0xff]
    %v2513 = vld [vmem:[%s67 + $0x8] sm:$0xff]
    %v2514 = vld [vmem:[%s67 + $0x10] sm:$0xff]
    %v2515 = vld [vmem:[%s67 + $0x18] sm:$0xff]
    %v2516 = vld [vmem:[%s67 + $0x20] sm:$0xff]
    %v2517 = vld [vmem:[%s67 + $0x28] sm:$0xff]
    %v2518 = vld [vmem:[%s67 + $0x30] sm:$0xff]
    %v2519 = vld [vmem:[%s67 + $0x38] sm:$0xff]
    %v2520 = vld [vmem:[#allocation2] sm:$0x1]
    %v2522 = vlaneseq
    %v2523 = vshrl.u32 %v2522, 7
    %v2524 = vsub.s32 0, %v2523
    %v2525 = vrot.slane %v2520, %v2524
    %v2528 = vsel %vm1226, %v2510, 0
    %v2531 = vsel %vm1226, %v2511, 0
    %2533 = vmatprep.subr.mxu0 0.0
    %2534 = vmatpush1.msra.mxu0 0.0
    %2535 = vmatprep.subr.mxu0 0.0
    %2536 = vmatpush1.msra.mxu0 0.0
    %2537 = vmatprep.subr.mxu0 0.0
    %2538 = vmatpush1.msra.mxu0 0.0
    %2539 = vmatprep.subr.mxu0 0.0
    %2540 = vmatpush1.msra.mxu0 0.0
    %2541 = vmatprep.subr.mxu0 0.0
    %2542 = vmatpush1.msra.mxu0 0.0
    %2543 = vmatprep.subr.mxu0 0.0
    %2544 = vmatpush1.msra.mxu0 0.0
    %2545 = vmatprep.subr.mxu0 0.0
    %2546 = vmatpush1.msra.mxu0 0.0
    %2547 = vmatprep.subr.mxu0 0.0
    %2548 = vmatpush1.msra.mxu0 0.0
    %2549 = vmatprep.subr.mxu0 0.0
    %2550 = vmatpush1.msra.mxu0 %v2519
    %2551 = vmatprep.subr.mxu0 0.0
    %2552 = vmatpush1.msra.mxu0 %v2518
    %2553 = vmatprep.subr.mxu0 0.0
    %2554 = vmatpush1.msra.mxu0 %v2517
    %2555 = vmatprep.subr.mxu0 0.0
    %2556 = vmatpush1.msra.mxu0 %v2516
    %2557 = vmatprep.subr.mxu0 0.0
    %2558 = vmatpush1.msra.mxu0 %v2515
    %2559 = vmatprep.subr.mxu0 0.0
    %2560 = vmatpush1.msra.mxu0 %v2514
    %2561 = vmatprep.subr.mxu0 0.0
    %2562 = vmatpush1.msra.mxu0 %v2513
    %2563 = vmatprep.subr.mxu0 0.0
    %2564 = vmatpush1.msra.mxu0 %v2512
    %2565 = vmatprep.subr.mxu0 0.0
    %2566 = vmatpush2.msra.mxu0 0.0
    %2567 = vmatprep.subr.mxu0 0.0
    %2568 = vmatpush2.msra.mxu0 0.0
    %2569 = vmatprep.subr.mxu0 0.0
    %2570 = vmatpush2.msra.mxu0 0.0
    %2571 = vmatprep.subr.mxu0 0.0
    %2572 = vmatpush2.msra.mxu0 0.0
    %2573 = vmatprep.subr.mxu0 0.0
    %2574 = vmatpush2.msra.mxu0 0.0
    %2575 = vmatprep.subr.mxu0 0.0
    %2576 = vmatpush2.msra.mxu0 0.0
    %2577 = vmatprep.subr.mxu0 0.0
    %2578 = vmatpush2.msra.mxu0 0.0
    %2579 = vmatprep.subr.mxu0 0.0
    %2580 = vmatpush2.msra.mxu0 0.0
    %2581 = vmatprep.subr.mxu0 0.0
    %2582 = vmatpush2.msra.mxu0 0.0
    %2583 = vmatprep.subr.mxu0 0.0
    %2584 = vmatpush2.msra.mxu0 0.0
    %2585 = vmatprep.subr.mxu0 0.0
    %2586 = vmatpush2.msra.mxu0 0.0
    %2587 = vmatprep.subr.mxu0 0.0
    %2588 = vmatpush2.msra.mxu0 0.0
    %2589 = vmatprep.subr.mxu0 0.0
    %2590 = vmatpush2.msra.mxu0 0.0
    %2591 = vmatprep.subr.mxu0 0.0
    %2592 = vmatpush2.msra.mxu0 0.0
    %2593 = vmatprep.subr.mxu0 0.0
    %2594 = vmatpush2.msra.mxu0 0.0
    %2595 = vmatprep.subr.mxu0 0.0
    %2596 = vmatpush2.msra.mxu0 0.0
    %2597 = vmatprep.mubr.f32.mxu0 0.0
    %2598 = vmatmul.mubr.f32.gmra.mxu0 %v2528
    %v2599 = vpop.f32.mrf.mxu0
    %v2600 = vadd.f32 %v2525, %v2599
    %v2601 = vpop.f32.mrf.mxu0
    %2602 = vmatprep.mubr.f32.mxu0 0.0
    %2603 = vmatmul.mubr.f32.gmra.mxu0 %v2531
    %v2604 = vpop.f32.mrf.mxu0
    %v2605 = vadd.f32 %v2525, %v2604
    %v2606 = vpop.f32.mrf.mxu0
    %2607 = vdwg.mxu0
    %v2608 = vadd.f32 %v2416, %v2600
    %v2609 = vadd.f32 %v2417, %v2605
    %v2610 = vsel %vm311, %v2608, 0.0
    %2611 = vadd.xlane.f32.xlu0 %v2610
    %v2612 = vpop.xlane.xlu0 %2611
    %v2613 = vsel %vm311, %v2609, 0.0
    %2614 = vadd.xlane.f32.xlu0 %v2613
    %v2615 = vpop.xlane.xlu0 %2614
    %v2616 = vmul.f32 %v2612, %v2385
    %v2617 = vmul.f32 %v2615, %v2385
    %v2618 = vsub.f32 %v2608, %v2616
    %v2619 = vsub.f32 %v2609, %v2617
    %v2620 = vmul.f32 %v2618, %v2618
    %v2621 = vmul.f32 %v2619, %v2619
    %v2622 = vsel %vm311, %v2620, 0.0
    %2623 = vadd.xlane.f32.xlu0 %v2622
    %v2624 = vpop.xlane.xlu0 %2623
    %v2625 = vsel %vm311, %v2621, 0.0
    %2626 = vadd.xlane.f32.xlu0 %v2625
    %v2627 = vpop.xlane.xlu0 %2626
    %v2628 = vmul.f32 %v2624, %v2385
    %v2629 = vmul.f32 %v2627, %v2385
    %v2630 = vadd.f32 %v2628, 1e-05
    %v2631 = vadd.f32 %v2629, 1e-05
    %v2632 = vrsqrt.pop %v2630
    %v2633 = vrsqrt.pop %v2631
    %v2634 = vmul.f32 %v2618, %v2632
    %v2635 = vmul.f32 %v2619, %v2633
    %v2636 = vlaneseq
    %v2637 = vshrl.u32 %v2636, 7
    %v2638 = vsub.s32 1, %v2637
    %v2639 = vrot.slane %v284, %v2638
    %v2640 = vmul.f32 %v2634, %v2639
    %v2641 = vmul.f32 %v2635, %v2639
    %v2642 = vlaneseq
    %v2643 = vshrl.u32 %v2642, 7
    %v2644 = vsub.s32 1, %v2643
    %v2645 = vrot.slane %v285, %v2644
    %v2646 = vadd.f32 %v2640, %v2645
    %v2647 = vadd.f32 %v2641, %v2645
    %v2648 = vld [vmem:[%s19] sm:$0xff]
    %v2649 = vld [vmem:[%s19 + $0x8] sm:$0xff]
    %2650 = vrot.lane.b32.xlu0 %v1053, 96
    %v2651 = vpop.permute.xlu0 %2650
    %2652 = vrot.lane.b32.xlu0 %v1054, 96
    %v2653 = vpop.permute.xlu0 %2652
    %2656 = vrot.lane.b32.xlu0 %v1045, 104
    %v2657 = vpop.permute.xlu0 %2656
    %2658 = vrot.lane.b32.xlu0 %v1050, 104
    %v2659 = vpop.permute.xlu0 %2658
    %v2662 = vsel %vm1075, %v2651, %v2657
    %v2663 = vsel %vm1075, %v2653, %v2659
    %2666 = vrot.lane.b32.xlu0 %v769, 8
    %v2667 = vpop.permute.xlu0 %2666
    %2668 = vrot.lane.b32.xlu0 %v774, 8
    %v2669 = vpop.permute.xlu0 %2668
    %v2672 = vsel %vm1075, %v1063, %v2667
    %v2673 = vsel %vm1075, %v1064, %v2669
    %v2674 = vmul.f32 %v2662, 0.25
    %v2675 = vmul.f32 %v2663, 0.25
    %v2677 = vsel %vm1120, %v2674, 0
    %v2680 = vsel %vm1120, %v2675, 0
    %v2683 = vsel %vm1120, %v2672, 0
    %v2686 = vsel %vm1120, %v2673, 0
    %2688 = vmatprep.subr.mxu0 0.0
    %2689 = vmatpush1.xpose.msra.mxu0 0.0
    %2690 = vmatprep.subr.mxu0 0.0
    %2691 = vmatpush1.xpose.msra.mxu0 0.0
    %2692 = vmatprep.subr.mxu0 0.0
    %2693 = vmatpush1.xpose.msra.mxu0 0.0
    %2694 = vmatprep.subr.mxu0 0.0
    %2695 = vmatpush1.xpose.msra.mxu0 0.0
    %2696 = vmatprep.subr.mxu0 0.0
    %2697 = vmatpush1.xpose.msra.mxu0 0.0
    %2698 = vmatprep.subr.mxu0 0.0
    %2699 = vmatpush1.xpose.msra.mxu0 0.0
    %2700 = vmatprep.subr.mxu0 0.0
    %2701 = vmatpush1.xpose.msra.mxu0 0.0
    %2702 = vmatprep.subr.mxu0 0.0
    %2703 = vmatpush1.xpose.msra.mxu0 0.0
    %2704 = vmatprep.subr.mxu0 0.0
    %2705 = vmatpush1.xpose.msra.mxu0 0.0
    %2706 = vmatprep.subr.mxu0 0.0
    %2707 = vmatpush1.xpose.msra.mxu0 0.0
    %2708 = vmatprep.subr.mxu0 0.0
    %2709 = vmatpush1.xpose.msra.mxu0 0.0
    %2710 = vmatprep.subr.mxu0 0.0
    %2711 = vmatpush1.xpose.msra.mxu0 0.0
    %2712 = vmatprep.subr.mxu0 0.0
    %2713 = vmatpush1.xpose.msra.mxu0 0.0
    %2714 = vmatprep.subr.mxu0 0.0
    %2715 = vmatpush1.xpose.msra.mxu0 0.0
    %2716 = vmatprep.subr.mxu0 0.0
    %2717 = vmatpush1.xpose.msra.mxu0 %v2686
    %2718 = vmatprep.subr.mxu0 0.0
    %2719 = vmatpush1.xpose.msra.mxu0 %v2683
    %2720 = vmatprep.subr.mxu0 0.0
    %2721 = vmatpush2.xpose.msra.mxu0 0.0
    %2722 = vmatprep.subr.mxu0 0.0
    %2723 = vmatpush2.xpose.msra.mxu0 0.0
    %2724 = vmatprep.subr.mxu0 0.0
    %2725 = vmatpush2.xpose.msra.mxu0 0.0
    %2726 = vmatprep.subr.mxu0 0.0
    %2727 = vmatpush2.xpose.msra.mxu0 0.0
    %2728 = vmatprep.subr.mxu0 0.0
    %2729 = vmatpush2.xpose.msra.mxu0 0.0
    %2730 = vmatprep.subr.mxu0 0.0
    %2731 = vmatpush2.xpose.msra.mxu0 0.0
    %2732 = vmatprep.subr.mxu0 0.0
    %2733 = vmatpush2.xpose.msra.mxu0 0.0
    %2734 = vmatprep.subr.mxu0 0.0
    %2735 = vmatpush2.xpose.msra.mxu0 0.0
    %2736 = vmatprep.subr.mxu0 0.0
    %2737 = vmatpush2.xpose.msra.mxu0 0.0
    %2738 = vmatprep.subr.mxu0 0.0
    %2739 = vmatpush2.xpose.msra.mxu0 0.0
    %2740 = vmatprep.subr.mxu0 0.0
    %2741 = vmatpush2.xpose.msra.mxu0 0.0
    %2742 = vmatprep.subr.mxu0 0.0
    %2743 = vmatpush2.xpose.msra.mxu0 0.0
    %2744 = vmatprep.subr.mxu0 0.0
    %2745 = vmatpush2.xpose.msra.mxu0 0.0
    %2746 = vmatprep.subr.mxu0 0.0
    %2747 = vmatpush2.xpose.msra.mxu0 0.0
    %2748 = vmatprep.subr.mxu0 0.0
    %2749 = vmatpush2.xpose.msra.mxu0 0.0
    %2750 = vmatprep.subr.mxu0 0.0
    %2751 = vmatpush2.xpose.msra.mxu0 0.0
    %2752 = vmatprep.mubr.f32.mxu0 0.0
    %2753 = vmatmul.mubr.f32.gmra.mxu0 %v2677
    %v2754 = vpop.f32.mrf.mxu0
    %v2755 = vadd.f32 %v2648, %v2754
    %v2756 = vpop.f32.mrf.mxu0
    %2757 = vmatprep.mubr.f32.mxu0 0.0
    %2758 = vmatmul.mubr.f32.gmra.mxu0 %v2680
    %v2759 = vpop.f32.mrf.mxu0
    %v2760 = vadd.f32 %v2649, %v2759
    %v2761 = vpop.f32.mrf.mxu0
    %2762 = vdwg.mxu0
    %v2763 = vsel %vm1120, %v2755, -inf
    %2764 = vmax.xlane.f32.xlu0 %v2763
    %v2765 = vpop.xlane.xlu0 %2764
    %v2766 = vsel %vm1120, %v2760, -inf
    %2767 = vmax.xlane.f32.xlu0 %v2766
    %v2768 = vpop.xlane.xlu0 %2767
    %v2769 = vsub.f32 %v2755, %v2765
    %v2770 = vsub.f32 %v2760, %v2768
    %v2771 = vmul.f32 %v2769, 1.442695
    %v2772 = vpow.pop %v2771
    %v2773 = vmul.f32 %v2770, 1.442695
    %v2774 = vpow.pop %v2773
    %v2775 = vsel %vm1120, %v2772, 0.0
    %2776 = vadd.xlane.f32.xlu0 %v2775
    %v2777 = vpop.xlane.xlu0 %2776
    %v2778 = vsel %vm1120, %v2774, 0.0
    %2779 = vadd.xlane.f32.xlu0 %v2778
    %v2780 = vpop.xlane.xlu0 %2779
    %v2781 = vrcp.pop %v2777
    %v2782 = vrcp.pop %v2780
    %v2783 = vmul.f32 %v2772, %v2781
    %v2784 = vmul.f32 %v2774, %v2782
    %2787 = vrot.lane.b32.xlu0 %v675, 96
    %v2788 = vpop.permute.xlu0 %2787
    %2789 = vrot.lane.b32.xlu0 %v680, 96
    %v2790 = vpop.permute.xlu0 %2789
    %v2794 = vsel %vm1120, %v2783, 0
    %v2797 = vsel %vm1120, %v2784, 0
    %2799 = vmatprep.subr.mxu0 0.0
    %2800 = vmatpush1.msra.mxu0 0.0
    %2801 = vmatprep.subr.mxu0 0.0
    %2802 = vmatpush1.msra.mxu0 0.0
    %2803 = vmatprep.subr.mxu0 0.0
    %2804 = vmatpush1.msra.mxu0 0.0
    %2805 = vmatprep.subr.mxu0 0.0
    %2806 = vmatpush1.msra.mxu0 0.0
    %2807 = vmatprep.subr.mxu0 0.0
    %2808 = vmatpush1.msra.mxu0 0.0
    %2809 = vmatprep.subr.mxu0 0.0
    %2810 = vmatpush1.msra.mxu0 0.0
    %2811 = vmatprep.subr.mxu0 0.0
    %2812 = vmatpush1.msra.mxu0 0.0
    %2813 = vmatprep.subr.mxu0 0.0
    %2814 = vmatpush1.msra.mxu0 0.0
    %2815 = vmatprep.subr.mxu0 0.0
    %2816 = vmatpush1.msra.mxu0 0.0
    %2817 = vmatprep.subr.mxu0 0.0
    %2818 = vmatpush1.msra.mxu0 0.0
    %2819 = vmatprep.subr.mxu0 0.0
    %2820 = vmatpush1.msra.mxu0 0.0
    %2821 = vmatprep.subr.mxu0 0.0
    %2822 = vmatpush1.msra.mxu0 0.0
    %2823 = vmatprep.subr.mxu0 0.0
    %2824 = vmatpush1.msra.mxu0 0.0
    %2825 = vmatprep.subr.mxu0 0.0
    %2826 = vmatpush1.msra.mxu0 0.0
    %2827 = vmatprep.subr.mxu0 0.0
    %2828 = vmatpush1.msra.mxu0 %v2790
    %2829 = vmatprep.subr.mxu0 0.0
    %2830 = vmatpush1.msra.mxu0 %v2788
    %2831 = vmatprep.subr.mxu0 0.0
    %2832 = vmatpush2.msra.mxu0 0.0
    %2833 = vmatprep.subr.mxu0 0.0
    %2834 = vmatpush2.msra.mxu0 0.0
    %2835 = vmatprep.subr.mxu0 0.0
    %2836 = vmatpush2.msra.mxu0 0.0
    %2837 = vmatprep.subr.mxu0 0.0
    %2838 = vmatpush2.msra.mxu0 0.0
    %2839 = vmatprep.subr.mxu0 0.0
    %2840 = vmatpush2.msra.mxu0 0.0
    %2841 = vmatprep.subr.mxu0 0.0
    %2842 = vmatpush2.msra.mxu0 0.0
    %2843 = vmatprep.subr.mxu0 0.0
    %2844 = vmatpush2.msra.mxu0 0.0
    %2845 = vmatprep.subr.mxu0 0.0
    %2846 = vmatpush2.msra.mxu0 0.0
    %2847 = vmatprep.subr.mxu0 0.0
    %2848 = vmatpush2.msra.mxu0 0.0
    %2849 = vmatprep.subr.mxu0 0.0
    %2850 = vmatpush2.msra.mxu0 0.0
    %2851 = vmatprep.subr.mxu0 0.0
    %2852 = vmatpush2.msra.mxu0 0.0
    %2853 = vmatprep.subr.mxu0 0.0
    %2854 = vmatpush2.msra.mxu0 0.0
    %2855 = vmatprep.subr.mxu0 0.0
    %2856 = vmatpush2.msra.mxu0 0.0
    %2857 = vmatprep.subr.mxu0 0.0
    %2858 = vmatpush2.msra.mxu0 0.0
    %2859 = vmatprep.subr.mxu0 0.0
    %2860 = vmatpush2.msra.mxu0 0.0
    %2861 = vmatprep.subr.mxu0 0.0
    %2862 = vmatpush2.msra.mxu0 0.0
    %2863 = vmatprep.mubr.f32.mxu0 0.0
    %2864 = vmatmul.mubr.f32.gmra.mxu0 %v2794
    %v2865 = vpop.f32.mrf.mxu0
    %v2866 = vadd.f32 0.0, %v2865
    %v2867 = vpop.f32.mrf.mxu0
    %2868 = vmatprep.mubr.f32.mxu0 0.0
    %2869 = vmatmul.mubr.f32.gmra.mxu0 %v2797
    %v2870 = vpop.f32.mrf.mxu0
    %v2871 = vadd.f32 0.0, %v2870
    %v2872 = vpop.f32.mrf.mxu0
    %2873 = vdwg.mxu0
    %2874 = vrot.lane.b32.xlu0 %v1053, 88
    %v2875 = vpop.permute.xlu0 %2874
    %2876 = vrot.lane.b32.xlu0 %v1054, 88
    %v2877 = vpop.permute.xlu0 %2876
    %2880 = vrot.lane.b32.xlu0 %v1045, 96
    %v2881 = vpop.permute.xlu0 %2880
    %2882 = vrot.lane.b32.xlu0 %v1050, 96
    %v2883 = vpop.permute.xlu0 %2882
    %v2886 = vsel %vm1075, %v2875, %v2881
    %v2887 = vsel %vm1075, %v2877, %v2883
    %2890 = vrot.lane.b32.xlu0 %v1063, 120
    %v2891 = vpop.permute.xlu0 %2890
    %2892 = vrot.lane.b32.xlu0 %v1064, 120
    %v2893 = vpop.permute.xlu0 %2892
    %v2896 = vsel %vm1075, %v2891, %v769
    %v2897 = vsel %vm1075, %v2893, %v774
    %v2898 = vmul.f32 %v2886, 0.25
    %v2899 = vmul.f32 %v2887, 0.25
    %v2901 = vsel %vm1120, %v2898, 0
    %v2904 = vsel %vm1120, %v2899, 0
    %v2907 = vsel %vm1120, %v2896, 0
    %v2910 = vsel %vm1120, %v2897, 0
    %2912 = vmatprep.subr.mxu0 0.0
    %2913 = vmatpush1.xpose.msra.mxu0 0.0
    %2914 = vmatprep.subr.mxu0 0.0
    %2915 = vmatpush1.xpose.msra.mxu0 0.0
    %2916 = vmatprep.subr.mxu0 0.0
    %2917 = vmatpush1.xpose.msra.mxu0 0.0
    %2918 = vmatprep.subr.mxu0 0.0
    %2919 = vmatpush1.xpose.msra.mxu0 0.0
    %2920 = vmatprep.subr.mxu0 0.0
    %2921 = vmatpush1.xpose.msra.mxu0 0.0
    %2922 = vmatprep.subr.mxu0 0.0
    %2923 = vmatpush1.xpose.msra.mxu0 0.0
    %2924 = vmatprep.subr.mxu0 0.0
    %2925 = vmatpush1.xpose.msra.mxu0 0.0
    %2926 = vmatprep.subr.mxu0 0.0
    %2927 = vmatpush1.xpose.msra.mxu0 0.0
    %2928 = vmatprep.subr.mxu0 0.0
    %2929 = vmatpush1.xpose.msra.mxu0 0.0
    %2930 = vmatprep.subr.mxu0 0.0
    %2931 = vmatpush1.xpose.msra.mxu0 0.0
    %2932 = vmatprep.subr.mxu0 0.0
    %2933 = vmatpush1.xpose.msra.mxu0 0.0
    %2934 = vmatprep.subr.mxu0 0.0
    %2935 = vmatpush1.xpose.msra.mxu0 0.0
    %2936 = vmatprep.subr.mxu0 0.0
    %2937 = vmatpush1.xpose.msra.mxu0 0.0
    %2938 = vmatprep.subr.mxu0 0.0
    %2939 = vmatpush1.xpose.msra.mxu0 0.0
    %2940 = vmatprep.subr.mxu0 0.0
    %2941 = vmatpush1.xpose.msra.mxu0 %v2910
    %2942 = vmatprep.subr.mxu0 0.0
    %2943 = vmatpush1.xpose.msra.mxu0 %v2907
    %2944 = vmatprep.subr.mxu0 0.0
    %2945 = vmatpush2.xpose.msra.mxu0 0.0
    %2946 = vmatprep.subr.mxu0 0.0
    %2947 = vmatpush2.xpose.msra.mxu0 0.0
    %2948 = vmatprep.subr.mxu0 0.0
    %2949 = vmatpush2.xpose.msra.mxu0 0.0
    %2950 = vmatprep.subr.mxu0 0.0
    %2951 = vmatpush2.xpose.msra.mxu0 0.0
    %2952 = vmatprep.subr.mxu0 0.0
    %2953 = vmatpush2.xpose.msra.mxu0 0.0
    %2954 = vmatprep.subr.mxu0 0.0
    %2955 = vmatpush2.xpose.msra.mxu0 0.0
    %2956 = vmatprep.subr.mxu0 0.0
    %2957 = vmatpush2.xpose.msra.mxu0 0.0
    %2958 = vmatprep.subr.mxu0 0.0
    %2959 = vmatpush2.xpose.msra.mxu0 0.0
    %2960 = vmatprep.subr.mxu0 0.0
    %2961 = vmatpush2.xpose.msra.mxu0 0.0
    %2962 = vmatprep.subr.mxu0 0.0
    %2963 = vmatpush2.xpose.msra.mxu0 0.0
    %2964 = vmatprep.subr.mxu0 0.0
    %2965 = vmatpush2.xpose.msra.mxu0 0.0
    %2966 = vmatprep.subr.mxu0 0.0
    %2967 = vmatpush2.xpose.msra.mxu0 0.0
    %2968 = vmatprep.subr.mxu0 0.0
    %2969 = vmatpush2.xpose.msra.mxu0 0.0
    %2970 = vmatprep.subr.mxu0 0.0
    %2971 = vmatpush2.xpose.msra.mxu0 0.0
    %2972 = vmatprep.subr.mxu0 0.0
    %2973 = vmatpush2.xpose.msra.mxu0 0.0
    %2974 = vmatprep.subr.mxu0 0.0
    %2975 = vmatpush2.xpose.msra.mxu0 0.0
    %2976 = vmatprep.mubr.f32.mxu0 0.0
    %2977 = vmatmul.mubr.f32.gmra.mxu0 %v2901
    %v2978 = vpop.f32.mrf.mxu0
    %v2979 = vadd.f32 %v2648, %v2978
    %v2980 = vpop.f32.mrf.mxu0
    %2981 = vmatprep.mubr.f32.mxu0 0.0
    %2982 = vmatmul.mubr.f32.gmra.mxu0 %v2904
    %v2983 = vpop.f32.mrf.mxu0
    %v2984 = vadd.f32 %v2649, %v2983
    %v2985 = vpop.f32.mrf.mxu0
    %2986 = vdwg.mxu0
    %v2987 = vsel %vm1120, %v2979, -inf
    %2988 = vmax.xlane.f32.xlu0 %v2987
    %v2989 = vpop.xlane.xlu0 %2988
    %v2990 = vsel %vm1120, %v2984, -inf
    %2991 = vmax.xlane.f32.xlu0 %v2990
    %v2992 = vpop.xlane.xlu0 %2991
    %v2993 = vsub.f32 %v2979, %v2989
    %v2994 = vsub.f32 %v2984, %v2992
    %v2995 = vmul.f32 %v2993, 1.442695
    %v2996 = vpow.pop %v2995
    %v2997 = vmul.f32 %v2994, 1.442695
    %v2998 = vpow.pop %v2997
    %v2999 = vsel %vm1120, %v2996, 0.0
    %3000 = vadd.xlane.f32.xlu0 %v2999
    %v3001 = vpop.xlane.xlu0 %3000
    %v3002 = vsel %vm1120, %v2998, 0.0
    %3003 = vadd.xlane.f32.xlu0 %v3002
    %v3004 = vpop.xlane.xlu0 %3003
    %v3005 = vrcp.pop %v3001
    %v3006 = vrcp.pop %v3004
    %v3007 = vmul.f32 %v2996, %v3005
    %v3008 = vmul.f32 %v2998, %v3006
    %3009 = vrot.lane.b32.xlu0 %v675, 88
    %v3010 = vpop.permute.xlu0 %3009
    %3011 = vrot.lane.b32.xlu0 %v680, 88
    %v3012 = vpop.permute.xlu0 %3011
    %v3016 = vsel %vm1120, %v3007, 0
    %v3019 = vsel %vm1120, %v3008, 0
    %3021 = vmatprep.subr.mxu0 0.0
    %3022 = vmatpush1.msra.mxu0 0.0
    %3023 = vmatprep.subr.mxu0 0.0
    %3024 = vmatpush1.msra.mxu0 0.0
    %3025 = vmatprep.subr.mxu0 0.0
    %3026 = vmatpush1.msra.mxu0 0.0
    %3027 = vmatprep.subr.mxu0 0.0
    %3028 = vmatpush1.msra.mxu0 0.0
    %3029 = vmatprep.subr.mxu0 0.0
    %3030 = vmatpush1.msra.mxu0 0.0
    %3031 = vmatprep.subr.mxu0 0.0
    %3032 = vmatpush1.msra.mxu0 0.0
    %3033 = vmatprep.subr.mxu0 0.0
    %3034 = vmatpush1.msra.mxu0 0.0
    %3035 = vmatprep.subr.mxu0 0.0
    %3036 = vmatpush1.msra.mxu0 0.0
    %3037 = vmatprep.subr.mxu0 0.0
    %3038 = vmatpush1.msra.mxu0 0.0
    %3039 = vmatprep.subr.mxu0 0.0
    %3040 = vmatpush1.msra.mxu0 0.0
    %3041 = vmatprep.subr.mxu0 0.0
    %3042 = vmatpush1.msra.mxu0 0.0
    %3043 = vmatprep.subr.mxu0 0.0
    %3044 = vmatpush1.msra.mxu0 0.0
    %3045 = vmatprep.subr.mxu0 0.0
    %3046 = vmatpush1.msra.mxu0 0.0
    %3047 = vmatprep.subr.mxu0 0.0
    %3048 = vmatpush1.msra.mxu0 0.0
    %3049 = vmatprep.subr.mxu0 0.0
    %3050 = vmatpush1.msra.mxu0 %v3012
    %3051 = vmatprep.subr.mxu0 0.0
    %3052 = vmatpush1.msra.mxu0 %v3010
    %3053 = vmatprep.subr.mxu0 0.0
    %3054 = vmatpush2.msra.mxu0 0.0
    %3055 = vmatprep.subr.mxu0 0.0
    %3056 = vmatpush2.msra.mxu0 0.0
    %3057 = vmatprep.subr.mxu0 0.0
    %3058 = vmatpush2.msra.mxu0 0.0
    %3059 = vmatprep.subr.mxu0 0.0
    %3060 = vmatpush2.msra.mxu0 0.0
    %3061 = vmatprep.subr.mxu0 0.0
    %3062 = vmatpush2.msra.mxu0 0.0
    %3063 = vmatprep.subr.mxu0 0.0
    %3064 = vmatpush2.msra.mxu0 0.0
    %3065 = vmatprep.subr.mxu0 0.0
    %3066 = vmatpush2.msra.mxu0 0.0
    %3067 = vmatprep.subr.mxu0 0.0
    %3068 = vmatpush2.msra.mxu0 0.0
    %3069 = vmatprep.subr.mxu0 0.0
    %3070 = vmatpush2.msra.mxu0 0.0
    %3071 = vmatprep.subr.mxu0 0.0
    %3072 = vmatpush2.msra.mxu0 0.0
    %3073 = vmatprep.subr.mxu0 0.0
    %3074 = vmatpush2.msra.mxu0 0.0
    %3075 = vmatprep.subr.mxu0 0.0
    %3076 = vmatpush2.msra.mxu0 0.0
    %3077 = vmatprep.subr.mxu0 0.0
    %3078 = vmatpush2.msra.mxu0 0.0
    %3079 = vmatprep.subr.mxu0 0.0
    %3080 = vmatpush2.msra.mxu0 0.0
    %3081 = vmatprep.subr.mxu0 0.0
    %3082 = vmatpush2.msra.mxu0 0.0
    %3083 = vmatprep.subr.mxu0 0.0
    %3084 = vmatpush2.msra.mxu0 0.0
    %3085 = vmatprep.mubr.f32.mxu0 0.0
    %3086 = vmatmul.mubr.f32.gmra.mxu0 %v3016
    %v3087 = vpop.f32.mrf.mxu0
    %v3088 = vadd.f32 0.0, %v3087
    %v3089 = vpop.f32.mrf.mxu0
    %3090 = vmatprep.mubr.f32.mxu0 0.0
    %3091 = vmatmul.mubr.f32.gmra.mxu0 %v3019
    %v3092 = vpop.f32.mrf.mxu0
    %v3093 = vadd.f32 0.0, %v3092
    %v3094 = vpop.f32.mrf.mxu0
    %3095 = vdwg.mxu0
    %3096 = vrot.lane.b32.xlu0 %v1053, 80
    %v3097 = vpop.permute.xlu0 %3096
    %3098 = vrot.lane.b32.xlu0 %v1054, 80
    %v3099 = vpop.permute.xlu0 %3098
    %3102 = vrot.lane.b32.xlu0 %v1045, 88
    %v3103 = vpop.permute.xlu0 %3102
    %3104 = vrot.lane.b32.xlu0 %v1050, 88
    %v3105 = vpop.permute.xlu0 %3104
    %v3108 = vsel %vm1075, %v3097, %v3103
    %v3109 = vsel %vm1075, %v3099, %v3105
    %3110 = vrot.lane.b32.xlu0 %v1063, 112
    %v3111 = vpop.permute.xlu0 %3110
    %3112 = vrot.lane.b32.xlu0 %v1064, 112
    %v3113 = vpop.permute.xlu0 %3112
    %3116 = vrot.lane.b32.xlu0 %v769, 120
    %v3117 = vpop.permute.xlu0 %3116
    %3118 = vrot.lane.b32.xlu0 %v774, 120
    %v3119 = vpop.permute.xlu0 %3118
    %v3122 = vsel %vm1075, %v3111, %v3117
    %v3123 = vsel %vm1075, %v3113, %v3119
    %v3124 = vmul.f32 %v3108, 0.25
    %v3125 = vmul.f32 %v3109, 0.25
    %v3127 = vsel %vm1120, %v3124, 0
    %v3130 = vsel %vm1120, %v3125, 0
    %v3133 = vsel %vm1120, %v3122, 0
    %v3136 = vsel %vm1120, %v3123, 0
    %3138 = vmatprep.subr.mxu0 0.0
    %3139 = vmatpush1.xpose.msra.mxu0 0.0
    %3140 = vmatprep.subr.mxu0 0.0
    %3141 = vmatpush1.xpose.msra.mxu0 0.0
    %3142 = vmatprep.subr.mxu0 0.0
    %3143 = vmatpush1.xpose.msra.mxu0 0.0
    %3144 = vmatprep.subr.mxu0 0.0
    %3145 = vmatpush1.xpose.msra.mxu0 0.0
    %3146 = vmatprep.subr.mxu0 0.0
    %3147 = vmatpush1.xpose.msra.mxu0 0.0
    %3148 = vmatprep.subr.mxu0 0.0
    %3149 = vmatpush1.xpose.msra.mxu0 0.0
    %3150 = vmatprep.subr.mxu0 0.0
    %3151 = vmatpush1.xpose.msra.mxu0 0.0
    %3152 = vmatprep.subr.mxu0 0.0
    %3153 = vmatpush1.xpose.msra.mxu0 0.0
    %3154 = vmatprep.subr.mxu0 0.0
    %3155 = vmatpush1.xpose.msra.mxu0 0.0
    %3156 = vmatprep.subr.mxu0 0.0
    %3157 = vmatpush1.xpose.msra.mxu0 0.0
    %3158 = vmatprep.subr.mxu0 0.0
    %3159 = vmatpush1.xpose.msra.mxu0 0.0
    %3160 = vmatprep.subr.mxu0 0.0
    %3161 = vmatpush1.xpose.msra.mxu0 0.0
    %3162 = vmatprep.subr.mxu0 0.0
    %3163 = vmatpush1.xpose.msra.mxu0 0.0
    %3164 = vmatprep.subr.mxu0 0.0
    %3165 = vmatpush1.xpose.msra.mxu0 0.0
    %3166 = vmatprep.subr.mxu0 0.0
    %3167 = vmatpush1.xpose.msra.mxu0 %v3136
    %3168 = vmatprep.subr.mxu0 0.0
    %3169 = vmatpush1.xpose.msra.mxu0 %v3133
    %3170 = vmatprep.subr.mxu0 0.0
    %3171 = vmatpush2.xpose.msra.mxu0 0.0
    %3172 = vmatprep.subr.mxu0 0.0
    %3173 = vmatpush2.xpose.msra.mxu0 0.0
    %3174 = vmatprep.subr.mxu0 0.0
    %3175 = vmatpush2.xpose.msra.mxu0 0.0
    %3176 = vmatprep.subr.mxu0 0.0
    %3177 = vmatpush2.xpose.msra.mxu0 0.0
    %3178 = vmatprep.subr.mxu0 0.0
    %3179 = vmatpush2.xpose.msra.mxu0 0.0
    %3180 = vmatprep.subr.mxu0 0.0
    %3181 = vmatpush2.xpose.msra.mxu0 0.0
    %3182 = vmatprep.subr.mxu0 0.0
    %3183 = vmatpush2.xpose.msra.mxu0 0.0
    %3184 = vmatprep.subr.mxu0 0.0
    %3185 = vmatpush2.xpose.msra.mxu0 0.0
    %3186 = vmatprep.subr.mxu0 0.0
    %3187 = vmatpush2.xpose.msra.mxu0 0.0
    %3188 = vmatprep.subr.mxu0 0.0
    %3189 = vmatpush2.xpose.msra.mxu0 0.0
    %3190 = vmatprep.subr.mxu0 0.0
    %3191 = vmatpush2.xpose.msra.mxu0 0.0
    %3192 = vmatprep.subr.mxu0 0.0
    %3193 = vmatpush2.xpose.msra.mxu0 0.0
    %3194 = vmatprep.subr.mxu0 0.0
    %3195 = vmatpush2.xpose.msra.mxu0 0.0
    %3196 = vmatprep.subr.mxu0 0.0
    %3197 = vmatpush2.xpose.msra.mxu0 0.0
    %3198 = vmatprep.subr.mxu0 0.0
    %3199 = vmatpush2.xpose.msra.mxu0 0.0
    %3200 = vmatprep.subr.mxu0 0.0
    %3201 = vmatpush2.xpose.msra.mxu0 0.0
    %3202 = vmatprep.mubr.f32.mxu0 0.0
    %3203 = vmatmul.mubr.f32.gmra.mxu0 %v3127
    %v3204 = vpop.f32.mrf.mxu0
    %v3205 = vadd.f32 %v2648, %v3204
    %v3206 = vpop.f32.mrf.mxu0
    %3207 = vmatprep.mubr.f32.mxu0 0.0
    %3208 = vmatmul.mubr.f32.gmra.mxu0 %v3130
    %v3209 = vpop.f32.mrf.mxu0
    %v3210 = vadd.f32 %v2649, %v3209
    %v3211 = vpop.f32.mrf.mxu0
    %3212 = vdwg.mxu0
    %v3213 = vsel %vm1120, %v3205, -inf
    %3214 = vmax.xlane.f32.xlu0 %v3213
    %v3215 = vpop.xlane.xlu0 %3214
    %v3216 = vsel %vm1120, %v3210, -inf
    %3217 = vmax.xlane.f32.xlu0 %v3216
    %v3218 = vpop.xlane.xlu0 %3217
    %v3219 = vsub.f32 %v3205, %v3215
    %v3220 = vsub.f32 %v3210, %v3218
    %v3221 = vmul.f32 %v3219, 1.442695
    %v3222 = vpow.pop %v3221
    %v3223 = vmul.f32 %v3220, 1.442695
    %v3224 = vpow.pop %v3223
    %v3225 = vsel %vm1120, %v3222, 0.0
    %3226 = vadd.xlane.f32.xlu0 %v3225
    %v3227 = vpop.xlane.xlu0 %3226
    %v3228 = vsel %vm1120, %v3224, 0.0
    %3229 = vadd.xlane.f32.xlu0 %v3228
    %v3230 = vpop.xlane.xlu0 %3229
    %v3231 = vrcp.pop %v3227
    %v3232 = vrcp.pop %v3230
    %v3233 = vmul.f32 %v3222, %v3231
    %v3234 = vmul.f32 %v3224, %v3232
    %3235 = vrot.lane.b32.xlu0 %v675, 80
    %v3236 = vpop.permute.xlu0 %3235
    %3237 = vrot.lane.b32.xlu0 %v680, 80
    %v3238 = vpop.permute.xlu0 %3237
    %v3242 = vsel %vm1120, %v3233, 0
    %v3245 = vsel %vm1120, %v3234, 0
    %3247 = vmatprep.subr.mxu0 0.0
    %3248 = vmatpush1.msra.mxu0 0.0
    %3249 = vmatprep.subr.mxu0 0.0
    %3250 = vmatpush1.msra.mxu0 0.0
    %3251 = vmatprep.subr.mxu0 0.0
    %3252 = vmatpush1.msra.mxu0 0.0
    %3253 = vmatprep.subr.mxu0 0.0
    %3254 = vmatpush1.msra.mxu0 0.0
    %3255 = vmatprep.subr.mxu0 0.0
    %3256 = vmatpush1.msra.mxu0 0.0
    %3257 = vmatprep.subr.mxu0 0.0
    %3258 = vmatpush1.msra.mxu0 0.0
    %3259 = vmatprep.subr.mxu0 0.0
    %3260 = vmatpush1.msra.mxu0 0.0
    %3261 = vmatprep.subr.mxu0 0.0
    %3262 = vmatpush1.msra.mxu0 0.0
    %3263 = vmatprep.subr.mxu0 0.0
    %3264 = vmatpush1.msra.mxu0 0.0
    %3265 = vmatprep.subr.mxu0 0.0
    %3266 = vmatpush1.msra.mxu0 0.0
    %3267 = vmatprep.subr.mxu0 0.0
    %3268 = vmatpush1.msra.mxu0 0.0
    %3269 = vmatprep.subr.mxu0 0.0
    %3270 = vmatpush1.msra.mxu0 0.0
    %3271 = vmatprep.subr.mxu0 0.0
    %3272 = vmatpush1.msra.mxu0 0.0
    %3273 = vmatprep.subr.mxu0 0.0
    %3274 = vmatpush1.msra.mxu0 0.0
    %3275 = vmatprep.subr.mxu0 0.0
    %3276 = vmatpush1.msra.mxu0 %v3238
    %3277 = vmatprep.subr.mxu0 0.0
    %3278 = vmatpush1.msra.mxu0 %v3236
    %3279 = vmatprep.subr.mxu0 0.0
    %3280 = vmatpush2.msra.mxu0 0.0
    %3281 = vmatprep.subr.mxu0 0.0
    %3282 = vmatpush2.msra.mxu0 0.0
    %3283 = vmatprep.subr.mxu0 0.0
    %3284 = vmatpush2.msra.mxu0 0.0
    %3285 = vmatprep.subr.mxu0 0.0
    %3286 = vmatpush2.msra.mxu0 0.0
    %3287 = vmatprep.subr.mxu0 0.0
    %3288 = vmatpush2.msra.mxu0 0.0
    %3289 = vmatprep.subr.mxu0 0.0
    %3290 = vmatpush2.msra.mxu0 0.0
    %3291 = vmatprep.subr.mxu0 0.0
    %3292 = vmatpush2.msra.mxu0 0.0
    %3293 = vmatprep.subr.mxu0 0.0
    %3294 = vmatpush2.msra.mxu0 0.0
    %3295 = vmatprep.subr.mxu0 0.0
    %3296 = vmatpush2.msra.mxu0 0.0
    %3297 = vmatprep.subr.mxu0 0.0
    %3298 = vmatpush2.msra.mxu0 0.0
    %3299 = vmatprep.subr.mxu0 0.0
    %3300 = vmatpush2.msra.mxu0 0.0
    %3301 = vmatprep.subr.mxu0 0.0
    %3302 = vmatpush2.msra.mxu0 0.0
    %3303 = vmatprep.subr.mxu0 0.0
    %3304 = vmatpush2.msra.mxu0 0.0
    %3305 = vmatprep.subr.mxu0 0.0
    %3306 = vmatpush2.msra.mxu0 0.0
    %3307 = vmatprep.subr.mxu0 0.0
    %3308 = vmatpush2.msra.mxu0 0.0
    %3309 = vmatprep.subr.mxu0 0.0
    %3310 = vmatpush2.msra.mxu0 0.0
    %3311 = vmatprep.mubr.f32.mxu0 0.0
    %3312 = vmatmul.mubr.f32.gmra.mxu0 %v3242
    %v3313 = vpop.f32.mrf.mxu0
    %v3314 = vadd.f32 0.0, %v3313
    %v3315 = vpop.f32.mrf.mxu0
    %3316 = vmatprep.mubr.f32.mxu0 0.0
    %3317 = vmatmul.mubr.f32.gmra.mxu0 %v3245
    %v3318 = vpop.f32.mrf.mxu0
    %v3319 = vadd.f32 0.0, %v3318
    %v3320 = vpop.f32.mrf.mxu0
    %3321 = vdwg.mxu0
    %3322 = vrot.lane.b32.xlu0 %v1053, 72
    %v3323 = vpop.permute.xlu0 %3322
    %3324 = vrot.lane.b32.xlu0 %v1054, 72
    %v3325 = vpop.permute.xlu0 %3324
    %3328 = vrot.lane.b32.xlu0 %v1045, 80
    %v3329 = vpop.permute.xlu0 %3328
    %3330 = vrot.lane.b32.xlu0 %v1050, 80
    %v3331 = vpop.permute.xlu0 %3330
    %v3334 = vsel %vm1075, %v3323, %v3329
    %v3335 = vsel %vm1075, %v3325, %v3331
    %3336 = vrot.lane.b32.xlu0 %v1063, 104
    %v3337 = vpop.permute.xlu0 %3336
    %3338 = vrot.lane.b32.xlu0 %v1064, 104
    %v3339 = vpop.permute.xlu0 %3338
    %3342 = vrot.lane.b32.xlu0 %v769, 112
    %v3343 = vpop.permute.xlu0 %3342
    %3344 = vrot.lane.b32.xlu0 %v774, 112
    %v3345 = vpop.permute.xlu0 %3344
    %v3348 = vsel %vm1075, %v3337, %v3343
    %v3349 = vsel %vm1075, %v3339, %v3345
    %v3350 = vmul.f32 %v3334, 0.25
    %v3351 = vmul.f32 %v3335, 0.25
    %v3353 = vsel %vm1120, %v3350, 0
    %v3356 = vsel %vm1120, %v3351, 0
    %v3359 = vsel %vm1120, %v3348, 0
    %v3362 = vsel %vm1120, %v3349, 0
    %3364 = vmatprep.subr.mxu0 0.0
    %3365 = vmatpush1.xpose.msra.mxu0 0.0
    %3366 = vmatprep.subr.mxu0 0.0
    %3367 = vmatpush1.xpose.msra.mxu0 0.0
    %3368 = vmatprep.subr.mxu0 0.0
    %3369 = vmatpush1.xpose.msra.mxu0 0.0
    %3370 = vmatprep.subr.mxu0 0.0
    %3371 = vmatpush1.xpose.msra.mxu0 0.0
    %3372 = vmatprep.subr.mxu0 0.0
    %3373 = vmatpush1.xpose.msra.mxu0 0.0
    %3374 = vmatprep.subr.mxu0 0.0
    %3375 = vmatpush1.xpose.msra.mxu0 0.0
    %3376 = vmatprep.subr.mxu0 0.0
    %3377 = vmatpush1.xpose.msra.mxu0 0.0
    %3378 = vmatprep.subr.mxu0 0.0
    %3379 = vmatpush1.xpose.msra.mxu0 0.0
    %3380 = vmatprep.subr.mxu0 0.0
    %3381 = vmatpush1.xpose.msra.mxu0 0.0
    %3382 = vmatprep.subr.mxu0 0.0
    %3383 = vmatpush1.xpose.msra.mxu0 0.0
    %3384 = vmatprep.subr.mxu0 0.0
    %3385 = vmatpush1.xpose.msra.mxu0 0.0
    %3386 = vmatprep.subr.mxu0 0.0
    %3387 = vmatpush1.xpose.msra.mxu0 0.0
    %3388 = vmatprep.subr.mxu0 0.0
    %3389 = vmatpush1.xpose.msra.mxu0 0.0
    %3390 = vmatprep.subr.mxu0 0.0
    %3391 = vmatpush1.xpose.msra.mxu0 0.0
    %3392 = vmatprep.subr.mxu0 0.0
    %3393 = vmatpush1.xpose.msra.mxu0 %v3362
    %3394 = vmatprep.subr.mxu0 0.0
    %3395 = vmatpush1.xpose.msra.mxu0 %v3359
    %3396 = vmatprep.subr.mxu0 0.0
    %3397 = vmatpush2.xpose.msra.mxu0 0.0
    %3398 = vmatprep.subr.mxu0 0.0
    %3399 = vmatpush2.xpose.msra.mxu0 0.0
    %3400 = vmatprep.subr.mxu0 0.0
    %3401 = vmatpush2.xpose.msra.mxu0 0.0
    %3402 = vmatprep.subr.mxu0 0.0
    %3403 = vmatpush2.xpose.msra.mxu0 0.0
    %3404 = vmatprep.subr.mxu0 0.0
    %3405 = vmatpush2.xpose.msra.mxu0 0.0
    %3406 = vmatprep.subr.mxu0 0.0
    %3407 = vmatpush2.xpose.msra.mxu0 0.0
    %3408 = vmatprep.subr.mxu0 0.0
    %3409 = vmatpush2.xpose.msra.mxu0 0.0
    %3410 = vmatprep.subr.mxu0 0.0
    %3411 = vmatpush2.xpose.msra.mxu0 0.0
    %3412 = vmatprep.subr.mxu0 0.0
    %3413 = vmatpush2.xpose.msra.mxu0 0.0
    %3414 = vmatprep.subr.mxu0 0.0
    %3415 = vmatpush2.xpose.msra.mxu0 0.0
    %3416 = vmatprep.subr.mxu0 0.0
    %3417 = vmatpush2.xpose.msra.mxu0 0.0
    %3418 = vmatprep.subr.mxu0 0.0
    %3419 = vmatpush2.xpose.msra.mxu0 0.0
    %3420 = vmatprep.subr.mxu0 0.0
    %3421 = vmatpush2.xpose.msra.mxu0 0.0
    %3422 = vmatprep.subr.mxu0 0.0
    %3423 = vmatpush2.xpose.msra.mxu0 0.0
    %3424 = vmatprep.subr.mxu0 0.0
    %3425 = vmatpush2.xpose.msra.mxu0 0.0
    %3426 = vmatprep.subr.mxu0 0.0
    %3427 = vmatpush2.xpose.msra.mxu0 0.0
    %3428 = vmatprep.mubr.f32.mxu0 0.0
    %3429 = vmatmul.mubr.f32.gmra.mxu0 %v3353
    %v3430 = vpop.f32.mrf.mxu0
    %v3431 = vadd.f32 %v2648, %v3430
    %v3432 = vpop.f32.mrf.mxu0
    %3433 = vmatprep.mubr.f32.mxu0 0.0
    %3434 = vmatmul.mubr.f32.gmra.mxu0 %v3356
    %v3435 = vpop.f32.mrf.mxu0
    %v3436 = vadd.f32 %v2649, %v3435
    %v3437 = vpop.f32.mrf.mxu0
    %3438 = vdwg.mxu0
    %v3439 = vsel %vm1120, %v3431, -inf
    %3440 = vmax.xlane.f32.xlu0 %v3439
    %v3441 = vpop.xlane.xlu0 %3440
    %v3442 = vsel %vm1120, %v3436, -inf
    %3443 = vmax.xlane.f32.xlu0 %v3442
    %v3444 = vpop.xlane.xlu0 %3443
    %v3445 = vsub.f32 %v3431, %v3441
    %v3446 = vsub.f32 %v3436, %v3444
    %v3447 = vmul.f32 %v3445, 1.442695
    %v3448 = vpow.pop %v3447
    %v3449 = vmul.f32 %v3446, 1.442695
    %v3450 = vpow.pop %v3449
    %v3451 = vsel %vm1120, %v3448, 0.0
    %3452 = vadd.xlane.f32.xlu0 %v3451
    %v3453 = vpop.xlane.xlu0 %3452
    %v3454 = vsel %vm1120, %v3450, 0.0
    %3455 = vadd.xlane.f32.xlu0 %v3454
    %v3456 = vpop.xlane.xlu0 %3455
    %v3457 = vrcp.pop %v3453
    %v3458 = vrcp.pop %v3456
    %v3459 = vmul.f32 %v3448, %v3457
    %v3460 = vmul.f32 %v3450, %v3458
    %3461 = vrot.lane.b32.xlu0 %v675, 72
    %v3462 = vpop.permute.xlu0 %3461
    %3463 = vrot.lane.b32.xlu0 %v680, 72
    %v3464 = vpop.permute.xlu0 %3463
    %v3468 = vsel %vm1120, %v3459, 0
    %v3471 = vsel %vm1120, %v3460, 0
    %3473 = vmatprep.subr.mxu0 0.0
    %3474 = vmatpush1.msra.mxu0 0.0
    %3475 = vmatprep.subr.mxu0 0.0
    %3476 = vmatpush1.msra.mxu0 0.0
    %3477 = vmatprep.subr.mxu0 0.0
    %3478 = vmatpush1.msra.mxu0 0.0
    %3479 = vmatprep.subr.mxu0 0.0
    %3480 = vmatpush1.msra.mxu0 0.0
    %3481 = vmatprep.subr.mxu0 0.0
    %3482 = vmatpush1.msra.mxu0 0.0
    %3483 = vmatprep.subr.mxu0 0.0
    %3484 = vmatpush1.msra.mxu0 0.0
    %3485 = vmatprep.subr.mxu0 0.0
    %3486 = vmatpush1.msra.mxu0 0.0
    %3487 = vmatprep.subr.mxu0 0.0
    %3488 = vmatpush1.msra.mxu0 0.0
    %3489 = vmatprep.subr.mxu0 0.0
    %3490 = vmatpush1.msra.mxu0 0.0
    %3491 = vmatprep.subr.mxu0 0.0
    %3492 = vmatpush1.msra.mxu0 0.0
    %3493 = vmatprep.subr.mxu0 0.0
    %3494 = vmatpush1.msra.mxu0 0.0
    %3495 = vmatprep.subr.mxu0 0.0
    %3496 = vmatpush1.msra.mxu0 0.0
    %3497 = vmatprep.subr.mxu0 0.0
    %3498 = vmatpush1.msra.mxu0 0.0
    %3499 = vmatprep.subr.mxu0 0.0
    %3500 = vmatpush1.msra.mxu0 0.0
    %3501 = vmatprep.subr.mxu0 0.0
    %3502 = vmatpush1.msra.mxu0 %v3464
    %3503 = vmatprep.subr.mxu0 0.0
    %3504 = vmatpush1.msra.mxu0 %v3462
    %3505 = vmatprep.subr.mxu0 0.0
    %3506 = vmatpush2.msra.mxu0 0.0
    %3507 = vmatprep.subr.mxu0 0.0
    %3508 = vmatpush2.msra.mxu0 0.0
    %3509 = vmatprep.subr.mxu0 0.0
    %3510 = vmatpush2.msra.mxu0 0.0
    %3511 = vmatprep.subr.mxu0 0.0
    %3512 = vmatpush2.msra.mxu0 0.0
    %3513 = vmatprep.subr.mxu0 0.0
    %3514 = vmatpush2.msra.mxu0 0.0
    %3515 = vmatprep.subr.mxu0 0.0
    %3516 = vmatpush2.msra.mxu0 0.0
    %3517 = vmatprep.subr.mxu0 0.0
    %3518 = vmatpush2.msra.mxu0 0.0
    %3519 = vmatprep.subr.mxu0 0.0
    %3520 = vmatpush2.msra.mxu0 0.0
    %3521 = vmatprep.subr.mxu0 0.0
    %3522 = vmatpush2.msra.mxu0 0.0
    %3523 = vmatprep.subr.mxu0 0.0
    %3524 = vmatpush2.msra.mxu0 0.0
    %3525 = vmatprep.subr.mxu0 0.0
    %3526 = vmatpush2.msra.mxu0 0.0
    %3527 = vmatprep.subr.mxu0 0.0
    %3528 = vmatpush2.msra.mxu0 0.0
    %3529 = vmatprep.subr.mxu0 0.0
    %3530 = vmatpush2.msra.mxu0 0.0
    %3531 = vmatprep.subr.mxu0 0.0
    %3532 = vmatpush2.msra.mxu0 0.0
    %3533 = vmatprep.subr.mxu0 0.0
    %3534 = vmatpush2.msra.mxu0 0.0
    %3535 = vmatprep.subr.mxu0 0.0
    %3536 = vmatpush2.msra.mxu0 0.0
    %3537 = vmatprep.mubr.f32.mxu0 0.0
    %3538 = vmatmul.mubr.f32.gmra.mxu0 %v3468
    %v3539 = vpop.f32.mrf.mxu0
    %v3540 = vadd.f32 0.0, %v3539
    %v3541 = vpop.f32.mrf.mxu0
    %3542 = vmatprep.mubr.f32.mxu0 0.0
    %3543 = vmatmul.mubr.f32.gmra.mxu0 %v3471
    %v3544 = vpop.f32.mrf.mxu0
    %v3545 = vadd.f32 0.0, %v3544
    %v3546 = vpop.f32.mrf.mxu0
    %3547 = vdwg.mxu0
    %3550 = vrot.lane.b32.xlu0 %v3088, 8
    %v3551 = vpop.permute.xlu0 %3550
    %3552 = vrot.lane.b32.xlu0 %v3093, 8
    %v3553 = vpop.permute.xlu0 %3552
    %3558 = vrot.lane.b32.xlu0 %v3314, 16
    %v3559 = vpop.permute.xlu0 %3558
    %3560 = vrot.lane.b32.xlu0 %v3319, 16
    %v3561 = vpop.permute.xlu0 %3560
    %3566 = vrot.lane.b32.xlu0 %v3540, 24
    %v3567 = vpop.permute.xlu0 %3566
    %3568 = vrot.lane.b32.xlu0 %v3545, 24
    %v3569 = vpop.permute.xlu0 %3568
    %v3572 = vsel %vm1075, %v2866, %v3551
    %v3573 = vsel %vm1075, %v2871, %v3553
    %v3574 = vsel %vm1120, %v3572, %v3559
    %v3575 = vsel %vm1120, %v3573, %v3561
    %v3576 = vsel %vm2282, %v3574, %v3567
    %v3577 = vsel %vm2282, %v3575, %v3569
    %v3578 = vld [vmem:[%s55] sm:$0xff]
    %v3579 = vld [vmem:[%s55 + $0x8] sm:$0xff]
    %v3580 = vld [vmem:[%s55 + $0x10] sm:$0xff]
    %v3581 = vld [vmem:[%s55 + $0x18] sm:$0xff]
    %v3582 = vld [vmem:[%s57] sm:$0x1]
    %v3584 = vlaneseq
    %v3585 = vshrl.u32 %v3584, 7
    %v3586 = vsub.s32 0, %v3585
    %v3587 = vrot.slane %v3582, %v3586
    %v3590 = vsel %vm311, %v3576, 0
    %v3593 = vsel %vm311, %v3577, 0
    %3595 = vmatprep.subr.mxu0 0.0
    %3596 = vmatpush1.msra.mxu0 0.0
    %3597 = vmatprep.subr.mxu0 0.0
    %3598 = vmatpush1.msra.mxu0 0.0
    %3599 = vmatprep.subr.mxu0 0.0
    %3600 = vmatpush1.msra.mxu0 0.0
    %3601 = vmatprep.subr.mxu0 0.0
    %3602 = vmatpush1.msra.mxu0 0.0
    %3603 = vmatprep.subr.mxu0 0.0
    %3604 = vmatpush1.msra.mxu0 0.0
    %3605 = vmatprep.subr.mxu0 0.0
    %3606 = vmatpush1.msra.mxu0 0.0
    %3607 = vmatprep.subr.mxu0 0.0
    %3608 = vmatpush1.msra.mxu0 0.0
    %3609 = vmatprep.subr.mxu0 0.0
    %3610 = vmatpush1.msra.mxu0 0.0
    %3611 = vmatprep.subr.mxu0 0.0
    %3612 = vmatpush1.msra.mxu0 0.0
    %3613 = vmatprep.subr.mxu0 0.0
    %3614 = vmatpush1.msra.mxu0 0.0
    %3615 = vmatprep.subr.mxu0 0.0
    %3616 = vmatpush1.msra.mxu0 0.0
    %3617 = vmatprep.subr.mxu0 0.0
    %3618 = vmatpush1.msra.mxu0 0.0
    %3619 = vmatprep.subr.mxu0 0.0
    %3620 = vmatpush1.msra.mxu0 %v3581
    %3621 = vmatprep.subr.mxu0 0.0
    %3622 = vmatpush1.msra.mxu0 %v3580
    %3623 = vmatprep.subr.mxu0 0.0
    %3624 = vmatpush1.msra.mxu0 %v3579
    %3625 = vmatprep.subr.mxu0 0.0
    %3626 = vmatpush1.msra.mxu0 %v3578
    %3627 = vmatprep.subr.mxu0 0.0
    %3628 = vmatpush2.msra.mxu0 0.0
    %3629 = vmatprep.subr.mxu0 0.0
    %3630 = vmatpush2.msra.mxu0 0.0
    %3631 = vmatprep.subr.mxu0 0.0
    %3632 = vmatpush2.msra.mxu0 0.0
    %3633 = vmatprep.subr.mxu0 0.0
    %3634 = vmatpush2.msra.mxu0 0.0
    %3635 = vmatprep.subr.mxu0 0.0
    %3636 = vmatpush2.msra.mxu0 0.0
    %3637 = vmatprep.subr.mxu0 0.0
    %3638 = vmatpush2.msra.mxu0 0.0
    %3639 = vmatprep.subr.mxu0 0.0
    %3640 = vmatpush2.msra.mxu0 0.0
    %3641 = vmatprep.subr.mxu0 0.0
    %3642 = vmatpush2.msra.mxu0 0.0
    %3643 = vmatprep.subr.mxu0 0.0
    %3644 = vmatpush2.msra.mxu0 0.0
    %3645 = vmatprep.subr.mxu0 0.0
    %3646 = vmatpush2.msra.mxu0 0.0
    %3647 = vmatprep.subr.mxu0 0.0
    %3648 = vmatpush2.msra.mxu0 0.0
    %3649 = vmatprep.subr.mxu0 0.0
    %3650 = vmatpush2.msra.mxu0 0.0
    %3651 = vmatprep.subr.mxu0 0.0
    %3652 = vmatpush2.msra.mxu0 0.0
    %3653 = vmatprep.subr.mxu0 0.0
    %3654 = vmatpush2.msra.mxu0 0.0
    %3655 = vmatprep.subr.mxu0 0.0
    %3656 = vmatpush2.msra.mxu0 0.0
    %3657 = vmatprep.subr.mxu0 0.0
    %3658 = vmatpush2.msra.mxu0 0.0
    %3659 = vmatprep.mubr.f32.mxu0 0.0
    %3660 = vmatmul.mubr.f32.gmra.mxu0 %v3590
    %v3661 = vpop.f32.mrf.mxu0
    %v3662 = vadd.f32 %v3587, %v3661
    %v3663 = vpop.f32.mrf.mxu0
    %3664 = vmatprep.mubr.f32.mxu0 0.0
    %3665 = vmatmul.mubr.f32.gmra.mxu0 %v3593
    %v3666 = vpop.f32.mrf.mxu0
    %v3667 = vadd.f32 %v3587, %v3666
    %v3668 = vpop.f32.mrf.mxu0
    %3669 = vdwg.mxu0
    %v3670 = vadd.f32 %v286, %v3662
    %v3671 = vadd.f32 %v287, %v3667
    %v3672 = vsel %vm311, %v3670, 0.0
    %3673 = vadd.xlane.f32.xlu0 %v3672
    %v3674 = vpop.xlane.xlu0 %3673
    %v3675 = vsel %vm311, %v3671, 0.0
    %3676 = vadd.xlane.f32.xlu0 %v3675
    %v3677 = vpop.xlane.xlu0 %3676
    %v3678 = vmul.f32 %v3674, %v2385
    %v3679 = vmul.f32 %v3677, %v2385
    %v3680 = vsub.f32 %v3670, %v3678
    %v3681 = vsub.f32 %v3671, %v3679
    %v3682 = vmul.f32 %v3680, %v3680
    %v3683 = vmul.f32 %v3681, %v3681
    %v3684 = vsel %vm311, %v3682, 0.0
    %3685 = vadd.xlane.f32.xlu0 %v3684
    %v3686 = vpop.xlane.xlu0 %3685
    %v3687 = vsel %vm311, %v3683, 0.0
    %3688 = vadd.xlane.f32.xlu0 %v3687
    %v3689 = vpop.xlane.xlu0 %3688
    %v3690 = vmul.f32 %v3686, %v2385
    %v3691 = vmul.f32 %v3689, %v2385
    %v3692 = vadd.f32 %v3690, 1e-05
    %v3693 = vadd.f32 %v3691, 1e-05
    %v3694 = vrsqrt.pop %v3692
    %v3695 = vrsqrt.pop %v3693
    %v3696 = vmul.f32 %v3680, %v3694
    %v3697 = vmul.f32 %v3681, %v3695
    %v3698 = vlaneseq
    %v3699 = vshrl.u32 %v3698, 7
    %v3700 = vsub.s32 2, %v3699
    %v3701 = vrot.slane %v284, %v3700
    %v3702 = vmul.f32 %v3696, %v3701
    %v3703 = vmul.f32 %v3697, %v3701
    %v3704 = vlaneseq
    %v3705 = vshrl.u32 %v3704, 7
    %v3706 = vsub.s32 2, %v3705
    %v3707 = vrot.slane %v285, %v3706
    %v3708 = vadd.f32 %v3702, %v3707
    %v3709 = vadd.f32 %v3703, %v3707
    %v3710 = vld [vmem:[%s71] sm:$0xff]
    %v3711 = vld [vmem:[%s71 + $0x8] sm:$0xff]
    %v3712 = vld [vmem:[%s71 + $0x10] sm:$0xff]
    %v3713 = vld [vmem:[%s71 + $0x18] sm:$0xff]
    %v3714 = vld [vmem:[#allocation5] sm:$0x1]
    %v3716 = vlaneseq
    %v3717 = vshrl.u32 %v3716, 7
    %v3718 = vsub.s32 0, %v3717
    %v3719 = vrot.slane %v3714, %v3718
    %v3722 = vsel %vm311, %v3708, 0
    %v3725 = vsel %vm311, %v3709, 0
    %3727 = vmatprep.subr.mxu0 0.0
    %3728 = vmatpush1.msra.mxu0 0.0
    %3729 = vmatprep.subr.mxu0 0.0
    %3730 = vmatpush1.msra.mxu0 0.0
    %3731 = vmatprep.subr.mxu0 0.0
    %3732 = vmatpush1.msra.mxu0 0.0
    %3733 = vmatprep.subr.mxu0 0.0
    %3734 = vmatpush1.msra.mxu0 0.0
    %3735 = vmatprep.subr.mxu0 0.0
    %3736 = vmatpush1.msra.mxu0 0.0
    %3737 = vmatprep.subr.mxu0 0.0
    %3738 = vmatpush1.msra.mxu0 0.0
    %3739 = vmatprep.subr.mxu0 0.0
    %3740 = vmatpush1.msra.mxu0 0.0
    %3741 = vmatprep.subr.mxu0 0.0
    %3742 = vmatpush1.msra.mxu0 0.0
    %3743 = vmatprep.subr.mxu0 0.0
    %3744 = vmatpush1.msra.mxu0 0.0
    %3745 = vmatprep.subr.mxu0 0.0
    %3746 = vmatpush1.msra.mxu0 0.0
    %3747 = vmatprep.subr.mxu0 0.0
    %3748 = vmatpush1.msra.mxu0 0.0
    %3749 = vmatprep.subr.mxu0 0.0
    %3750 = vmatpush1.msra.mxu0 0.0
    %3751 = vmatprep.subr.mxu0 0.0
    %3752 = vmatpush1.msra.mxu0 %v3713
    %3753 = vmatprep.subr.mxu0 0.0
    %3754 = vmatpush1.msra.mxu0 %v3712
    %3755 = vmatprep.subr.mxu0 0.0
    %3756 = vmatpush1.msra.mxu0 %v3711
    %3757 = vmatprep.subr.mxu0 0.0
    %3758 = vmatpush1.msra.mxu0 %v3710
    %3759 = vmatprep.subr.mxu0 0.0
    %3760 = vmatpush2.msra.mxu0 0.0
    %3761 = vmatprep.subr.mxu0 0.0
    %3762 = vmatpush2.msra.mxu0 0.0
    %3763 = vmatprep.subr.mxu0 0.0
    %3764 = vmatpush2.msra.mxu0 0.0
    %3765 = vmatprep.subr.mxu0 0.0
    %3766 = vmatpush2.msra.mxu0 0.0
    %3767 = vmatprep.subr.mxu0 0.0
    %3768 = vmatpush2.msra.mxu0 0.0
    %3769 = vmatprep.subr.mxu0 0.0
    %3770 = vmatpush2.msra.mxu0 0.0
    %3771 = vmatprep.subr.mxu0 0.0
    %3772 = vmatpush2.msra.mxu0 0.0
    %3773 = vmatprep.subr.mxu0 0.0
    %3774 = vmatpush2.msra.mxu0 0.0
    %3775 = vmatprep.subr.mxu0 0.0
    %3776 = vmatpush2.msra.mxu0 0.0
    %3777 = vmatprep.subr.mxu0 0.0
    %3778 = vmatpush2.msra.mxu0 0.0
    %3779 = vmatprep.subr.mxu0 0.0
    %3780 = vmatpush2.msra.mxu0 0.0
    %3781 = vmatprep.subr.mxu0 0.0
    %3782 = vmatpush2.msra.mxu0 0.0
    %3783 = vmatprep.subr.mxu0 0.0
    %3784 = vmatpush2.msra.mxu0 0.0
    %3785 = vmatprep.subr.mxu0 0.0
    %3786 = vmatpush2.msra.mxu0 0.0
    %3787 = vmatprep.subr.mxu0 0.0
    %3788 = vmatpush2.msra.mxu0 0.0
    %3789 = vmatprep.subr.mxu0 0.0
    %3790 = vmatpush2.msra.mxu0 0.0
    %3791 = vmatprep.mubr.f32.mxu0 0.0
    %3792 = vmatmul.mubr.f32.gmra.mxu0 %v3722
    %v3793 = vpop.f32.mrf.mxu0
    %v3794 = vadd.f32 %v3719, %v3793
    %v3795 = vpop.f32.mrf.mxu0
    %3796 = vmatprep.mubr.f32.mxu0 0.0
    %3797 = vmatmul.mubr.f32.gmra.mxu0 %v3725
    %v3798 = vpop.f32.mrf.mxu0
    %v3799 = vadd.f32 %v3719, %v3798
    %v3800 = vpop.f32.mrf.mxu0
    %3801 = vdwg.mxu0
    %v3802 = vmax.f32 %v3794, 0.0
    %v3803 = vmax.f32 %v3799, 0.0
    %v3804 = vld [vmem:[%s75] sm:$0xff]
    %v3805 = vld [vmem:[%s75 + $0x8] sm:$0xff]
    %v3806 = vld [vmem:[%s75 + $0x10] sm:$0xff]
    %v3807 = vld [vmem:[%s75 + $0x18] sm:$0xff]
    %v3808 = vld [vmem:[%s75 + $0x20] sm:$0xff]
    %v3809 = vld [vmem:[%s75 + $0x28] sm:$0xff]
    %v3810 = vld [vmem:[%s75 + $0x30] sm:$0xff]
    %v3811 = vld [vmem:[%s75 + $0x38] sm:$0xff]
    %v3812 = vld [vmem:[#allocation7] sm:$0x1]
    %v3814 = vlaneseq
    %v3815 = vshrl.u32 %v3814, 7
    %v3816 = vsub.s32 0, %v3815
    %v3817 = vrot.slane %v3812, %v3816
    %v3820 = vsel %vm1226, %v3802, 0
    %v3823 = vsel %vm1226, %v3803, 0
    %3825 = vmatprep.subr.mxu0 0.0
    %3826 = vmatpush1.msra.mxu0 0.0
    %3827 = vmatprep.subr.mxu0 0.0
    %3828 = vmatpush1.msra.mxu0 0.0
    %3829 = vmatprep.subr.mxu0 0.0
    %3830 = vmatpush1.msra.mxu0 0.0
    %3831 = vmatprep.subr.mxu0 0.0
    %3832 = vmatpush1.msra.mxu0 0.0
    %3833 = vmatprep.subr.mxu0 0.0
    %3834 = vmatpush1.msra.mxu0 0.0
    %3835 = vmatprep.subr.mxu0 0.0
    %3836 = vmatpush1.msra.mxu0 0.0
    %3837 = vmatprep.subr.mxu0 0.0
    %3838 = vmatpush1.msra.mxu0 0.0
    %3839 = vmatprep.subr.mxu0 0.0
    %3840 = vmatpush1.msra.mxu0 0.0
    %3841 = vmatprep.subr.mxu0 0.0
    %3842 = vmatpush1.msra.mxu0 %v3811
    %3843 = vmatprep.subr.mxu0 0.0
    %3844 = vmatpush1.msra.mxu0 %v3810
    %3845 = vmatprep.subr.mxu0 0.0
    %3846 = vmatpush1.msra.mxu0 %v3809
    %3847 = vmatprep.subr.mxu0 0.0
    %3848 = vmatpush1.msra.mxu0 %v3808
    %3849 = vmatprep.subr.mxu0 0.0
    %3850 = vmatpush1.msra.mxu0 %v3807
    %3851 = vmatprep.subr.mxu0 0.0
    %3852 = vmatpush1.msra.mxu0 %v3806
    %3853 = vmatprep.subr.mxu0 0.0
    %3854 = vmatpush1.msra.mxu0 %v3805
    %3855 = vmatprep.subr.mxu0 0.0
    %3856 = vmatpush1.msra.mxu0 %v3804
    %3857 = vmatprep.subr.mxu0 0.0
    %3858 = vmatpush2.msra.mxu0 0.0
    %3859 = vmatprep.subr.mxu0 0.0
    %3860 = vmatpush2.msra.mxu0 0.0
    %3861 = vmatprep.subr.mxu0 0.0
    %3862 = vmatpush2.msra.mxu0 0.0
    %3863 = vmatprep.subr.mxu0 0.0
    %3864 = vmatpush2.msra.mxu0 0.0
    %3865 = vmatprep.subr.mxu0 0.0
    %3866 = vmatpush2.msra.mxu0 0.0
    %3867 = vmatprep.subr.mxu0 0.0
    %3868 = vmatpush2.msra.mxu0 0.0
    %3869 = vmatprep.subr.mxu0 0.0
    %3870 = vmatpush2.msra.mxu0 0.0
    %3871 = vmatprep.subr.mxu0 0.0
    %3872 = vmatpush2.msra.mxu0 0.0
    %3873 = vmatprep.subr.mxu0 0.0
    %3874 = vmatpush2.msra.mxu0 0.0
    %3875 = vmatprep.subr.mxu0 0.0
    %3876 = vmatpush2.msra.mxu0 0.0
    %3877 = vmatprep.subr.mxu0 0.0
    %3878 = vmatpush2.msra.mxu0 0.0
    %3879 = vmatprep.subr.mxu0 0.0
    %3880 = vmatpush2.msra.mxu0 0.0
    %3881 = vmatprep.subr.mxu0 0.0
    %3882 = vmatpush2.msra.mxu0 0.0
    %3883 = vmatprep.subr.mxu0 0.0
    %3884 = vmatpush2.msra.mxu0 0.0
    %3885 = vmatprep.subr.mxu0 0.0
    %3886 = vmatpush2.msra.mxu0 0.0
    %3887 = vmatprep.subr.mxu0 0.0
    %3888 = vmatpush2.msra.mxu0 0.0
    %3889 = vmatprep.mubr.f32.mxu0 0.0
    %3890 = vmatmul.mubr.f32.gmra.mxu0 %v3820
    %v3891 = vpop.f32.mrf.mxu0
    %v3892 = vadd.f32 %v3817, %v3891
    %v3893 = vpop.f32.mrf.mxu0
    %3894 = vmatprep.mubr.f32.mxu0 0.0
    %3895 = vmatmul.mubr.f32.gmra.mxu0 %v3823
    %v3896 = vpop.f32.mrf.mxu0
    %v3897 = vadd.f32 %v3817, %v3896
    %v3898 = vpop.f32.mrf.mxu0
    %3899 = vdwg.mxu0
    %v3900 = vadd.f32 %v3708, %v3892
    %v3901 = vadd.f32 %v3709, %v3897
    %v3902 = vsel %vm311, %v3900, 0.0
    %3903 = vadd.xlane.f32.xlu0 %v3902
    %v3904 = vpop.xlane.xlu0 %3903
    %v3905 = vsel %vm311, %v3901, 0.0
    %3906 = vadd.xlane.f32.xlu0 %v3905
    %v3907 = vpop.xlane.xlu0 %3906
    %v3908 = vmul.f32 %v3904, %v2385
    %v3909 = vmul.f32 %v3907, %v2385
    %v3910 = vsub.f32 %v3900, %v3908
    %v3911 = vsub.f32 %v3901, %v3909
    %v3912 = vmul.f32 %v3910, %v3910
    %v3913 = vmul.f32 %v3911, %v3911
    %v3914 = vsel %vm311, %v3912, 0.0
    %3915 = vadd.xlane.f32.xlu0 %v3914
    %v3916 = vpop.xlane.xlu0 %3915
    %v3917 = vsel %vm311, %v3913, 0.0
    %3918 = vadd.xlane.f32.xlu0 %v3917
    %v3919 = vpop.xlane.xlu0 %3918
    %v3920 = vmul.f32 %v3916, %v2385
    %v3921 = vmul.f32 %v3919, %v2385
    %v3922 = vadd.f32 %v3920, 1e-05
    %v3923 = vadd.f32 %v3921, 1e-05
    %v3924 = vrsqrt.pop %v3922
    %v3925 = vrsqrt.pop %v3923
    %v3926 = vmul.f32 %v3910, %v3924
    %v3927 = vmul.f32 %v3911, %v3925
    %v3928 = vlaneseq
    %v3929 = vshrl.u32 %v3928, 7
    %v3930 = vsub.s32 3, %v3929
    %v3931 = vrot.slane %v284, %v3930
    %v3932 = vmul.f32 %v3926, %v3931
    %v3933 = vmul.f32 %v3927, %v3931
    %v3934 = vlaneseq
    %v3935 = vshrl.u32 %v3934, 7
    %v3936 = vsub.s32 3, %v3935
    %v3937 = vrot.slane %v285, %v3936
    %v3938 = vadd.f32 %v3932, %v3937
    %v3939 = vadd.f32 %v3933, %v3937
    %v3940 = vld [vmem:[%s5] sm:$0xff]
    %v3941 = vld [vmem:[%s5 + $0x8] sm:$0xff]
    %3944 = vrot.lane.b32.xlu0 %v2646, 32
    %v3945 = vpop.permute.xlu0 %3944
    %3946 = vrot.lane.b32.xlu0 %v2647, 32
    %v3947 = vpop.permute.xlu0 %3946
    %3952 = vrot.lane.b32.xlu0 %v3938, 64
    %v3953 = vpop.permute.xlu0 %3952
    %3954 = vrot.lane.b32.xlu0 %v3939, 64
    %v3955 = vpop.permute.xlu0 %3954
    %v3958 = vsel %vm311, %v3940, %v3945
    %v3959 = vsel %vm311, %v3941, %v3947
    %v3960 = vsel %vm1226, %v3958, %v3953
    %v3961 = vsel %vm1226, %v3959, %v3955
    %v3962 = vld [vmem:[%s79] sm:$0xff]
    %v3963 = vld [vmem:[%s79 + $0x8] sm:$0xff]
    %v3964 = vld [vmem:[%s79 + $0x10] sm:$0xff]
    %v3965 = vld [vmem:[%s79 + $0x18] sm:$0xff]
    %v3966 = vld [vmem:[%s79 + $0x20] sm:$0xff]
    %v3967 = vld [vmem:[%s79 + $0x28] sm:$0xff]
    %v3968 = vld [vmem:[%s79 + $0x30] sm:$0xff]
    %v3969 = vld [vmem:[%s79 + $0x38] sm:$0xff]
    %v3970 = vld [vmem:[%s79 + $0x40] sm:$0xff]
    %v3971 = vld [vmem:[%s79 + $0x48] sm:$0xff]
    %v3972 = vld [vmem:[%s79 + $0x50] sm:$0xff]
    %v3973 = vld [vmem:[%s79 + $0x58] sm:$0xff]
    %v3974 = vld [vmem:[#allocation8] sm:$0x1]
    %v3976 = vlaneseq
    %v3977 = vshrl.u32 %v3976, 7
    %v3978 = vsub.s32 0, %v3977
    %v3979 = vrot.slane %v3974, %v3978
    %vm3981 = vcmask 785408
    %v3983 = vsel %vm3981, %v3960, 0
    %v3986 = vsel %vm3981, %v3961, 0
    %3988 = vmatprep.subr.mxu0 0.0
    %3989 = vmatpush1.msra.mxu0 0.0
    %3990 = vmatprep.subr.mxu0 0.0
    %3991 = vmatpush1.msra.mxu0 0.0
    %3992 = vmatprep.subr.mxu0 0.0
    %3993 = vmatpush1.msra.mxu0 0.0
    %3994 = vmatprep.subr.mxu0 0.0
    %3995 = vmatpush1.msra.mxu0 0.0
    %3996 = vmatprep.subr.mxu0 0.0
    %3997 = vmatpush1.msra.mxu0 %v3973
    %3998 = vmatprep.subr.mxu0 0.0
    %3999 = vmatpush1.msra.mxu0 %v3972
    %4000 = vmatprep.subr.mxu0 0.0
    %4001 = vmatpush1.msra.mxu0 %v3971
    %4002 = vmatprep.subr.mxu0 0.0
    %4003 = vmatpush1.msra.mxu0 %v3970
    %4004 = vmatprep.subr.mxu0 0.0
    %4005 = vmatpush1.msra.mxu0 %v3969
    %4006 = vmatprep.subr.mxu0 0.0
    %4007 = vmatpush1.msra.mxu0 %v3968
    %4008 = vmatprep.subr.mxu0 0.0
    %4009 = vmatpush1.msra.mxu0 %v3967
    %4010 = vmatprep.subr.mxu0 0.0
    %4011 = vmatpush1.msra.mxu0 %v3966
    %4012 = vmatprep.subr.mxu0 0.0
    %4013 = vmatpush1.msra.mxu0 %v3965
    %4014 = vmatprep.subr.mxu0 0.0
    %4015 = vmatpush1.msra.mxu0 %v3964
    %4016 = vmatprep.subr.mxu0 0.0
    %4017 = vmatpush1.msra.mxu0 %v3963
    %4018 = vmatprep.subr.mxu0 0.0
    %4019 = vmatpush1.msra.mxu0 %v3962
    %4020 = vmatprep.subr.mxu0 0.0
    %4021 = vmatpush2.msra.mxu0 0.0
    %4022 = vmatprep.subr.mxu0 0.0
    %4023 = vmatpush2.msra.mxu0 0.0
    %4024 = vmatprep.subr.mxu0 0.0
    %4025 = vmatpush2.msra.mxu0 0.0
    %4026 = vmatprep.subr.mxu0 0.0
    %4027 = vmatpush2.msra.mxu0 0.0
    %4028 = vmatprep.subr.mxu0 0.0
    %4029 = vmatpush2.msra.mxu0 0.0
    %4030 = vmatprep.subr.mxu0 0.0
    %4031 = vmatpush2.msra.mxu0 0.0
    %4032 = vmatprep.subr.mxu0 0.0
    %4033 = vmatpush2.msra.mxu0 0.0
    %4034 = vmatprep.subr.mxu0 0.0
    %4035 = vmatpush2.msra.mxu0 0.0
    %4036 = vmatprep.subr.mxu0 0.0
    %4037 = vmatpush2.msra.mxu0 0.0
    %4038 = vmatprep.subr.mxu0 0.0
    %4039 = vmatpush2.msra.mxu0 0.0
    %4040 = vmatprep.subr.mxu0 0.0
    %4041 = vmatpush2.msra.mxu0 0.0
    %4042 = vmatprep.subr.mxu0 0.0
    %4043 = vmatpush2.msra.mxu0 0.0
    %4044 = vmatprep.subr.mxu0 0.0
    %4045 = vmatpush2.msra.mxu0 0.0
    %4046 = vmatprep.subr.mxu0 0.0
    %4047 = vmatpush2.msra.mxu0 0.0
    %4048 = vmatprep.subr.mxu0 0.0
    %4049 = vmatpush2.msra.mxu0 0.0
    %4050 = vmatprep.subr.mxu0 0.0
    %4051 = vmatpush2.msra.mxu0 0.0
    %4052 = vmatprep.mubr.f32.mxu0 0.0
    %4053 = vmatmul.mubr.f32.gmra.mxu0 %v3983
    %v4054 = vpop.f32.mrf.mxu0
    %v4055 = vadd.f32 %v3979, %v4054
    %v4056 = vpop.f32.mrf.mxu0
    %4057 = vmatprep.mubr.f32.mxu0 0.0
    %4058 = vmatmul.mubr.f32.gmra.mxu0 %v3986
    %v4059 = vpop.f32.mrf.mxu0
    %v4060 = vadd.f32 %v3979, %v4059
    %v4061 = vpop.f32.mrf.mxu0
    %4062 = vdwg.mxu0
    %v4063 = vmax.f32 %v4055, 0.0
    %v4064 = vmax.f32 %v4060, 0.0
    %v4065 = vld [vmem:[%s83] sm:$0xff]
    %v4066 = vld [vmem:[%s83 + $0x8] sm:$0xff]
    %v4067 = vld [vmem:[%s83 + $0x10] sm:$0xff]
    %v4068 = vld [vmem:[%s83 + $0x18] sm:$0xff]
    %v4069 = vld [vmem:[%s83 + $0x20] sm:$0xff]
    %v4070 = vld [vmem:[%s83 + $0x28] sm:$0xff]
    %v4071 = vld [vmem:[%s83 + $0x30] sm:$0xff]
    %v4072 = vld [vmem:[%s83 + $0x38] sm:$0xff]
    %v4073 = vld [vmem:[%s83 + $0x40] sm:$0xff]
    %v4074 = vld [vmem:[%s83 + $0x48] sm:$0xff]
    %v4075 = vld [vmem:[%s83 + $0x50] sm:$0xff]
    %v4076 = vld [vmem:[%s83 + $0x58] sm:$0xff]
    %v4077 = vld [vmem:[#allocation10] sm:$0x1]
    %v4079 = vlaneseq
    %v4080 = vshrl.u32 %v4079, 7
    %v4081 = vsub.s32 0, %v4080
    %v4082 = vrot.slane %v4077, %v4081
    %v4085 = vsel %vm3981, %v4063, 0
    %v4088 = vsel %vm3981, %v4064, 0
    %4090 = vmatprep.subr.mxu0 0.0
    %4091 = vmatpush1.msra.mxu0 0.0
    %4092 = vmatprep.subr.mxu0 0.0
    %4093 = vmatpush1.msra.mxu0 0.0
    %4094 = vmatprep.subr.mxu0 0.0
    %4095 = vmatpush1.msra.mxu0 0.0
    %4096 = vmatprep.subr.mxu0 0.0
    %4097 = vmatpush1.msra.mxu0 0.0
    %4098 = vmatprep.subr.mxu0 0.0
    %4099 = vmatpush1.msra.mxu0 %v4076
    %4100 = vmatprep.subr.mxu0 0.0
    %4101 = vmatpush1.msra.mxu0 %v4075
    %4102 = vmatprep.subr.mxu0 0.0
    %4103 = vmatpush1.msra.mxu0 %v4074
    %4104 = vmatprep.subr.mxu0 0.0
    %4105 = vmatpush1.msra.mxu0 %v4073
    %4106 = vmatprep.subr.mxu0 0.0
    %4107 = vmatpush1.msra.mxu0 %v4072
    %4108 = vmatprep.subr.mxu0 0.0
    %4109 = vmatpush1.msra.mxu0 %v4071
    %4110 = vmatprep.subr.mxu0 0.0
    %4111 = vmatpush1.msra.mxu0 %v4070
    %4112 = vmatprep.subr.mxu0 0.0
    %4113 = vmatpush1.msra.mxu0 %v4069
    %4114 = vmatprep.subr.mxu0 0.0
    %4115 = vmatpush1.msra.mxu0 %v4068
    %4116 = vmatprep.subr.mxu0 0.0
    %4117 = vmatpush1.msra.mxu0 %v4067
    %4118 = vmatprep.subr.mxu0 0.0
    %4119 = vmatpush1.msra.mxu0 %v4066
    %4120 = vmatprep.subr.mxu0 0.0
    %4121 = vmatpush1.msra.mxu0 %v4065
    %4122 = vmatprep.subr.mxu0 0.0
    %4123 = vmatpush2.msra.mxu0 0.0
    %4124 = vmatprep.subr.mxu0 0.0
    %4125 = vmatpush2.msra.mxu0 0.0
    %4126 = vmatprep.subr.mxu0 0.0
    %4127 = vmatpush2.msra.mxu0 0.0
    %4128 = vmatprep.subr.mxu0 0.0
    %4129 = vmatpush2.msra.mxu0 0.0
    %4130 = vmatprep.subr.mxu0 0.0
    %4131 = vmatpush2.msra.mxu0 0.0
    %4132 = vmatprep.subr.mxu0 0.0
    %4133 = vmatpush2.msra.mxu0 0.0
    %4134 = vmatprep.subr.mxu0 0.0
    %4135 = vmatpush2.msra.mxu0 0.0
    %4136 = vmatprep.subr.mxu0 0.0
    %4137 = vmatpush2.msra.mxu0 0.0
    %4138 = vmatprep.subr.mxu0 0.0
    %4139 = vmatpush2.msra.mxu0 0.0
    %4140 = vmatprep.subr.mxu0 0.0
    %4141 = vmatpush2.msra.mxu0 0.0
    %4142 = vmatprep.subr.mxu0 0.0
    %4143 = vmatpush2.msra.mxu0 0.0
    %4144 = vmatprep.subr.mxu0 0.0
    %4145 = vmatpush2.msra.mxu0 0.0
    %4146 = vmatprep.subr.mxu0 0.0
    %4147 = vmatpush2.msra.mxu0 0.0
    %4148 = vmatprep.subr.mxu0 0.0
    %4149 = vmatpush2.msra.mxu0 0.0
    %4150 = vmatprep.subr.mxu0 0.0
    %4151 = vmatpush2.msra.mxu0 0.0
    %4152 = vmatprep.subr.mxu0 0.0
    %4153 = vmatpush2.msra.mxu0 0.0
    %4154 = vmatprep.mubr.f32.mxu0 0.0
    %4155 = vmatmul.mubr.f32.gmra.mxu0 %v4085
    %v4156 = vpop.f32.mrf.mxu0
    %v4157 = vadd.f32 %v4082, %v4156
    %v4158 = vpop.f32.mrf.mxu0
    %4159 = vmatprep.mubr.f32.mxu0 0.0
    %4160 = vmatmul.mubr.f32.gmra.mxu0 %v4088
    %v4161 = vpop.f32.mrf.mxu0
    %v4162 = vadd.f32 %v4082, %v4161
    %v4163 = vpop.f32.mrf.mxu0
    %4164 = vdwg.mxu0
    %v4165 = vmax.f32 %v4157, 0.0
    %v4166 = vmax.f32 %v4162, 0.0
    %v4167 = vld [vmem:[%s87] sm:$0xff]
    %v4168 = vld [vmem:[%s87 + $0x8] sm:$0xff]
    %v4169 = vld [vmem:[%s87 + $0x10] sm:$0xff]
    %v4170 = vld [vmem:[%s87 + $0x18] sm:$0xff]
    %v4171 = vld [vmem:[%s87 + $0x20] sm:$0xff]
    %v4172 = vld [vmem:[%s87 + $0x28] sm:$0xff]
    %v4173 = vld [vmem:[%s87 + $0x30] sm:$0xff]
    %v4174 = vld [vmem:[%s87 + $0x38] sm:$0xff]
    %v4175 = vld [vmem:[%s87 + $0x40] sm:$0xff]
    %v4176 = vld [vmem:[%s87 + $0x48] sm:$0xff]
    %v4177 = vld [vmem:[%s87 + $0x50] sm:$0xff]
    %v4178 = vld [vmem:[%s87 + $0x58] sm:$0xff]
    %v4179 = vld [vmem:[#allocation11] sm:$0x1]
    %v4181 = vlaneseq
    %v4182 = vshrl.u32 %v4181, 7
    %v4183 = vsub.s32 0, %v4182
    %v4184 = vrot.slane %v4179, %v4183
    %v4187 = vsel %vm3981, %v4165, 0
    %v4190 = vsel %vm3981, %v4166, 0
    %4192 = vmatprep.subr.mxu0 0.0
    %4193 = vmatpush1.msra.mxu0 0.0
    %4194 = vmatprep.subr.mxu0 0.0
    %4195 = vmatpush1.msra.mxu0 0.0
    %4196 = vmatprep.subr.mxu0 0.0
    %4197 = vmatpush1.msra.mxu0 0.0
    %4198 = vmatprep.subr.mxu0 0.0
    %4199 = vmatpush1.msra.mxu0 0.0
    %4200 = vmatprep.subr.mxu0 0.0
    %4201 = vmatpush1.msra.mxu0 %v4178
    %4202 = vmatprep.subr.mxu0 0.0
    %4203 = vmatpush1.msra.mxu0 %v4177
    %4204 = vmatprep.subr.mxu0 0.0
    %4205 = vmatpush1.msra.mxu0 %v4176
    %4206 = vmatprep.subr.mxu0 0.0
    %4207 = vmatpush1.msra.mxu0 %v4175
    %4208 = vmatprep.subr.mxu0 0.0
    %4209 = vmatpush1.msra.mxu0 %v4174
    %4210 = vmatprep.subr.mxu0 0.0
    %4211 = vmatpush1.msra.mxu0 %v4173
    %4212 = vmatprep.subr.mxu0 0.0
    %4213 = vmatpush1.msra.mxu0 %v4172
    %4214 = vmatprep.subr.mxu0 0.0
    %4215 = vmatpush1.msra.mxu0 %v4171
    %4216 = vmatprep.subr.mxu0 0.0
    %4217 = vmatpush1.msra.mxu0 %v4170
    %4218 = vmatprep.subr.mxu0 0.0
    %4219 = vmatpush1.msra.mxu0 %v4169
    %4220 = vmatprep.subr.mxu0 0.0
    %4221 = vmatpush1.msra.mxu0 %v4168
    %4222 = vmatprep.subr.mxu0 0.0
    %4223 = vmatpush1.msra.mxu0 %v4167
    %4224 = vmatprep.subr.mxu0 0.0
    %4225 = vmatpush2.msra.mxu0 0.0
    %4226 = vmatprep.subr.mxu0 0.0
    %4227 = vmatpush2.msra.mxu0 0.0
    %4228 = vmatprep.subr.mxu0 0.0
    %4229 = vmatpush2.msra.mxu0 0.0
    %4230 = vmatprep.subr.mxu0 0.0
    %4231 = vmatpush2.msra.mxu0 0.0
    %4232 = vmatprep.subr.mxu0 0.0
    %4233 = vmatpush2.msra.mxu0 0.0
    %4234 = vmatprep.subr.mxu0 0.0
    %4235 = vmatpush2.msra.mxu0 0.0
    %4236 = vmatprep.subr.mxu0 0.0
    %4237 = vmatpush2.msra.mxu0 0.0
    %4238 = vmatprep.subr.mxu0 0.0
    %4239 = vmatpush2.msra.mxu0 0.0
    %4240 = vmatprep.subr.mxu0 0.0
    %4241 = vmatpush2.msra.mxu0 0.0
    %4242 = vmatprep.subr.mxu0 0.0
    %4243 = vmatpush2.msra.mxu0 0.0
    %4244 = vmatprep.subr.mxu0 0.0
    %4245 = vmatpush2.msra.mxu0 0.0
    %4246 = vmatprep.subr.mxu0 0.0
    %4247 = vmatpush2.msra.mxu0 0.0
    %4248 = vmatprep.subr.mxu0 0.0
    %4249 = vmatpush2.msra.mxu0 0.0
    %4250 = vmatprep.subr.mxu0 0.0
    %4251 = vmatpush2.msra.mxu0 0.0
    %4252 = vmatprep.subr.mxu0 0.0
    %4253 = vmatpush2.msra.mxu0 0.0
    %4254 = vmatprep.subr.mxu0 0.0
    %4255 = vmatpush2.msra.mxu0 0.0
    %4256 = vmatprep.mubr.f32.mxu0 0.0
    %4257 = vmatmul.mubr.f32.gmra.mxu0 %v4187
    %v4258 = vpop.f32.mrf.mxu0
    %v4259 = vadd.f32 %v4184, %v4258
    %v4260 = vpop.f32.mrf.mxu0
    %4261 = vmatprep.mubr.f32.mxu0 0.0
    %4262 = vmatmul.mubr.f32.gmra.mxu0 %v4190
    %v4263 = vpop.f32.mrf.mxu0
    %v4264 = vadd.f32 %v4184, %v4263
    %v4265 = vpop.f32.mrf.mxu0
    %4266 = vdwg.mxu0
    %v4267 = vld [vmem:[%s91] sm:$0xff]
    %v4268 = vld [vmem:[%s91 + $0x8] sm:$0xff]
    %v4269 = vld [vmem:[%s91 + $0x10] sm:$0xff]
    %v4270 = vld [vmem:[%s91 + $0x18] sm:$0xff]
    %v4271 = vld [vmem:[#allocation13] sm:$0x1]
    %v4273 = vlaneseq
    %v4274 = vshrl.u32 %v4273, 7
    %v4275 = vsub.s32 0, %v4274
    %v4276 = vrot.slane %v4271, %v4275
    %v4279 = vsel %vm311, %v4259, 0
    %v4282 = vsel %vm311, %v4264, 0
    %4284 = vmatprep.subr.mxu0 0.0
    %4285 = vmatpush1.msra.mxu0 0.0
    %4286 = vmatprep.subr.mxu0 0.0
    %4287 = vmatpush1.msra.mxu0 0.0
    %4288 = vmatprep.subr.mxu0 0.0
    %4289 = vmatpush1.msra.mxu0 0.0
    %4290 = vmatprep.subr.mxu0 0.0
    %4291 = vmatpush1.msra.mxu0 0.0
    %4292 = vmatprep.subr.mxu0 0.0
    %4293 = vmatpush1.msra.mxu0 0.0
    %4294 = vmatprep.subr.mxu0 0.0
    %4295 = vmatpush1.msra.mxu0 0.0
    %4296 = vmatprep.subr.mxu0 0.0
    %4297 = vmatpush1.msra.mxu0 0.0
    %4298 = vmatprep.subr.mxu0 0.0
    %4299 = vmatpush1.msra.mxu0 0.0
    %4300 = vmatprep.subr.mxu0 0.0
    %4301 = vmatpush1.msra.mxu0 0.0
    %4302 = vmatprep.subr.mxu0 0.0
    %4303 = vmatpush1.msra.mxu0 0.0
    %4304 = vmatprep.subr.mxu0 0.0
    %4305 = vmatpush1.msra.mxu0 0.0
    %4306 = vmatprep.subr.mxu0 0.0
    %4307 = vmatpush1.msra.mxu0 0.0
    %4308 = vmatprep.subr.mxu0 0.0
    %4309 = vmatpush1.msra.mxu0 %v4270
    %4310 = vmatprep.subr.mxu0 0.0
    %4311 = vmatpush1.msra.mxu0 %v4269
    %4312 = vmatprep.subr.mxu0 0.0
    %4313 = vmatpush1.msra.mxu0 %v4268
    %4314 = vmatprep.subr.mxu0 0.0
    %4315 = vmatpush1.msra.mxu0 %v4267
    %4316 = vmatprep.subr.mxu0 0.0
    %4317 = vmatpush2.msra.mxu0 0.0
    %4318 = vmatprep.subr.mxu0 0.0
    %4319 = vmatpush2.msra.mxu0 0.0
    %4320 = vmatprep.subr.mxu0 0.0
    %4321 = vmatpush2.msra.mxu0 0.0
    %4322 = vmatprep.subr.mxu0 0.0
    %4323 = vmatpush2.msra.mxu0 0.0
    %4324 = vmatprep.subr.mxu0 0.0
    %4325 = vmatpush2.msra.mxu0 0.0
    %4326 = vmatprep.subr.mxu0 0.0
    %4327 = vmatpush2.msra.mxu0 0.0
    %4328 = vmatprep.subr.mxu0 0.0
    %4329 = vmatpush2.msra.mxu0 0.0
    %4330 = vmatprep.subr.mxu0 0.0
    %4331 = vmatpush2.msra.mxu0 0.0
    %4332 = vmatprep.subr.mxu0 0.0
    %4333 = vmatpush2.msra.mxu0 0.0
    %4334 = vmatprep.subr.mxu0 0.0
    %4335 = vmatpush2.msra.mxu0 0.0
    %4336 = vmatprep.subr.mxu0 0.0
    %4337 = vmatpush2.msra.mxu0 0.0
    %4338 = vmatprep.subr.mxu0 0.0
    %4339 = vmatpush2.msra.mxu0 0.0
    %4340 = vmatprep.subr.mxu0 0.0
    %4341 = vmatpush2.msra.mxu0 0.0
    %4342 = vmatprep.subr.mxu0 0.0
    %4343 = vmatpush2.msra.mxu0 0.0
    %4344 = vmatprep.subr.mxu0 0.0
    %4345 = vmatpush2.msra.mxu0 0.0
    %4346 = vmatprep.subr.mxu0 0.0
    %4347 = vmatpush2.msra.mxu0 0.0
    %4348 = vmatprep.mubr.f32.mxu0 0.0
    %4349 = vmatmul.mubr.f32.gmra.mxu0 %v4279
    %v4350 = vpop.f32.mrf.mxu0
    %v4351 = vadd.f32 %v4276, %v4350
    %v4352 = vpop.f32.mrf.mxu0
    %4353 = vmatprep.mubr.f32.mxu0 0.0
    %4354 = vmatmul.mubr.f32.gmra.mxu0 %v4282
    %v4355 = vpop.f32.mrf.mxu0
    %v4356 = vadd.f32 %v4276, %v4355
    %v4357 = vpop.f32.mrf.mxu0
    %4358 = vdwg.mxu0
    %4361 = vrot.lane.b32.xlu0 %v953, 64
    %v4362 = vpop.permute.xlu0 %4361
    %4363 = vrot.lane.b32.xlu0 %v958, 64
    %v4364 = vpop.permute.xlu0 %4363
    %v4367 = vadd.f32 %v4351, %v4362
    %v4368 = vadd.f32 %v4356, %v4364
    %v4369 = vld [vmem:[%s21] sm:$0xff]
    %v4370 = vld [vmem:[%s21 + $0x8] sm:$0xff]
    %v4371 = vmul.f32 %v4367, 0.35355338
    %v4372 = vmul.f32 %v4368, 0.35355338
    %4375 = vrot.lane.b32.xlu0 %v4367, 96
    %v4376 = vpop.permute.xlu0 %4375
    %4377 = vrot.lane.b32.xlu0 %v4368, 96
    %v4378 = vpop.permute.xlu0 %4377
    %v4380 = vsel %vm1075, %v4371, 0
    %v4383 = vsel %vm1075, %v4372, 0
    %v4385 = vsel %vm1075, %v4376, 0
    %v4387 = vsel %vm1075, %v4378, 0
    %4389 = vmatprep.subr.mxu0 0.0
    %4390 = vmatpush1.xpose.msra.mxu0 0.0
    %4391 = vmatprep.subr.mxu0 0.0
    %4392 = vmatpush1.xpose.msra.mxu0 0.0
    %4393 = vmatprep.subr.mxu0 0.0
    %4394 = vmatpush1.xpose.msra.mxu0 0.0
    %4395 = vmatprep.subr.mxu0 0.0
    %4396 = vmatpush1.xpose.msra.mxu0 0.0
    %4397 = vmatprep.subr.mxu0 0.0
    %4398 = vmatpush1.xpose.msra.mxu0 0.0
    %4399 = vmatprep.subr.mxu0 0.0
    %4400 = vmatpush1.xpose.msra.mxu0 0.0
    %4401 = vmatprep.subr.mxu0 0.0
    %4402 = vmatpush1.xpose.msra.mxu0 0.0
    %4403 = vmatprep.subr.mxu0 0.0
    %4404 = vmatpush1.xpose.msra.mxu0 0.0
    %4405 = vmatprep.subr.mxu0 0.0
    %4406 = vmatpush1.xpose.msra.mxu0 0.0
    %4407 = vmatprep.subr.mxu0 0.0
    %4408 = vmatpush1.xpose.msra.mxu0 0.0
    %4409 = vmatprep.subr.mxu0 0.0
    %4410 = vmatpush1.xpose.msra.mxu0 0.0
    %4411 = vmatprep.subr.mxu0 0.0
    %4412 = vmatpush1.xpose.msra.mxu0 0.0
    %4413 = vmatprep.subr.mxu0 0.0
    %4414 = vmatpush1.xpose.msra.mxu0 0.0
    %4415 = vmatprep.subr.mxu0 0.0
    %4416 = vmatpush1.xpose.msra.mxu0 0.0
    %4417 = vmatprep.subr.mxu0 0.0
    %4418 = vmatpush1.xpose.msra.mxu0 %v4387
    %4419 = vmatprep.subr.mxu0 0.0
    %4420 = vmatpush1.xpose.msra.mxu0 %v4385
    %4421 = vmatprep.subr.mxu0 0.0
    %4422 = vmatpush2.xpose.msra.mxu0 0.0
    %4423 = vmatprep.subr.mxu0 0.0
    %4424 = vmatpush2.xpose.msra.mxu0 0.0
    %4425 = vmatprep.subr.mxu0 0.0
    %4426 = vmatpush2.xpose.msra.mxu0 0.0
    %4427 = vmatprep.subr.mxu0 0.0
    %4428 = vmatpush2.xpose.msra.mxu0 0.0
    %4429 = vmatprep.subr.mxu0 0.0
    %4430 = vmatpush2.xpose.msra.mxu0 0.0
    %4431 = vmatprep.subr.mxu0 0.0
    %4432 = vmatpush2.xpose.msra.mxu0 0.0
    %4433 = vmatprep.subr.mxu0 0.0
    %4434 = vmatpush2.xpose.msra.mxu0 0.0
    %4435 = vmatprep.subr.mxu0 0.0
    %4436 = vmatpush2.xpose.msra.mxu0 0.0
    %4437 = vmatprep.subr.mxu0 0.0
    %4438 = vmatpush2.xpose.msra.mxu0 0.0
    %4439 = vmatprep.subr.mxu0 0.0
    %4440 = vmatpush2.xpose.msra.mxu0 0.0
    %4441 = vmatprep.subr.mxu0 0.0
    %4442 = vmatpush2.xpose.msra.mxu0 0.0
    %4443 = vmatprep.subr.mxu0 0.0
    %4444 = vmatpush2.xpose.msra.mxu0 0.0
    %4445 = vmatprep.subr.mxu0 0.0
    %4446 = vmatpush2.xpose.msra.mxu0 0.0
    %4447 = vmatprep.subr.mxu0 0.0
    %4448 = vmatpush2.xpose.msra.mxu0 0.0
    %4449 = vmatprep.subr.mxu0 0.0
    %4450 = vmatpush2.xpose.msra.mxu0 0.0
    %4451 = vmatprep.subr.mxu0 0.0
    %4452 = vmatpush2.xpose.msra.mxu0 0.0
    %4453 = vmatprep.mubr.f32.mxu0 0.0
    %4454 = vmatmul.mubr.f32.gmra.mxu0 %v4380
    %v4455 = vpop.f32.mrf.mxu0
    %v4456 = vadd.f32 %v4369, %v4455
    %v4457 = vpop.f32.mrf.mxu0
    %4458 = vmatprep.mubr.f32.mxu0 0.0
    %4459 = vmatmul.mubr.f32.gmra.mxu0 %v4383
    %v4460 = vpop.f32.mrf.mxu0
    %v4461 = vadd.f32 %v4370, %v4460
    %v4462 = vpop.f32.mrf.mxu0
    %4463 = vdwg.mxu0
    %v4464 = vsel %vm1120, %v4456, -inf
    %4465 = vmax.xlane.f32.xlu0 %v4464
    %v4466 = vpop.xlane.xlu0 %4465
    %v4467 = vsel %vm1120, %v4461, -inf
    %4468 = vmax.xlane.f32.xlu0 %v4467
    %v4469 = vpop.xlane.xlu0 %4468
    %v4470 = vsub.f32 %v4456, %v4466
    %v4471 = vsub.f32 %v4461, %v4469
    %v4472 = vmul.f32 %v4470, 1.442695
    %v4473 = vpow.pop %v4472
    %v4474 = vmul.f32 %v4471, 1.442695
    %v4475 = vpow.pop %v4474
    %v4476 = vsel %vm1120, %v4473, 0.0
    %4477 = vadd.xlane.f32.xlu0 %v4476
    %v4478 = vpop.xlane.xlu0 %4477
    %v4479 = vsel %vm1120, %v4475, 0.0
    %4480 = vadd.xlane.f32.xlu0 %v4479
    %v4481 = vpop.xlane.xlu0 %4480
    %v4482 = vrcp.pop %v4478
    %v4483 = vrcp.pop %v4481
    %v4484 = vmul.f32 %v4473, %v4482
    %v4485 = vmul.f32 %v4475, %v4483
    %4488 = vrot.lane.b32.xlu0 %v4351, 64
    %v4489 = vpop.permute.xlu0 %4488
    %4490 = vrot.lane.b32.xlu0 %v4356, 64
    %v4491 = vpop.permute.xlu0 %4490
    %v4495 = vsel %vm1120, %v4484, 0
    %v4498 = vsel %vm1120, %v4485, 0
    %4500 = vmatprep.subr.mxu0 0.0
    %4501 = vmatpush1.msra.mxu0 0.0
    %4502 = vmatprep.subr.mxu0 0.0
    %4503 = vmatpush1.msra.mxu0 0.0
    %4504 = vmatprep.subr.mxu0 0.0
    %4505 = vmatpush1.msra.mxu0 0.0
    %4506 = vmatprep.subr.mxu0 0.0
    %4507 = vmatpush1.msra.mxu0 0.0
    %4508 = vmatprep.subr.mxu0 0.0
    %4509 = vmatpush1.msra.mxu0 0.0
    %4510 = vmatprep.subr.mxu0 0.0
    %4511 = vmatpush1.msra.mxu0 0.0
    %4512 = vmatprep.subr.mxu0 0.0
    %4513 = vmatpush1.msra.mxu0 0.0
    %4514 = vmatprep.subr.mxu0 0.0
    %4515 = vmatpush1.msra.mxu0 0.0
    %4516 = vmatprep.subr.mxu0 0.0
    %4517 = vmatpush1.msra.mxu0 0.0
    %4518 = vmatprep.subr.mxu0 0.0
    %4519 = vmatpush1.msra.mxu0 0.0
    %4520 = vmatprep.subr.mxu0 0.0
    %4521 = vmatpush1.msra.mxu0 0.0
    %4522 = vmatprep.subr.mxu0 0.0
    %4523 = vmatpush1.msra.mxu0 0.0
    %4524 = vmatprep.subr.mxu0 0.0
    %4525 = vmatpush1.msra.mxu0 0.0
    %4526 = vmatprep.subr.mxu0 0.0
    %4527 = vmatpush1.msra.mxu0 0.0
    %4528 = vmatprep.subr.mxu0 0.0
    %4529 = vmatpush1.msra.mxu0 %v4491
    %4530 = vmatprep.subr.mxu0 0.0
    %4531 = vmatpush1.msra.mxu0 %v4489
    %4532 = vmatprep.subr.mxu0 0.0
    %4533 = vmatpush2.msra.mxu0 0.0
    %4534 = vmatprep.subr.mxu0 0.0
    %4535 = vmatpush2.msra.mxu0 0.0
    %4536 = vmatprep.subr.mxu0 0.0
    %4537 = vmatpush2.msra.mxu0 0.0
    %4538 = vmatprep.subr.mxu0 0.0
    %4539 = vmatpush2.msra.mxu0 0.0
    %4540 = vmatprep.subr.mxu0 0.0
    %4541 = vmatpush2.msra.mxu0 0.0
    %4542 = vmatprep.subr.mxu0 0.0
    %4543 = vmatpush2.msra.mxu0 0.0
    %4544 = vmatprep.subr.mxu0 0.0
    %4545 = vmatpush2.msra.mxu0 0.0
    %4546 = vmatprep.subr.mxu0 0.0
    %4547 = vmatpush2.msra.mxu0 0.0
    %4548 = vmatprep.subr.mxu0 0.0
    %4549 = vmatpush2.msra.mxu0 0.0
    %4550 = vmatprep.subr.mxu0 0.0
    %4551 = vmatpush2.msra.mxu0 0.0
    %4552 = vmatprep.subr.mxu0 0.0
    %4553 = vmatpush2.msra.mxu0 0.0
    %4554 = vmatprep.subr.mxu0 0.0
    %4555 = vmatpush2.msra.mxu0 0.0
    %4556 = vmatprep.subr.mxu0 0.0
    %4557 = vmatpush2.msra.mxu0 0.0
    %4558 = vmatprep.subr.mxu0 0.0
    %4559 = vmatpush2.msra.mxu0 0.0
    %4560 = vmatprep.subr.mxu0 0.0
    %4561 = vmatpush2.msra.mxu0 0.0
    %4562 = vmatprep.subr.mxu0 0.0
    %4563 = vmatpush2.msra.mxu0 0.0
    %4564 = vmatprep.mubr.f32.mxu0 0.0
    %4565 = vmatmul.mubr.f32.gmra.mxu0 %v4495
    %v4566 = vpop.f32.mrf.mxu0
    %v4567 = vadd.f32 0.0, %v4566
    %v4568 = vpop.f32.mrf.mxu0
    %4569 = vmatprep.mubr.f32.mxu0 0.0
    %4570 = vmatmul.mubr.f32.gmra.mxu0 %v4498
    %v4571 = vpop.f32.mrf.mxu0
    %v4572 = vadd.f32 0.0, %v4571
    %v4573 = vpop.f32.mrf.mxu0
    %4574 = vdwg.mxu0
    %4575 = vrot.lane.b32.xlu0 %v4371, 120
    %v4576 = vpop.permute.xlu0 %4575
    %4577 = vrot.lane.b32.xlu0 %v4372, 120
    %v4578 = vpop.permute.xlu0 %4577
    %4579 = vrot.lane.b32.xlu0 %v4367, 88
    %v4580 = vpop.permute.xlu0 %4579
    %4581 = vrot.lane.b32.xlu0 %v4368, 88
    %v4582 = vpop.permute.xlu0 %4581
    %v4583 = vsel %vm1075, %v4576, 0
    %v4585 = vsel %vm1075, %v4578, 0
    %v4587 = vsel %vm1075, %v4580, 0
    %v4589 = vsel %vm1075, %v4582, 0
    %4591 = vmatprep.subr.mxu0 0.0
    %4592 = vmatpush1.xpose.msra.mxu0 0.0
    %4593 = vmatprep.subr.mxu0 0.0
    %4594 = vmatpush1.xpose.msra.mxu0 0.0
    %4595 = vmatprep.subr.mxu0 0.0
    %4596 = vmatpush1.xpose.msra.mxu0 0.0
    %4597 = vmatprep.subr.mxu0 0.0
    %4598 = vmatpush1.xpose.msra.mxu0 0.0
    %4599 = vmatprep.subr.mxu0 0.0
    %4600 = vmatpush1.xpose.msra.mxu0 0.0
    %4601 = vmatprep.subr.mxu0 0.0
    %4602 = vmatpush1.xpose.msra.mxu0 0.0
    %4603 = vmatprep.subr.mxu0 0.0
    %4604 = vmatpush1.xpose.msra.mxu0 0.0
    %4605 = vmatprep.subr.mxu0 0.0
    %4606 = vmatpush1.xpose.msra.mxu0 0.0
    %4607 = vmatprep.subr.mxu0 0.0
    %4608 = vmatpush1.xpose.msra.mxu0 0.0
    %4609 = vmatprep.subr.mxu0 0.0
    %4610 = vmatpush1.xpose.msra.mxu0 0.0
    %4611 = vmatprep.subr.mxu0 0.0
    %4612 = vmatpush1.xpose.msra.mxu0 0.0
    %4613 = vmatprep.subr.mxu0 0.0
    %4614 = vmatpush1.xpose.msra.mxu0 0.0
    %4615 = vmatprep.subr.mxu0 0.0
    %4616 = vmatpush1.xpose.msra.mxu0 0.0
    %4617 = vmatprep.subr.mxu0 0.0
    %4618 = vmatpush1.xpose.msra.mxu0 0.0
    %4619 = vmatprep.subr.mxu0 0.0
    %4620 = vmatpush1.xpose.msra.mxu0 %v4589
    %4621 = vmatprep.subr.mxu0 0.0
    %4622 = vmatpush1.xpose.msra.mxu0 %v4587
    %4623 = vmatprep.subr.mxu0 0.0
    %4624 = vmatpush2.xpose.msra.mxu0 0.0
    %4625 = vmatprep.subr.mxu0 0.0
    %4626 = vmatpush2.xpose.msra.mxu0 0.0
    %4627 = vmatprep.subr.mxu0 0.0
    %4628 = vmatpush2.xpose.msra.mxu0 0.0
    %4629 = vmatprep.subr.mxu0 0.0
    %4630 = vmatpush2.xpose.msra.mxu0 0.0
    %4631 = vmatprep.subr.mxu0 0.0
    %4632 = vmatpush2.xpose.msra.mxu0 0.0
    %4633 = vmatprep.subr.mxu0 0.0
    %4634 = vmatpush2.xpose.msra.mxu0 0.0
    %4635 = vmatprep.subr.mxu0 0.0
    %4636 = vmatpush2.xpose.msra.mxu0 0.0
    %4637 = vmatprep.subr.mxu0 0.0
    %4638 = vmatpush2.xpose.msra.mxu0 0.0
    %4639 = vmatprep.subr.mxu0 0.0
    %4640 = vmatpush2.xpose.msra.mxu0 0.0
    %4641 = vmatprep.subr.mxu0 0.0
    %4642 = vmatpush2.xpose.msra.mxu0 0.0
    %4643 = vmatprep.subr.mxu0 0.0
    %4644 = vmatpush2.xpose.msra.mxu0 0.0
    %4645 = vmatprep.subr.mxu0 0.0
    %4646 = vmatpush2.xpose.msra.mxu0 0.0
    %4647 = vmatprep.subr.mxu0 0.0
    %4648 = vmatpush2.xpose.msra.mxu0 0.0
    %4649 = vmatprep.subr.mxu0 0.0
    %4650 = vmatpush2.xpose.msra.mxu0 0.0
    %4651 = vmatprep.subr.mxu0 0.0
    %4652 = vmatpush2.xpose.msra.mxu0 0.0
    %4653 = vmatprep.subr.mxu0 0.0
    %4654 = vmatpush2.xpose.msra.mxu0 0.0
    %4655 = vmatprep.mubr.f32.mxu0 0.0
    %4656 = vmatmul.mubr.f32.gmra.mxu0 %v4583
    %v4657 = vpop.f32.mrf.mxu0
    %v4658 = vadd.f32 %v4369, %v4657
    %v4659 = vpop.f32.mrf.mxu0
    %4660 = vmatprep.mubr.f32.mxu0 0.0
    %4661 = vmatmul.mubr.f32.gmra.mxu0 %v4585
    %v4662 = vpop.f32.mrf.mxu0
    %v4663 = vadd.f32 %v4370, %v4662
    %v4664 = vpop.f32.mrf.mxu0
    %4665 = vdwg.mxu0
    %v4666 = vsel %vm1120, %v4658, -inf
    %4667 = vmax.xlane.f32.xlu0 %v4666
    %v4668 = vpop.xlane.xlu0 %4667
    %v4669 = vsel %vm1120, %v4663, -inf
    %4670 = vmax.xlane.f32.xlu0 %v4669
    %v4671 = vpop.xlane.xlu0 %4670
    %v4672 = vsub.f32 %v4658, %v4668
    %v4673 = vsub.f32 %v4663, %v4671
    %v4674 = vmul.f32 %v4672, 1.442695
    %v4675 = vpow.pop %v4674
    %v4676 = vmul.f32 %v4673, 1.442695
    %v4677 = vpow.pop %v4676
    %v4678 = vsel %vm1120, %v4675, 0.0
    %4679 = vadd.xlane.f32.xlu0 %v4678
    %v4680 = vpop.xlane.xlu0 %4679
    %v4681 = vsel %vm1120, %v4677, 0.0
    %4682 = vadd.xlane.f32.xlu0 %v4681
    %v4683 = vpop.xlane.xlu0 %4682
    %v4684 = vrcp.pop %v4680
    %v4685 = vrcp.pop %v4683
    %v4686 = vmul.f32 %v4675, %v4684
    %v4687 = vmul.f32 %v4677, %v4685
    %4688 = vrot.lane.b32.xlu0 %v4351, 56
    %v4689 = vpop.permute.xlu0 %4688
    %4690 = vrot.lane.b32.xlu0 %v4356, 56
    %v4691 = vpop.permute.xlu0 %4690
    %v4695 = vsel %vm1120, %v4686, 0
    %v4698 = vsel %vm1120, %v4687, 0
    %4700 = vmatprep.subr.mxu0 0.0
    %4701 = vmatpush1.msra.mxu0 0.0
    %4702 = vmatprep.subr.mxu0 0.0
    %4703 = vmatpush1.msra.mxu0 0.0
    %4704 = vmatprep.subr.mxu0 0.0
    %4705 = vmatpush1.msra.mxu0 0.0
    %4706 = vmatprep.subr.mxu0 0.0
    %4707 = vmatpush1.msra.mxu0 0.0
    %4708 = vmatprep.subr.mxu0 0.0
    %4709 = vmatpush1.msra.mxu0 0.0
    %4710 = vmatprep.subr.mxu0 0.0
    %4711 = vmatpush1.msra.mxu0 0.0
    %4712 = vmatprep.subr.mxu0 0.0
    %4713 = vmatpush1.msra.mxu0 0.0
    %4714 = vmatprep.subr.mxu0 0.0
    %4715 = vmatpush1.msra.mxu0 0.0
    %4716 = vmatprep.subr.mxu0 0.0
    %4717 = vmatpush1.msra.mxu0 0.0
    %4718 = vmatprep.subr.mxu0 0.0
    %4719 = vmatpush1.msra.mxu0 0.0
    %4720 = vmatprep.subr.mxu0 0.0
    %4721 = vmatpush1.msra.mxu0 0.0
    %4722 = vmatprep.subr.mxu0 0.0
    %4723 = vmatpush1.msra.mxu0 0.0
    %4724 = vmatprep.subr.mxu0 0.0
    %4725 = vmatpush1.msra.mxu0 0.0
    %4726 = vmatprep.subr.mxu0 0.0
    %4727 = vmatpush1.msra.mxu0 0.0
    %4728 = vmatprep.subr.mxu0 0.0
    %4729 = vmatpush1.msra.mxu0 %v4691
    %4730 = vmatprep.subr.mxu0 0.0
    %4731 = vmatpush1.msra.mxu0 %v4689
    %4732 = vmatprep.subr.mxu0 0.0
    %4733 = vmatpush2.msra.mxu0 0.0
    %4734 = vmatprep.subr.mxu0 0.0
    %4735 = vmatpush2.msra.mxu0 0.0
    %4736 = vmatprep.subr.mxu0 0.0
    %4737 = vmatpush2.msra.mxu0 0.0
    %4738 = vmatprep.subr.mxu0 0.0
    %4739 = vmatpush2.msra.mxu0 0.0
    %4740 = vmatprep.subr.mxu0 0.0
    %4741 = vmatpush2.msra.mxu0 0.0
    %4742 = vmatprep.subr.mxu0 0.0
    %4743 = vmatpush2.msra.mxu0 0.0
    %4744 = vmatprep.subr.mxu0 0.0
    %4745 = vmatpush2.msra.mxu0 0.0
    %4746 = vmatprep.subr.mxu0 0.0
    %4747 = vmatpush2.msra.mxu0 0.0
    %4748 = vmatprep.subr.mxu0 0.0
    %4749 = vmatpush2.msra.mxu0 0.0
    %4750 = vmatprep.subr.mxu0 0.0
    %4751 = vmatpush2.msra.mxu0 0.0
    %4752 = vmatprep.subr.mxu0 0.0
    %4753 = vmatpush2.msra.mxu0 0.0
    %4754 = vmatprep.subr.mxu0 0.0
    %4755 = vmatpush2.msra.mxu0 0.0
    %4756 = vmatprep.subr.mxu0 0.0
    %4757 = vmatpush2.msra.mxu0 0.0
    %4758 = vmatprep.subr.mxu0 0.0
    %4759 = vmatpush2.msra.mxu0 0.0
    %4760 = vmatprep.subr.mxu0 0.0
    %4761 = vmatpush2.msra.mxu0 0.0
    %4762 = vmatprep.subr.mxu0 0.0
    %4763 = vmatpush2.msra.mxu0 0.0
    %4764 = vmatprep.mubr.f32.mxu0 0.0
    %4765 = vmatmul.mubr.f32.gmra.mxu0 %v4695
    %v4766 = vpop.f32.mrf.mxu0
    %v4767 = vadd.f32 0.0, %v4766
    %v4768 = vpop.f32.mrf.mxu0
    %4769 = vmatprep.mubr.f32.mxu0 0.0
    %4770 = vmatmul.mubr.f32.gmra.mxu0 %v4698
    %v4771 = vpop.f32.mrf.mxu0
    %v4772 = vadd.f32 0.0, %v4771
    %v4773 = vpop.f32.mrf.mxu0
    %4774 = vdwg.mxu0
    %4775 = vrot.lane.b32.xlu0 %v4371, 112
    %v4776 = vpop.permute.xlu0 %4775
    %4777 = vrot.lane.b32.xlu0 %v4372, 112
    %v4778 = vpop.permute.xlu0 %4777
    %4779 = vrot.lane.b32.xlu0 %v4367, 80
    %v4780 = vpop.permute.xlu0 %4779
    %4781 = vrot.lane.b32.xlu0 %v4368, 80
    %v4782 = vpop.permute.xlu0 %4781
    %v4783 = vsel %vm1075, %v4776, 0
    %v4785 = vsel %vm1075, %v4778, 0
    %v4787 = vsel %vm1075, %v4780, 0
    %v4789 = vsel %vm1075, %v4782, 0
    %4791 = vmatprep.subr.mxu0 0.0
    %4792 = vmatpush1.xpose.msra.mxu0 0.0
    %4793 = vmatprep.subr.mxu0 0.0
    %4794 = vmatpush1.xpose.msra.mxu0 0.0
    %4795 = vmatprep.subr.mxu0 0.0
    %4796 = vmatpush1.xpose.msra.mxu0 0.0
    %4797 = vmatprep.subr.mxu0 0.0
    %4798 = vmatpush1.xpose.msra.mxu0 0.0
    %4799 = vmatprep.subr.mxu0 0.0
    %4800 = vmatpush1.xpose.msra.mxu0 0.0
    %4801 = vmatprep.subr.mxu0 0.0
    %4802 = vmatpush1.xpose.msra.mxu0 0.0
    %4803 = vmatprep.subr.mxu0 0.0
    %4804 = vmatpush1.xpose.msra.mxu0 0.0
    %4805 = vmatprep.subr.mxu0 0.0
    %4806 = vmatpush1.xpose.msra.mxu0 0.0
    %4807 = vmatprep.subr.mxu0 0.0
    %4808 = vmatpush1.xpose.msra.mxu0 0.0
    %4809 = vmatprep.subr.mxu0 0.0
    %4810 = vmatpush1.xpose.msra.mxu0 0.0
    %4811 = vmatprep.subr.mxu0 0.0
    %4812 = vmatpush1.xpose.msra.mxu0 0.0
    %4813 = vmatprep.subr.mxu0 0.0
    %4814 = vmatpush1.xpose.msra.mxu0 0.0
    %4815 = vmatprep.subr.mxu0 0.0
    %4816 = vmatpush1.xpose.msra.mxu0 0.0
    %4817 = vmatprep.subr.mxu0 0.0
    %4818 = vmatpush1.xpose.msra.mxu0 0.0
    %4819 = vmatprep.subr.mxu0 0.0
    %4820 = vmatpush1.xpose.msra.mxu0 %v4789
    %4821 = vmatprep.subr.mxu0 0.0
    %4822 = vmatpush1.xpose.msra.mxu0 %v4787
    %4823 = vmatprep.subr.mxu0 0.0
    %4824 = vmatpush2.xpose.msra.mxu0 0.0
    %4825 = vmatprep.subr.mxu0 0.0
    %4826 = vmatpush2.xpose.msra.mxu0 0.0
    %4827 = vmatprep.subr.mxu0 0.0
    %4828 = vmatpush2.xpose.msra.mxu0 0.0
    %4829 = vmatprep.subr.mxu0 0.0
    %4830 = vmatpush2.xpose.msra.mxu0 0.0
    %4831 = vmatprep.subr.mxu0 0.0
    %4832 = vmatpush2.xpose.msra.mxu0 0.0
    %4833 = vmatprep.subr.mxu0 0.0
    %4834 = vmatpush2.xpose.msra.mxu0 0.0
    %4835 = vmatprep.subr.mxu0 0.0
    %4836 = vmatpush2.xpose.msra.mxu0 0.0
    %4837 = vmatprep.subr.mxu0 0.0
    %4838 = vmatpush2.xpose.msra.mxu0 0.0
    %4839 = vmatprep.subr.mxu0 0.0
    %4840 = vmatpush2.xpose.msra.mxu0 0.0
    %4841 = vmatprep.subr.mxu0 0.0
    %4842 = vmatpush2.xpose.msra.mxu0 0.0
    %4843 = vmatprep.subr.mxu0 0.0
    %4844 = vmatpush2.xpose.msra.mxu0 0.0
    %4845 = vmatprep.subr.mxu0 0.0
    %4846 = vmatpush2.xpose.msra.mxu0 0.0
    %4847 = vmatprep.subr.mxu0 0.0
    %4848 = vmatpush2.xpose.msra.mxu0 0.0
    %4849 = vmatprep.subr.mxu0 0.0
    %4850 = vmatpush2.xpose.msra.mxu0 0.0
    %4851 = vmatprep.subr.mxu0 0.0
    %4852 = vmatpush2.xpose.msra.mxu0 0.0
    %4853 = vmatprep.subr.mxu0 0.0
    %4854 = vmatpush2.xpose.msra.mxu0 0.0
    %4855 = vmatprep.mubr.f32.mxu0 0.0
    %4856 = vmatmul.mubr.f32.gmra.mxu0 %v4783
    %v4857 = vpop.f32.mrf.mxu0
    %v4858 = vadd.f32 %v4369, %v4857
    %v4859 = vpop.f32.mrf.mxu0
    %4860 = vmatprep.mubr.f32.mxu0 0.0
    %4861 = vmatmul.mubr.f32.gmra.mxu0 %v4785
    %v4862 = vpop.f32.mrf.mxu0
    %v4863 = vadd.f32 %v4370, %v4862
    %v4864 = vpop.f32.mrf.mxu0
    %4865 = vdwg.mxu0
    %v4866 = vsel %vm1120, %v4858, -inf
    %4867 = vmax.xlane.f32.xlu0 %v4866
    %v4868 = vpop.xlane.xlu0 %4867
    %v4869 = vsel %vm1120, %v4863, -inf
    %4870 = vmax.xlane.f32.xlu0 %v4869
    %v4871 = vpop.xlane.xlu0 %4870
    %v4872 = vsub.f32 %v4858, %v4868
    %v4873 = vsub.f32 %v4863, %v4871
    %v4874 = vmul.f32 %v4872, 1.442695
    %v4875 = vpow.pop %v4874
    %v4876 = vmul.f32 %v4873, 1.442695
    %v4877 = vpow.pop %v4876
    %v4878 = vsel %vm1120, %v4875, 0.0
    %4879 = vadd.xlane.f32.xlu0 %v4878
    %v4880 = vpop.xlane.xlu0 %4879
    %v4881 = vsel %vm1120, %v4877, 0.0
    %4882 = vadd.xlane.f32.xlu0 %v4881
    %v4883 = vpop.xlane.xlu0 %4882
    %v4884 = vrcp.pop %v4880
    %v4885 = vrcp.pop %v4883
    %v4886 = vmul.f32 %v4875, %v4884
    %v4887 = vmul.f32 %v4877, %v4885
    %4888 = vrot.lane.b32.xlu0 %v4351, 48
    %v4889 = vpop.permute.xlu0 %4888
    %4890 = vrot.lane.b32.xlu0 %v4356, 48
    %v4891 = vpop.permute.xlu0 %4890
    %v4895 = vsel %vm1120, %v4886, 0
    %v4898 = vsel %vm1120, %v4887, 0
    %4900 = vmatprep.subr.mxu0 0.0
    %4901 = vmatpush1.msra.mxu0 0.0
    %4902 = vmatprep.subr.mxu0 0.0
    %4903 = vmatpush1.msra.mxu0 0.0
    %4904 = vmatprep.subr.mxu0 0.0
    %4905 = vmatpush1.msra.mxu0 0.0
    %4906 = vmatprep.subr.mxu0 0.0
    %4907 = vmatpush1.msra.mxu0 0.0
    %4908 = vmatprep.subr.mxu0 0.0
    %4909 = vmatpush1.msra.mxu0 0.0
    %4910 = vmatprep.subr.mxu0 0.0
    %4911 = vmatpush1.msra.mxu0 0.0
    %4912 = vmatprep.subr.mxu0 0.0
    %4913 = vmatpush1.msra.mxu0 0.0
    %4914 = vmatprep.subr.mxu0 0.0
    %4915 = vmatpush1.msra.mxu0 0.0
    %4916 = vmatprep.subr.mxu0 0.0
    %4917 = vmatpush1.msra.mxu0 0.0
    %4918 = vmatprep.subr.mxu0 0.0
    %4919 = vmatpush1.msra.mxu0 0.0
    %4920 = vmatprep.subr.mxu0 0.0
    %4921 = vmatpush1.msra.mxu0 0.0
    %4922 = vmatprep.subr.mxu0 0.0
    %4923 = vmatpush1.msra.mxu0 0.0
    %4924 = vmatprep.subr.mxu0 0.0
    %4925 = vmatpush1.msra.mxu0 0.0
    %4926 = vmatprep.subr.mxu0 0.0
    %4927 = vmatpush1.msra.mxu0 0.0
    %4928 = vmatprep.subr.mxu0 0.0
    %4929 = vmatpush1.msra.mxu0 %v4891
    %4930 = vmatprep.subr.mxu0 0.0
    %4931 = vmatpush1.msra.mxu0 %v4889
    %4932 = vmatprep.subr.mxu0 0.0
    %4933 = vmatpush2.msra.mxu0 0.0
    %4934 = vmatprep.subr.mxu0 0.0
    %4935 = vmatpush2.msra.mxu0 0.0
    %4936 = vmatprep.subr.mxu0 0.0
    %4937 = vmatpush2.msra.mxu0 0.0
    %4938 = vmatprep.subr.mxu0 0.0
    %4939 = vmatpush2.msra.mxu0 0.0
    %4940 = vmatprep.subr.mxu0 0.0
    %4941 = vmatpush2.msra.mxu0 0.0
    %4942 = vmatprep.subr.mxu0 0.0
    %4943 = vmatpush2.msra.mxu0 0.0
    %4944 = vmatprep.subr.mxu0 0.0
    %4945 = vmatpush2.msra.mxu0 0.0
    %4946 = vmatprep.subr.mxu0 0.0
    %4947 = vmatpush2.msra.mxu0 0.0
    %4948 = vmatprep.subr.mxu0 0.0
    %4949 = vmatpush2.msra.mxu0 0.0
    %4950 = vmatprep.subr.mxu0 0.0
    %4951 = vmatpush2.msra.mxu0 0.0
    %4952 = vmatprep.subr.mxu0 0.0
    %4953 = vmatpush2.msra.mxu0 0.0
    %4954 = vmatprep.subr.mxu0 0.0
    %4955 = vmatpush2.msra.mxu0 0.0
    %4956 = vmatprep.subr.mxu0 0.0
    %4957 = vmatpush2.msra.mxu0 0.0
    %4958 = vmatprep.subr.mxu0 0.0
    %4959 = vmatpush2.msra.mxu0 0.0
    %4960 = vmatprep.subr.mxu0 0.0
    %4961 = vmatpush2.msra.mxu0 0.0
    %4962 = vmatprep.subr.mxu0 0.0
    %4963 = vmatpush2.msra.mxu0 0.0
    %4964 = vmatprep.mubr.f32.mxu0 0.0
    %4965 = vmatmul.mubr.f32.gmra.mxu0 %v4895
    %v4966 = vpop.f32.mrf.mxu0
    %v4967 = vadd.f32 0.0, %v4966
    %v4968 = vpop.f32.mrf.mxu0
    %4969 = vmatprep.mubr.f32.mxu0 0.0
    %4970 = vmatmul.mubr.f32.gmra.mxu0 %v4898
    %v4971 = vpop.f32.mrf.mxu0
    %v4972 = vadd.f32 0.0, %v4971
    %v4973 = vpop.f32.mrf.mxu0
    %4974 = vdwg.mxu0
    %4975 = vrot.lane.b32.xlu0 %v4371, 104
    %v4976 = vpop.permute.xlu0 %4975
    %4977 = vrot.lane.b32.xlu0 %v4372, 104
    %v4978 = vpop.permute.xlu0 %4977
    %4979 = vrot.lane.b32.xlu0 %v4367, 72
    %v4980 = vpop.permute.xlu0 %4979
    %4981 = vrot.lane.b32.xlu0 %v4368, 72
    %v4982 = vpop.permute.xlu0 %4981
    %v4983 = vsel %vm1075, %v4976, 0
    %v4985 = vsel %vm1075, %v4978, 0
    %v4987 = vsel %vm1075, %v4980, 0
    %v4989 = vsel %vm1075, %v4982, 0
    %4991 = vmatprep.subr.mxu0 0.0
    %4992 = vmatpush1.xpose.msra.mxu0 0.0
    %4993 = vmatprep.subr.mxu0 0.0
    %4994 = vmatpush1.xpose.msra.mxu0 0.0
    %4995 = vmatprep.subr.mxu0 0.0
    %4996 = vmatpush1.xpose.msra.mxu0 0.0
    %4997 = vmatprep.subr.mxu0 0.0
    %4998 = vmatpush1.xpose.msra.mxu0 0.0
    %4999 = vmatprep.subr.mxu0 0.0
    %5000 = vmatpush1.xpose.msra.mxu0 0.0
    %5001 = vmatprep.subr.mxu0 0.0
    %5002 = vmatpush1.xpose.msra.mxu0 0.0
    %5003 = vmatprep.subr.mxu0 0.0
    %5004 = vmatpush1.xpose.msra.mxu0 0.0
    %5005 = vmatprep.subr.mxu0 0.0
    %5006 = vmatpush1.xpose.msra.mxu0 0.0
    %5007 = vmatprep.subr.mxu0 0.0
    %5008 = vmatpush1.xpose.msra.mxu0 0.0
    %5009 = vmatprep.subr.mxu0 0.0
    %5010 = vmatpush1.xpose.msra.mxu0 0.0
    %5011 = vmatprep.subr.mxu0 0.0
    %5012 = vmatpush1.xpose.msra.mxu0 0.0
    %5013 = vmatprep.subr.mxu0 0.0
    %5014 = vmatpush1.xpose.msra.mxu0 0.0
    %5015 = vmatprep.subr.mxu0 0.0
    %5016 = vmatpush1.xpose.msra.mxu0 0.0
    %5017 = vmatprep.subr.mxu0 0.0
    %5018 = vmatpush1.xpose.msra.mxu0 0.0
    %5019 = vmatprep.subr.mxu0 0.0
    %5020 = vmatpush1.xpose.msra.mxu0 %v4989
    %5021 = vmatprep.subr.mxu0 0.0
    %5022 = vmatpush1.xpose.msra.mxu0 %v4987
    %5023 = vmatprep.subr.mxu0 0.0
    %5024 = vmatpush2.xpose.msra.mxu0 0.0
    %5025 = vmatprep.subr.mxu0 0.0
    %5026 = vmatpush2.xpose.msra.mxu0 0.0
    %5027 = vmatprep.subr.mxu0 0.0
    %5028 = vmatpush2.xpose.msra.mxu0 0.0
    %5029 = vmatprep.subr.mxu0 0.0
    %5030 = vmatpush2.xpose.msra.mxu0 0.0
    %5031 = vmatprep.subr.mxu0 0.0
    %5032 = vmatpush2.xpose.msra.mxu0 0.0
    %5033 = vmatprep.subr.mxu0 0.0
    %5034 = vmatpush2.xpose.msra.mxu0 0.0
    %5035 = vmatprep.subr.mxu0 0.0
    %5036 = vmatpush2.xpose.msra.mxu0 0.0
    %5037 = vmatprep.subr.mxu0 0.0
    %5038 = vmatpush2.xpose.msra.mxu0 0.0
    %5039 = vmatprep.subr.mxu0 0.0
    %5040 = vmatpush2.xpose.msra.mxu0 0.0
    %5041 = vmatprep.subr.mxu0 0.0
    %5042 = vmatpush2.xpose.msra.mxu0 0.0
    %5043 = vmatprep.subr.mxu0 0.0
    %5044 = vmatpush2.xpose.msra.mxu0 0.0
    %5045 = vmatprep.subr.mxu0 0.0
    %5046 = vmatpush2.xpose.msra.mxu0 0.0
    %5047 = vmatprep.subr.mxu0 0.0
    %5048 = vmatpush2.xpose.msra.mxu0 0.0
    %5049 = vmatprep.subr.mxu0 0.0
    %5050 = vmatpush2.xpose.msra.mxu0 0.0
    %5051 = vmatprep.subr.mxu0 0.0
    %5052 = vmatpush2.xpose.msra.mxu0 0.0
    %5053 = vmatprep.subr.mxu0 0.0
    %5054 = vmatpush2.xpose.msra.mxu0 0.0
    %5055 = vmatprep.mubr.f32.mxu0 0.0
    %5056 = vmatmul.mubr.f32.gmra.mxu0 %v4983
    %v5057 = vpop.f32.mrf.mxu0
    %v5058 = vadd.f32 %v4369, %v5057
    %v5059 = vpop.f32.mrf.mxu0
    %5060 = vmatprep.mubr.f32.mxu0 0.0
    %5061 = vmatmul.mubr.f32.gmra.mxu0 %v4985
    %v5062 = vpop.f32.mrf.mxu0
    %v5063 = vadd.f32 %v4370, %v5062
    %v5064 = vpop.f32.mrf.mxu0
    %5065 = vdwg.mxu0
    %v5066 = vsel %vm1120, %v5058, -inf
    %5067 = vmax.xlane.f32.xlu0 %v5066
    %v5068 = vpop.xlane.xlu0 %5067
    %v5069 = vsel %vm1120, %v5063, -inf
    %5070 = vmax.xlane.f32.xlu0 %v5069
    %v5071 = vpop.xlane.xlu0 %5070
    %v5072 = vsub.f32 %v5058, %v5068
    %v5073 = vsub.f32 %v5063, %v5071
    %v5074 = vmul.f32 %v5072, 1.442695
    %v5075 = vpow.pop %v5074
    %v5076 = vmul.f32 %v5073, 1.442695
    %v5077 = vpow.pop %v5076
    %v5078 = vsel %vm1120, %v5075, 0.0
    %5079 = vadd.xlane.f32.xlu0 %v5078
    %v5080 = vpop.xlane.xlu0 %5079
    %v5081 = vsel %vm1120, %v5077, 0.0
    %5082 = vadd.xlane.f32.xlu0 %v5081
    %v5083 = vpop.xlane.xlu0 %5082
    %v5084 = vrcp.pop %v5080
    %v5085 = vrcp.pop %v5083
    %v5086 = vmul.f32 %v5075, %v5084
    %v5087 = vmul.f32 %v5077, %v5085
    %5088 = vrot.lane.b32.xlu0 %v4351, 40
    %v5089 = vpop.permute.xlu0 %5088
    %5090 = vrot.lane.b32.xlu0 %v4356, 40
    %v5091 = vpop.permute.xlu0 %5090
    %v5095 = vsel %vm1120, %v5086, 0
    %v5098 = vsel %vm1120, %v5087, 0
    %5100 = vmatprep.subr.mxu0 0.0
    %5101 = vmatpush1.msra.mxu0 0.0
    %5102 = vmatprep.subr.mxu0 0.0
    %5103 = vmatpush1.msra.mxu0 0.0
    %5104 = vmatprep.subr.mxu0 0.0
    %5105 = vmatpush1.msra.mxu0 0.0
    %5106 = vmatprep.subr.mxu0 0.0
    %5107 = vmatpush1.msra.mxu0 0.0
    %5108 = vmatprep.subr.mxu0 0.0
    %5109 = vmatpush1.msra.mxu0 0.0
    %5110 = vmatprep.subr.mxu0 0.0
    %5111 = vmatpush1.msra.mxu0 0.0
    %5112 = vmatprep.subr.mxu0 0.0
    %5113 = vmatpush1.msra.mxu0 0.0
    %5114 = vmatprep.subr.mxu0 0.0
    %5115 = vmatpush1.msra.mxu0 0.0
    %5116 = vmatprep.subr.mxu0 0.0
    %5117 = vmatpush1.msra.mxu0 0.0
    %5118 = vmatprep.subr.mxu0 0.0
    %5119 = vmatpush1.msra.mxu0 0.0
    %5120 = vmatprep.subr.mxu0 0.0
    %5121 = vmatpush1.msra.mxu0 0.0
    %5122 = vmatprep.subr.mxu0 0.0
    %5123 = vmatpush1.msra.mxu0 0.0
    %5124 = vmatprep.subr.mxu0 0.0
    %5125 = vmatpush1.msra.mxu0 0.0
    %5126 = vmatprep.subr.mxu0 0.0
    %5127 = vmatpush1.msra.mxu0 0.0
    %5128 = vmatprep.subr.mxu0 0.0
    %5129 = vmatpush1.msra.mxu0 %v5091
    %5130 = vmatprep.subr.mxu0 0.0
    %5131 = vmatpush1.msra.mxu0 %v5089
    %5132 = vmatprep.subr.mxu0 0.0
    %5133 = vmatpush2.msra.mxu0 0.0
    %5134 = vmatprep.subr.mxu0 0.0
    %5135 = vmatpush2.msra.mxu0 0.0
    %5136 = vmatprep.subr.mxu0 0.0
    %5137 = vmatpush2.msra.mxu0 0.0
    %5138 = vmatprep.subr.mxu0 0.0
    %5139 = vmatpush2.msra.mxu0 0.0
    %5140 = vmatprep.subr.mxu0 0.0
    %5141 = vmatpush2.msra.mxu0 0.0
    %5142 = vmatprep.subr.mxu0 0.0
    %5143 = vmatpush2.msra.mxu0 0.0
    %5144 = vmatprep.subr.mxu0 0.0
    %5145 = vmatpush2.msra.mxu0 0.0
    %5146 = vmatprep.subr.mxu0 0.0
    %5147 = vmatpush2.msra.mxu0 0.0
    %5148 = vmatprep.subr.mxu0 0.0
    %5149 = vmatpush2.msra.mxu0 0.0
    %5150 = vmatprep.subr.mxu0 0.0
    %5151 = vmatpush2.msra.mxu0 0.0
    %5152 = vmatprep.subr.mxu0 0.0
    %5153 = vmatpush2.msra.mxu0 0.0
    %5154 = vmatprep.subr.mxu0 0.0
    %5155 = vmatpush2.msra.mxu0 0.0
    %5156 = vmatprep.subr.mxu0 0.0
    %5157 = vmatpush2.msra.mxu0 0.0
    %5158 = vmatprep.subr.mxu0 0.0
    %5159 = vmatpush2.msra.mxu0 0.0
    %5160 = vmatprep.subr.mxu0 0.0
    %5161 = vmatpush2.msra.mxu0 0.0
    %5162 = vmatprep.subr.mxu0 0.0
    %5163 = vmatpush2.msra.mxu0 0.0
    %5164 = vmatprep.mubr.f32.mxu0 0.0
    %5165 = vmatmul.mubr.f32.gmra.mxu0 %v5095
    %v5166 = vpop.f32.mrf.mxu0
    %v5167 = vadd.f32 0.0, %v5166
    %v5168 = vpop.f32.mrf.mxu0
    %5169 = vmatprep.mubr.f32.mxu0 0.0
    %5170 = vmatmul.mubr.f32.gmra.mxu0 %v5098
    %v5171 = vpop.f32.mrf.mxu0
    %v5172 = vadd.f32 0.0, %v5171
    %v5173 = vpop.f32.mrf.mxu0
    %5174 = vdwg.mxu0
    %5177 = vrot.lane.b32.xlu0 %v4767, 8
    %v5178 = vpop.permute.xlu0 %5177
    %5179 = vrot.lane.b32.xlu0 %v4772, 8
    %v5180 = vpop.permute.xlu0 %5179
    %5185 = vrot.lane.b32.xlu0 %v4967, 16
    %v5186 = vpop.permute.xlu0 %5185
    %5187 = vrot.lane.b32.xlu0 %v4972, 16
    %v5188 = vpop.permute.xlu0 %5187
    %5193 = vrot.lane.b32.xlu0 %v5167, 24
    %v5194 = vpop.permute.xlu0 %5193
    %5195 = vrot.lane.b32.xlu0 %v5172, 24
    %v5196 = vpop.permute.xlu0 %5195
    %v5199 = vsel %vm1075, %v4567, %v5178
    %v5200 = vsel %vm1075, %v4572, %v5180
    %v5201 = vsel %vm1120, %v5199, %v5186
    %v5202 = vsel %vm1120, %v5200, %v5188
    %v5203 = vsel %vm2282, %v5201, %v5194
    %v5204 = vsel %vm2282, %v5202, %v5196
    %v5205 = vld [vmem:[%s59] sm:$0xff]
    %v5206 = vld [vmem:[%s59 + $0x8] sm:$0xff]
    %v5207 = vld [vmem:[%s59 + $0x10] sm:$0xff]
    %v5208 = vld [vmem:[%s59 + $0x18] sm:$0xff]
    %v5209 = vld [vmem:[%s61] sm:$0x1]
    %v5211 = vlaneseq
    %v5212 = vshrl.u32 %v5211, 7
    %v5213 = vsub.s32 0, %v5212
    %v5214 = vrot.slane %v5209, %v5213
    %v5217 = vsel %vm311, %v5203, 0
    %v5220 = vsel %vm311, %v5204, 0
    %5222 = vmatprep.subr.mxu0 0.0
    %5223 = vmatpush1.msra.mxu0 0.0
    %5224 = vmatprep.subr.mxu0 0.0
    %5225 = vmatpush1.msra.mxu0 0.0
    %5226 = vmatprep.subr.mxu0 0.0
    %5227 = vmatpush1.msra.mxu0 0.0
    %5228 = vmatprep.subr.mxu0 0.0
    %5229 = vmatpush1.msra.mxu0 0.0
    %5230 = vmatprep.subr.mxu0 0.0
    %5231 = vmatpush1.msra.mxu0 0.0
    %5232 = vmatprep.subr.mxu0 0.0
    %5233 = vmatpush1.msra.mxu0 0.0
    %5234 = vmatprep.subr.mxu0 0.0
    %5235 = vmatpush1.msra.mxu0 0.0
    %5236 = vmatprep.subr.mxu0 0.0
    %5237 = vmatpush1.msra.mxu0 0.0
    %5238 = vmatprep.subr.mxu0 0.0
    %5239 = vmatpush1.msra.mxu0 0.0
    %5240 = vmatprep.subr.mxu0 0.0
    %5241 = vmatpush1.msra.mxu0 0.0
    %5242 = vmatprep.subr.mxu0 0.0
    %5243 = vmatpush1.msra.mxu0 0.0
    %5244 = vmatprep.subr.mxu0 0.0
    %5245 = vmatpush1.msra.mxu0 0.0
    %5246 = vmatprep.subr.mxu0 0.0
    %5247 = vmatpush1.msra.mxu0 %v5208
    %5248 = vmatprep.subr.mxu0 0.0
    %5249 = vmatpush1.msra.mxu0 %v5207
    %5250 = vmatprep.subr.mxu0 0.0
    %5251 = vmatpush1.msra.mxu0 %v5206
    %5252 = vmatprep.subr.mxu0 0.0
    %5253 = vmatpush1.msra.mxu0 %v5205
    %5254 = vmatprep.subr.mxu0 0.0
    %5255 = vmatpush2.msra.mxu0 0.0
    %5256 = vmatprep.subr.mxu0 0.0
    %5257 = vmatpush2.msra.mxu0 0.0
    %5258 = vmatprep.subr.mxu0 0.0
    %5259 = vmatpush2.msra.mxu0 0.0
    %5260 = vmatprep.subr.mxu0 0.0
    %5261 = vmatpush2.msra.mxu0 0.0
    %5262 = vmatprep.subr.mxu0 0.0
    %5263 = vmatpush2.msra.mxu0 0.0
    %5264 = vmatprep.subr.mxu0 0.0
    %5265 = vmatpush2.msra.mxu0 0.0
    %5266 = vmatprep.subr.mxu0 0.0
    %5267 = vmatpush2.msra.mxu0 0.0
    %5268 = vmatprep.subr.mxu0 0.0
    %5269 = vmatpush2.msra.mxu0 0.0
    %5270 = vmatprep.subr.mxu0 0.0
    %5271 = vmatpush2.msra.mxu0 0.0
    %5272 = vmatprep.subr.mxu0 0.0
    %5273 = vmatpush2.msra.mxu0 0.0
    %5274 = vmatprep.subr.mxu0 0.0
    %5275 = vmatpush2.msra.mxu0 0.0
    %5276 = vmatprep.subr.mxu0 0.0
    %5277 = vmatpush2.msra.mxu0 0.0
    %5278 = vmatprep.subr.mxu0 0.0
    %5279 = vmatpush2.msra.mxu0 0.0
    %5280 = vmatprep.subr.mxu0 0.0
    %5281 = vmatpush2.msra.mxu0 0.0
    %5282 = vmatprep.subr.mxu0 0.0
    %5283 = vmatpush2.msra.mxu0 0.0
    %5284 = vmatprep.subr.mxu0 0.0
    %5285 = vmatpush2.msra.mxu0 0.0
    %5286 = vmatprep.mubr.f32.mxu0 0.0
    %5287 = vmatmul.mubr.f32.gmra.mxu0 %v5217
    %v5288 = vpop.f32.mrf.mxu0
    %v5289 = vadd.f32 %v5214, %v5288
    %v5290 = vpop.f32.mrf.mxu0
    %5291 = vmatprep.mubr.f32.mxu0 0.0
    %5292 = vmatmul.mubr.f32.gmra.mxu0 %v5220
    %v5293 = vpop.f32.mrf.mxu0
    %v5294 = vadd.f32 %v5214, %v5293
    %v5295 = vpop.f32.mrf.mxu0
    %5296 = vdwg.mxu0
    %v5297 = vadd.f32 %v4259, %v5289
    %v5298 = vadd.f32 %v4264, %v5294
    %v5299 = vsel %vm311, %v5297, 0.0
    %5300 = vadd.xlane.f32.xlu0 %v5299
    %v5301 = vpop.xlane.xlu0 %5300
    %v5302 = vsel %vm311, %v5298, 0.0
    %5303 = vadd.xlane.f32.xlu0 %v5302
    %v5304 = vpop.xlane.xlu0 %5303
    %v5305 = vmul.f32 %v5301, %v2385
    %v5306 = vmul.f32 %v5304, %v2385
    %v5307 = vsub.f32 %v5297, %v5305
    %v5308 = vsub.f32 %v5298, %v5306
    %v5309 = vmul.f32 %v5307, %v5307
    %v5310 = vmul.f32 %v5308, %v5308
    %v5311 = vsel %vm311, %v5309, 0.0
    %5312 = vadd.xlane.f32.xlu0 %v5311
    %v5313 = vpop.xlane.xlu0 %5312
    %v5314 = vsel %vm311, %v5310, 0.0
    %5315 = vadd.xlane.f32.xlu0 %v5314
    %v5316 = vpop.xlane.xlu0 %5315
    %v5317 = vmul.f32 %v5313, %v2385
    %v5318 = vmul.f32 %v5316, %v2385
    %v5319 = vadd.f32 %v5317, 1e-05
    %v5320 = vadd.f32 %v5318, 1e-05
    %v5321 = vrsqrt.pop %v5319
    %v5322 = vrsqrt.pop %v5320
    %v5323 = vmul.f32 %v5307, %v5321
    %v5324 = vmul.f32 %v5308, %v5322
    %v5325 = vlaneseq
    %v5326 = vshrl.u32 %v5325, 7
    %v5327 = vsub.s32 4, %v5326
    %v5328 = vrot.slane %v284, %v5327
    %v5329 = vmul.f32 %v5323, %v5328
    %v5330 = vmul.f32 %v5324, %v5328
    %v5331 = vlaneseq
    %v5332 = vshrl.u32 %v5331, 7
    %v5333 = vsub.s32 4, %v5332
    %v5334 = vrot.slane %v285, %v5333
    %v5335 = vadd.f32 %v5329, %v5334
    %v5336 = vadd.f32 %v5330, %v5334
    %5337 = vst.msk [vmem:[#allocation14] sm:$0xff] %vm311, %v5335
    %5338 = vst.msk [vmem:[#allocation14 + $0x8] sm:$0xff] %vm311, %v5336
    // Predicated region
    $region226: #{refine_decoder_layer_forward.1} parent=1 // pred_check
      _
    $region227: #{refine_decoder_layer_forward.1} parent=1 // pred_check_branch
      %5340 = sbr.rel (0) target = $region229
    $region228: #{refine_decoder_layer_forward.1} parent=1 // pred_region
      %s5342 = ssub.s32 256, 256
      %5343 = vsyncadd [#allocation4], %s5342
      %s5344 = sshll.u32 [#allocation14], 4
      %s5345 = int_to_ptr.vmem [resolvable:$true] %s5344
      %5350 = dma.vmem_to_hbm [thread:$0]  %s5345, 256, %s99, [#allocation4], 128, 128, 8
    $region229: #{refine_decoder_layer_forward.1} parent=1 // pred_fallthru
      _
    // Predicated region
    $region230: #{refine_decoder_layer_forward.1} parent=1 // pred_check
      _
    $region231: #{refine_decoder_layer_forward.1} parent=1 // pred_check_branch
      %5352 = sbr.rel (0) target = $region233
    $region232: #{refine_decoder_layer_forward.1} parent=1 // pred_region
      %5353 = dma.done [#allocation4], 256
    $region233: #{refine_decoder_layer_forward.1} parent=1 // pred_fallthru
      _
    %5354 = vsyncpa [#allocation3], 1
    %5355 = vsyncpa [#allocation6], 1
    %5356 = vsyncpa [#allocation9], 1
    %5357 = vsyncpa [#allocation12], 1
    %5358 = vsyncpa [#allocation4], 1

</llo_original>
